<compile_context>
chip_gen: v7x
topology: tpu7x:2x2x1
jax: 0.10.0
libtpu: 0.0.40
codegen_flags: <defaults>
</compile_context>

<pallas_src>
import functools

import numpy as np

import jax
import jax.numpy as jnp
from jax.experimental import pallas as pl
from jax.experimental.pallas import tpu as pltpu


# ----------------------------- model config (small, synthetic) ---------------
NZ = 8        # latent dim
NGF = 2       # base feature count
NC = 3        # output image channels
BATCH = 2
BN_EPS = 1e-5

CHANS = [NZ, NGF * 64, NGF * 32, NGF * 16, NGF * 8, NGF * 4, NGF * 2, NGF, NC]
KSIZES = [2, 4, 4, 4, 4, 4, 4, 4]    # layer 0: k=2,s=1,p=0; layers 1..7: k=4,s=2,p=1

_VMEM_LIMIT = 32 * 1024 * 1024       # explicit scoped-VMEM budget (fits v5e/v6e/v7x)

# For a k=4,s=2,p=1 ConvTranspose2d, output row 2*i+rh only receives taps
#   rh == 0:  (input row i+0, kh=1), (input row i-1, kh=3)
#   rh == 1:  (input row i+0, kh=2), (input row i+1, kh=0)
# (same along width) -> each output parity is a 2x2-tap conv over a 3x3 shift
# neighbourhood of the input, which we fold into the packed weight matrix.
_TAPS = {0: ((0, 1), (-1, 3)), 1: ((0, 2), (1, 0))}


# ----------------------------- Pallas kernels --------------------------------
def _deconv_bn_relu_kernel(x_ref, w_ref, a_ref, gamma_ref, beta_ref, o_ref, *,
                           inv_count):
    """Fused: packed deconv matmul -> BN batch stats -> normalize+affine+ReLU.

    x: (rows, K) bf16   packed im2col operand (G spatial positions per row)
    w: (K, cols) bf16   block weight matrix (col2im overlap-add folded in)
    a: (cols, cols) f32 0/1 matrix summing the 4*G packing groups per channel
    gamma/beta: (1, cols) f32, pre-tiled per packing group
    o: (rows, cols) bf16
    """
    y = jnp.dot(x_ref[...], w_ref[...], preferred_element_type=jnp.float32)
    # Training-mode BatchNorm statistics fused as a matmul epilogue: per-channel
    # sums over all rows and over the 4*G packing/parity groups (lane-dense).
    mean = jnp.sum(jnp.dot(y, a_ref[...], preferred_element_type=jnp.float32),
                   axis=0, keepdims=True) * inv_count
    mean_sq = jnp.sum(jnp.dot(y * y, a_ref[...],
                              preferred_element_type=jnp.float32),
                      axis=0, keepdims=True) * inv_count
    inv_std = jax.lax.rsqrt(mean_sq - mean * mean + BN_EPS)
    scale = gamma_ref[...] * inv_std
    shift = beta_ref[...] - mean * scale
    o_ref[...] = jnp.maximum(y * scale + shift, 0.0).astype(o_ref.dtype)


def _deconv_tanh_kernel(x_ref, w_ref, o_ref):
    """Fused final layer: packed deconv matmul -> tanh (no BatchNorm)."""
    y = jnp.dot(x_ref[...], w_ref[...], preferred_element_type=jnp.float32)
    o_ref[...] = jnp.tanh(y)


# ----------------------------- pallas_call wrappers --------------------------
def _fused_bn_relu_layer(x, lay):
    rows, k, cols = lay["rows"], lay["k"], lay["cols"]
    kernel = functools.partial(_deconv_bn_relu_kernel, inv_count=lay["inv_count"])
    return pl.pallas_call(
        kernel,
        out_shape=jax.ShapeDtypeStruct((rows, cols), jnp.bfloat16),
        grid=(1,),   # whole layer in one step: BN batch stats couple all rows
        in_specs=[
            pl.BlockSpec((rows, k), lambda i: (0, 0)),
            pl.BlockSpec((k, cols), lambda i: (0, 0)),
            pl.BlockSpec((cols, cols), lambda i: (0, 0)),
            pl.BlockSpec((1, cols), lambda i: (0, 0)),
            pl.BlockSpec((1, cols), lambda i: (0, 0)),
        ],
        out_specs=pl.BlockSpec((rows, cols), lambda i: (0, 0)),
        compiler_params=pltpu.CompilerParams(
            dimension_semantics=("arbitrary",),
            vmem_limit_bytes=_VMEM_LIMIT),
    )(x, lay["w"], lay["a"], lay["gamma"], lay["beta"])


def _fused_tanh_layer(x, lay):
    rows, k, cols = lay["rows"], lay["k"], lay["cols"]
    row_tile = 256 if rows % 256 == 0 else rows
    return pl.pallas_call(
        _deconv_tanh_kernel,
        out_shape=jax.ShapeDtypeStruct((rows, cols), jnp.float32),
        grid=(rows // row_tile,),
        in_specs=[
            pl.BlockSpec((row_tile, k), lambda i: (i, 0)),
            pl.BlockSpec((k, cols), lambda i: (0, 0)),
        ],
        out_specs=pl.BlockSpec((row_tile, cols), lambda i: (i, 0)),
        compiler_params=pltpu.CompilerParams(
            dimension_semantics=("parallel",),   # uses both TensorCores on v7x
            vmem_limit_bytes=_VMEM_LIMIT),
    )(x, lay["w"])


# ----------------------------- one-time parameter packing --------------------
def _build_wbig_first(w):
    """Layer 0: ConvTranspose2d(nz, C, k=2, s=1, p=0) on a 1x1 input."""
    cin, cout = w.shape[0], w.shape[1]
    w = np.asarray(w, np.float32)
    wb = np.zeros((cin, 4 * cout), np.float32)
    for kh in (0, 1):
        for kw in (0, 1):
            p = 2 * kh + kw
            wb[:, p * cout:(p + 1) * cout] = w[:, :, kh, kw]
    return wb


def _build_wbig_s2k4p1(w):
    """k=4,s=2,p=1 deconv -> (9*Cin, 4*Cout) block matrix mapping the 3x3-shift
    packed input directly to the parity-blocked output (col2im folded in)."""
    cin, cout = w.shape[0], w.shape[1]
    w = np.asarray(w, np.float32)
    wb = np.zeros((9 * cin, 4 * cout), np.float32)
    for rh in (0, 1):
        for rw in (0, 1):
            p = 2 * rh + rw
            for dh, kh in _TAPS[rh]:
                for dw, kw in _TAPS[rw]:
                    d = (dh + 1) * 3 + (dw + 1)
                    wb[d * cin:(d + 1) * cin, p * cout:(p + 1) * cout] += w[:, :, kh, kw]
    return wb


def prepare_decoder_params(weights, gammas, betas):
    """Repack torch-layout weights into fused-kernel operands (done once,
    hoisted out of the forward pass per perf feedback)."""
    layers = []
    ih = iw = 1
    for l in range(8):
        cin, cout = CHANS[l], CHANS[l + 1]
        m = BATCH * ih * iw
        c4 = 4 * cout
        # pack G spatial positions per matmul row so outputs are >=128 lanes wide
        g = 1
        while g * c4 < 128 and g < m:
            g *= 2
        wb = _build_wbig_first(weights[0]) if l == 0 else _build_wbig_s2k4p1(weights[l])
        wb_g = np.kron(np.eye(g, dtype=np.float32), wb)
        lay = dict(
            cin=cin, cout=cout, ih=ih, iw=iw, m=m, g=g,
            rows=m // g, k=wb_g.shape[0], cols=g * c4,
            w=jnp.asarray(wb_g, jnp.bfloat16),
        )
        if l < 7:   # layers 0..6 carry BatchNorm + ReLU
            a = np.kron(np.ones((4 * g, 4 * g), np.float32),
                        np.eye(cout, dtype=np.float32))
            lay.update(
                a=jnp.asarray(a, jnp.float32),
                gamma=jnp.asarray(np.tile(np.asarray(gammas[l], np.float32), 4 * g)[None, :]),
                beta=jnp.asarray(np.tile(np.asarray(betas[l], np.float32), 4 * g)[None, :]),
                inv_count=1.0 / float(4 * m),
            )
        layers.append(lay)
        ih, iw = (2, 2) if l == 0 else (2 * ih, 2 * iw)
    return layers


# ----------------------------- thin XLA repacking between layers -------------
def _parity_to_nhwc(out, n, ih, iw, c):
    """Parity/packed layer output (rows, G*4*C) -> logical NHWC (n, 2ih, 2iw, c)."""
    t = out.reshape(n, ih, iw, 2, 2, c)
    t = jnp.transpose(t, (0, 1, 3, 2, 4, 5))
    return t.reshape(n, 2 * ih, 2 * iw, c)


def _nhwc_to_packed_x9(h, rows, k):
    """NHWC activation -> packed (rows, K) operand holding, for every spatial
    position, its zero-padded 3x3 shift neighbourhood times all channels."""
    n, hh, ww, c = h.shape
    hp = jnp.pad(h, ((0, 0), (1, 1), (1, 1), (0, 0)))
    x9 = jnp.concatenate(
        [hp[:, 1 + dh:1 + dh + hh, 1 + dw:1 + dw + ww, :]
         for dh in (-1, 0, 1) for dw in (-1, 0, 1)], axis=-1)
    return x9.reshape(rows, k)


# ----------------------------- full forward ----------------------------------
def pallas_decoder_forward(x, layers):
    """x: (N, NZ, 1, 1) -> (N, NC, 256, 256), matching Decoder256.forward."""
    n = x.shape[0]
    h = x.reshape(n, NZ).astype(jnp.bfloat16)
    for l in range(7):
        lay = layers[l]
        out = _fused_bn_relu_layer(h, lay)
        nxt = layers[l + 1]
        # TODO(synk): this small repacking (<=1 MiB/layer) stays in XLA; doing it
        # in-kernel would need sublane shifts of the interleaved activations.
        h_nhwc = _parity_to_nhwc(out, n, lay["ih"], lay["iw"], lay["cout"])
        h = _nhwc_to_packed_x9(h_nhwc, nxt["rows"], nxt["k"])
    lay7 = layers[7]
    out = _fused_tanh_layer(h, lay7)
    # parity-blocked (rows, G*4*NC) -> NCHW with a lane-dense 256-wide last dim
    t = out.reshape(n, lay7["ih"], lay7["iw"], 2, 2, NC)
    t = jnp.transpose(t, (0, 5, 1, 3, 2, 4))
    return t.reshape(n, NC, 2 * lay7["ih"], 2 * lay7["iw"])


# ----------------------------- pure-JAX reference ----------------------------
def _convT_ref(x_nchw, w, stride, pad):
    k = w.shape[2]
    w_flip = jnp.transpose(jnp.flip(w, (2, 3)), (1, 0, 2, 3))   # (Cout, Cin, k, k)
    return jax.lax.conv_general_dilated(
        x_nchw, w_flip, window_strides=(1, 1),
        padding=[(k - 1 - pad, k - 1 - pad)] * 2,
        lhs_dilation=(stride, stride),
        dimension_numbers=("NCHW", "OIHW", "NCHW"),
        precision=jax.lax.Precision.HIGHEST)


def _bn_relu_ref(x, gamma, beta):
    mean = jnp.mean(x, axis=(0, 2, 3), keepdims=True)
    var = jnp.mean((x - mean) ** 2, axis=(0, 2, 3), keepdims=True)
    y = (x - mean) * jax.lax.rsqrt(var + BN_EPS)
    y = y * gamma.reshape(1, -1, 1, 1) + beta.reshape(1, -1, 1, 1)
    return jnp.maximum(y, 0.0)


def ref_decoder_forward(x, weights, gammas, betas):
    h = x.reshape(-1, NZ, 1, 1)
    h = _convT_ref(h, weights[0], 1, 0)
    h = _bn_relu_ref(h, gammas[0], betas[0])
    for i in range(1, 7):
        h = _convT_ref(h, weights[i], 2, 1)
        h = _bn_relu_ref(h, gammas[i], betas[i])
    h = _convT_ref(h, weights[7], 2, 1)
    return jnp.tanh(h)


# ----------------------------- main -------------------------------------------
if __name__ == "__main__":
    key = jax.random.PRNGKey(0)
    k_in, k_w = jax.random.split(key)

    wkeys = jax.random.split(k_w, 8)
    weights = [
        0.05 * jax.random.normal(
            wkeys[i], (CHANS[i], CHANS[i + 1], KSIZES[i], KSIZES[i]), jnp.float32)
        for i in range(8)
    ]
    # BatchNorm affine params at their PyTorch default init (gamma=1, beta=0)
    gammas = [jnp.ones((CHANS[i + 1],), jnp.float32) for i in range(7)]
    betas = [jnp.zeros((CHANS[i + 1],), jnp.float32) for i in range(7)]

    x = jax.random.normal(k_in, (BATCH, NZ, 1, 1), jnp.float32)

    layers = prepare_decoder_params(weights, gammas, betas)
    fwd = jax.jit(functools.partial(pallas_decoder_forward, layers=layers))
    out = jax.block_until_ready(fwd(x))

    ref = jax.block_until_ready(ref_decoder_forward(x, weights, gammas, betas))

    assert out.shape == (BATCH, NC, 256, 256), out.shape
    assert out.dtype == jnp.float32
    assert bool(jnp.all(jnp.isfinite(out)))
    err = jnp.abs(out - ref)
    max_err = float(jnp.max(err))
    mean_err = float(jnp.mean(err))
    # bf16 MXU operands (per perf feedback) vs. an f32 HIGHEST reference:
    # budget sized for bf16; structural bugs would give O(1) errors.
    assert max_err < 0.1, (max_err, mean_err)
    assert mean_err < 0.02, (max_err, mean_err)
    print("KERNEL_OK")
</pallas_src>

<mosaic_0001>
module attributes {stable_mosaic.version = 11 : i64} {
  func.func @_deconv_bn_relu_kernel(%arg0: i32, %arg1: memref<2x8xbf16, #tpu.memory_space<vmem>>, %arg2: memref<8x512xbf16, #tpu.memory_space<vmem>>, %arg3: memref<512x512xf32, #tpu.memory_space<vmem>>, %arg4: memref<1x512xf32, #tpu.memory_space<vmem>>, %arg5: memref<1x512xf32, #tpu.memory_space<vmem>>, %arg6: memref<2x512xbf16, #tpu.memory_space<vmem>>) attributes {dimension_semantics = [#tpu.dimension_semantics<arbitrary>], iteration_bounds = array<i64: 1>, scalar_prefetch = 0 : i64, scratch_operands = 0 : i64, tpu.core_type = #tpu.core_type<tc>, window_params = [{pipeline_mode = #tpu.pipeline_mode<synchronous>, transform_indices = @transform_0, window_bounds = array<i64: 2, 8>}, {pipeline_mode = #tpu.pipeline_mode<synchronous>, transform_indices = @transform_1, window_bounds = array<i64: 8, 512>}, {pipeline_mode = #tpu.pipeline_mode<synchronous>, transform_indices = @transform_2, window_bounds = array<i64: 512, 512>}, {pipeline_mode = #tpu.pipeline_mode<synchronous>, transform_indices = @transform_3, window_bounds = array<i64: 1, 512>}, {pipeline_mode = #tpu.pipeline_mode<synchronous>, transform_indices = @transform_4, window_bounds = array<i64: 1, 512>}, {pipeline_mode = #tpu.pipeline_mode<synchronous>, transform_indices = @transform_5, window_bounds = array<i64: 2, 512>}]} {
    %c0 = arith.constant 0 : index
    %c0_0 = arith.constant 0 : index
    %0 = vector.load %arg1[%c0, %c0_0] : memref<2x8xbf16, #tpu.memory_space<vmem>>, vector<2x8xbf16>
    %c0_1 = arith.constant 0 : index
    %c0_2 = arith.constant 0 : index
    %1 = vector.load %arg2[%c0_1, %c0_2] : memref<8x512xbf16, #tpu.memory_space<vmem>>, vector<8x512xbf16>
    %cst = arith.constant dense<0.000000e+00> : vector<2x512xf32>
    %2 = tpu.matmul %0, %1, %cst {dimension_numbers = #tpu.dot_dimension_numbers<[1], [0], [0], [1], [0, 0, 1, 1], [], []>} : vector<2x8xbf16>, vector<8x512xbf16>, vector<2x512xf32> -> vector<2x512xf32>
    %c0_3 = arith.constant 0 : index
    %c0_4 = arith.constant 0 : index
    %3 = vector.load %arg3[%c0_3, %c0_4] : memref<512x512xf32, #tpu.memory_space<vmem>>, vector<512x512xf32>
    %cst_5 = arith.constant dense<0.000000e+00> : vector<2x512xf32>
    %4 = tpu.matmul %2, %3, %cst_5 {dimension_numbers = #tpu.dot_dimension_numbers<[1], [0], [0], [1], [0, 0, 1, 1], [], []>} : vector<2x512xf32>, vector<512x512xf32>, vector<2x512xf32> -> vector<2x512xf32>
    %cst_6 = arith.constant dense<0.000000e+00> : vector<512xf32>
    %5 = vector.multi_reduction <add>, %4, %cst_6 [0] : vector<2x512xf32> to vector<512xf32>
    %6 = vector.shape_cast %5 : vector<512xf32> to vector<1x512xf32>
    %cst_7 = arith.constant 1.250000e-01 : f32
    %7 = vector.broadcast %cst_7 : f32 to vector<1x512xf32>
    %8 = arith.mulf %6, %7 : vector<1x512xf32>
    %9 = arith.mulf %2, %2 : vector<2x512xf32>
    %c0_8 = arith.constant 0 : index
    %c0_9 = arith.constant 0 : index
    %10 = vector.load %arg3[%c0_8, %c0_9] : memref<512x512xf32, #tpu.memory_space<vmem>>, vector<512x512xf32>
    %cst_10 = arith.constant dense<0.000000e+00> : vector<2x512xf32>
    %11 = tpu.matmul %9, %10, %cst_10 {dimension_numbers = #tpu.dot_dimension_numbers<[1], [0], [0], [1], [0, 0, 1, 1], [], []>} : vector<2x512xf32>, vector<512x512xf32>, vector<2x512xf32> -> vector<2x512xf32>
    %cst_11 = arith.constant dense<0.000000e+00> : vector<512xf32>
    %12 = vector.multi_reduction <add>, %11, %cst_11 [0] : vector<2x512xf32> to vector<512xf32>
    %13 = vector.shape_cast %12 : vector<512xf32> to vector<1x512xf32>
    %cst_12 = arith.constant 1.250000e-01 : f32
    %14 = vector.broadcast %cst_12 : f32 to vector<1x512xf32>
    %15 = arith.mulf %13, %14 : vector<1x512xf32>
    %16 = arith.mulf %8, %8 : vector<1x512xf32>
    %17 = arith.subf %15, %16 : vector<1x512xf32>
    %cst_13 = arith.constant 9.99999974E-6 : f32
    %18 = vector.broadcast %cst_13 : f32 to vector<1x512xf32>
    %19 = arith.addf %17, %18 : vector<1x512xf32>
    %20 = math.rsqrt %19 : vector<1x512xf32>
    %c0_14 = arith.constant 0 : index
    %c0_15 = arith.constant 0 : index
    %21 = vector.load %arg4[%c0_14, %c0_15] : memref<1x512xf32, #tpu.memory_space<vmem>>, vector<1x512xf32>
    %22 = arith.mulf %21, %20 : vector<1x512xf32>
    %c0_16 = arith.constant 0 : index
    %c0_17 = arith.constant 0 : index
    %23 = vector.load %arg5[%c0_16, %c0_17] : memref<1x512xf32, #tpu.memory_space<vmem>>, vector<1x512xf32>
    %24 = arith.mulf %8, %22 : vector<1x512xf32>
    %25 = arith.subf %23, %24 : vector<1x512xf32>
    %26 = vector.broadcast %22 : vector<1x512xf32> to vector<2x512xf32>
    %27 = arith.mulf %2, %26 : vector<2x512xf32>
    %28 = vector.broadcast %25 : vector<1x512xf32> to vector<2x512xf32>
    %29 = arith.addf %27, %28 : vector<2x512xf32>
    %cst_18 = arith.constant 0.000000e+00 : f32
    %30 = vector.broadcast %cst_18 : f32 to vector<2x512xf32>
    %31 = arith.maximumf %29, %30 : vector<2x512xf32>
    %32 = arith.truncf %31 : vector<2x512xf32> to vector<2x512xbf16>
    %c0_19 = arith.constant 0 : index
    %c0_20 = arith.constant 0 : index
    %33 = vector.load %arg6[%c0_19, %c0_20] : memref<2x512xbf16, #tpu.memory_space<vmem>>, vector<2x512xbf16>
    tpu.vector_store %arg6[%c0_19, %c0_20], %32 {strides = array<i32>} : memref<2x512xbf16, #tpu.memory_space<vmem>>, vector<2x512xbf16>,
    return
  }
  func.func @transform_0(%arg0: i32) -> (i32, i32) {
    %c0_i32 = arith.constant 0 : i32
    %c0_i32_0 = arith.constant 0 : i32
    %c0_i32_1 = arith.constant 0 : i32
    return %c0_i32, %c0_i32_0 : i32, i32
  }
  func.func @transform_1(%arg0: i32) -> (i32, i32) {
    %c0_i32 = arith.constant 0 : i32
    %c0_i32_0 = arith.constant 0 : i32
    %c0_i32_1 = arith.constant 0 : i32
    return %c0_i32, %c0_i32_0 : i32, i32
  }
  func.func @transform_2(%arg0: i32) -> (i32, i32) {
    %c0_i32 = arith.constant 0 : i32
    %c0_i32_0 = arith.constant 0 : i32
    %c0_i32_1 = arith.constant 0 : i32
    return %c0_i32, %c0_i32_0 : i32, i32
  }
  func.func @transform_3(%arg0: i32) -> (i32, i32) {
    %c0_i32 = arith.constant 0 : i32
    %c0_i32_0 = arith.constant 0 : i32
    %c0_i32_1 = arith.constant 0 : i32
    return %c0_i32, %c0_i32_0 : i32, i32
  }
  func.func @transform_4(%arg0: i32) -> (i32, i32) {
    %c0_i32 = arith.constant 0 : i32
    %c0_i32_0 = arith.constant 0 : i32
    %c0_i32_1 = arith.constant 0 : i32
    return %c0_i32, %c0_i32_0 : i32, i32
  }
  func.func @transform_5(%arg0: i32) -> (i32, i32) {
    %c0_i32 = arith.constant 0 : i32
    %c0_i32_0 = arith.constant 0 : i32
    %c0_i32_1 = arith.constant 0 : i32
    return %c0_i32, %c0_i32_0 : i32, i32
  }
}

module attributes {stable_mosaic.version = 11 : i64} {
  func.func @_deconv_bn_relu_kernel(%arg0: i32, %arg1: memref<8x1152xbf16, #tpu.memory_space<vmem>>, %arg2: memref<1152x256xbf16, #tpu.memory_space<vmem>>, %arg3: memref<256x256xf32, #tpu.memory_space<vmem>>, %arg4: memref<1x256xf32, #tpu.memory_space<vmem>>, %arg5: memref<1x256xf32, #tpu.memory_space<vmem>>, %arg6: memref<8x256xbf16, #tpu.memory_space<vmem>>) attributes {dimension_semantics = [#tpu.dimension_semantics<arbitrary>], iteration_bounds = array<i64: 1>, scalar_prefetch = 0 : i64, scratch_operands = 0 : i64, tpu.core_type = #tpu.core_type<tc>, window_params = [{pipeline_mode = #tpu.pipeline_mode<synchronous>, transform_indices = @transform_0, window_bounds = array<i64: 8, 1152>}, {pipeline_mode = #tpu.pipeline_mode<synchronous>, transform_indices = @transform_1, window_bounds = array<i64: 1152, 256>}, {pipeline_mode = #tpu.pipeline_mode<synchronous>, transform_indices = @transform_2, window_bounds = array<i64: 256, 256>}, {pipeline_mode = #tpu.pipeline_mode<synchronous>, transform_indices = @transform_3, window_bounds = array<i64: 1, 256>}, {pipeline_mode = #tpu.pipeline_mode<synchronous>, transform_indices = @transform_4, window_bounds = array<i64: 1, 256>}, {pipeline_mode = #tpu.pipeline_mode<synchronous>, transform_indices = @transform_5, window_bounds = array<i64: 8, 256>}]} {
    %c0 = arith.constant 0 : index
    %c0_0 = arith.constant 0 : index
    %0 = vector.load %arg1[%c0, %c0_0] : memref<8x1152xbf16, #tpu.memory_space<vmem>>, vector<8x1152xbf16>
    %c0_1 = arith.constant 0 : index
    %c0_2 = arith.constant 0 : index
    %1 = vector.load %arg2[%c0_1, %c0_2] : memref<1152x256xbf16, #tpu.memory_space<vmem>>, vector<1152x256xbf16>
    %cst = arith.constant dense<0.000000e+00> : vector<8x256xf32>
    %2 = tpu.matmul %0, %1, %cst {dimension_numbers = #tpu.dot_dimension_numbers<[1], [0], [0], [1], [0, 0, 1, 1], [], []>} : vector<8x1152xbf16>, vector<1152x256xbf16>, vector<8x256xf32> -> vector<8x256xf32>
    %c0_3 = arith.constant 0 : index
    %c0_4 = arith.constant 0 : index
    %3 = vector.load %arg3[%c0_3, %c0_4] : memref<256x256xf32, #tpu.memory_space<vmem>>, vector<256x256xf32>
    %cst_5 = arith.constant dense<0.000000e+00> : vector<8x256xf32>
    %4 = tpu.matmul %2, %3, %cst_5 {dimension_numbers = #tpu.dot_dimension_numbers<[1], [0], [0], [1], [0, 0, 1, 1], [], []>} : vector<8x256xf32>, vector<256x256xf32>, vector<8x256xf32> -> vector<8x256xf32>
    %cst_6 = arith.constant dense<0.000000e+00> : vector<256xf32>
    %5 = vector.multi_reduction <add>, %4, %cst_6 [0] : vector<8x256xf32> to vector<256xf32>
    %6 = vector.shape_cast %5 : vector<256xf32> to vector<1x256xf32>
    %cst_7 = arith.constant 3.125000e-02 : f32
    %7 = vector.broadcast %cst_7 : f32 to vector<1x256xf32>
    %8 = arith.mulf %6, %7 : vector<1x256xf32>
    %9 = arith.mulf %2, %2 : vector<8x256xf32>
    %c0_8 = arith.constant 0 : index
    %c0_9 = arith.constant 0 : index
    %10 = vector.load %arg3[%c0_8, %c0_9] : memref<256x256xf32, #tpu.memory_space<vmem>>, vector<256x256xf32>
    %cst_10 = arith.constant dense<0.000000e+00> : vector<8x256xf32>
    %11 = tpu.matmul %9, %10, %cst_10 {dimension_numbers = #tpu.dot_dimension_numbers<[1], [0], [0], [1], [0, 0, 1, 1], [], []>} : vector<8x256xf32>, vector<256x256xf32>, vector<8x256xf32> -> vector<8x256xf32>
    %cst_11 = arith.constant dense<0.000000e+00> : vector<256xf32>
    %12 = vector.multi_reduction <add>, %11, %cst_11 [0] : vector<8x256xf32> to vector<256xf32>
    %13 = vector.shape_cast %12 : vector<256xf32> to vector<1x256xf32>
    %cst_12 = arith.constant 3.125000e-02 : f32
    %14 = vector.broadcast %cst_12 : f32 to vector<1x256xf32>
    %15 = arith.mulf %13, %14 : vector<1x256xf32>
    %16 = arith.mulf %8, %8 : vector<1x256xf32>
    %17 = arith.subf %15, %16 : vector<1x256xf32>
    %cst_13 = arith.constant 9.99999974E-6 : f32
    %18 = vector.broadcast %cst_13 : f32 to vector<1x256xf32>
    %19 = arith.addf %17, %18 : vector<1x256xf32>
    %20 = math.rsqrt %19 : vector<1x256xf32>
    %c0_14 = arith.constant 0 : index
    %c0_15 = arith.constant 0 : index
    %21 = vector.load %arg4[%c0_14, %c0_15] : memref<1x256xf32, #tpu.memory_space<vmem>>, vector<1x256xf32>
    %22 = arith.mulf %21, %20 : vector<1x256xf32>
    %c0_16 = arith.constant 0 : index
    %c0_17 = arith.constant 0 : index
    %23 = vector.load %arg5[%c0_16, %c0_17] : memref<1x256xf32, #tpu.memory_space<vmem>>, vector<1x256xf32>
    %24 = arith.mulf %8, %22 : vector<1x256xf32>
    %25 = arith.subf %23, %24 : vector<1x256xf32>
    %26 = vector.broadcast %22 : vector<1x256xf32> to vector<8x256xf32>
    %27 = arith.mulf %2, %26 : vector<8x256xf32>
    %28 = vector.broadcast %25 : vector<1x256xf32> to vector<8x256xf32>
    %29 = arith.addf %27, %28 : vector<8x256xf32>
    %cst_18 = arith.constant 0.000000e+00 : f32
    %30 = vector.broadcast %cst_18 : f32 to vector<8x256xf32>
    %31 = arith.maximumf %29, %30 : vector<8x256xf32>
    %32 = arith.truncf %31 : vector<8x256xf32> to vector<8x256xbf16>
    %c0_19 = arith.constant 0 : index
    %c0_20 = arith.constant 0 : index
    %33 = vector.load %arg6[%c0_19, %c0_20] : memref<8x256xbf16, #tpu.memory_space<vmem>>, vector<8x256xbf16>
    tpu.vector_store %arg6[%c0_19, %c0_20], %32 {strides = array<i32>} : memref<8x256xbf16, #tpu.memory_space<vmem>>, vector<8x256xbf16>,
    return
  }
  func.func @transform_0(%arg0: i32) -> (i32, i32) {
    %c0_i32 = arith.constant 0 : i32
    %c0_i32_0 = arith.constant 0 : i32
    %c0_i32_1 = arith.constant 0 : i32
    return %c0_i32, %c0_i32_0 : i32, i32
  }
  func.func @transform_1(%arg0: i32) -> (i32, i32) {
    %c0_i32 = arith.constant 0 : i32
    %c0_i32_0 = arith.constant 0 : i32
    %c0_i32_1 = arith.constant 0 : i32
    return %c0_i32, %c0_i32_0 : i32, i32
  }
  func.func @transform_2(%arg0: i32) -> (i32, i32) {
    %c0_i32 = arith.constant 0 : i32
    %c0_i32_0 = arith.constant 0 : i32
    %c0_i32_1 = arith.constant 0 : i32
    return %c0_i32, %c0_i32_0 : i32, i32
  }
  func.func @transform_3(%arg0: i32) -> (i32, i32) {
    %c0_i32 = arith.constant 0 : i32
    %c0_i32_0 = arith.constant 0 : i32
    %c0_i32_1 = arith.constant 0 : i32
    return %c0_i32, %c0_i32_0 : i32, i32
  }
  func.func @transform_4(%arg0: i32) -> (i32, i32) {
    %c0_i32 = arith.constant 0 : i32
    %c0_i32_0 = arith.constant 0 : i32
    %c0_i32_1 = arith.constant 0 : i32
    return %c0_i32, %c0_i32_0 : i32, i32
  }
  func.func @transform_5(%arg0: i32) -> (i32, i32) {
    %c0_i32 = arith.constant 0 : i32
    %c0_i32_0 = arith.constant 0 : i32
    %c0_i32_1 = arith.constant 0 : i32
    return %c0_i32, %c0_i32_0 : i32, i32
  }
}

module attributes {stable_mosaic.version = 11 : i64} {
  func.func @_deconv_bn_relu_kernel(%arg0: i32, %arg1: memref<32x576xbf16, #tpu.memory_space<vmem>>, %arg2: memref<576x128xbf16, #tpu.memory_space<vmem>>, %arg3: memref<128x128xf32, #tpu.memory_space<vmem>>, %arg4: memref<1x128xf32, #tpu.memory_space<vmem>>, %arg5: memref<1x128xf32, #tpu.memory_space<vmem>>, %arg6: memref<32x128xbf16, #tpu.memory_space<vmem>>) attributes {dimension_semantics = [#tpu.dimension_semantics<arbitrary>], iteration_bounds = array<i64: 1>, scalar_prefetch = 0 : i64, scratch_operands = 0 : i64, tpu.core_type = #tpu.core_type<tc>, window_params = [{pipeline_mode = #tpu.pipeline_mode<synchronous>, transform_indices = @transform_0, window_bounds = array<i64: 32, 576>}, {pipeline_mode = #tpu.pipeline_mode<synchronous>, transform_indices = @transform_1, window_bounds = array<i64: 576, 128>}, {pipeline_mode = #tpu.pipeline_mode<synchronous>, transform_indices = @transform_2, window_bounds = array<i64: 128, 128>}, {pipeline_mode = #tpu.pipeline_mode<synchronous>, transform_indices = @transform_3, window_bounds = array<i64: 1, 128>}, {pipeline_mode = #tpu.pipeline_mode<synchronous>, transform_indices = @transform_4, window_bounds = array<i64: 1, 128>}, {pipeline_mode = #tpu.pipeline_mode<synchronous>, transform_indices = @transform_5, window_bounds = array<i64: 32, 128>}]} {
    %c0 = arith.constant 0 : index
    %c0_0 = arith.constant 0 : index
    %0 = vector.load %arg1[%c0, %c0_0] : memref<32x576xbf16, #tpu.memory_space<vmem>>, vector<32x576xbf16>
    %c0_1 = arith.constant 0 : index
    %c0_2 = arith.constant 0 : index
    %1 = vector.load %arg2[%c0_1, %c0_2] : memref<576x128xbf16, #tpu.memory_space<vmem>>, vector<576x128xbf16>
    %cst = arith.constant dense<0.000000e+00> : vector<32x128xf32>
    %2 = tpu.matmul %0, %1, %cst {dimension_numbers = #tpu.dot_dimension_numbers<[1], [0], [0], [1], [0, 0, 1, 1], [], []>} : vector<32x576xbf16>, vector<576x128xbf16>, vector<32x128xf32> -> vector<32x128xf32>
    %c0_3 = arith.constant 0 : index
    %c0_4 = arith.constant 0 : index
    %3 = vector.load %arg3[%c0_3, %c0_4] : memref<128x128xf32, #tpu.memory_space<vmem>>, vector<128x128xf32>
    %cst_5 = arith.constant dense<0.000000e+00> : vector<32x128xf32>
    %4 = tpu.matmul %2, %3, %cst_5 {dimension_numbers = #tpu.dot_dimension_numbers<[1], [0], [0], [1], [0, 0, 1, 1], [], []>} : vector<32x128xf32>, vector<128x128xf32>, vector<32x128xf32> -> vector<32x128xf32>
    %cst_6 = arith.constant dense<0.000000e+00> : vector<128xf32>
    %5 = vector.multi_reduction <add>, %4, %cst_6 [0] : vector<32x128xf32> to vector<128xf32>
    %6 = vector.shape_cast %5 : vector<128xf32> to vector<1x128xf32>
    %cst_7 = arith.constant 7.812500e-03 : f32
    %7 = vector.broadcast %cst_7 : f32 to vector<1x128xf32>
    %8 = arith.mulf %6, %7 : vector<1x128xf32>
    %9 = arith.mulf %2, %2 : vector<32x128xf32>
    %c0_8 = arith.constant 0 : index
    %c0_9 = arith.constant 0 : index
    %10 = vector.load %arg3[%c0_8, %c0_9] : memref<128x128xf32, #tpu.memory_space<vmem>>, vector<128x128xf32>
    %cst_10 = arith.constant dense<0.000000e+00> : vector<32x128xf32>
    %11 = tpu.matmul %9, %10, %cst_10 {dimension_numbers = #tpu.dot_dimension_numbers<[1], [0], [0], [1], [0, 0, 1, 1], [], []>} : vector<32x128xf32>, vector<128x128xf32>, vector<32x128xf32> -> vector<32x128xf32>
    %cst_11 = arith.constant dense<0.000000e+00> : vector<128xf32>
    %12 = vector.multi_reduction <add>, %11, %cst_11 [0] : vector<32x128xf32> to vector<128xf32>
    %13 = vector.shape_cast %12 : vector<128xf32> to vector<1x128xf32>
    %cst_12 = arith.constant 7.812500e-03 : f32
    %14 = vector.broadcast %cst_12 : f32 to vector<1x128xf32>
    %15 = arith.mulf %13, %14 : vector<1x128xf32>
    %16 = arith.mulf %8, %8 : vector<1x128xf32>
    %17 = arith.subf %15, %16 : vector<1x128xf32>
    %cst_13 = arith.constant 9.99999974E-6 : f32
    %18 = vector.broadcast %cst_13 : f32 to vector<1x128xf32>
    %19 = arith.addf %17, %18 : vector<1x128xf32>
    %20 = math.rsqrt %19 : vector<1x128xf32>
    %c0_14 = arith.constant 0 : index
    %c0_15 = arith.constant 0 : index
    %21 = vector.load %arg4[%c0_14, %c0_15] : memref<1x128xf32, #tpu.memory_space<vmem>>, vector<1x128xf32>
    %22 = arith.mulf %21, %20 : vector<1x128xf32>
    %c0_16 = arith.constant 0 : index
    %c0_17 = arith.constant 0 : index
    %23 = vector.load %arg5[%c0_16, %c0_17] : memref<1x128xf32, #tpu.memory_space<vmem>>, vector<1x128xf32>
    %24 = arith.mulf %8, %22 : vector<1x128xf32>
    %25 = arith.subf %23, %24 : vector<1x128xf32>
    %26 = vector.broadcast %22 : vector<1x128xf32> to vector<32x128xf32>
    %27 = arith.mulf %2, %26 : vector<32x128xf32>
    %28 = vector.broadcast %25 : vector<1x128xf32> to vector<32x128xf32>
    %29 = arith.addf %27, %28 : vector<32x128xf32>
    %cst_18 = arith.constant 0.000000e+00 : f32
    %30 = vector.broadcast %cst_18 : f32 to vector<32x128xf32>
    %31 = arith.maximumf %29, %30 : vector<32x128xf32>
    %32 = arith.truncf %31 : vector<32x128xf32> to vector<32x128xbf16>
    %c0_19 = arith.constant 0 : index
    %c0_20 = arith.constant 0 : index
    %33 = vector.load %arg6[%c0_19, %c0_20] : memref<32x128xbf16, #tpu.memory_space<vmem>>, vector<32x128xbf16>
    tpu.vector_store %arg6[%c0_19, %c0_20], %32 {strides = array<i32>} : memref<32x128xbf16, #tpu.memory_space<vmem>>, vector<32x128xbf16>,
    return
  }
  func.func @transform_0(%arg0: i32) -> (i32, i32) {
    %c0_i32 = arith.constant 0 : i32
    %c0_i32_0 = arith.constant 0 : i32
    %c0_i32_1 = arith.constant 0 : i32
    return %c0_i32, %c0_i32_0 : i32, i32
  }
  func.func @transform_1(%arg0: i32) -> (i32, i32) {
    %c0_i32 = arith.constant 0 : i32
    %c0_i32_0 = arith.constant 0 : i32
    %c0_i32_1 = arith.constant 0 : i32
    return %c0_i32, %c0_i32_0 : i32, i32
  }
  func.func @transform_2(%arg0: i32) -> (i32, i32) {
    %c0_i32 = arith.constant 0 : i32
    %c0_i32_0 = arith.constant 0 : i32
    %c0_i32_1 = arith.constant 0 : i32
    return %c0_i32, %c0_i32_0 : i32, i32
  }
  func.func @transform_3(%arg0: i32) -> (i32, i32) {
    %c0_i32 = arith.constant 0 : i32
    %c0_i32_0 = arith.constant 0 : i32
    %c0_i32_1 = arith.constant 0 : i32
    return %c0_i32, %c0_i32_0 : i32, i32
  }
  func.func @transform_4(%arg0: i32) -> (i32, i32) {
    %c0_i32 = arith.constant 0 : i32
    %c0_i32_0 = arith.constant 0 : i32
    %c0_i32_1 = arith.constant 0 : i32
    return %c0_i32, %c0_i32_0 : i32, i32
  }
  func.func @transform_5(%arg0: i32) -> (i32, i32) {
    %c0_i32 = arith.constant 0 : i32
    %c0_i32_0 = arith.constant 0 : i32
    %c0_i32_1 = arith.constant 0 : i32
    return %c0_i32, %c0_i32_0 : i32, i32
  }
}

module attributes {stable_mosaic.version = 11 : i64} {
  func.func @_deconv_bn_relu_kernel(%arg0: i32, %arg1: memref<64x576xbf16, #tpu.memory_space<vmem>>, %arg2: memref<576x128xbf16, #tpu.memory_space<vmem>>, %arg3: memref<128x128xf32, #tpu.memory_space<vmem>>, %arg4: memref<1x128xf32, #tpu.memory_space<vmem>>, %arg5: memref<1x128xf32, #tpu.memory_space<vmem>>, %arg6: memref<64x128xbf16, #tpu.memory_space<vmem>>) attributes {dimension_semantics = [#tpu.dimension_semantics<arbitrary>], iteration_bounds = array<i64: 1>, scalar_prefetch = 0 : i64, scratch_operands = 0 : i64, tpu.core_type = #tpu.core_type<tc>, window_params = [{pipeline_mode = #tpu.pipeline_mode<synchronous>, transform_indices = @transform_0, window_bounds = array<i64: 64, 576>}, {pipeline_mode = #tpu.pipeline_mode<synchronous>, transform_indices = @transform_1, window_bounds = array<i64: 576, 128>}, {pipeline_mode = #tpu.pipeline_mode<synchronous>, transform_indices = @transform_2, window_bounds = array<i64: 128, 128>}, {pipeline_mode = #tpu.pipeline_mode<synchronous>, transform_indices = @transform_3, window_bounds = array<i64: 1, 128>}, {pipeline_mode = #tpu.pipeline_mode<synchronous>, transform_indices = @transform_4, window_bounds = array<i64: 1, 128>}, {pipeline_mode = #tpu.pipeline_mode<synchronous>, transform_indices = @transform_5, window_bounds = array<i64: 64, 128>}]} {
    %c0 = arith.constant 0 : index
    %c0_0 = arith.constant 0 : index
    %0 = vector.load %arg1[%c0, %c0_0] : memref<64x576xbf16, #tpu.memory_space<vmem>>, vector<64x576xbf16>
    %c0_1 = arith.constant 0 : index
    %c0_2 = arith.constant 0 : index
    %1 = vector.load %arg2[%c0_1, %c0_2] : memref<576x128xbf16, #tpu.memory_space<vmem>>, vector<576x128xbf16>
    %cst = arith.constant dense<0.000000e+00> : vector<64x128xf32>
    %2 = tpu.matmul %0, %1, %cst {dimension_numbers = #tpu.dot_dimension_numbers<[1], [0], [0], [1], [0, 0, 1, 1], [], []>} : vector<64x576xbf16>, vector<576x128xbf16>, vector<64x128xf32> -> vector<64x128xf32>
    %c0_3 = arith.constant 0 : index
    %c0_4 = arith.constant 0 : index
    %3 = vector.load %arg3[%c0_3, %c0_4] : memref<128x128xf32, #tpu.memory_space<vmem>>, vector<128x128xf32>
    %cst_5 = arith.constant dense<0.000000e+00> : vector<64x128xf32>
    %4 = tpu.matmul %2, %3, %cst_5 {dimension_numbers = #tpu.dot_dimension_numbers<[1], [0], [0], [1], [0, 0, 1, 1], [], []>} : vector<64x128xf32>, vector<128x128xf32>, vector<64x128xf32> -> vector<64x128xf32>
    %cst_6 = arith.constant dense<0.000000e+00> : vector<128xf32>
    %5 = vector.multi_reduction <add>, %4, %cst_6 [0] : vector<64x128xf32> to vector<128xf32>
    %6 = vector.shape_cast %5 : vector<128xf32> to vector<1x128xf32>
    %cst_7 = arith.constant 0.001953125 : f32
    %7 = vector.broadcast %cst_7 : f32 to vector<1x128xf32>
    %8 = arith.mulf %6, %7 : vector<1x128xf32>
    %9 = arith.mulf %2, %2 : vector<64x128xf32>
    %c0_8 = arith.constant 0 : index
    %c0_9 = arith.constant 0 : index
    %10 = vector.load %arg3[%c0_8, %c0_9] : memref<128x128xf32, #tpu.memory_space<vmem>>, vector<128x128xf32>
    %cst_10 = arith.constant dense<0.000000e+00> : vector<64x128xf32>
    %11 = tpu.matmul %9, %10, %cst_10 {dimension_numbers = #tpu.dot_dimension_numbers<[1], [0], [0], [1], [0, 0, 1, 1], [], []>} : vector<64x128xf32>, vector<128x128xf32>, vector<64x128xf32> -> vector<64x128xf32>
    %cst_11 = arith.constant dense<0.000000e+00> : vector<128xf32>
    %12 = vector.multi_reduction <add>, %11, %cst_11 [0] : vector<64x128xf32> to vector<128xf32>
    %13 = vector.shape_cast %12 : vector<128xf32> to vector<1x128xf32>
    %cst_12 = arith.constant 0.001953125 : f32
    %14 = vector.broadcast %cst_12 : f32 to vector<1x128xf32>
    %15 = arith.mulf %13, %14 : vector<1x128xf32>
    %16 = arith.mulf %8, %8 : vector<1x128xf32>
    %17 = arith.subf %15, %16 : vector<1x128xf32>
    %cst_13 = arith.constant 9.99999974E-6 : f32
    %18 = vector.broadcast %cst_13 : f32 to vector<1x128xf32>
    %19 = arith.addf %17, %18 : vector<1x128xf32>
    %20 = math.rsqrt %19 : vector<1x128xf32>
    %c0_14 = arith.constant 0 : index
    %c0_15 = arith.constant 0 : index
    %21 = vector.load %arg4[%c0_14, %c0_15] : memref<1x128xf32, #tpu.memory_space<vmem>>, vector<1x128xf32>
    %22 = arith.mulf %21, %20 : vector<1x128xf32>
    %c0_16 = arith.constant 0 : index
    %c0_17 = arith.constant 0 : index
    %23 = vector.load %arg5[%c0_16, %c0_17] : memref<1x128xf32, #tpu.memory_space<vmem>>, vector<1x128xf32>
    %24 = arith.mulf %8, %22 : vector<1x128xf32>
    %25 = arith.subf %23, %24 : vector<1x128xf32>
    %26 = vector.broadcast %22 : vector<1x128xf32> to vector<64x128xf32>
    %27 = arith.mulf %2, %26 : vector<64x128xf32>
    %28 = vector.broadcast %25 : vector<1x128xf32> to vector<64x128xf32>
    %29 = arith.addf %27, %28 : vector<64x128xf32>
    %cst_18 = arith.constant 0.000000e+00 : f32
    %30 = vector.broadcast %cst_18 : f32 to vector<64x128xf32>
    %31 = arith.maximumf %29, %30 : vector<64x128xf32>
    %32 = arith.truncf %31 : vector<64x128xf32> to vector<64x128xbf16>
    %c0_19 = arith.constant 0 : index
    %c0_20 = arith.constant 0 : index
    %33 = vector.load %arg6[%c0_19, %c0_20] : memref<64x128xbf16, #tpu.memory_space<vmem>>, vector<64x128xbf16>
    tpu.vector_store %arg6[%c0_19, %c0_20], %32 {strides = array<i32>} : memref<64x128xbf16, #tpu.memory_space<vmem>>, vector<64x128xbf16>,
    return
  }
  func.func @transform_0(%arg0: i32) -> (i32, i32) {
    %c0_i32 = arith.constant 0 : i32
    %c0_i32_0 = arith.constant 0 : i32
    %c0_i32_1 = arith.constant 0 : i32
    return %c0_i32, %c0_i32_0 : i32, i32
  }
  func.func @transform_1(%arg0: i32) -> (i32, i32) {
    %c0_i32 = arith.constant 0 : i32
    %c0_i32_0 = arith.constant 0 : i32
    %c0_i32_1 = arith.constant 0 : i32
    return %c0_i32, %c0_i32_0 : i32, i32
  }
  func.func @transform_2(%arg0: i32) -> (i32, i32) {
    %c0_i32 = arith.constant 0 : i32
    %c0_i32_0 = arith.constant 0 : i32
    %c0_i32_1 = arith.constant 0 : i32
    return %c0_i32, %c0_i32_0 : i32, i32
  }
  func.func @transform_3(%arg0: i32) -> (i32, i32) {
    %c0_i32 = arith.constant 0 : i32
    %c0_i32_0 = arith.constant 0 : i32
    %c0_i32_1 = arith.constant 0 : i32
    return %c0_i32, %c0_i32_0 : i32, i32
  }
  func.func @transform_4(%arg0: i32) -> (i32, i32) {
    %c0_i32 = arith.constant 0 : i32
    %c0_i32_0 = arith.constant 0 : i32
    %c0_i32_1 = arith.constant 0 : i32
    return %c0_i32, %c0_i32_0 : i32, i32
  }
  func.func @transform_5(%arg0: i32) -> (i32, i32) {
    %c0_i32 = arith.constant 0 : i32
    %c0_i32_0 = arith.constant 0 : i32
    %c0_i32_1 = arith.constant 0 : i32
    return %c0_i32, %c0_i32_0 : i32, i32
  }
}

module attributes {stable_mosaic.version = 11 : i64} {
  func.func @_deconv_bn_relu_kernel(%arg0: i32, %arg1: memref<128x576xbf16, #tpu.memory_space<vmem>>, %arg2: memref<576x128xbf16, #tpu.memory_space<vmem>>, %arg3: memref<128x128xf32, #tpu.memory_space<vmem>>, %arg4: memref<1x128xf32, #tpu.memory_space<vmem>>, %arg5: memref<1x128xf32, #tpu.memory_space<vmem>>, %arg6: memref<128x128xbf16, #tpu.memory_space<vmem>>) attributes {dimension_semantics = [#tpu.dimension_semantics<arbitrary>], iteration_bounds = array<i64: 1>, scalar_prefetch = 0 : i64, scratch_operands = 0 : i64, tpu.core_type = #tpu.core_type<tc>, window_params = [{pipeline_mode = #tpu.pipeline_mode<synchronous>, transform_indices = @transform_0, window_bounds = array<i64: 128, 576>}, {pipeline_mode = #tpu.pipeline_mode<synchronous>, transform_indices = @transform_1, window_bounds = array<i64: 576, 128>}, {pipeline_mode = #tpu.pipeline_mode<synchronous>, transform_indices = @transform_2, window_bounds = array<i64: 128, 128>}, {pipeline_mode = #tpu.pipeline_mode<synchronous>, transform_indices = @transform_3, window_bounds = array<i64: 1, 128>}, {pipeline_mode = #tpu.pipeline_mode<synchronous>, transform_indices = @transform_4, window_bounds = array<i64: 1, 128>}, {pipeline_mode = #tpu.pipeline_mode<synchronous>, transform_indices = @transform_5, window_bounds = array<i64: 128, 128>}]} {
    %c0 = arith.constant 0 : index
    %c0_0 = arith.constant 0 : index
    %0 = vector.load %arg1[%c0, %c0_0] : memref<128x576xbf16, #tpu.memory_space<vmem>>, vector<128x576xbf16>
    %c0_1 = arith.constant 0 : index
    %c0_2 = arith.constant 0 : index
    %1 = vector.load %arg2[%c0_1, %c0_2] : memref<576x128xbf16, #tpu.memory_space<vmem>>, vector<576x128xbf16>
    %cst = arith.constant dense<0.000000e+00> : vector<128x128xf32>
    %2 = tpu.matmul %0, %1, %cst {dimension_numbers = #tpu.dot_dimension_numbers<[1], [0], [0], [1], [0, 0, 1, 1], [], []>} : vector<128x576xbf16>, vector<576x128xbf16>, vector<128x128xf32> -> vector<128x128xf32>
    %c0_3 = arith.constant 0 : index
    %c0_4 = arith.constant 0 : index
    %3 = vector.load %arg3[%c0_3, %c0_4] : memref<128x128xf32, #tpu.memory_space<vmem>>, vector<128x128xf32>
    %cst_5 = arith.constant dense<0.000000e+00> : vector<128x128xf32>
    %4 = tpu.matmul %2, %3, %cst_5 {dimension_numbers = #tpu.dot_dimension_numbers<[1], [0], [0], [1], [0, 0, 1, 1], [], []>} : vector<128x128xf32>, vector<128x128xf32>, vector<128x128xf32> -> vector<128x128xf32>
    %cst_6 = arith.constant dense<0.000000e+00> : vector<128xf32>
    %5 = vector.multi_reduction <add>, %4, %cst_6 [0] : vector<128x128xf32> to vector<128xf32>
    %6 = vector.shape_cast %5 : vector<128xf32> to vector<1x128xf32>
    %cst_7 = arith.constant 4.8828125E-4 : f32
    %7 = vector.broadcast %cst_7 : f32 to vector<1x128xf32>
    %8 = arith.mulf %6, %7 : vector<1x128xf32>
    %9 = arith.mulf %2, %2 : vector<128x128xf32>
    %c0_8 = arith.constant 0 : index
    %c0_9 = arith.constant 0 : index
    %10 = vector.load %arg3[%c0_8, %c0_9] : memref<128x128xf32, #tpu.memory_space<vmem>>, vector<128x128xf32>
    %cst_10 = arith.constant dense<0.000000e+00> : vector<128x128xf32>
    %11 = tpu.matmul %9, %10, %cst_10 {dimension_numbers = #tpu.dot_dimension_numbers<[1], [0], [0], [1], [0, 0, 1, 1], [], []>} : vector<128x128xf32>, vector<128x128xf32>, vector<128x128xf32> -> vector<128x128xf32>
    %cst_11 = arith.constant dense<0.000000e+00> : vector<128xf32>
    %12 = vector.multi_reduction <add>, %11, %cst_11 [0] : vector<128x128xf32> to vector<128xf32>
    %13 = vector.shape_cast %12 : vector<128xf32> to vector<1x128xf32>
    %cst_12 = arith.constant 4.8828125E-4 : f32
    %14 = vector.broadcast %cst_12 : f32 to vector<1x128xf32>
    %15 = arith.mulf %13, %14 : vector<1x128xf32>
    %16 = arith.mulf %8, %8 : vector<1x128xf32>
    %17 = arith.subf %15, %16 : vector<1x128xf32>
    %cst_13 = arith.constant 9.99999974E-6 : f32
    %18 = vector.broadcast %cst_13 : f32 to vector<1x128xf32>
    %19 = arith.addf %17, %18 : vector<1x128xf32>
    %20 = math.rsqrt %19 : vector<1x128xf32>
    %c0_14 = arith.constant 0 : index
    %c0_15 = arith.constant 0 : index
    %21 = vector.load %arg4[%c0_14, %c0_15] : memref<1x128xf32, #tpu.memory_space<vmem>>, vector<1x128xf32>
    %22 = arith.mulf %21, %20 : vector<1x128xf32>
    %c0_16 = arith.constant 0 : index
    %c0_17 = arith.constant 0 : index
    %23 = vector.load %arg5[%c0_16, %c0_17] : memref<1x128xf32, #tpu.memory_space<vmem>>, vector<1x128xf32>
    %24 = arith.mulf %8, %22 : vector<1x128xf32>
    %25 = arith.subf %23, %24 : vector<1x128xf32>
    %26 = vector.broadcast %22 : vector<1x128xf32> to vector<128x128xf32>
    %27 = arith.mulf %2, %26 : vector<128x128xf32>
    %28 = vector.broadcast %25 : vector<1x128xf32> to vector<128x128xf32>
    %29 = arith.addf %27, %28 : vector<128x128xf32>
    %cst_18 = arith.constant 0.000000e+00 : f32
    %30 = vector.broadcast %cst_18 : f32 to vector<128x128xf32>
    %31 = arith.maximumf %29, %30 : vector<128x128xf32>
    %32 = arith.truncf %31 : vector<128x128xf32> to vector<128x128xbf16>
    %c0_19 = arith.constant 0 : index
    %c0_20 = arith.constant 0 : index
    %33 = vector.load %arg6[%c0_19, %c0_20] : memref<128x128xbf16, #tpu.memory_space<vmem>>, vector<128x128xbf16>
    tpu.vector_store %arg6[%c0_19, %c0_20], %32 {strides = array<i32>} : memref<128x128xbf16, #tpu.memory_space<vmem>>, vector<128x128xbf16>,
    return
  }
  func.func @transform_0(%arg0: i32) -> (i32, i32) {
    %c0_i32 = arith.constant 0 : i32
    %c0_i32_0 = arith.constant 0 : i32
    %c0_i32_1 = arith.constant 0 : i32
    return %c0_i32, %c0_i32_0 : i32, i32
  }
  func.func @transform_1(%arg0: i32) -> (i32, i32) {
    %c0_i32 = arith.constant 0 : i32
    %c0_i32_0 = arith.constant 0 : i32
    %c0_i32_1 = arith.constant 0 : i32
    return %c0_i32, %c0_i32_0 : i32, i32
  }
  func.func @transform_2(%arg0: i32) -> (i32, i32) {
    %c0_i32 = arith.constant 0 : i32
    %c0_i32_0 = arith.constant 0 : i32
    %c0_i32_1 = arith.constant 0 : i32
    return %c0_i32, %c0_i32_0 : i32, i32
  }
  func.func @transform_3(%arg0: i32) -> (i32, i32) {
    %c0_i32 = arith.constant 0 : i32
    %c0_i32_0 = arith.constant 0 : i32
    %c0_i32_1 = arith.constant 0 : i32
    return %c0_i32, %c0_i32_0 : i32, i32
  }
  func.func @transform_4(%arg0: i32) -> (i32, i32) {
    %c0_i32 = arith.constant 0 : i32
    %c0_i32_0 = arith.constant 0 : i32
    %c0_i32_1 = arith.constant 0 : i32
    return %c0_i32, %c0_i32_0 : i32, i32
  }
  func.func @transform_5(%arg0: i32) -> (i32, i32) {
    %c0_i32 = arith.constant 0 : i32
    %c0_i32_0 = arith.constant 0 : i32
    %c0_i32_1 = arith.constant 0 : i32
    return %c0_i32, %c0_i32_0 : i32, i32
  }
}

module attributes {stable_mosaic.version = 11 : i64} {
  func.func @_deconv_bn_relu_kernel(%arg0: i32, %arg1: memref<256x576xbf16, #tpu.memory_space<vmem>>, %arg2: memref<576x128xbf16, #tpu.memory_space<vmem>>, %arg3: memref<128x128xf32, #tpu.memory_space<vmem>>, %arg4: memref<1x128xf32, #tpu.memory_space<vmem>>, %arg5: memref<1x128xf32, #tpu.memory_space<vmem>>, %arg6: memref<256x128xbf16, #tpu.memory_space<vmem>>) attributes {dimension_semantics = [#tpu.dimension_semantics<arbitrary>], iteration_bounds = array<i64: 1>, scalar_prefetch = 0 : i64, scratch_operands = 0 : i64, tpu.core_type = #tpu.core_type<tc>, window_params = [{pipeline_mode = #tpu.pipeline_mode<synchronous>, transform_indices = @transform_0, window_bounds = array<i64: 256, 576>}, {pipeline_mode = #tpu.pipeline_mode<synchronous>, transform_indices = @transform_1, window_bounds = array<i64: 576, 128>}, {pipeline_mode = #tpu.pipeline_mode<synchronous>, transform_indices = @transform_2, window_bounds = array<i64: 128, 128>}, {pipeline_mode = #tpu.pipeline_mode<synchronous>, transform_indices = @transform_3, window_bounds = array<i64: 1, 128>}, {pipeline_mode = #tpu.pipeline_mode<synchronous>, transform_indices = @transform_4, window_bounds = array<i64: 1, 128>}, {pipeline_mode = #tpu.pipeline_mode<synchronous>, transform_indices = @transform_5, window_bounds = array<i64: 256, 128>}]} {
    %c0 = arith.constant 0 : index
    %c0_0 = arith.constant 0 : index
    %0 = vector.load %arg1[%c0, %c0_0] : memref<256x576xbf16, #tpu.memory_space<vmem>>, vector<256x576xbf16>
    %c0_1 = arith.constant 0 : index
    %c0_2 = arith.constant 0 : index
    %1 = vector.load %arg2[%c0_1, %c0_2] : memref<576x128xbf16, #tpu.memory_space<vmem>>, vector<576x128xbf16>
    %cst = arith.constant dense<0.000000e+00> : vector<256x128xf32>
    %2 = tpu.matmul %0, %1, %cst {dimension_numbers = #tpu.dot_dimension_numbers<[1], [0], [0], [1], [0, 0, 1, 1], [], []>} : vector<256x576xbf16>, vector<576x128xbf16>, vector<256x128xf32> -> vector<256x128xf32>
    %c0_3 = arith.constant 0 : index
    %c0_4 = arith.constant 0 : index
    %3 = vector.load %arg3[%c0_3, %c0_4] : memref<128x128xf32, #tpu.memory_space<vmem>>, vector<128x128xf32>
    %cst_5 = arith.constant dense<0.000000e+00> : vector<256x128xf32>
    %4 = tpu.matmul %2, %3, %cst_5 {dimension_numbers = #tpu.dot_dimension_numbers<[1], [0], [0], [1], [0, 0, 1, 1], [], []>} : vector<256x128xf32>, vector<128x128xf32>, vector<256x128xf32> -> vector<256x128xf32>
    %cst_6 = arith.constant dense<0.000000e+00> : vector<128xf32>
    %5 = vector.multi_reduction <add>, %4, %cst_6 [0] : vector<256x128xf32> to vector<128xf32>
    %6 = vector.shape_cast %5 : vector<128xf32> to vector<1x128xf32>
    %cst_7 = arith.constant 1.22070313E-4 : f32
    %7 = vector.broadcast %cst_7 : f32 to vector<1x128xf32>
    %8 = arith.mulf %6, %7 : vector<1x128xf32>
    %9 = arith.mulf %2, %2 : vector<256x128xf32>
    %c0_8 = arith.constant 0 : index
    %c0_9 = arith.constant 0 : index
    %10 = vector.load %arg3[%c0_8, %c0_9] : memref<128x128xf32, #tpu.memory_space<vmem>>, vector<128x128xf32>
    %cst_10 = arith.constant dense<0.000000e+00> : vector<256x128xf32>
    %11 = tpu.matmul %9, %10, %cst_10 {dimension_numbers = #tpu.dot_dimension_numbers<[1], [0], [0], [1], [0, 0, 1, 1], [], []>} : vector<256x128xf32>, vector<128x128xf32>, vector<256x128xf32> -> vector<256x128xf32>
    %cst_11 = arith.constant dense<0.000000e+00> : vector<128xf32>
    %12 = vector.multi_reduction <add>, %11, %cst_11 [0] : vector<256x128xf32> to vector<128xf32>
    %13 = vector.shape_cast %12 : vector<128xf32> to vector<1x128xf32>
    %cst_12 = arith.constant 1.22070313E-4 : f32
    %14 = vector.broadcast %cst_12 : f32 to vector<1x128xf32>
    %15 = arith.mulf %13, %14 : vector<1x128xf32>
    %16 = arith.mulf %8, %8 : vector<1x128xf32>
    %17 = arith.subf %15, %16 : vector<1x128xf32>
    %cst_13 = arith.constant 9.99999974E-6 : f32
    %18 = vector.broadcast %cst_13 : f32 to vector<1x128xf32>
    %19 = arith.addf %17, %18 : vector<1x128xf32>
    %20 = math.rsqrt %19 : vector<1x128xf32>
    %c0_14 = arith.constant 0 : index
    %c0_15 = arith.constant 0 : index
    %21 = vector.load %arg4[%c0_14, %c0_15] : memref<1x128xf32, #tpu.memory_space<vmem>>, vector<1x128xf32>
    %22 = arith.mulf %21, %20 : vector<1x128xf32>
    %c0_16 = arith.constant 0 : index
    %c0_17 = arith.constant 0 : index
    %23 = vector.load %arg5[%c0_16, %c0_17] : memref<1x128xf32, #tpu.memory_space<vmem>>, vector<1x128xf32>
    %24 = arith.mulf %8, %22 : vector<1x128xf32>
    %25 = arith.subf %23, %24 : vector<1x128xf32>
    %26 = vector.broadcast %22 : vector<1x128xf32> to vector<256x128xf32>
    %27 = arith.mulf %2, %26 : vector<256x128xf32>
    %28 = vector.broadcast %25 : vector<1x128xf32> to vector<256x128xf32>
    %29 = arith.addf %27, %28 : vector<256x128xf32>
    %cst_18 = arith.constant 0.000000e+00 : f32
    %30 = vector.broadcast %cst_18 : f32 to vector<256x128xf32>
    %31 = arith.maximumf %29, %30 : vector<256x128xf32>
    %32 = arith.truncf %31 : vector<256x128xf32> to vector<256x128xbf16>
    %c0_19 = arith.constant 0 : index
    %c0_20 = arith.constant 0 : index
    %33 = vector.load %arg6[%c0_19, %c0_20] : memref<256x128xbf16, #tpu.memory_space<vmem>>, vector<256x128xbf16>
    tpu.vector_store %arg6[%c0_19, %c0_20], %32 {strides = array<i32>} : memref<256x128xbf16, #tpu.memory_space<vmem>>, vector<256x128xbf16>,
    return
  }
  func.func @transform_0(%arg0: i32) -> (i32, i32) {
    %c0_i32 = arith.constant 0 : i32
    %c0_i32_0 = arith.constant 0 : i32
    %c0_i32_1 = arith.constant 0 : i32
    return %c0_i32, %c0_i32_0 : i32, i32
  }
  func.func @transform_1(%arg0: i32) -> (i32, i32) {
    %c0_i32 = arith.constant 0 : i32
    %c0_i32_0 = arith.constant 0 : i32
    %c0_i32_1 = arith.constant 0 : i32
    return %c0_i32, %c0_i32_0 : i32, i32
  }
  func.func @transform_2(%arg0: i32) -> (i32, i32) {
    %c0_i32 = arith.constant 0 : i32
    %c0_i32_0 = arith.constant 0 : i32
    %c0_i32_1 = arith.constant 0 : i32
    return %c0_i32, %c0_i32_0 : i32, i32
  }
  func.func @transform_3(%arg0: i32) -> (i32, i32) {
    %c0_i32 = arith.constant 0 : i32
    %c0_i32_0 = arith.constant 0 : i32
    %c0_i32_1 = arith.constant 0 : i32
    return %c0_i32, %c0_i32_0 : i32, i32
  }
  func.func @transform_4(%arg0: i32) -> (i32, i32) {
    %c0_i32 = arith.constant 0 : i32
    %c0_i32_0 = arith.constant 0 : i32
    %c0_i32_1 = arith.constant 0 : i32
    return %c0_i32, %c0_i32_0 : i32, i32
  }
  func.func @transform_5(%arg0: i32) -> (i32, i32) {
    %c0_i32 = arith.constant 0 : i32
    %c0_i32_0 = arith.constant 0 : i32
    %c0_i32_1 = arith.constant 0 : i32
    return %c0_i32, %c0_i32_0 : i32, i32
  }
}

module attributes {stable_mosaic.version = 11 : i64} {
  func.func @_deconv_bn_relu_kernel(%arg0: i32, %arg1: memref<512x576xbf16, #tpu.memory_space<vmem>>, %arg2: memref<576x128xbf16, #tpu.memory_space<vmem>>, %arg3: memref<128x128xf32, #tpu.memory_space<vmem>>, %arg4: memref<1x128xf32, #tpu.memory_space<vmem>>, %arg5: memref<1x128xf32, #tpu.memory_space<vmem>>, %arg6: memref<512x128xbf16, #tpu.memory_space<vmem>>) attributes {dimension_semantics = [#tpu.dimension_semantics<arbitrary>], iteration_bounds = array<i64: 1>, scalar_prefetch = 0 : i64, scratch_operands = 0 : i64, tpu.core_type = #tpu.core_type<tc>, window_params = [{pipeline_mode = #tpu.pipeline_mode<synchronous>, transform_indices = @transform_0, window_bounds = array<i64: 512, 576>}, {pipeline_mode = #tpu.pipeline_mode<synchronous>, transform_indices = @transform_1, window_bounds = array<i64: 576, 128>}, {pipeline_mode = #tpu.pipeline_mode<synchronous>, transform_indices = @transform_2, window_bounds = array<i64: 128, 128>}, {pipeline_mode = #tpu.pipeline_mode<synchronous>, transform_indices = @transform_3, window_bounds = array<i64: 1, 128>}, {pipeline_mode = #tpu.pipeline_mode<synchronous>, transform_indices = @transform_4, window_bounds = array<i64: 1, 128>}, {pipeline_mode = #tpu.pipeline_mode<synchronous>, transform_indices = @transform_5, window_bounds = array<i64: 512, 128>}]} {
    %c0 = arith.constant 0 : index
    %c0_0 = arith.constant 0 : index
    %0 = vector.load %arg1[%c0, %c0_0] : memref<512x576xbf16, #tpu.memory_space<vmem>>, vector<512x576xbf16>
    %c0_1 = arith.constant 0 : index
    %c0_2 = arith.constant 0 : index
    %1 = vector.load %arg2[%c0_1, %c0_2] : memref<576x128xbf16, #tpu.memory_space<vmem>>, vector<576x128xbf16>
    %cst = arith.constant dense<0.000000e+00> : vector<512x128xf32>
    %2 = tpu.matmul %0, %1, %cst {dimension_numbers = #tpu.dot_dimension_numbers<[1], [0], [0], [1], [0, 0, 1, 1], [], []>} : vector<512x576xbf16>, vector<576x128xbf16>, vector<512x128xf32> -> vector<512x128xf32>
    %c0_3 = arith.constant 0 : index
    %c0_4 = arith.constant 0 : index
    %3 = vector.load %arg3[%c0_3, %c0_4] : memref<128x128xf32, #tpu.memory_space<vmem>>, vector<128x128xf32>
    %cst_5 = arith.constant dense<0.000000e+00> : vector<512x128xf32>
    %4 = tpu.matmul %2, %3, %cst_5 {dimension_numbers = #tpu.dot_dimension_numbers<[1], [0], [0], [1], [0, 0, 1, 1], [], []>} : vector<512x128xf32>, vector<128x128xf32>, vector<512x128xf32> -> vector<512x128xf32>
    %cst_6 = arith.constant dense<0.000000e+00> : vector<128xf32>
    %5 = vector.multi_reduction <add>, %4, %cst_6 [0] : vector<512x128xf32> to vector<128xf32>
    %6 = vector.shape_cast %5 : vector<128xf32> to vector<1x128xf32>
    %cst_7 = arith.constant 3.05175781E-5 : f32
    %7 = vector.broadcast %cst_7 : f32 to vector<1x128xf32>
    %8 = arith.mulf %6, %7 : vector<1x128xf32>
    %9 = arith.mulf %2, %2 : vector<512x128xf32>
    %c0_8 = arith.constant 0 : index
    %c0_9 = arith.constant 0 : index
    %10 = vector.load %arg3[%c0_8, %c0_9] : memref<128x128xf32, #tpu.memory_space<vmem>>, vector<128x128xf32>
    %cst_10 = arith.constant dense<0.000000e+00> : vector<512x128xf32>
    %11 = tpu.matmul %9, %10, %cst_10 {dimension_numbers = #tpu.dot_dimension_numbers<[1], [0], [0], [1], [0, 0, 1, 1], [], []>} : vector<512x128xf32>, vector<128x128xf32>, vector<512x128xf32> -> vector<512x128xf32>
    %cst_11 = arith.constant dense<0.000000e+00> : vector<128xf32>
    %12 = vector.multi_reduction <add>, %11, %cst_11 [0] : vector<512x128xf32> to vector<128xf32>
    %13 = vector.shape_cast %12 : vector<128xf32> to vector<1x128xf32>
    %cst_12 = arith.constant 3.05175781E-5 : f32
    %14 = vector.broadcast %cst_12 : f32 to vector<1x128xf32>
    %15 = arith.mulf %13, %14 : vector<1x128xf32>
    %16 = arith.mulf %8, %8 : vector<1x128xf32>
    %17 = arith.subf %15, %16 : vector<1x128xf32>
    %cst_13 = arith.constant 9.99999974E-6 : f32
    %18 = vector.broadcast %cst_13 : f32 to vector<1x128xf32>
    %19 = arith.addf %17, %18 : vector<1x128xf32>
    %20 = math.rsqrt %19 : vector<1x128xf32>
    %c0_14 = arith.constant 0 : index
    %c0_15 = arith.constant 0 : index
    %21 = vector.load %arg4[%c0_14, %c0_15] : memref<1x128xf32, #tpu.memory_space<vmem>>, vector<1x128xf32>
    %22 = arith.mulf %21, %20 : vector<1x128xf32>
    %c0_16 = arith.constant 0 : index
    %c0_17 = arith.constant 0 : index
    %23 = vector.load %arg5[%c0_16, %c0_17] : memref<1x128xf32, #tpu.memory_space<vmem>>, vector<1x128xf32>
    %24 = arith.mulf %8, %22 : vector<1x128xf32>
    %25 = arith.subf %23, %24 : vector<1x128xf32>
    %26 = vector.broadcast %22 : vector<1x128xf32> to vector<512x128xf32>
    %27 = arith.mulf %2, %26 : vector<512x128xf32>
    %28 = vector.broadcast %25 : vector<1x128xf32> to vector<512x128xf32>
    %29 = arith.addf %27, %28 : vector<512x128xf32>
    %cst_18 = arith.constant 0.000000e+00 : f32
    %30 = vector.broadcast %cst_18 : f32 to vector<512x128xf32>
    %31 = arith.maximumf %29, %30 : vector<512x128xf32>
    %32 = arith.truncf %31 : vector<512x128xf32> to vector<512x128xbf16>
    %c0_19 = arith.constant 0 : index
    %c0_20 = arith.constant 0 : index
    %33 = vector.load %arg6[%c0_19, %c0_20] : memref<512x128xbf16, #tpu.memory_space<vmem>>, vector<512x128xbf16>
    tpu.vector_store %arg6[%c0_19, %c0_20], %32 {strides = array<i32>} : memref<512x128xbf16, #tpu.memory_space<vmem>>, vector<512x128xbf16>,
    return
  }
  func.func @transform_0(%arg0: i32) -> (i32, i32) {
    %c0_i32 = arith.constant 0 : i32
    %c0_i32_0 = arith.constant 0 : i32
    %c0_i32_1 = arith.constant 0 : i32
    return %c0_i32, %c0_i32_0 : i32, i32
  }
  func.func @transform_1(%arg0: i32) -> (i32, i32) {
    %c0_i32 = arith.constant 0 : i32
    %c0_i32_0 = arith.constant 0 : i32
    %c0_i32_1 = arith.constant 0 : i32
    return %c0_i32, %c0_i32_0 : i32, i32
  }
  func.func @transform_2(%arg0: i32) -> (i32, i32) {
    %c0_i32 = arith.constant 0 : i32
    %c0_i32_0 = arith.constant 0 : i32
    %c0_i32_1 = arith.constant 0 : i32
    return %c0_i32, %c0_i32_0 : i32, i32
  }
  func.func @transform_3(%arg0: i32) -> (i32, i32) {
    %c0_i32 = arith.constant 0 : i32
    %c0_i32_0 = arith.constant 0 : i32
    %c0_i32_1 = arith.constant 0 : i32
    return %c0_i32, %c0_i32_0 : i32, i32
  }
  func.func @transform_4(%arg0: i32) -> (i32, i32) {
    %c0_i32 = arith.constant 0 : i32
    %c0_i32_0 = arith.constant 0 : i32
    %c0_i32_1 = arith.constant 0 : i32
    return %c0_i32, %c0_i32_0 : i32, i32
  }
  func.func @transform_5(%arg0: i32) -> (i32, i32) {
    %c0_i32 = arith.constant 0 : i32
    %c0_i32_0 = arith.constant 0 : i32
    %c0_i32_1 = arith.constant 0 : i32
    return %c0_i32, %c0_i32_0 : i32, i32
  }
}

module attributes {stable_mosaic.version = 11 : i64} {
  func.func @_deconv_tanh_kernel(%arg0: i32, %arg1: memref<256x288xbf16, #tpu.memory_space<vmem>>, %arg2: memref<288x192xbf16, #tpu.memory_space<vmem>>, %arg3: memref<256x192xf32, #tpu.memory_space<vmem>>) attributes {dimension_semantics = [#tpu.dimension_semantics<parallel>], iteration_bounds = array<i64: 8>, scalar_prefetch = 0 : i64, scratch_operands = 0 : i64, tpu.core_type = #tpu.core_type<tc>, window_params = [{transform_indices = @transform_0, window_bounds = array<i64: 256, 288>}, {pipeline_mode = #tpu.pipeline_mode<synchronous>, transform_indices = @transform_1, window_bounds = array<i64: 288, 192>}, {transform_indices = @transform_2, window_bounds = array<i64: 256, 192>}]} {
    %c0 = arith.constant 0 : index
    %c0_0 = arith.constant 0 : index
    %0 = vector.load %arg1[%c0, %c0_0] : memref<256x288xbf16, #tpu.memory_space<vmem>>, vector<256x288xbf16>
    %c0_1 = arith.constant 0 : index
    %c0_2 = arith.constant 0 : index
    %1 = vector.load %arg2[%c0_1, %c0_2] : memref<288x192xbf16, #tpu.memory_space<vmem>>, vector<288x192xbf16>
    %cst = arith.constant dense<0.000000e+00> : vector<256x192xf32>
    %2 = tpu.matmul %0, %1, %cst {dimension_numbers = #tpu.dot_dimension_numbers<[1], [0], [0], [1], [0, 0, 1, 1], [], []>} : vector<256x288xbf16>, vector<288x192xbf16>, vector<256x192xf32> -> vector<256x192xf32>
    %3 = math.tanh %2 : vector<256x192xf32>
    %c0_3 = arith.constant 0 : index
    %c0_4 = arith.constant 0 : index
    %4 = vector.load %arg3[%c0_3, %c0_4] : memref<256x192xf32, #tpu.memory_space<vmem>>, vector<256x192xf32>
    tpu.vector_store %arg3[%c0_3, %c0_4], %3 {strides = array<i32>} : memref<256x192xf32, #tpu.memory_space<vmem>>, vector<256x192xf32>,
    return
  }
  func.func @transform_0(%arg0: i32) -> (i32, i32) {
    %c0_i32 = arith.constant 0 : i32
    %c0_i32_0 = arith.constant 0 : i32
    return %arg0, %c0_i32 : i32, i32
  }
  func.func @transform_1(%arg0: i32) -> (i32, i32) {
    %c0_i32 = arith.constant 0 : i32
    %c0_i32_0 = arith.constant 0 : i32
    %c0_i32_1 = arith.constant 0 : i32
    return %c0_i32, %c0_i32_0 : i32, i32
  }
  func.func @transform_2(%arg0: i32) -> (i32, i32) {
    %c0_i32 = arith.constant 0 : i32
    %c0_i32_0 = arith.constant 0 : i32
    return %arg0, %c0_i32 : i32, i32
  }
}

</mosaic_0001>

<llo_original>
// kernel: pallas_decoder_forward.8
$region0: #{pallas_decoder_forward.8}
  #allocation0 [shape = 'u32[]', space=smem, size = 0x4, offset = 0x4, fixed_abs, tag = 'smem constant byte address 0x4 - core index']
  #allocation1 [shape = 'u32[144,128]{1,0:T(1,128)}', space=vmem, size = 0x12000, scoped, tag = 'internal scratch']
  %s0 = inlined_call_operand.vmem [shape: bf16[2,8], index: 0, kind: input, shape index: {}]
  %s1 = inlined_call_operand.hbm [shape: bf16[8,512], index: 1, kind: input, shape index: {}]
  %s2 = inlined_call_operand.hbm [shape: f32[512,512], index: 2, kind: input, shape index: {}]
  %s3 = inlined_call_operand.vmem [shape: f32[1,512], index: 3, kind: input, shape index: {}]
  %s4 = inlined_call_operand.vmem [shape: f32[1,512], index: 4, kind: input, shape index: {}]
  %s5 = inlined_call_operand.vmem [shape: bf16[2,512], index: 5, kind: output, shape index: {}]
  %s6 = sld [smem:[#allocation0]]
  $region38: #{pallas_decoder_forward.8} parent=0
    _
  %s8 = ssub.s32 1, %s6
  %s9 = scalar_select 0, %s8, %s6
  $region1: #{pallas_decoder_forward.8} parent=0
    #allocation2 [shape = 'u8[8192]{0}', space=vmem, size = 0x2000, scoped, tag = 'input window, operand 1, single buffered']
    #allocation3 [shape = 's32[1]{0}', space=sflag, size = 0x4, scoped, tag = 'scoped memory for pallas_decoder_forward.8']
    #allocation4 [shape = 'u8[1048576]{0}', space=vmem, size = 0x100000, scoped, tag = 'input window, operand 2, single buffered']
    #allocation5 [shape = 's32[1]{0}', space=sflag, size = 0x4, scoped, tag = 'scoped memory for pallas_decoder_forward.8']
    %10 = vsyncpa [#allocation3], 0
    %11 = vsyncpa [#allocation5], 0
    // Predicated region
    $region2: #{pallas_decoder_forward.8} parent=1 // pred_check
      _
    $region3: #{pallas_decoder_forward.8} parent=1 // pred_check_branch
      %13 = sbr.rel (0) target = $region5
    $region4: #{pallas_decoder_forward.8} parent=1 // pred_region
      _
    $region5: #{pallas_decoder_forward.8} parent=1 // pred_fallthru
      _
    // Predicated region
    $region6: #{pallas_decoder_forward.8} parent=1 // pred_check
      _
    $region7: #{pallas_decoder_forward.8} parent=1 // pred_check_branch
      %15 = sbr.rel (0) target = $region9
    $region8: #{pallas_decoder_forward.8} parent=1 // pred_region
      %s17 = ssub.s32 256, 256
      %18 = vsyncadd [#allocation3], %s17
      %s20 = sshll.u32 [#allocation2], 4
      %s21 = int_to_ptr.vmem [resolvable:$true] %s20
      %23 = dma.hbm_to_vmem [thread:$0]  %s1, 256, %s21, [#allocation3]
    $region9: #{pallas_decoder_forward.8} parent=1 // pred_fallthru
      _
    // Predicated region
    $region10: #{pallas_decoder_forward.8} parent=1 // pred_check
      _
    $region11: #{pallas_decoder_forward.8} parent=1 // pred_check_branch
      %25 = sbr.rel (0) target = $region13
    $region12: #{pallas_decoder_forward.8} parent=1 // pred_region
      %s27 = ssub.s32 32768, 32768
      %28 = vsyncadd [#allocation5], %s27
      %s29 = sshll.u32 [#allocation4], 4
      %s30 = int_to_ptr.vmem [resolvable:$true] %s29
      %35 = dma.hbm_to_vmem [thread:$0]  %s2, 32768, %s30, [#allocation5], 512, 512, 32
    $region13: #{pallas_decoder_forward.8} parent=1 // pred_fallthru
      _
    // Predicated region
    $region14: #{pallas_decoder_forward.8} parent=1 // pred_check
      _
    $region15: #{pallas_decoder_forward.8} parent=1 // pred_check_branch
      %37 = sbr.rel (0) target = $region17
    $region16: #{pallas_decoder_forward.8} parent=1 // pred_region
      _
    $region17: #{pallas_decoder_forward.8} parent=1 // pred_fallthru
      _
    // Predicated region
    $region18: #{pallas_decoder_forward.8} parent=1 // pred_check
      _
    $region19: #{pallas_decoder_forward.8} parent=1 // pred_check_branch
      %39 = sbr.rel (0) target = $region21
    $region20: #{pallas_decoder_forward.8} parent=1 // pred_region
      _
    $region21: #{pallas_decoder_forward.8} parent=1 // pred_fallthru
      _
    // Predicated region
    $region22: #{pallas_decoder_forward.8} parent=1 // pred_check
      _
    $region23: #{pallas_decoder_forward.8} parent=1 // pred_check_branch
      %41 = sbr.rel (0) target = $region25
    $region24: #{pallas_decoder_forward.8} parent=1 // pred_region
      %42 = dma.done [#allocation3], 256
    $region25: #{pallas_decoder_forward.8} parent=1 // pred_fallthru
      _
    // Predicated region
    $region26: #{pallas_decoder_forward.8} parent=1 // pred_check
      _
    $region27: #{pallas_decoder_forward.8} parent=1 // pred_check_branch
      %44 = sbr.rel (0) target = $region29
    $region28: #{pallas_decoder_forward.8} parent=1 // pred_region
      %45 = dma.done [#allocation5], 32768
    $region29: #{pallas_decoder_forward.8} parent=1 // pred_fallthru
      _
    %v47 = vld [vmem:[%s0] sm:$0x1]
    %v48 = vld [vmem:[#allocation2] sm:$0xff]
    %v49 = vld [vmem:[#allocation2 + $0x8] sm:$0xff]
    %v52 = vunpack.c.l.b16 %v48
    %v53 = vunpack.c.h.b16 %v48
    %v54 = vunpack.c.l.b16 %v49
    %v55 = vunpack.c.h.b16 %v49
    %v56 = vpack.c.b16 %v52, %v52
    %v57 = vpack.c.b16 %v53, %v53
    %v58 = vpack.c.b16 %v54, %v54
    %v59 = vpack.c.b16 %v55, %v55
    %vm60 = vcmask 64512
    %v62 = vsel %vm60, %v47, 0
    %vm64 = vcmask 1043456
    %v66 = vsel %vm64, %v56, 0
    %v69 = vsel %vm64, %v57, 0
    %v72 = vsel %vm64, %v58, 0
    %v75 = vsel %vm64, %v59, 0
    %77 = vmatprep.subr.bf16.mxu0 %v69
    %78 = vmatpush1.bf16.msra.mxu0 %v66
    %79 = vmatprep.subr.bf16.mxu0 0
    %80 = vmatpush1.bf16.msra.mxu0 0
    %81 = vmatprep.subr.bf16.mxu0 0
    %82 = vmatpush1.bf16.msra.mxu0 0
    %83 = vmatprep.subr.bf16.mxu0 0
    %84 = vmatpush1.bf16.msra.mxu0 0
    %85 = vmatprep.subr.bf16.mxu0 0
    %86 = vmatpush1.bf16.msra.mxu0 0
    %87 = vmatprep.subr.bf16.mxu0 0
    %88 = vmatpush1.bf16.msra.mxu0 0
    %89 = vmatprep.subr.bf16.mxu0 0
    %90 = vmatpush1.bf16.msra.mxu0 0
    %91 = vmatprep.subr.bf16.mxu0 0
    %92 = vmatpush1.bf16.msra.mxu0 0
    %93 = vmatprep.subr.bf16.mxu0 0
    %94 = vmatpush1.bf16.msra.mxu0 0
    %95 = vmatprep.subr.bf16.mxu0 0
    %96 = vmatpush1.bf16.msra.mxu0 0
    %97 = vmatprep.subr.bf16.mxu0 0
    %98 = vmatpush1.bf16.msra.mxu0 0
    %99 = vmatprep.subr.bf16.mxu0 0
    %100 = vmatpush1.bf16.msra.mxu0 0
    %101 = vmatprep.subr.bf16.mxu0 0
    %102 = vmatpush1.bf16.msra.mxu0 0
    %103 = vmatprep.subr.bf16.mxu0 0
    %104 = vmatpush1.bf16.msra.mxu0 0
    %105 = vmatprep.subr.bf16.mxu0 0
    %106 = vmatpush1.bf16.msra.mxu0 0
    %107 = vmatprep.subr.bf16.mxu0 0
    %108 = vmatpush1.bf16.msra.mxu0 0
    %109 = vmatprep.mubr.bf16.mxu0 0
    %110 = vmatmul.mubr.bf16.gmra.mrb[0].mxu0 %v62
    %v111 = vpop.f32.mrb[0].mxu0
    %v112 = vadd.f32 0.0, %v111
    %v113 = vpop.f32.mrb[0].mxu0
    %v114 = vadd.f32 0.0, %v113
    %v115 = vpop.f32.mrb[0].mxu0
    %v116 = vpop.f32.mrb[0].mxu0
    %117 = vdwg.mxu0
    %118 = vmatprep.subr.bf16.mxu0 %v75
    %119 = vmatpush1.bf16.msra.mxu0 %v72
    %120 = vmatprep.subr.bf16.mxu0 0
    %121 = vmatpush1.bf16.msra.mxu0 0
    %122 = vmatprep.subr.bf16.mxu0 0
    %123 = vmatpush1.bf16.msra.mxu0 0
    %124 = vmatprep.subr.bf16.mxu0 0
    %125 = vmatpush1.bf16.msra.mxu0 0
    %126 = vmatprep.subr.bf16.mxu0 0
    %127 = vmatpush1.bf16.msra.mxu0 0
    %128 = vmatprep.subr.bf16.mxu0 0
    %129 = vmatpush1.bf16.msra.mxu0 0
    %130 = vmatprep.subr.bf16.mxu0 0
    %131 = vmatpush1.bf16.msra.mxu0 0
    %132 = vmatprep.subr.bf16.mxu0 0
    %133 = vmatpush1.bf16.msra.mxu0 0
    %134 = vmatprep.subr.bf16.mxu0 0
    %135 = vmatpush1.bf16.msra.mxu0 0
    %136 = vmatprep.subr.bf16.mxu0 0
    %137 = vmatpush1.bf16.msra.mxu0 0
    %138 = vmatprep.subr.bf16.mxu0 0
    %139 = vmatpush1.bf16.msra.mxu0 0
    %140 = vmatprep.subr.bf16.mxu0 0
    %141 = vmatpush1.bf16.msra.mxu0 0
    %142 = vmatprep.subr.bf16.mxu0 0
    %143 = vmatpush1.bf16.msra.mxu0 0
    %144 = vmatprep.subr.bf16.mxu0 0
    %145 = vmatpush1.bf16.msra.mxu0 0
    %146 = vmatprep.subr.bf16.mxu0 0
    %147 = vmatpush1.bf16.msra.mxu0 0
    %148 = vmatprep.subr.bf16.mxu0 0
    %149 = vmatpush1.bf16.msra.mxu0 0
    %150 = vmatprep.mubr.bf16.mxu0 0
    %151 = vmatmul.mubr.bf16.gmra.mrb[0].mxu0 %v62
    %v152 = vpop.f32.mrb[0].mxu0
    %v153 = vadd.f32 0.0, %v152
    %v154 = vpop.f32.mrb[0].mxu0
    %v155 = vadd.f32 0.0, %v154
    %v156 = vpop.f32.mrb[0].mxu0
    %v157 = vpop.f32.mrb[0].mxu0
    %158 = vdwg.mxu0
    %v159 = vld [vmem:[#allocation4] sm:$0xff]
    %v160 = vld [vmem:[#allocation4 + $0x8] sm:$0xff]
    %v161 = vld [vmem:[#allocation4 + $0x10] sm:$0xff]
    %v162 = vld [vmem:[#allocation4 + $0x18] sm:$0xff]
    %v163 = vld [vmem:[#allocation4 + $0x20] sm:$0xff]
    %v164 = vld [vmem:[#allocation4 + $0x28] sm:$0xff]
    %v165 = vld [vmem:[#allocation4 + $0x30] sm:$0xff]
    %v166 = vld [vmem:[#allocation4 + $0x38] sm:$0xff]
    %v167 = vld [vmem:[#allocation4 + $0x40] sm:$0xff]
    %v168 = vld [vmem:[#allocation4 + $0x48] sm:$0xff]
    %v169 = vld [vmem:[#allocation4 + $0x50] sm:$0xff]
    %v170 = vld [vmem:[#allocation4 + $0x58] sm:$0xff]
    %v171 = vld [vmem:[#allocation4 + $0x60] sm:$0xff]
    %v172 = vld [vmem:[#allocation4 + $0x68] sm:$0xff]
    %v173 = vld [vmem:[#allocation4 + $0x70] sm:$0xff]
    %v174 = vld [vmem:[#allocation4 + $0x78] sm:$0xff]
    %v175 = vld [vmem:[#allocation4 + $0x80] sm:$0xff]
    %v176 = vld [vmem:[#allocation4 + $0x88] sm:$0xff]
    %v177 = vld [vmem:[#allocation4 + $0x90] sm:$0xff]
    %v178 = vld [vmem:[#allocation4 + $0x98] sm:$0xff]
    %v179 = vld [vmem:[#allocation4 + $0xa0] sm:$0xff]
    %v180 = vld [vmem:[#allocation4 + $0xa8] sm:$0xff]
    %v181 = vld [vmem:[#allocation4 + $0xb0] sm:$0xff]
    %v182 = vld [vmem:[#allocation4 + $0xb8] sm:$0xff]
    %v183 = vld [vmem:[#allocation4 + $0xc0] sm:$0xff]
    %v184 = vld [vmem:[#allocation4 + $0xc8] sm:$0xff]
    %v185 = vld [vmem:[#allocation4 + $0xd0] sm:$0xff]
    %v186 = vld [vmem:[#allocation4 + $0xd8] sm:$0xff]
    %v187 = vld [vmem:[#allocation4 + $0xe0] sm:$0xff]
    %v188 = vld [vmem:[#allocation4 + $0xe8] sm:$0xff]
    %v189 = vld [vmem:[#allocation4 + $0xf0] sm:$0xff]
    %v190 = vld [vmem:[#allocation4 + $0xf8] sm:$0xff]
    %v191 = vld [vmem:[#allocation4 + $0x100] sm:$0xff]
    %v192 = vld [vmem:[#allocation4 + $0x108] sm:$0xff]
    %v193 = vld [vmem:[#allocation4 + $0x110] sm:$0xff]
    %v194 = vld [vmem:[#allocation4 + $0x118] sm:$0xff]
    %v195 = vld [vmem:[#allocation4 + $0x120] sm:$0xff]
    %v196 = vld [vmem:[#allocation4 + $0x128] sm:$0xff]
    %v197 = vld [vmem:[#allocation4 + $0x130] sm:$0xff]
    %v198 = vld [vmem:[#allocation4 + $0x138] sm:$0xff]
    %v199 = vld [vmem:[#allocation4 + $0x140] sm:$0xff]
    %v200 = vld [vmem:[#allocation4 + $0x148] sm:$0xff]
    %v201 = vld [vmem:[#allocation4 + $0x150] sm:$0xff]
    %v202 = vld [vmem:[#allocation4 + $0x158] sm:$0xff]
    %v203 = vld [vmem:[#allocation4 + $0x160] sm:$0xff]
    %v204 = vld [vmem:[#allocation4 + $0x168] sm:$0xff]
    %v205 = vld [vmem:[#allocation4 + $0x170] sm:$0xff]
    %v206 = vld [vmem:[#allocation4 + $0x178] sm:$0xff]
    %v207 = vld [vmem:[#allocation4 + $0x180] sm:$0xff]
    %v208 = vld [vmem:[#allocation4 + $0x188] sm:$0xff]
    %v209 = vld [vmem:[#allocation4 + $0x190] sm:$0xff]
    %v210 = vld [vmem:[#allocation4 + $0x198] sm:$0xff]
    %v211 = vld [vmem:[#allocation4 + $0x1a0] sm:$0xff]
    %v212 = vld [vmem:[#allocation4 + $0x1a8] sm:$0xff]
    %v213 = vld [vmem:[#allocation4 + $0x1b0] sm:$0xff]
    %v214 = vld [vmem:[#allocation4 + $0x1b8] sm:$0xff]
    %v215 = vld [vmem:[#allocation4 + $0x1c0] sm:$0xff]
    %v216 = vld [vmem:[#allocation4 + $0x1c8] sm:$0xff]
    %v217 = vld [vmem:[#allocation4 + $0x1d0] sm:$0xff]
    %v218 = vld [vmem:[#allocation4 + $0x1d8] sm:$0xff]
    %v219 = vld [vmem:[#allocation4 + $0x1e0] sm:$0xff]
    %v220 = vld [vmem:[#allocation4 + $0x1e8] sm:$0xff]
    %v221 = vld [vmem:[#allocation4 + $0x1f0] sm:$0xff]
    %v222 = vld [vmem:[#allocation4 + $0x1f8] sm:$0xff]
    %v223 = vld [vmem:[#allocation4 + $0x200] sm:$0xff]
    %v224 = vld [vmem:[#allocation4 + $0x208] sm:$0xff]
    %v225 = vld [vmem:[#allocation4 + $0x210] sm:$0xff]
    %v226 = vld [vmem:[#allocation4 + $0x218] sm:$0xff]
    %v227 = vld [vmem:[#allocation4 + $0x220] sm:$0xff]
    %v228 = vld [vmem:[#allocation4 + $0x228] sm:$0xff]
    %v229 = vld [vmem:[#allocation4 + $0x230] sm:$0xff]
    %v230 = vld [vmem:[#allocation4 + $0x238] sm:$0xff]
    %v231 = vld [vmem:[#allocation4 + $0x240] sm:$0xff]
    %v232 = vld [vmem:[#allocation4 + $0x248] sm:$0xff]
    %v233 = vld [vmem:[#allocation4 + $0x250] sm:$0xff]
    %v234 = vld [vmem:[#allocation4 + $0x258] sm:$0xff]
    %v235 = vld [vmem:[#allocation4 + $0x260] sm:$0xff]
    %v236 = vld [vmem:[#allocation4 + $0x268] sm:$0xff]
    %v237 = vld [vmem:[#allocation4 + $0x270] sm:$0xff]
    %v238 = vld [vmem:[#allocation4 + $0x278] sm:$0xff]
    %v239 = vld [vmem:[#allocation4 + $0x280] sm:$0xff]
    %v240 = vld [vmem:[#allocation4 + $0x288] sm:$0xff]
    %v241 = vld [vmem:[#allocation4 + $0x290] sm:$0xff]
    %v242 = vld [vmem:[#allocation4 + $0x298] sm:$0xff]
    %v243 = vld [vmem:[#allocation4 + $0x2a0] sm:$0xff]
    %v244 = vld [vmem:[#allocation4 + $0x2a8] sm:$0xff]
    %v245 = vld [vmem:[#allocation4 + $0x2b0] sm:$0xff]
    %v246 = vld [vmem:[#allocation4 + $0x2b8] sm:$0xff]
    %v247 = vld [vmem:[#allocation4 + $0x2c0] sm:$0xff]
    %v248 = vld [vmem:[#allocation4 + $0x2c8] sm:$0xff]
    %v249 = vld [vmem:[#allocation4 + $0x2d0] sm:$0xff]
    %v250 = vld [vmem:[#allocation4 + $0x2d8] sm:$0xff]
    %v251 = vld [vmem:[#allocation4 + $0x2e0] sm:$0xff]
    %v252 = vld [vmem:[#allocation4 + $0x2e8] sm:$0xff]
    %v253 = vld [vmem:[#allocation4 + $0x2f0] sm:$0xff]
    %v254 = vld [vmem:[#allocation4 + $0x2f8] sm:$0xff]
    %v255 = vld [vmem:[#allocation4 + $0x300] sm:$0xff]
    %v256 = vld [vmem:[#allocation4 + $0x308] sm:$0xff]
    %v257 = vld [vmem:[#allocation4 + $0x310] sm:$0xff]
    %v258 = vld [vmem:[#allocation4 + $0x318] sm:$0xff]
    %v259 = vld [vmem:[#allocation4 + $0x320] sm:$0xff]
    %v260 = vld [vmem:[#allocation4 + $0x328] sm:$0xff]
    %v261 = vld [vmem:[#allocation4 + $0x330] sm:$0xff]
    %v262 = vld [vmem:[#allocation4 + $0x338] sm:$0xff]
    %v263 = vld [vmem:[#allocation4 + $0x340] sm:$0xff]
    %v264 = vld [vmem:[#allocation4 + $0x348] sm:$0xff]
    %v265 = vld [vmem:[#allocation4 + $0x350] sm:$0xff]
    %v266 = vld [vmem:[#allocation4 + $0x358] sm:$0xff]
    %v267 = vld [vmem:[#allocation4 + $0x360] sm:$0xff]
    %v268 = vld [vmem:[#allocation4 + $0x368] sm:$0xff]
    %v269 = vld [vmem:[#allocation4 + $0x370] sm:$0xff]
    %v270 = vld [vmem:[#allocation4 + $0x378] sm:$0xff]
    %v271 = vld [vmem:[#allocation4 + $0x380] sm:$0xff]
    %v272 = vld [vmem:[#allocation4 + $0x388] sm:$0xff]
    %v273 = vld [vmem:[#allocation4 + $0x390] sm:$0xff]
    %v274 = vld [vmem:[#allocation4 + $0x398] sm:$0xff]
    %v275 = vld [vmem:[#allocation4 + $0x3a0] sm:$0xff]
    %v276 = vld [vmem:[#allocation4 + $0x3a8] sm:$0xff]
    %v277 = vld [vmem:[#allocation4 + $0x3b0] sm:$0xff]
    %v278 = vld [vmem:[#allocation4 + $0x3b8] sm:$0xff]
    %v279 = vld [vmem:[#allocation4 + $0x3c0] sm:$0xff]
    %v280 = vld [vmem:[#allocation4 + $0x3c8] sm:$0xff]
    %v281 = vld [vmem:[#allocation4 + $0x3d0] sm:$0xff]
    %v282 = vld [vmem:[#allocation4 + $0x3d8] sm:$0xff]
    %v283 = vld [vmem:[#allocation4 + $0x3e0] sm:$0xff]
    %v284 = vld [vmem:[#allocation4 + $0x3e8] sm:$0xff]
    %v285 = vld [vmem:[#allocation4 + $0x3f0] sm:$0xff]
    %v286 = vld [vmem:[#allocation4 + $0x3f8] sm:$0xff]
    %v287 = vld [vmem:[#allocation4 + $0x400] sm:$0xff]
    %v288 = vld [vmem:[#allocation4 + $0x408] sm:$0xff]
    %v289 = vld [vmem:[#allocation4 + $0x410] sm:$0xff]
    %v290 = vld [vmem:[#allocation4 + $0x418] sm:$0xff]
    %v291 = vld [vmem:[#allocation4 + $0x420] sm:$0xff]
    %v292 = vld [vmem:[#allocation4 + $0x428] sm:$0xff]
    %v293 = vld [vmem:[#allocation4 + $0x430] sm:$0xff]
    %v294 = vld [vmem:[#allocation4 + $0x438] sm:$0xff]
    %v295 = vld [vmem:[#allocation4 + $0x440] sm:$0xff]
    %v296 = vld [vmem:[#allocation4 + $0x448] sm:$0xff]
    %v297 = vld [vmem:[#allocation4 + $0x450] sm:$0xff]
    %v298 = vld [vmem:[#allocation4 + $0x458] sm:$0xff]
    %v299 = vld [vmem:[#allocation4 + $0x460] sm:$0xff]
    %v300 = vld [vmem:[#allocation4 + $0x468] sm:$0xff]
    %v301 = vld [vmem:[#allocation4 + $0x470] sm:$0xff]
    %v302 = vld [vmem:[#allocation4 + $0x478] sm:$0xff]
    %v303 = vld [vmem:[#allocation4 + $0x480] sm:$0xff]
    %v304 = vld [vmem:[#allocation4 + $0x488] sm:$0xff]
    %v305 = vld [vmem:[#allocation4 + $0x490] sm:$0xff]
    %v306 = vld [vmem:[#allocation4 + $0x498] sm:$0xff]
    %v307 = vld [vmem:[#allocation4 + $0x4a0] sm:$0xff]
    %v308 = vld [vmem:[#allocation4 + $0x4a8] sm:$0xff]
    %v309 = vld [vmem:[#allocation4 + $0x4b0] sm:$0xff]
    %v310 = vld [vmem:[#allocation4 + $0x4b8] sm:$0xff]
    %v311 = vld [vmem:[#allocation4 + $0x4c0] sm:$0xff]
    %v312 = vld [vmem:[#allocation4 + $0x4c8] sm:$0xff]
    %v313 = vld [vmem:[#allocation4 + $0x4d0] sm:$0xff]
    %v314 = vld [vmem:[#allocation4 + $0x4d8] sm:$0xff]
    %v315 = vld [vmem:[#allocation4 + $0x4e0] sm:$0xff]
    %v316 = vld [vmem:[#allocation4 + $0x4e8] sm:$0xff]
    %v317 = vld [vmem:[#allocation4 + $0x4f0] sm:$0xff]
    %v318 = vld [vmem:[#allocation4 + $0x4f8] sm:$0xff]
    %v319 = vld [vmem:[#allocation4 + $0x500] sm:$0xff]
    %v320 = vld [vmem:[#allocation4 + $0x508] sm:$0xff]
    %v321 = vld [vmem:[#allocation4 + $0x510] sm:$0xff]
    %v322 = vld [vmem:[#allocation4 + $0x518] sm:$0xff]
    %v323 = vld [vmem:[#allocation4 + $0x520] sm:$0xff]
    %v324 = vld [vmem:[#allocation4 + $0x528] sm:$0xff]
    %v325 = vld [vmem:[#allocation4 + $0x530] sm:$0xff]
    %v326 = vld [vmem:[#allocation4 + $0x538] sm:$0xff]
    %v327 = vld [vmem:[#allocation4 + $0x540] sm:$0xff]
    %v328 = vld [vmem:[#allocation4 + $0x548] sm:$0xff]
    %v329 = vld [vmem:[#allocation4 + $0x550] sm:$0xff]
    %v330 = vld [vmem:[#allocation4 + $0x558] sm:$0xff]
    %v331 = vld [vmem:[#allocation4 + $0x560] sm:$0xff]
    %v332 = vld [vmem:[#allocation4 + $0x568] sm:$0xff]
    %v333 = vld [vmem:[#allocation4 + $0x570] sm:$0xff]
    %v334 = vld [vmem:[#allocation4 + $0x578] sm:$0xff]
    %v335 = vld [vmem:[#allocation4 + $0x580] sm:$0xff]
    %v336 = vld [vmem:[#allocation4 + $0x588] sm:$0xff]
    %v337 = vld [vmem:[#allocation4 + $0x590] sm:$0xff]
    %v338 = vld [vmem:[#allocation4 + $0x598] sm:$0xff]
    %v339 = vld [vmem:[#allocation4 + $0x5a0] sm:$0xff]
    %v340 = vld [vmem:[#allocation4 + $0x5a8] sm:$0xff]
    %v341 = vld [vmem:[#allocation4 + $0x5b0] sm:$0xff]
    %v342 = vld [vmem:[#allocation4 + $0x5b8] sm:$0xff]
    %v343 = vld [vmem:[#allocation4 + $0x5c0] sm:$0xff]
    %v344 = vld [vmem:[#allocation4 + $0x5c8] sm:$0xff]
    %v345 = vld [vmem:[#allocation4 + $0x5d0] sm:$0xff]
    %v346 = vld [vmem:[#allocation4 + $0x5d8] sm:$0xff]
    %v347 = vld [vmem:[#allocation4 + $0x5e0] sm:$0xff]
    %v348 = vld [vmem:[#allocation4 + $0x5e8] sm:$0xff]
    %v349 = vld [vmem:[#allocation4 + $0x5f0] sm:$0xff]
    %v350 = vld [vmem:[#allocation4 + $0x5f8] sm:$0xff]
    %v351 = vld [vmem:[#allocation4 + $0x600] sm:$0xff]
    %v352 = vld [vmem:[#allocation4 + $0x608] sm:$0xff]
    %v353 = vld [vmem:[#allocation4 + $0x610] sm:$0xff]
    %v354 = vld [vmem:[#allocation4 + $0x618] sm:$0xff]
    %v355 = vld [vmem:[#allocation4 + $0x620] sm:$0xff]
    %v356 = vld [vmem:[#allocation4 + $0x628] sm:$0xff]
    %v357 = vld [vmem:[#allocation4 + $0x630] sm:$0xff]
    %v358 = vld [vmem:[#allocation4 + $0x638] sm:$0xff]
    %v359 = vld [vmem:[#allocation4 + $0x640] sm:$0xff]
    %v360 = vld [vmem:[#allocation4 + $0x648] sm:$0xff]
    %v361 = vld [vmem:[#allocation4 + $0x650] sm:$0xff]
    %v362 = vld [vmem:[#allocation4 + $0x658] sm:$0xff]
    %v363 = vld [vmem:[#allocation4 + $0x660] sm:$0xff]
    %v364 = vld [vmem:[#allocation4 + $0x668] sm:$0xff]
    %v365 = vld [vmem:[#allocation4 + $0x670] sm:$0xff]
    %v366 = vld [vmem:[#allocation4 + $0x678] sm:$0xff]
    %v367 = vld [vmem:[#allocation4 + $0x680] sm:$0xff]
    %v368 = vld [vmem:[#allocation4 + $0x688] sm:$0xff]
    %v369 = vld [vmem:[#allocation4 + $0x690] sm:$0xff]
    %v370 = vld [vmem:[#allocation4 + $0x698] sm:$0xff]
    %v371 = vld [vmem:[#allocation4 + $0x6a0] sm:$0xff]
    %v372 = vld [vmem:[#allocation4 + $0x6a8] sm:$0xff]
    %v373 = vld [vmem:[#allocation4 + $0x6b0] sm:$0xff]
    %v374 = vld [vmem:[#allocation4 + $0x6b8] sm:$0xff]
    %v375 = vld [vmem:[#allocation4 + $0x6c0] sm:$0xff]
    %v376 = vld [vmem:[#allocation4 + $0x6c8] sm:$0xff]
    %v377 = vld [vmem:[#allocation4 + $0x6d0] sm:$0xff]
    %v378 = vld [vmem:[#allocation4 + $0x6d8] sm:$0xff]
    %v379 = vld [vmem:[#allocation4 + $0x6e0] sm:$0xff]
    %v380 = vld [vmem:[#allocation4 + $0x6e8] sm:$0xff]
    %v381 = vld [vmem:[#allocation4 + $0x6f0] sm:$0xff]
    %v382 = vld [vmem:[#allocation4 + $0x6f8] sm:$0xff]
    %v383 = vld [vmem:[#allocation4 + $0x700] sm:$0xff]
    %v384 = vld [vmem:[#allocation4 + $0x708] sm:$0xff]
    %v385 = vld [vmem:[#allocation4 + $0x710] sm:$0xff]
    %v386 = vld [vmem:[#allocation4 + $0x718] sm:$0xff]
    %v387 = vld [vmem:[#allocation4 + $0x720] sm:$0xff]
    %v388 = vld [vmem:[#allocation4 + $0x728] sm:$0xff]
    %v389 = vld [vmem:[#allocation4 + $0x730] sm:$0xff]
    %v390 = vld [vmem:[#allocation4 + $0x738] sm:$0xff]
    %v391 = vld [vmem:[#allocation4 + $0x740] sm:$0xff]
    %v392 = vld [vmem:[#allocation4 + $0x748] sm:$0xff]
    %v393 = vld [vmem:[#allocation4 + $0x750] sm:$0xff]
    %v394 = vld [vmem:[#allocation4 + $0x758] sm:$0xff]
    %v395 = vld [vmem:[#allocation4 + $0x760] sm:$0xff]
    %v396 = vld [vmem:[#allocation4 + $0x768] sm:$0xff]
    %v397 = vld [vmem:[#allocation4 + $0x770] sm:$0xff]
    %v398 = vld [vmem:[#allocation4 + $0x778] sm:$0xff]
    %v399 = vld [vmem:[#allocation4 + $0x780] sm:$0xff]
    %v400 = vld [vmem:[#allocation4 + $0x788] sm:$0xff]
    %v401 = vld [vmem:[#allocation4 + $0x790] sm:$0xff]
    %v402 = vld [vmem:[#allocation4 + $0x798] sm:$0xff]
    %v403 = vld [vmem:[#allocation4 + $0x7a0] sm:$0xff]
    %v404 = vld [vmem:[#allocation4 + $0x7a8] sm:$0xff]
    %v405 = vld [vmem:[#allocation4 + $0x7b0] sm:$0xff]
    %v406 = vld [vmem:[#allocation4 + $0x7b8] sm:$0xff]
    %v407 = vld [vmem:[#allocation4 + $0x7c0] sm:$0xff]
    %v408 = vld [vmem:[#allocation4 + $0x7c8] sm:$0xff]
    %v409 = vld [vmem:[#allocation4 + $0x7d0] sm:$0xff]
    %v410 = vld [vmem:[#allocation4 + $0x7d8] sm:$0xff]
    %v411 = vld [vmem:[#allocation4 + $0x7e0] sm:$0xff]
    %v412 = vld [vmem:[#allocation4 + $0x7e8] sm:$0xff]
    %v413 = vld [vmem:[#allocation4 + $0x7f0] sm:$0xff]
    %v414 = vld [vmem:[#allocation4 + $0x7f8] sm:$0xff]
    %415 = vmatprep.subr.mxu0 %v160
    %416 = vmatpush1.msra.mxu0 %v159
    %417 = vmatprep.subr.mxu0 %v164
    %418 = vmatpush1.msra.mxu0 %v163
    %419 = vmatprep.subr.mxu0 %v168
    %420 = vmatpush1.msra.mxu0 %v167
    %421 = vmatprep.subr.mxu0 %v172
    %422 = vmatpush1.msra.mxu0 %v171
    %423 = vmatprep.subr.mxu0 %v176
    %424 = vmatpush1.msra.mxu0 %v175
    %425 = vmatprep.subr.mxu0 %v180
    %426 = vmatpush1.msra.mxu0 %v179
    %427 = vmatprep.subr.mxu0 %v184
    %428 = vmatpush1.msra.mxu0 %v183
    %429 = vmatprep.subr.mxu0 %v188
    %430 = vmatpush1.msra.mxu0 %v187
    %431 = vmatprep.subr.mxu0 %v192
    %432 = vmatpush1.msra.mxu0 %v191
    %433 = vmatprep.subr.mxu0 %v196
    %434 = vmatpush1.msra.mxu0 %v195
    %435 = vmatprep.subr.mxu0 %v200
    %436 = vmatpush1.msra.mxu0 %v199
    %437 = vmatprep.subr.mxu0 %v204
    %438 = vmatpush1.msra.mxu0 %v203
    %439 = vmatprep.subr.mxu0 %v208
    %440 = vmatpush1.msra.mxu0 %v207
    %441 = vmatprep.subr.mxu0 %v212
    %442 = vmatpush1.msra.mxu0 %v211
    %443 = vmatprep.subr.mxu0 %v216
    %444 = vmatpush1.msra.mxu0 %v215
    %445 = vmatprep.subr.mxu0 %v220
    %446 = vmatpush1.msra.mxu0 %v219
    %447 = vmatprep.subr.mxu0 %v224
    %448 = vmatpush1.msra.mxu0 %v223
    %449 = vmatprep.subr.mxu0 %v228
    %450 = vmatpush1.msra.mxu0 %v227
    %451 = vmatprep.subr.mxu0 %v232
    %452 = vmatpush1.msra.mxu0 %v231
    %453 = vmatprep.subr.mxu0 %v236
    %454 = vmatpush1.msra.mxu0 %v235
    %455 = vmatprep.subr.mxu0 %v240
    %456 = vmatpush1.msra.mxu0 %v239
    %457 = vmatprep.subr.mxu0 %v244
    %458 = vmatpush1.msra.mxu0 %v243
    %459 = vmatprep.subr.mxu0 %v248
    %460 = vmatpush1.msra.mxu0 %v247
    %461 = vmatprep.subr.mxu0 %v252
    %462 = vmatpush1.msra.mxu0 %v251
    %463 = vmatprep.subr.mxu0 %v256
    %464 = vmatpush1.msra.mxu0 %v255
    %465 = vmatprep.subr.mxu0 %v260
    %466 = vmatpush1.msra.mxu0 %v259
    %467 = vmatprep.subr.mxu0 %v264
    %468 = vmatpush1.msra.mxu0 %v263
    %469 = vmatprep.subr.mxu0 %v268
    %470 = vmatpush1.msra.mxu0 %v267
    %471 = vmatprep.subr.mxu0 %v272
    %472 = vmatpush1.msra.mxu0 %v271
    %473 = vmatprep.subr.mxu0 %v276
    %474 = vmatpush1.msra.mxu0 %v275
    %475 = vmatprep.subr.mxu0 %v280
    %476 = vmatpush1.msra.mxu0 %v279
    %477 = vmatprep.subr.mxu0 %v284
    %478 = vmatpush1.msra.mxu0 %v283
    %479 = vmatprep.mubr.f32.mxu0 %v114
    %480 = vmatmul.mubr.f32.gmra.mrb[0].mxu0 %v112
    %v481 = vpop.f32.mrb[0].mxu0
    %v482 = vadd.f32 0.0, %v481
    %v483 = vpop.f32.mrb[0].mxu0
    %v484 = vadd.f32 0.0, %v483
    %485 = vdwg.mxu0
    %486 = vmatprep.subr.mxu0 %v288
    %487 = vmatpush1.msra.mxu0 %v287
    %488 = vmatprep.subr.mxu0 %v292
    %489 = vmatpush1.msra.mxu0 %v291
    %490 = vmatprep.subr.mxu0 %v296
    %491 = vmatpush1.msra.mxu0 %v295
    %492 = vmatprep.subr.mxu0 %v300
    %493 = vmatpush1.msra.mxu0 %v299
    %494 = vmatprep.subr.mxu0 %v304
    %495 = vmatpush1.msra.mxu0 %v303
    %496 = vmatprep.subr.mxu0 %v308
    %497 = vmatpush1.msra.mxu0 %v307
    %498 = vmatprep.subr.mxu0 %v312
    %499 = vmatpush1.msra.mxu0 %v311
    %500 = vmatprep.subr.mxu0 %v316
    %501 = vmatpush1.msra.mxu0 %v315
    %502 = vmatprep.subr.mxu0 %v320
    %503 = vmatpush1.msra.mxu0 %v319
    %504 = vmatprep.subr.mxu0 %v324
    %505 = vmatpush1.msra.mxu0 %v323
    %506 = vmatprep.subr.mxu0 %v328
    %507 = vmatpush1.msra.mxu0 %v327
    %508 = vmatprep.subr.mxu0 %v332
    %509 = vmatpush1.msra.mxu0 %v331
    %510 = vmatprep.subr.mxu0 %v336
    %511 = vmatpush1.msra.mxu0 %v335
    %512 = vmatprep.subr.mxu0 %v340
    %513 = vmatpush1.msra.mxu0 %v339
    %514 = vmatprep.subr.mxu0 %v344
    %515 = vmatpush1.msra.mxu0 %v343
    %516 = vmatprep.subr.mxu0 %v348
    %517 = vmatpush1.msra.mxu0 %v347
    %518 = vmatprep.subr.mxu0 %v352
    %519 = vmatpush1.msra.mxu0 %v351
    %520 = vmatprep.subr.mxu0 %v356
    %521 = vmatpush1.msra.mxu0 %v355
    %522 = vmatprep.subr.mxu0 %v360
    %523 = vmatpush1.msra.mxu0 %v359
    %524 = vmatprep.subr.mxu0 %v364
    %525 = vmatpush1.msra.mxu0 %v363
    %526 = vmatprep.subr.mxu0 %v368
    %527 = vmatpush1.msra.mxu0 %v367
    %528 = vmatprep.subr.mxu0 %v372
    %529 = vmatpush1.msra.mxu0 %v371
    %530 = vmatprep.subr.mxu0 %v376
    %531 = vmatpush1.msra.mxu0 %v375
    %532 = vmatprep.subr.mxu0 %v380
    %533 = vmatpush1.msra.mxu0 %v379
    %534 = vmatprep.subr.mxu0 %v384
    %535 = vmatpush1.msra.mxu0 %v383
    %536 = vmatprep.subr.mxu0 %v388
    %537 = vmatpush1.msra.mxu0 %v387
    %538 = vmatprep.subr.mxu0 %v392
    %539 = vmatpush1.msra.mxu0 %v391
    %540 = vmatprep.subr.mxu0 %v396
    %541 = vmatpush1.msra.mxu0 %v395
    %542 = vmatprep.subr.mxu0 %v400
    %543 = vmatpush1.msra.mxu0 %v399
    %544 = vmatprep.subr.mxu0 %v404
    %545 = vmatpush1.msra.mxu0 %v403
    %546 = vmatprep.subr.mxu0 %v408
    %547 = vmatpush1.msra.mxu0 %v407
    %548 = vmatprep.subr.mxu0 %v412
    %549 = vmatpush1.msra.mxu0 %v411
    %550 = vmatprep.mubr.f32.mxu0 %v155
    %551 = vmatmul.mubr.f32.gmra.mrb[0].mxu0 %v153
    %v552 = vpop.f32.mrb[0].mxu0
    %v553 = vadd.f32 %v482, %v552
    %v554 = vpop.f32.mrb[0].mxu0
    %v555 = vadd.f32 %v484, %v554
    %556 = vdwg.mxu0
    %557 = vmatprep.subr.mxu0 %v162
    %558 = vmatpush1.msra.mxu0 %v161
    %559 = vmatprep.subr.mxu0 %v166
    %560 = vmatpush1.msra.mxu0 %v165
    %561 = vmatprep.subr.mxu0 %v170
    %562 = vmatpush1.msra.mxu0 %v169
    %563 = vmatprep.subr.mxu0 %v174
    %564 = vmatpush1.msra.mxu0 %v173
    %565 = vmatprep.subr.mxu0 %v178
    %566 = vmatpush1.msra.mxu0 %v177
    %567 = vmatprep.subr.mxu0 %v182
    %568 = vmatpush1.msra.mxu0 %v181
    %569 = vmatprep.subr.mxu0 %v186
    %570 = vmatpush1.msra.mxu0 %v185
    %571 = vmatprep.subr.mxu0 %v190
    %572 = vmatpush1.msra.mxu0 %v189
    %573 = vmatprep.subr.mxu0 %v194
    %574 = vmatpush1.msra.mxu0 %v193
    %575 = vmatprep.subr.mxu0 %v198
    %576 = vmatpush1.msra.mxu0 %v197
    %577 = vmatprep.subr.mxu0 %v202
    %578 = vmatpush1.msra.mxu0 %v201
    %579 = vmatprep.subr.mxu0 %v206
    %580 = vmatpush1.msra.mxu0 %v205
    %581 = vmatprep.subr.mxu0 %v210
    %582 = vmatpush1.msra.mxu0 %v209
    %583 = vmatprep.subr.mxu0 %v214
    %584 = vmatpush1.msra.mxu0 %v213
    %585 = vmatprep.subr.mxu0 %v218
    %586 = vmatpush1.msra.mxu0 %v217
    %587 = vmatprep.subr.mxu0 %v222
    %588 = vmatpush1.msra.mxu0 %v221
    %589 = vmatprep.subr.mxu0 %v226
    %590 = vmatpush1.msra.mxu0 %v225
    %591 = vmatprep.subr.mxu0 %v230
    %592 = vmatpush1.msra.mxu0 %v229
    %593 = vmatprep.subr.mxu0 %v234
    %594 = vmatpush1.msra.mxu0 %v233
    %595 = vmatprep.subr.mxu0 %v238
    %596 = vmatpush1.msra.mxu0 %v237
    %597 = vmatprep.subr.mxu0 %v242
    %598 = vmatpush1.msra.mxu0 %v241
    %599 = vmatprep.subr.mxu0 %v246
    %600 = vmatpush1.msra.mxu0 %v245
    %601 = vmatprep.subr.mxu0 %v250
    %602 = vmatpush1.msra.mxu0 %v249
    %603 = vmatprep.subr.mxu0 %v254
    %604 = vmatpush1.msra.mxu0 %v253
    %605 = vmatprep.subr.mxu0 %v258
    %606 = vmatpush1.msra.mxu0 %v257
    %607 = vmatprep.subr.mxu0 %v262
    %608 = vmatpush1.msra.mxu0 %v261
    %609 = vmatprep.subr.mxu0 %v266
    %610 = vmatpush1.msra.mxu0 %v265
    %611 = vmatprep.subr.mxu0 %v270
    %612 = vmatpush1.msra.mxu0 %v269
    %613 = vmatprep.subr.mxu0 %v274
    %614 = vmatpush1.msra.mxu0 %v273
    %615 = vmatprep.subr.mxu0 %v278
    %616 = vmatpush1.msra.mxu0 %v277
    %617 = vmatprep.subr.mxu0 %v282
    %618 = vmatpush1.msra.mxu0 %v281
    %619 = vmatprep.subr.mxu0 %v286
    %620 = vmatpush1.msra.mxu0 %v285
    %621 = vmatprep.mubr.f32.mxu0 %v114
    %622 = vmatmul.mubr.f32.gmra.mrb[0].mxu0 %v112
    %v623 = vpop.f32.mrb[0].mxu0
    %v624 = vadd.f32 0.0, %v623
    %v625 = vpop.f32.mrb[0].mxu0
    %v626 = vadd.f32 0.0, %v625
    %627 = vdwg.mxu0
    %628 = vmatprep.subr.mxu0 %v290
    %629 = vmatpush1.msra.mxu0 %v289
    %630 = vmatprep.subr.mxu0 %v294
    %631 = vmatpush1.msra.mxu0 %v293
    %632 = vmatprep.subr.mxu0 %v298
    %633 = vmatpush1.msra.mxu0 %v297
    %634 = vmatprep.subr.mxu0 %v302
    %635 = vmatpush1.msra.mxu0 %v301
    %636 = vmatprep.subr.mxu0 %v306
    %637 = vmatpush1.msra.mxu0 %v305
    %638 = vmatprep.subr.mxu0 %v310
    %639 = vmatpush1.msra.mxu0 %v309
    %640 = vmatprep.subr.mxu0 %v314
    %641 = vmatpush1.msra.mxu0 %v313
    %642 = vmatprep.subr.mxu0 %v318
    %643 = vmatpush1.msra.mxu0 %v317
    %644 = vmatprep.subr.mxu0 %v322
    %645 = vmatpush1.msra.mxu0 %v321
    %646 = vmatprep.subr.mxu0 %v326
    %647 = vmatpush1.msra.mxu0 %v325
    %648 = vmatprep.subr.mxu0 %v330
    %649 = vmatpush1.msra.mxu0 %v329
    %650 = vmatprep.subr.mxu0 %v334
    %651 = vmatpush1.msra.mxu0 %v333
    %652 = vmatprep.subr.mxu0 %v338
    %653 = vmatpush1.msra.mxu0 %v337
    %654 = vmatprep.subr.mxu0 %v342
    %655 = vmatpush1.msra.mxu0 %v341
    %656 = vmatprep.subr.mxu0 %v346
    %657 = vmatpush1.msra.mxu0 %v345
    %658 = vmatprep.subr.mxu0 %v350
    %659 = vmatpush1.msra.mxu0 %v349
    %660 = vmatprep.subr.mxu0 %v354
    %661 = vmatpush1.msra.mxu0 %v353
    %662 = vmatprep.subr.mxu0 %v358
    %663 = vmatpush1.msra.mxu0 %v357
    %664 = vmatprep.subr.mxu0 %v362
    %665 = vmatpush1.msra.mxu0 %v361
    %666 = vmatprep.subr.mxu0 %v366
    %667 = vmatpush1.msra.mxu0 %v365
    %668 = vmatprep.subr.mxu0 %v370
    %669 = vmatpush1.msra.mxu0 %v369
    %670 = vmatprep.subr.mxu0 %v374
    %671 = vmatpush1.msra.mxu0 %v373
    %672 = vmatprep.subr.mxu0 %v378
    %673 = vmatpush1.msra.mxu0 %v377
    %674 = vmatprep.subr.mxu0 %v382
    %675 = vmatpush1.msra.mxu0 %v381
    %676 = vmatprep.subr.mxu0 %v386
    %677 = vmatpush1.msra.mxu0 %v385
    %678 = vmatprep.subr.mxu0 %v390
    %679 = vmatpush1.msra.mxu0 %v389
    %680 = vmatprep.subr.mxu0 %v394
    %681 = vmatpush1.msra.mxu0 %v393
    %682 = vmatprep.subr.mxu0 %v398
    %683 = vmatpush1.msra.mxu0 %v397
    %684 = vmatprep.subr.mxu0 %v402
    %685 = vmatpush1.msra.mxu0 %v401
    %686 = vmatprep.subr.mxu0 %v406
    %687 = vmatpush1.msra.mxu0 %v405
    %688 = vmatprep.subr.mxu0 %v410
    %689 = vmatpush1.msra.mxu0 %v409
    %690 = vmatprep.subr.mxu0 %v414
    %691 = vmatpush1.msra.mxu0 %v413
    %692 = vmatprep.mubr.f32.mxu0 %v155
    %693 = vmatmul.mubr.f32.gmra.mrb[0].mxu0 %v153
    %v694 = vpop.f32.mrb[0].mxu0
    %v695 = vadd.f32 %v624, %v694
    %v696 = vpop.f32.mrb[0].mxu0
    %v697 = vadd.f32 %v626, %v696
    %698 = vdwg.mxu0
    %vm699 = vcmask 1041408
    %v700 = vsel %vm699, %v553, 0.0
    %v701 = vrot.slane %v700, 4
    %v702 = vadd.f32 %v700, %v701
    %v703 = vrot.slane %v702, 2
    %v704 = vadd.f32 %v702, %v703
    %v705 = vrot.slane %v704, 1
    %v706 = vadd.f32 %v704, %v705
    %v707 = vsel %vm699, %v555, 0.0
    %v708 = vrot.slane %v707, 4
    %v709 = vadd.f32 %v707, %v708
    %v710 = vrot.slane %v709, 2
    %v711 = vadd.f32 %v709, %v710
    %v712 = vrot.slane %v711, 1
    %v713 = vadd.f32 %v711, %v712
    %v714 = vsel %vm699, %v695, 0.0
    %v715 = vrot.slane %v714, 4
    %v716 = vadd.f32 %v714, %v715
    %v717 = vrot.slane %v716, 2
    %v718 = vadd.f32 %v716, %v717
    %v719 = vrot.slane %v718, 1
    %v720 = vadd.f32 %v718, %v719
    %v721 = vsel %vm699, %v697, 0.0
    %v722 = vrot.slane %v721, 4
    %v723 = vadd.f32 %v721, %v722
    %v724 = vrot.slane %v723, 2
    %v725 = vadd.f32 %v723, %v724
    %v726 = vrot.slane %v725, 1
    %v727 = vadd.f32 %v725, %v726
    %v728 = vmul.f32 %v706, 0.125
    %v729 = vmul.f32 %v713, 0.125
    %v730 = vmul.f32 %v720, 0.125
    %v731 = vmul.f32 %v727, 0.125
    %v732 = vmul.f32 %v112, %v112
    %v733 = vmul.f32 %v114, %v114
    %v734 = vmul.f32 %v153, %v153
    %v735 = vmul.f32 %v155, %v155
    %736 = vmatprep.subr.mxu0 %v160
    %737 = vmatpush1.msra.mxu0 %v159
    %738 = vmatprep.subr.mxu0 %v164
    %739 = vmatpush1.msra.mxu0 %v163
    %740 = vmatprep.subr.mxu0 %v168
    %741 = vmatpush1.msra.mxu0 %v167
    %742 = vmatprep.subr.mxu0 %v172
    %743 = vmatpush1.msra.mxu0 %v171
    %744 = vmatprep.subr.mxu0 %v176
    %745 = vmatpush1.msra.mxu0 %v175
    %746 = vmatprep.subr.mxu0 %v180
    %747 = vmatpush1.msra.mxu0 %v179
    %748 = vmatprep.subr.mxu0 %v184
    %749 = vmatpush1.msra.mxu0 %v183
    %750 = vmatprep.subr.mxu0 %v188
    %751 = vmatpush1.msra.mxu0 %v187
    %752 = vmatprep.subr.mxu0 %v192
    %753 = vmatpush1.msra.mxu0 %v191
    %754 = vmatprep.subr.mxu0 %v196
    %755 = vmatpush1.msra.mxu0 %v195
    %756 = vmatprep.subr.mxu0 %v200
    %757 = vmatpush1.msra.mxu0 %v199
    %758 = vmatprep.subr.mxu0 %v204
    %759 = vmatpush1.msra.mxu0 %v203
    %760 = vmatprep.subr.mxu0 %v208
    %761 = vmatpush1.msra.mxu0 %v207
    %762 = vmatprep.subr.mxu0 %v212
    %763 = vmatpush1.msra.mxu0 %v211
    %764 = vmatprep.subr.mxu0 %v216
    %765 = vmatpush1.msra.mxu0 %v215
    %766 = vmatprep.subr.mxu0 %v220
    %767 = vmatpush1.msra.mxu0 %v219
    %768 = vmatprep.subr.mxu0 %v224
    %769 = vmatpush1.msra.mxu0 %v223
    %770 = vmatprep.subr.mxu0 %v228
    %771 = vmatpush1.msra.mxu0 %v227
    %772 = vmatprep.subr.mxu0 %v232
    %773 = vmatpush1.msra.mxu0 %v231
    %774 = vmatprep.subr.mxu0 %v236
    %775 = vmatpush1.msra.mxu0 %v235
    %776 = vmatprep.subr.mxu0 %v240
    %777 = vmatpush1.msra.mxu0 %v239
    %778 = vmatprep.subr.mxu0 %v244
    %779 = vmatpush1.msra.mxu0 %v243
    %780 = vmatprep.subr.mxu0 %v248
    %781 = vmatpush1.msra.mxu0 %v247
    %782 = vmatprep.subr.mxu0 %v252
    %783 = vmatpush1.msra.mxu0 %v251
    %784 = vmatprep.subr.mxu0 %v256
    %785 = vmatpush1.msra.mxu0 %v255
    %786 = vmatprep.subr.mxu0 %v260
    %787 = vmatpush1.msra.mxu0 %v259
    %788 = vmatprep.subr.mxu0 %v264
    %789 = vmatpush1.msra.mxu0 %v263
    %790 = vmatprep.subr.mxu0 %v268
    %791 = vmatpush1.msra.mxu0 %v267
    %792 = vmatprep.subr.mxu0 %v272
    %793 = vmatpush1.msra.mxu0 %v271
    %794 = vmatprep.subr.mxu0 %v276
    %795 = vmatpush1.msra.mxu0 %v275
    %796 = vmatprep.subr.mxu0 %v280
    %797 = vmatpush1.msra.mxu0 %v279
    %798 = vmatprep.subr.mxu0 %v284
    %799 = vmatpush1.msra.mxu0 %v283
    %800 = vmatprep.mubr.f32.mxu0 %v733
    %801 = vmatmul.mubr.f32.gmra.mrb[0].mxu0 %v732
    %v802 = vpop.f32.mrb[0].mxu0
    %v803 = vadd.f32 0.0, %v802
    %v804 = vpop.f32.mrb[0].mxu0
    %v805 = vadd.f32 0.0, %v804
    %806 = vdwg.mxu0
    %807 = vmatprep.subr.mxu0 %v288
    %808 = vmatpush1.msra.mxu0 %v287
    %809 = vmatprep.subr.mxu0 %v292
    %810 = vmatpush1.msra.mxu0 %v291
    %811 = vmatprep.subr.mxu0 %v296
    %812 = vmatpush1.msra.mxu0 %v295
    %813 = vmatprep.subr.mxu0 %v300
    %814 = vmatpush1.msra.mxu0 %v299
    %815 = vmatprep.subr.mxu0 %v304
    %816 = vmatpush1.msra.mxu0 %v303
    %817 = vmatprep.subr.mxu0 %v308
    %818 = vmatpush1.msra.mxu0 %v307
    %819 = vmatprep.subr.mxu0 %v312
    %820 = vmatpush1.msra.mxu0 %v311
    %821 = vmatprep.subr.mxu0 %v316
    %822 = vmatpush1.msra.mxu0 %v315
    %823 = vmatprep.subr.mxu0 %v320
    %824 = vmatpush1.msra.mxu0 %v319
    %825 = vmatprep.subr.mxu0 %v324
    %826 = vmatpush1.msra.mxu0 %v323
    %827 = vmatprep.subr.mxu0 %v328
    %828 = vmatpush1.msra.mxu0 %v327
    %829 = vmatprep.subr.mxu0 %v332
    %830 = vmatpush1.msra.mxu0 %v331
    %831 = vmatprep.subr.mxu0 %v336
    %832 = vmatpush1.msra.mxu0 %v335
    %833 = vmatprep.subr.mxu0 %v340
    %834 = vmatpush1.msra.mxu0 %v339
    %835 = vmatprep.subr.mxu0 %v344
    %836 = vmatpush1.msra.mxu0 %v343
    %837 = vmatprep.subr.mxu0 %v348
    %838 = vmatpush1.msra.mxu0 %v347
    %839 = vmatprep.subr.mxu0 %v352
    %840 = vmatpush1.msra.mxu0 %v351
    %841 = vmatprep.subr.mxu0 %v356
    %842 = vmatpush1.msra.mxu0 %v355
    %843 = vmatprep.subr.mxu0 %v360
    %844 = vmatpush1.msra.mxu0 %v359
    %845 = vmatprep.subr.mxu0 %v364
    %846 = vmatpush1.msra.mxu0 %v363
    %847 = vmatprep.subr.mxu0 %v368
    %848 = vmatpush1.msra.mxu0 %v367
    %849 = vmatprep.subr.mxu0 %v372
    %850 = vmatpush1.msra.mxu0 %v371
    %851 = vmatprep.subr.mxu0 %v376
    %852 = vmatpush1.msra.mxu0 %v375
    %853 = vmatprep.subr.mxu0 %v380
    %854 = vmatpush1.msra.mxu0 %v379
    %855 = vmatprep.subr.mxu0 %v384
    %856 = vmatpush1.msra.mxu0 %v383
    %857 = vmatprep.subr.mxu0 %v388
    %858 = vmatpush1.msra.mxu0 %v387
    %859 = vmatprep.subr.mxu0 %v392
    %860 = vmatpush1.msra.mxu0 %v391
    %861 = vmatprep.subr.mxu0 %v396
    %862 = vmatpush1.msra.mxu0 %v395
    %863 = vmatprep.subr.mxu0 %v400
    %864 = vmatpush1.msra.mxu0 %v399
    %865 = vmatprep.subr.mxu0 %v404
    %866 = vmatpush1.msra.mxu0 %v403
    %867 = vmatprep.subr.mxu0 %v408
    %868 = vmatpush1.msra.mxu0 %v407
    %869 = vmatprep.subr.mxu0 %v412
    %870 = vmatpush1.msra.mxu0 %v411
    %871 = vmatprep.mubr.f32.mxu0 %v735
    %872 = vmatmul.mubr.f32.gmra.mrb[0].mxu0 %v734
    %v873 = vpop.f32.mrb[0].mxu0
    %v874 = vadd.f32 %v803, %v873
    %v875 = vpop.f32.mrb[0].mxu0
    %v876 = vadd.f32 %v805, %v875
    %877 = vdwg.mxu0
    %878 = vmatprep.subr.mxu0 %v162
    %879 = vmatpush1.msra.mxu0 %v161
    %880 = vmatprep.subr.mxu0 %v166
    %881 = vmatpush1.msra.mxu0 %v165
    %882 = vmatprep.subr.mxu0 %v170
    %883 = vmatpush1.msra.mxu0 %v169
    %884 = vmatprep.subr.mxu0 %v174
    %885 = vmatpush1.msra.mxu0 %v173
    %886 = vmatprep.subr.mxu0 %v178
    %887 = vmatpush1.msra.mxu0 %v177
    %888 = vmatprep.subr.mxu0 %v182
    %889 = vmatpush1.msra.mxu0 %v181
    %890 = vmatprep.subr.mxu0 %v186
    %891 = vmatpush1.msra.mxu0 %v185
    %892 = vmatprep.subr.mxu0 %v190
    %893 = vmatpush1.msra.mxu0 %v189
    %894 = vmatprep.subr.mxu0 %v194
    %895 = vmatpush1.msra.mxu0 %v193
    %896 = vmatprep.subr.mxu0 %v198
    %897 = vmatpush1.msra.mxu0 %v197
    %898 = vmatprep.subr.mxu0 %v202
    %899 = vmatpush1.msra.mxu0 %v201
    %900 = vmatprep.subr.mxu0 %v206
    %901 = vmatpush1.msra.mxu0 %v205
    %902 = vmatprep.subr.mxu0 %v210
    %903 = vmatpush1.msra.mxu0 %v209
    %904 = vmatprep.subr.mxu0 %v214
    %905 = vmatpush1.msra.mxu0 %v213
    %906 = vmatprep.subr.mxu0 %v218
    %907 = vmatpush1.msra.mxu0 %v217
    %908 = vmatprep.subr.mxu0 %v222
    %909 = vmatpush1.msra.mxu0 %v221
    %910 = vmatprep.subr.mxu0 %v226
    %911 = vmatpush1.msra.mxu0 %v225
    %912 = vmatprep.subr.mxu0 %v230
    %913 = vmatpush1.msra.mxu0 %v229
    %914 = vmatprep.subr.mxu0 %v234
    %915 = vmatpush1.msra.mxu0 %v233
    %916 = vmatprep.subr.mxu0 %v238
    %917 = vmatpush1.msra.mxu0 %v237
    %918 = vmatprep.subr.mxu0 %v242
    %919 = vmatpush1.msra.mxu0 %v241
    %920 = vmatprep.subr.mxu0 %v246
    %921 = vmatpush1.msra.mxu0 %v245
    %922 = vmatprep.subr.mxu0 %v250
    %923 = vmatpush1.msra.mxu0 %v249
    %924 = vmatprep.subr.mxu0 %v254
    %925 = vmatpush1.msra.mxu0 %v253
    %926 = vmatprep.subr.mxu0 %v258
    %927 = vmatpush1.msra.mxu0 %v257
    %928 = vmatprep.subr.mxu0 %v262
    %929 = vmatpush1.msra.mxu0 %v261
    %930 = vmatprep.subr.mxu0 %v266
    %931 = vmatpush1.msra.mxu0 %v265
    %932 = vmatprep.subr.mxu0 %v270
    %933 = vmatpush1.msra.mxu0 %v269
    %934 = vmatprep.subr.mxu0 %v274
    %935 = vmatpush1.msra.mxu0 %v273
    %936 = vmatprep.subr.mxu0 %v278
    %937 = vmatpush1.msra.mxu0 %v277
    %938 = vmatprep.subr.mxu0 %v282
    %939 = vmatpush1.msra.mxu0 %v281
    %940 = vmatprep.subr.mxu0 %v286
    %941 = vmatpush1.msra.mxu0 %v285
    %942 = vmatprep.mubr.f32.mxu0 %v733
    %943 = vmatmul.mubr.f32.gmra.mrb[0].mxu0 %v732
    %v944 = vpop.f32.mrb[0].mxu0
    %v945 = vadd.f32 0.0, %v944
    %v946 = vpop.f32.mrb[0].mxu0
    %v947 = vadd.f32 0.0, %v946
    %948 = vdwg.mxu0
    %949 = vmatprep.subr.mxu0 %v290
    %950 = vmatpush1.msra.mxu0 %v289
    %951 = vmatprep.subr.mxu0 %v294
    %952 = vmatpush1.msra.mxu0 %v293
    %953 = vmatprep.subr.mxu0 %v298
    %954 = vmatpush1.msra.mxu0 %v297
    %955 = vmatprep.subr.mxu0 %v302
    %956 = vmatpush1.msra.mxu0 %v301
    %957 = vmatprep.subr.mxu0 %v306
    %958 = vmatpush1.msra.mxu0 %v305
    %959 = vmatprep.subr.mxu0 %v310
    %960 = vmatpush1.msra.mxu0 %v309
    %961 = vmatprep.subr.mxu0 %v314
    %962 = vmatpush1.msra.mxu0 %v313
    %963 = vmatprep.subr.mxu0 %v318
    %964 = vmatpush1.msra.mxu0 %v317
    %965 = vmatprep.subr.mxu0 %v322
    %966 = vmatpush1.msra.mxu0 %v321
    %967 = vmatprep.subr.mxu0 %v326
    %968 = vmatpush1.msra.mxu0 %v325
    %969 = vmatprep.subr.mxu0 %v330
    %970 = vmatpush1.msra.mxu0 %v329
    %971 = vmatprep.subr.mxu0 %v334
    %972 = vmatpush1.msra.mxu0 %v333
    %973 = vmatprep.subr.mxu0 %v338
    %974 = vmatpush1.msra.mxu0 %v337
    %975 = vmatprep.subr.mxu0 %v342
    %976 = vmatpush1.msra.mxu0 %v341
    %977 = vmatprep.subr.mxu0 %v346
    %978 = vmatpush1.msra.mxu0 %v345
    %979 = vmatprep.subr.mxu0 %v350
    %980 = vmatpush1.msra.mxu0 %v349
    %981 = vmatprep.subr.mxu0 %v354
    %982 = vmatpush1.msra.mxu0 %v353
    %983 = vmatprep.subr.mxu0 %v358
    %984 = vmatpush1.msra.mxu0 %v357
    %985 = vmatprep.subr.mxu0 %v362
    %986 = vmatpush1.msra.mxu0 %v361
    %987 = vmatprep.subr.mxu0 %v366
    %988 = vmatpush1.msra.mxu0 %v365
    %989 = vmatprep.subr.mxu0 %v370
    %990 = vmatpush1.msra.mxu0 %v369
    %991 = vmatprep.subr.mxu0 %v374
    %992 = vmatpush1.msra.mxu0 %v373
    %993 = vmatprep.subr.mxu0 %v378
    %994 = vmatpush1.msra.mxu0 %v377
    %995 = vmatprep.subr.mxu0 %v382
    %996 = vmatpush1.msra.mxu0 %v381
    %997 = vmatprep.subr.mxu0 %v386
    %998 = vmatpush1.msra.mxu0 %v385
    %999 = vmatprep.subr.mxu0 %v390
    %1000 = vmatpush1.msra.mxu0 %v389
    %1001 = vmatprep.subr.mxu0 %v394
    %1002 = vmatpush1.msra.mxu0 %v393
    %1003 = vmatprep.subr.mxu0 %v398
    %1004 = vmatpush1.msra.mxu0 %v397
    %1005 = vmatprep.subr.mxu0 %v402
    %1006 = vmatpush1.msra.mxu0 %v401
    %1007 = vmatprep.subr.mxu0 %v406
    %1008 = vmatpush1.msra.mxu0 %v405
    %1009 = vmatprep.subr.mxu0 %v410
    %1010 = vmatpush1.msra.mxu0 %v409
    %1011 = vmatprep.subr.mxu0 %v414
    %1012 = vmatpush1.msra.mxu0 %v413
    %1013 = vmatprep.mubr.f32.mxu0 %v735
    %1014 = vmatmul.mubr.f32.gmra.mrb[0].mxu0 %v734
    %v1015 = vpop.f32.mrb[0].mxu0
    %v1016 = vadd.f32 %v945, %v1015
    %v1017 = vpop.f32.mrb[0].mxu0
    %v1018 = vadd.f32 %v947, %v1017
    %1019 = vdwg.mxu0
    %v1020 = vsel %vm699, %v874, 0.0
    %v1021 = vrot.slane %v1020, 4
    %v1022 = vadd.f32 %v1020, %v1021
    %v1023 = vrot.slane %v1022, 2
    %v1024 = vadd.f32 %v1022, %v1023
    %v1025 = vrot.slane %v1024, 1
    %v1026 = vadd.f32 %v1024, %v1025
    %v1027 = vsel %vm699, %v876, 0.0
    %v1028 = vrot.slane %v1027, 4
    %v1029 = vadd.f32 %v1027, %v1028
    %v1030 = vrot.slane %v1029, 2
    %v1031 = vadd.f32 %v1029, %v1030
    %v1032 = vrot.slane %v1031, 1
    %v1033 = vadd.f32 %v1031, %v1032
    %v1034 = vsel %vm699, %v1016, 0.0
    %v1035 = vrot.slane %v1034, 4
    %v1036 = vadd.f32 %v1034, %v1035
    %v1037 = vrot.slane %v1036, 2
    %v1038 = vadd.f32 %v1036, %v1037
    %v1039 = vrot.slane %v1038, 1
    %v1040 = vadd.f32 %v1038, %v1039
    %v1041 = vsel %vm699, %v1018, 0.0
    %v1042 = vrot.slane %v1041, 4
    %v1043 = vadd.f32 %v1041, %v1042
    %v1044 = vrot.slane %v1043, 2
    %v1045 = vadd.f32 %v1043, %v1044
    %v1046 = vrot.slane %v1045, 1
    %v1047 = vadd.f32 %v1045, %v1046
    %v1048 = vmul.f32 %v1026, 0.125
    %v1049 = vmul.f32 %v1033, 0.125
    %v1050 = vmul.f32 %v1040, 0.125
    %v1051 = vmul.f32 %v1047, 0.125
    %v1052 = vmul.f32 %v728, %v728
    %v1053 = vmul.f32 %v729, %v729
    %v1054 = vmul.f32 %v730, %v730
    %v1055 = vmul.f32 %v731, %v731
    %v1056 = vsub.f32 %v1048, %v1052
    %v1057 = vsub.f32 %v1049, %v1053
    %v1058 = vsub.f32 %v1050, %v1054
    %v1059 = vsub.f32 %v1051, %v1055
    %v1060 = vadd.f32 %v1056, 1e-05
    %v1061 = vadd.f32 %v1057, 1e-05
    %v1062 = vadd.f32 %v1058, 1e-05
    %v1063 = vadd.f32 %v1059, 1e-05
    %v1064 = vrsqrt.pop %v1060
    %v1065 = vrsqrt.pop %v1061
    %v1066 = vrsqrt.pop %v1062
    %v1067 = vrsqrt.pop %v1063
    %v1068 = vld [vmem:[%s3] sm:$0xf]
    %v1073 = vcombine.low %v1064, %v1065
    %v1074 = vcombine.low %v1066, %v1067
    %v1076 = vunpack.c.l.s4 1966171168
    %v1077 = vunpack.c.0.s8 %v1076
    %v1078 = vlaneseq
    %v1079 = vshrl.u32 %v1078, 7
    %v1080 = vsub.s32 %v1077, %v1079
    %v1081 = vrot.slane %v1073, %v1080
    %v1083 = vunpack.c.l.s4 1966171168
    %v1084 = vunpack.c.0.s8 %v1083
    %v1085 = vlaneseq
    %v1086 = vshrl.u32 %v1085, 7
    %v1087 = vsub.s32 %v1084, %v1086
    %v1088 = vrot.slane %v1074, %v1087
    %v1089 = vcombine.low %v1081, %v1088
    %v1091 = vunpack.c.l.s4 1966171168
    %v1092 = vunpack.c.0.s8 %v1091
    %v1093 = vlaneseq
    %v1094 = vshrl.u32 %v1093, 7
    %v1095 = vsub.s32 %v1092, %v1094
    %v1096 = vrot.slane %v1089, %v1095
    %v1098 = vmul.f32 %v1068, %v1096
    %v1099 = vld [vmem:[%s4] sm:$0xf]
    %v1101 = vlaneseq
    %v1102 = vshrl.u32 %v1101, 7
    %v1103 = vsub.s32 0, %v1102
    %v1104 = vrot.slane %v1098, %v1103
    %v1105 = vlaneseq
    %v1106 = vshrl.u32 %v1105, 7
    %v1107 = vsub.s32 1, %v1106
    %v1108 = vrot.slane %v1098, %v1107
    %v1109 = vlaneseq
    %v1110 = vshrl.u32 %v1109, 7
    %v1111 = vsub.s32 2, %v1110
    %v1112 = vrot.slane %v1098, %v1111
    %v1113 = vlaneseq
    %v1114 = vshrl.u32 %v1113, 7
    %v1115 = vsub.s32 3, %v1114
    %v1116 = vrot.slane %v1098, %v1115
    %v1121 = vmul.f32 %v728, %v1104
    %v1122 = vmul.f32 %v729, %v1108
    %v1123 = vmul.f32 %v730, %v1112
    %v1124 = vmul.f32 %v731, %v1116
    %v1129 = vcombine.low %v1121, %v1122
    %v1130 = vcombine.low %v1123, %v1124
    %v1132 = vunpack.c.l.s4 1966171168
    %v1133 = vunpack.c.0.s8 %v1132
    %v1134 = vlaneseq
    %v1135 = vshrl.u32 %v1134, 7
    %v1136 = vsub.s32 %v1133, %v1135
    %v1137 = vrot.slane %v1129, %v1136
    %v1139 = vunpack.c.l.s4 1966171168
    %v1140 = vunpack.c.0.s8 %v1139
    %v1141 = vlaneseq
    %v1142 = vshrl.u32 %v1141, 7
    %v1143 = vsub.s32 %v1140, %v1142
    %v1144 = vrot.slane %v1130, %v1143
    %v1145 = vcombine.low %v1137, %v1144
    %v1147 = vunpack.c.l.s4 1966171168
    %v1148 = vunpack.c.0.s8 %v1147
    %v1149 = vlaneseq
    %v1150 = vshrl.u32 %v1149, 7
    %v1151 = vsub.s32 %v1148, %v1150
    %v1152 = vrot.slane %v1145, %v1151
    %v1154 = vsub.f32 %v1099, %v1152
    %v1155 = vmul.f32 %v112, %v1104
    %v1156 = vmul.f32 %v114, %v1108
    %v1157 = vmul.f32 %v153, %v1112
    %v1158 = vmul.f32 %v155, %v1116
    %v1160 = vlaneseq
    %v1161 = vshrl.u32 %v1160, 7
    %v1162 = vsub.s32 0, %v1161
    %v1163 = vrot.slane %v1154, %v1162
    %v1164 = vlaneseq
    %v1165 = vshrl.u32 %v1164, 7
    %v1166 = vsub.s32 1, %v1165
    %v1167 = vrot.slane %v1154, %v1166
    %v1168 = vlaneseq
    %v1169 = vshrl.u32 %v1168, 7
    %v1170 = vsub.s32 2, %v1169
    %v1171 = vrot.slane %v1154, %v1170
    %v1172 = vlaneseq
    %v1173 = vshrl.u32 %v1172, 7
    %v1174 = vsub.s32 3, %v1173
    %v1175 = vrot.slane %v1154, %v1174
    %v1180 = vadd.f32 %v1155, %v1163
    %v1181 = vadd.f32 %v1156, %v1167
    %v1182 = vadd.f32 %v1157, %v1171
    %v1183 = vadd.f32 %v1158, %v1175
    %v1184 = vmax.f32 %v1180, 0.0
    %v1185 = vmax.f32 %v1181, 0.0
    %v1186 = vmax.f32 %v1182, 0.0
    %v1187 = vmax.f32 %v1183, 0.0
    %v1188 = vpack.c.bf16 %v1184, %v1184
    %v1189 = vpack.c.bf16 %v1185, %v1185
    %v1190 = vpack.c.bf16 %v1186, %v1186
    %v1191 = vpack.c.bf16 %v1187, %v1187
    %v1196 = vcombine.low %v1188, %v1189
    %v1197 = vcombine.low %v1190, %v1191
    %v1199 = vunpack.c.l.s4 1966171168
    %v1200 = vunpack.c.0.s8 %v1199
    %v1201 = vlaneseq
    %v1202 = vshrl.u32 %v1201, 7
    %v1203 = vsub.s32 %v1200, %v1202
    %v1204 = vrot.slane %v1196, %v1203
    %v1206 = vunpack.c.l.s4 1966171168
    %v1207 = vunpack.c.0.s8 %v1206
    %v1208 = vlaneseq
    %v1209 = vshrl.u32 %v1208, 7
    %v1210 = vsub.s32 %v1207, %v1209
    %v1211 = vrot.slane %v1197, %v1210
    %v1212 = vcombine.low %v1204, %v1211
    %v1214 = vunpack.c.l.s4 1966171168
    %v1215 = vunpack.c.0.s8 %v1214
    %v1216 = vlaneseq
    %v1217 = vshrl.u32 %v1216, 7
    %v1218 = vsub.s32 %v1215, %v1217
    %v1219 = vrot.slane %v1212, %v1218
    %1221 = vst [vmem:[%s5] sm:$0xf] %v1219
    // Predicated region
    $region30: #{pallas_decoder_forward.8} parent=1 // pred_check
      _
    $region31: #{pallas_decoder_forward.8} parent=1 // pred_check_branch
      %1223 = sbr.rel (0) target = $region33
    $region32: #{pallas_decoder_forward.8} parent=1 // pred_region
      _
    $region33: #{pallas_decoder_forward.8} parent=1 // pred_fallthru
      _
    // Predicated region
    $region34: #{pallas_decoder_forward.8} parent=1 // pred_check
      _
    $region35: #{pallas_decoder_forward.8} parent=1 // pred_check_branch
      %1225 = sbr.rel (0) target = $region37
    $region36: #{pallas_decoder_forward.8} parent=1 // pred_region
      _
    $region37: #{pallas_decoder_forward.8} parent=1 // pred_fallthru
      _
    %1226 = vsyncpa [#allocation3], 1
    %1227 = vsyncpa [#allocation5], 1

// kernel: pallas_decoder_forward.10
$region0: #{pallas_decoder_forward.10}
  #allocation0 [shape = 'u32[]', space=smem, size = 0x4, offset = 0x4, fixed_abs, tag = 'smem constant byte address 0x4 - core index']
  #allocation1 [shape = 'u32[144,128]{1,0:T(1,128)}', space=vmem, size = 0x12000, scoped, tag = 'internal scratch']
  %s0 = inlined_call_operand.vmem [shape: bf16[32,576], index: 0, kind: input, shape index: {}]
  %s1 = inlined_call_operand.vmem [shape: bf16[576,128], index: 1, kind: input, shape index: {}]
  %s2 = inlined_call_operand.vmem [shape: f32[128,128], index: 2, kind: input, shape index: {}]
  %s3 = inlined_call_operand.vmem [shape: f32[1,128], index: 3, kind: input, shape index: {}]
  %s4 = inlined_call_operand.vmem [shape: f32[1,128], index: 4, kind: input, shape index: {}]
  %s5 = inlined_call_operand.vmem [shape: bf16[32,128], index: 5, kind: output, shape index: {}]
  %s6 = sld [smem:[#allocation0]]
  $region30: #{pallas_decoder_forward.10} parent=0
    _
  %s8 = ssub.s32 1, %s6
  %s9 = scalar_select 0, %s8, %s6
  // Predicated region
  $region2: #{pallas_decoder_forward.10} parent=0 // pred_check
    _
  $region3: #{pallas_decoder_forward.10} parent=0 // pred_check_branch
    %11 = sbr.rel (0) target = $region5
  $region4: #{pallas_decoder_forward.10} parent=0 // pred_region
    _
  $region5: #{pallas_decoder_forward.10} parent=0 // pred_fallthru
    _
  // Predicated region
  $region6: #{pallas_decoder_forward.10} parent=0 // pred_check
    _
  $region7: #{pallas_decoder_forward.10} parent=0 // pred_check_branch
    %13 = sbr.rel (0) target = $region9
  $region8: #{pallas_decoder_forward.10} parent=0 // pred_region
    _
  $region9: #{pallas_decoder_forward.10} parent=0 // pred_fallthru
    _
  // Predicated region
  $region10: #{pallas_decoder_forward.10} parent=0 // pred_check
    _
  $region11: #{pallas_decoder_forward.10} parent=0 // pred_check_branch
    %15 = sbr.rel (0) target = $region13
  $region12: #{pallas_decoder_forward.10} parent=0 // pred_region
    _
  $region13: #{pallas_decoder_forward.10} parent=0 // pred_fallthru
    _
  // Predicated region
  $region14: #{pallas_decoder_forward.10} parent=0 // pred_check
    _
  $region15: #{pallas_decoder_forward.10} parent=0 // pred_check_branch
    %17 = sbr.rel (0) target = $region17
  $region16: #{pallas_decoder_forward.10} parent=0 // pred_region
    _
  $region17: #{pallas_decoder_forward.10} parent=0 // pred_fallthru
    _
  // Predicated region
  $region18: #{pallas_decoder_forward.10} parent=0 // pred_check
    _
  $region19: #{pallas_decoder_forward.10} parent=0 // pred_check_branch
    %19 = sbr.rel (0) target = $region21
  $region20: #{pallas_decoder_forward.10} parent=0 // pred_region
    _
  $region21: #{pallas_decoder_forward.10} parent=0 // pred_fallthru
    _
  %v21 = vld [vmem:[%s0] sm:$0xff]
  %v22 = vld [vmem:[%s0 + $0x8] sm:$0xff]
  %v23 = vld [vmem:[%s0 + $0x10] sm:$0xf]
  %v24 = vld [vmem:[%s0 + $0x14] sm:$0xff]
  %v25 = vld [vmem:[%s0 + $0x1c] sm:$0xff]
  %v26 = vld [vmem:[%s0 + $0x24] sm:$0xf]
  %v27 = vld [vmem:[%s0 + $0x28] sm:$0xff]
  %v28 = vld [vmem:[%s0 + $0x30] sm:$0xff]
  %v29 = vld [vmem:[%s0 + $0x38] sm:$0xf]
  %v30 = vld [vmem:[%s0 + $0x3c] sm:$0xff]
  %v31 = vld [vmem:[%s0 + $0x44] sm:$0xff]
  %v32 = vld [vmem:[%s0 + $0x4c] sm:$0xf]
  %v33 = vld [vmem:[%s1] sm:$0xf]
  %v34 = vld [vmem:[%s1 + $0x4] sm:$0xf]
  %v35 = vld [vmem:[%s1 + $0x8] sm:$0xf]
  %v36 = vld [vmem:[%s1 + $0xc] sm:$0xf]
  %v37 = vld [vmem:[%s1 + $0x10] sm:$0xf]
  %v38 = vld [vmem:[%s1 + $0x14] sm:$0xf]
  %v39 = vld [vmem:[%s1 + $0x18] sm:$0xf]
  %v40 = vld [vmem:[%s1 + $0x1c] sm:$0xf]
  %v41 = vld [vmem:[%s1 + $0x20] sm:$0xf]
  %v42 = vld [vmem:[%s1 + $0x24] sm:$0xf]
  %v43 = vld [vmem:[%s1 + $0x28] sm:$0xf]
  %v44 = vld [vmem:[%s1 + $0x2c] sm:$0xf]
  %v45 = vld [vmem:[%s1 + $0x30] sm:$0xf]
  %v46 = vld [vmem:[%s1 + $0x34] sm:$0xf]
  %v47 = vld [vmem:[%s1 + $0x38] sm:$0xf]
  %v48 = vld [vmem:[%s1 + $0x3c] sm:$0xf]
  %v49 = vld [vmem:[%s1 + $0x40] sm:$0xf]
  %v50 = vld [vmem:[%s1 + $0x44] sm:$0xf]
  %v51 = vld [vmem:[%s1 + $0x48] sm:$0xf]
  %v52 = vld [vmem:[%s1 + $0x4c] sm:$0xf]
  %v53 = vld [vmem:[%s1 + $0x50] sm:$0xf]
  %v54 = vld [vmem:[%s1 + $0x54] sm:$0xf]
  %v55 = vld [vmem:[%s1 + $0x58] sm:$0xf]
  %v56 = vld [vmem:[%s1 + $0x5c] sm:$0xf]
  %v57 = vld [vmem:[%s1 + $0x60] sm:$0xf]
  %v58 = vld [vmem:[%s1 + $0x64] sm:$0xf]
  %v59 = vld [vmem:[%s1 + $0x68] sm:$0xf]
  %v60 = vld [vmem:[%s1 + $0x6c] sm:$0xf]
  %v61 = vld [vmem:[%s1 + $0x70] sm:$0xf]
  %v62 = vld [vmem:[%s1 + $0x74] sm:$0xf]
  %v63 = vld [vmem:[%s1 + $0x78] sm:$0xf]
  %v64 = vld [vmem:[%s1 + $0x7c] sm:$0xf]
  %v65 = vld [vmem:[%s1 + $0x80] sm:$0xf]
  %v66 = vld [vmem:[%s1 + $0x84] sm:$0xf]
  %v67 = vld [vmem:[%s1 + $0x88] sm:$0xf]
  %v68 = vld [vmem:[%s1 + $0x8c] sm:$0xf]
  %v69 = vld [vmem:[%s1 + $0x90] sm:$0xf]
  %v70 = vld [vmem:[%s1 + $0x94] sm:$0xf]
  %v71 = vld [vmem:[%s1 + $0x98] sm:$0xf]
  %v72 = vld [vmem:[%s1 + $0x9c] sm:$0xf]
  %v73 = vld [vmem:[%s1 + $0xa0] sm:$0xf]
  %v74 = vld [vmem:[%s1 + $0xa4] sm:$0xf]
  %v75 = vld [vmem:[%s1 + $0xa8] sm:$0xf]
  %v76 = vld [vmem:[%s1 + $0xac] sm:$0xf]
  %v77 = vld [vmem:[%s1 + $0xb0] sm:$0xf]
  %v78 = vld [vmem:[%s1 + $0xb4] sm:$0xf]
  %v79 = vld [vmem:[%s1 + $0xb8] sm:$0xf]
  %v80 = vld [vmem:[%s1 + $0xbc] sm:$0xf]
  %v81 = vld [vmem:[%s1 + $0xc0] sm:$0xf]
  %v82 = vld [vmem:[%s1 + $0xc4] sm:$0xf]
  %v83 = vld [vmem:[%s1 + $0xc8] sm:$0xf]
  %v84 = vld [vmem:[%s1 + $0xcc] sm:$0xf]
  %v85 = vld [vmem:[%s1 + $0xd0] sm:$0xf]
  %v86 = vld [vmem:[%s1 + $0xd4] sm:$0xf]
  %v87 = vld [vmem:[%s1 + $0xd8] sm:$0xf]
  %v88 = vld [vmem:[%s1 + $0xdc] sm:$0xf]
  %v89 = vld [vmem:[%s1 + $0xe0] sm:$0xf]
  %v90 = vld [vmem:[%s1 + $0xe4] sm:$0xf]
  %v91 = vld [vmem:[%s1 + $0xe8] sm:$0xf]
  %v92 = vld [vmem:[%s1 + $0xec] sm:$0xf]
  %v93 = vld [vmem:[%s1 + $0xf0] sm:$0xf]
  %v94 = vld [vmem:[%s1 + $0xf4] sm:$0xf]
  %v95 = vld [vmem:[%s1 + $0xf8] sm:$0xf]
  %v96 = vld [vmem:[%s1 + $0xfc] sm:$0xf]
  %v97 = vld [vmem:[%s1 + $0x100] sm:$0xf]
  %v98 = vld [vmem:[%s1 + $0x104] sm:$0xf]
  %v99 = vld [vmem:[%s1 + $0x108] sm:$0xf]
  %v100 = vld [vmem:[%s1 + $0x10c] sm:$0xf]
  %v101 = vld [vmem:[%s1 + $0x110] sm:$0xf]
  %v102 = vld [vmem:[%s1 + $0x114] sm:$0xf]
  %v103 = vld [vmem:[%s1 + $0x118] sm:$0xf]
  %v104 = vld [vmem:[%s1 + $0x11c] sm:$0xf]
  %v117 = vunpack.c.l.b16 %v21
  %v118 = vunpack.c.h.b16 %v21
  %v119 = vunpack.c.l.b16 %v22
  %v120 = vunpack.c.h.b16 %v22
  %v121 = vunpack.c.l.b16 %v23
  %v122 = vunpack.c.l.b16 %v24
  %v123 = vunpack.c.h.b16 %v24
  %v124 = vunpack.c.l.b16 %v25
  %v125 = vunpack.c.h.b16 %v25
  %v126 = vunpack.c.l.b16 %v26
  %v127 = vunpack.c.l.b16 %v27
  %v128 = vunpack.c.h.b16 %v27
  %v129 = vunpack.c.l.b16 %v28
  %v130 = vunpack.c.h.b16 %v28
  %v131 = vunpack.c.l.b16 %v29
  %v132 = vunpack.c.l.b16 %v30
  %v133 = vunpack.c.h.b16 %v30
  %v134 = vunpack.c.l.b16 %v31
  %v135 = vunpack.c.h.b16 %v31
  %v136 = vunpack.c.l.b16 %v32
  %v137 = vpack.c.b16 %v122, %v117
  %v138 = vpack.c.b16 %v123, %v118
  %v139 = vpack.c.b16 %v124, %v119
  %v140 = vpack.c.b16 %v125, %v120
  %v141 = vpack.c.b16 %v126, %v121
  %v142 = vpack.c.b16 %v132, %v127
  %v143 = vpack.c.b16 %v133, %v128
  %v144 = vpack.c.b16 %v134, %v129
  %v145 = vpack.c.b16 %v135, %v130
  %v146 = vpack.c.b16 %v136, %v131
  %v227 = vunpack.c.l.b16 %v33
  %v228 = vunpack.c.l.b16 %v34
  %v229 = vunpack.c.l.b16 %v35
  %v230 = vunpack.c.l.b16 %v36
  %v231 = vunpack.c.l.b16 %v37
  %v232 = vunpack.c.l.b16 %v38
  %v233 = vunpack.c.l.b16 %v39
  %v234 = vunpack.c.l.b16 %v40
  %v235 = vunpack.c.l.b16 %v41
  %v236 = vunpack.c.l.b16 %v42
  %v237 = vunpack.c.l.b16 %v43
  %v238 = vunpack.c.l.b16 %v44
  %v239 = vunpack.c.l.b16 %v45
  %v240 = vunpack.c.l.b16 %v46
  %v241 = vunpack.c.l.b16 %v47
  %v242 = vunpack.c.l.b16 %v48
  %v243 = vunpack.c.l.b16 %v49
  %v244 = vunpack.c.l.b16 %v50
  %v245 = vunpack.c.l.b16 %v51
  %v246 = vunpack.c.l.b16 %v52
  %v247 = vunpack.c.l.b16 %v53
  %v248 = vunpack.c.l.b16 %v54
  %v249 = vunpack.c.l.b16 %v55
  %v250 = vunpack.c.l.b16 %v56
  %v251 = vunpack.c.l.b16 %v57
  %v252 = vunpack.c.l.b16 %v58
  %v253 = vunpack.c.l.b16 %v59
  %v254 = vunpack.c.l.b16 %v60
  %v255 = vunpack.c.l.b16 %v61
  %v256 = vunpack.c.l.b16 %v62
  %v257 = vunpack.c.l.b16 %v63
  %v258 = vunpack.c.l.b16 %v64
  %v259 = vunpack.c.l.b16 %v65
  %v260 = vunpack.c.l.b16 %v66
  %v261 = vunpack.c.l.b16 %v67
  %v262 = vunpack.c.l.b16 %v68
  %v263 = vunpack.c.l.b16 %v69
  %v264 = vunpack.c.l.b16 %v70
  %v265 = vunpack.c.l.b16 %v71
  %v266 = vunpack.c.l.b16 %v72
  %v267 = vunpack.c.l.b16 %v73
  %v268 = vunpack.c.l.b16 %v74
  %v269 = vunpack.c.l.b16 %v75
  %v270 = vunpack.c.l.b16 %v76
  %v271 = vunpack.c.l.b16 %v77
  %v272 = vunpack.c.l.b16 %v78
  %v273 = vunpack.c.l.b16 %v79
  %v274 = vunpack.c.l.b16 %v80
  %v275 = vunpack.c.l.b16 %v81
  %v276 = vunpack.c.l.b16 %v82
  %v277 = vunpack.c.l.b16 %v83
  %v278 = vunpack.c.l.b16 %v84
  %v279 = vunpack.c.l.b16 %v85
  %v280 = vunpack.c.l.b16 %v86
  %v281 = vunpack.c.l.b16 %v87
  %v282 = vunpack.c.l.b16 %v88
  %v283 = vunpack.c.l.b16 %v89
  %v284 = vunpack.c.l.b16 %v90
  %v285 = vunpack.c.l.b16 %v91
  %v286 = vunpack.c.l.b16 %v92
  %v287 = vunpack.c.l.b16 %v93
  %v288 = vunpack.c.l.b16 %v94
  %v289 = vunpack.c.l.b16 %v95
  %v290 = vunpack.c.l.b16 %v96
  %v291 = vunpack.c.l.b16 %v97
  %v292 = vunpack.c.l.b16 %v98
  %v293 = vunpack.c.l.b16 %v99
  %v294 = vunpack.c.l.b16 %v100
  %v295 = vunpack.c.l.b16 %v101
  %v296 = vunpack.c.l.b16 %v102
  %v297 = vunpack.c.l.b16 %v103
  %v298 = vunpack.c.l.b16 %v104
  %v299 = vpack.c.b16 %v228, %v227
  %v300 = vpack.c.b16 %v230, %v229
  %v301 = vpack.c.b16 %v232, %v231
  %v302 = vpack.c.b16 %v234, %v233
  %v303 = vpack.c.b16 %v236, %v235
  %v304 = vpack.c.b16 %v238, %v237
  %v305 = vpack.c.b16 %v240, %v239
  %v306 = vpack.c.b16 %v242, %v241
  %v307 = vpack.c.b16 %v244, %v243
  %v308 = vpack.c.b16 %v246, %v245
  %v309 = vpack.c.b16 %v248, %v247
  %v310 = vpack.c.b16 %v250, %v249
  %v311 = vpack.c.b16 %v252, %v251
  %v312 = vpack.c.b16 %v254, %v253
  %v313 = vpack.c.b16 %v256, %v255
  %v314 = vpack.c.b16 %v258, %v257
  %v315 = vpack.c.b16 %v260, %v259
  %v316 = vpack.c.b16 %v262, %v261
  %v317 = vpack.c.b16 %v264, %v263
  %v318 = vpack.c.b16 %v266, %v265
  %v319 = vpack.c.b16 %v268, %v267
  %v320 = vpack.c.b16 %v270, %v269
  %v321 = vpack.c.b16 %v272, %v271
  %v322 = vpack.c.b16 %v274, %v273
  %v323 = vpack.c.b16 %v276, %v275
  %v324 = vpack.c.b16 %v278, %v277
  %v325 = vpack.c.b16 %v280, %v279
  %v326 = vpack.c.b16 %v282, %v281
  %v327 = vpack.c.b16 %v284, %v283
  %v328 = vpack.c.b16 %v286, %v285
  %v329 = vpack.c.b16 %v288, %v287
  %v330 = vpack.c.b16 %v290, %v289
  %v331 = vpack.c.b16 %v292, %v291
  %v332 = vpack.c.b16 %v294, %v293
  %v333 = vpack.c.b16 %v296, %v295
  %v334 = vpack.c.b16 %v298, %v297
  %vm371 = vcmask 523264
  %v373 = vsel %vm371, %v141, 0
  %v376 = vsel %vm371, %v146, 0
  %378 = vmatprep.subr.bf16.mxu0 0
  %379 = vmatpush1.bf16.msra.mxu0 %v299
  %380 = vmatprep.subr.bf16.mxu0 0
  %381 = vmatpush1.bf16.msra.mxu0 %v300
  %382 = vmatprep.subr.bf16.mxu0 0
  %383 = vmatpush1.bf16.msra.mxu0 %v301
  %384 = vmatprep.subr.bf16.mxu0 0
  %385 = vmatpush1.bf16.msra.mxu0 %v302
  %386 = vmatprep.subr.bf16.mxu0 0
  %387 = vmatpush1.bf16.msra.mxu0 %v303
  %388 = vmatprep.subr.bf16.mxu0 0
  %389 = vmatpush1.bf16.msra.mxu0 %v304
  %390 = vmatprep.subr.bf16.mxu0 0
  %391 = vmatpush1.bf16.msra.mxu0 %v305
  %392 = vmatprep.subr.bf16.mxu0 0
  %393 = vmatpush1.bf16.msra.mxu0 %v306
  %394 = vmatprep.subr.bf16.mxu0 0
  %395 = vmatpush1.bf16.msra.mxu0 %v307
  %396 = vmatprep.subr.bf16.mxu0 0
  %397 = vmatpush1.bf16.msra.mxu0 %v308
  %398 = vmatprep.subr.bf16.mxu0 0
  %399 = vmatpush1.bf16.msra.mxu0 %v309
  %400 = vmatprep.subr.bf16.mxu0 0
  %401 = vmatpush1.bf16.msra.mxu0 %v310
  %402 = vmatprep.subr.bf16.mxu0 0
  %403 = vmatpush1.bf16.msra.mxu0 %v311
  %404 = vmatprep.subr.bf16.mxu0 0
  %405 = vmatpush1.bf16.msra.mxu0 %v312
  %406 = vmatprep.subr.bf16.mxu0 0
  %407 = vmatpush1.bf16.msra.mxu0 %v313
  %408 = vmatprep.subr.bf16.mxu0 0
  %409 = vmatpush1.bf16.msra.mxu0 %v314
  %410 = vmatprep.mubr.bf16.mxu0 %v138
  %411 = vmatmul.mubr.bf16.gmra.mrb[0].mxu0 %v137
  %v412 = vpop.f32.mrb[0].mxu0
  %v413 = vadd.f32 0.0, %v412
  %v414 = vpop.f32.mrb[0].mxu0
  %v415 = vpop.f32.mrb[0].mxu0
  %v416 = vadd.f32 0.0, %v415
  %v417 = vpop.f32.mrb[0].mxu0
  %418 = vmatprep.mubr.bf16.mxu0 %v143
  %419 = vmatmul.mubr.bf16.gmra.mrb[0].mxu0 %v142
  %v420 = vpop.f32.mrb[0].mxu0
  %v421 = vadd.f32 0.0, %v420
  %v422 = vpop.f32.mrb[0].mxu0
  %v423 = vpop.f32.mrb[0].mxu0
  %v424 = vadd.f32 0.0, %v423
  %v425 = vpop.f32.mrb[0].mxu0
  %426 = vdwg.mxu0
  %427 = vmatprep.subr.bf16.mxu0 0
  %428 = vmatpush1.bf16.msra.mxu0 %v315
  %429 = vmatprep.subr.bf16.mxu0 0
  %430 = vmatpush1.bf16.msra.mxu0 %v316
  %431 = vmatprep.subr.bf16.mxu0 0
  %432 = vmatpush1.bf16.msra.mxu0 %v317
  %433 = vmatprep.subr.bf16.mxu0 0
  %434 = vmatpush1.bf16.msra.mxu0 %v318
  %435 = vmatprep.subr.bf16.mxu0 0
  %436 = vmatpush1.bf16.msra.mxu0 %v319
  %437 = vmatprep.subr.bf16.mxu0 0
  %438 = vmatpush1.bf16.msra.mxu0 %v320
  %439 = vmatprep.subr.bf16.mxu0 0
  %440 = vmatpush1.bf16.msra.mxu0 %v321
  %441 = vmatprep.subr.bf16.mxu0 0
  %442 = vmatpush1.bf16.msra.mxu0 %v322
  %443 = vmatprep.subr.bf16.mxu0 0
  %444 = vmatpush1.bf16.msra.mxu0 %v323
  %445 = vmatprep.subr.bf16.mxu0 0
  %446 = vmatpush1.bf16.msra.mxu0 %v324
  %447 = vmatprep.subr.bf16.mxu0 0
  %448 = vmatpush1.bf16.msra.mxu0 %v325
  %449 = vmatprep.subr.bf16.mxu0 0
  %450 = vmatpush1.bf16.msra.mxu0 %v326
  %451 = vmatprep.subr.bf16.mxu0 0
  %452 = vmatpush1.bf16.msra.mxu0 %v327
  %453 = vmatprep.subr.bf16.mxu0 0
  %454 = vmatpush1.bf16.msra.mxu0 %v328
  %455 = vmatprep.subr.bf16.mxu0 0
  %456 = vmatpush1.bf16.msra.mxu0 %v329
  %457 = vmatprep.subr.bf16.mxu0 0
  %458 = vmatpush1.bf16.msra.mxu0 %v330
  %459 = vmatprep.mubr.bf16.mxu0 %v140
  %460 = vmatmul.mubr.bf16.gmra.mrb[0].mxu0 %v139
  %v461 = vpop.f32.mrb[0].mxu0
  %v462 = vadd.f32 %v413, %v461
  %v463 = vpop.f32.mrb[0].mxu0
  %v464 = vpop.f32.mrb[0].mxu0
  %v465 = vadd.f32 %v416, %v464
  %v466 = vpop.f32.mrb[0].mxu0
  %467 = vmatprep.mubr.bf16.mxu0 %v145
  %468 = vmatmul.mubr.bf16.gmra.mrb[0].mxu0 %v144
  %v469 = vpop.f32.mrb[0].mxu0
  %v470 = vadd.f32 %v421, %v469
  %v471 = vpop.f32.mrb[0].mxu0
  %v472 = vpop.f32.mrb[0].mxu0
  %v473 = vadd.f32 %v424, %v472
  %v474 = vpop.f32.mrb[0].mxu0
  %475 = vdwg.mxu0
  %476 = vmatprep.subr.bf16.mxu0 0
  %477 = vmatpush1.bf16.msra.mxu0 %v331
  %478 = vmatprep.subr.bf16.mxu0 0
  %479 = vmatpush1.bf16.msra.mxu0 %v332
  %480 = vmatprep.subr.bf16.mxu0 0
  %481 = vmatpush1.bf16.msra.mxu0 %v333
  %482 = vmatprep.subr.bf16.mxu0 0
  %483 = vmatpush1.bf16.msra.mxu0 %v334
  %484 = vmatprep.subr.bf16.mxu0 0
  %485 = vmatpush1.bf16.msra.mxu0 0
  %486 = vmatprep.subr.bf16.mxu0 0
  %487 = vmatpush1.bf16.msra.mxu0 0
  %488 = vmatprep.subr.bf16.mxu0 0
  %489 = vmatpush1.bf16.msra.mxu0 0
  %490 = vmatprep.subr.bf16.mxu0 0
  %491 = vmatpush1.bf16.msra.mxu0 0
  %492 = vmatprep.subr.bf16.mxu0 0
  %493 = vmatpush1.bf16.msra.mxu0 0
  %494 = vmatprep.subr.bf16.mxu0 0
  %495 = vmatpush1.bf16.msra.mxu0 0
  %496 = vmatprep.subr.bf16.mxu0 0
  %497 = vmatpush1.bf16.msra.mxu0 0
  %498 = vmatprep.subr.bf16.mxu0 0
  %499 = vmatpush1.bf16.msra.mxu0 0
  %500 = vmatprep.subr.bf16.mxu0 0
  %501 = vmatpush1.bf16.msra.mxu0 0
  %502 = vmatprep.subr.bf16.mxu0 0
  %503 = vmatpush1.bf16.msra.mxu0 0
  %504 = vmatprep.subr.bf16.mxu0 0
  %505 = vmatpush1.bf16.msra.mxu0 0
  %506 = vmatprep.subr.bf16.mxu0 0
  %507 = vmatpush1.bf16.msra.mxu0 0
  %508 = vmatprep.mubr.bf16.mxu0 0
  %509 = vmatmul.mubr.bf16.gmra.mrb[0].mxu0 %v373
  %v510 = vpop.f32.mrb[0].mxu0
  %v511 = vadd.f32 %v462, %v510
  %v512 = vpop.f32.mrb[0].mxu0
  %v513 = vpop.f32.mrb[0].mxu0
  %v514 = vadd.f32 %v465, %v513
  %v515 = vpop.f32.mrb[0].mxu0
  %516 = vmatprep.mubr.bf16.mxu0 0
  %517 = vmatmul.mubr.bf16.gmra.mrb[0].mxu0 %v376
  %v518 = vpop.f32.mrb[0].mxu0
  %v519 = vadd.f32 %v470, %v518
  %v520 = vpop.f32.mrb[0].mxu0
  %v521 = vpop.f32.mrb[0].mxu0
  %v522 = vadd.f32 %v473, %v521
  %v523 = vpop.f32.mrb[0].mxu0
  %524 = vdwg.mxu0
  %v525 = vld [vmem:[%s2] sm:$0xff]
  %v526 = vld [vmem:[%s2 + $0x8] sm:$0xff]
  %v527 = vld [vmem:[%s2 + $0x10] sm:$0xff]
  %v528 = vld [vmem:[%s2 + $0x18] sm:$0xff]
  %v529 = vld [vmem:[%s2 + $0x20] sm:$0xff]
  %v530 = vld [vmem:[%s2 + $0x28] sm:$0xff]
  %v531 = vld [vmem:[%s2 + $0x30] sm:$0xff]
  %v532 = vld [vmem:[%s2 + $0x38] sm:$0xff]
  %v533 = vld [vmem:[%s2 + $0x40] sm:$0xff]
  %v534 = vld [vmem:[%s2 + $0x48] sm:$0xff]
  %v535 = vld [vmem:[%s2 + $0x50] sm:$0xff]
  %v536 = vld [vmem:[%s2 + $0x58] sm:$0xff]
  %v537 = vld [vmem:[%s2 + $0x60] sm:$0xff]
  %v538 = vld [vmem:[%s2 + $0x68] sm:$0xff]
  %v539 = vld [vmem:[%s2 + $0x70] sm:$0xff]
  %v540 = vld [vmem:[%s2 + $0x78] sm:$0xff]
  %541 = vmatprep.subr.mxu0 0.0
  %542 = vmatpush1.msra.mxu0 %v525
  %543 = vmatprep.subr.mxu0 0.0
  %544 = vmatpush1.msra.mxu0 %v526
  %545 = vmatprep.subr.mxu0 0.0
  %546 = vmatpush1.msra.mxu0 %v527
  %547 = vmatprep.subr.mxu0 0.0
  %548 = vmatpush1.msra.mxu0 %v528
  %549 = vmatprep.subr.mxu0 0.0
  %550 = vmatpush1.msra.mxu0 %v529
  %551 = vmatprep.subr.mxu0 0.0
  %552 = vmatpush1.msra.mxu0 %v530
  %553 = vmatprep.subr.mxu0 0.0
  %554 = vmatpush1.msra.mxu0 %v531
  %555 = vmatprep.subr.mxu0 0.0
  %556 = vmatpush1.msra.mxu0 %v532
  %557 = vmatprep.subr.mxu0 0.0
  %558 = vmatpush1.msra.mxu0 %v533
  %559 = vmatprep.subr.mxu0 0.0
  %560 = vmatpush1.msra.mxu0 %v534
  %561 = vmatprep.subr.mxu0 0.0
  %562 = vmatpush1.msra.mxu0 %v535
  %563 = vmatprep.subr.mxu0 0.0
  %564 = vmatpush1.msra.mxu0 %v536
  %565 = vmatprep.subr.mxu0 0.0
  %566 = vmatpush1.msra.mxu0 %v537
  %567 = vmatprep.subr.mxu0 0.0
  %568 = vmatpush1.msra.mxu0 %v538
  %569 = vmatprep.subr.mxu0 0.0
  %570 = vmatpush1.msra.mxu0 %v539
  %571 = vmatprep.subr.mxu0 0.0
  %572 = vmatpush1.msra.mxu0 %v540
  %573 = vmatprep.subr.mxu0 0.0
  %574 = vmatpush1.msra.mxu0 0.0
  %575 = vmatprep.subr.mxu0 0.0
  %576 = vmatpush1.msra.mxu0 0.0
  %577 = vmatprep.subr.mxu0 0.0
  %578 = vmatpush1.msra.mxu0 0.0
  %579 = vmatprep.subr.mxu0 0.0
  %580 = vmatpush1.msra.mxu0 0.0
  %581 = vmatprep.subr.mxu0 0.0
  %582 = vmatpush1.msra.mxu0 0.0
  %583 = vmatprep.subr.mxu0 0.0
  %584 = vmatpush1.msra.mxu0 0.0
  %585 = vmatprep.subr.mxu0 0.0
  %586 = vmatpush1.msra.mxu0 0.0
  %587 = vmatprep.subr.mxu0 0.0
  %588 = vmatpush1.msra.mxu0 0.0
  %589 = vmatprep.subr.mxu0 0.0
  %590 = vmatpush1.msra.mxu0 0.0
  %591 = vmatprep.subr.mxu0 0.0
  %592 = vmatpush1.msra.mxu0 0.0
  %593 = vmatprep.subr.mxu0 0.0
  %594 = vmatpush1.msra.mxu0 0.0
  %595 = vmatprep.subr.mxu0 0.0
  %596 = vmatpush1.msra.mxu0 0.0
  %597 = vmatprep.subr.mxu0 0.0
  %598 = vmatpush1.msra.mxu0 0.0
  %599 = vmatprep.subr.mxu0 0.0
  %600 = vmatpush1.msra.mxu0 0.0
  %601 = vmatprep.subr.mxu0 0.0
  %602 = vmatpush1.msra.mxu0 0.0
  %603 = vmatprep.subr.mxu0 0.0
  %604 = vmatpush1.msra.mxu0 0.0
  %605 = vmatprep.mubr.f32.mxu0 0.0
  %606 = vmatmul.mubr.f32.gmra.mrb[0].mxu0 %v511
  %v607 = vpop.f32.mrb[0].mxu0
  %v608 = vadd.f32 0.0, %v607
  %v609 = vpop.f32.mrb[0].mxu0
  %610 = vmatprep.mubr.f32.mxu0 0.0
  %611 = vmatmul.mubr.f32.gmra.mrb[0].mxu0 %v514
  %v612 = vpop.f32.mrb[0].mxu0
  %v613 = vadd.f32 0.0, %v612
  %v614 = vpop.f32.mrb[0].mxu0
  %615 = vmatprep.mubr.f32.mxu0 0.0
  %616 = vmatmul.mubr.f32.gmra.mrb[0].mxu0 %v519
  %v617 = vpop.f32.mrb[0].mxu0
  %v618 = vadd.f32 0.0, %v617
  %v619 = vpop.f32.mrb[0].mxu0
  %620 = vmatprep.mubr.f32.mxu0 0.0
  %621 = vmatmul.mubr.f32.gmra.mrb[0].mxu0 %v522
  %v622 = vpop.f32.mrb[0].mxu0
  %v623 = vadd.f32 0.0, %v622
  %v624 = vpop.f32.mrb[0].mxu0
  %625 = vdwg.mxu0
  %v626 = vadd.f32 %v608, %v613
  %v627 = vadd.f32 %v626, %v618
  %v628 = vadd.f32 %v627, %v623
  %v629 = vrot.slane %v628, 4
  %v630 = vadd.f32 %v628, %v629
  %v631 = vrot.slane %v630, 2
  %v632 = vadd.f32 %v630, %v631
  %v633 = vrot.slane %v632, 1
  %v634 = vadd.f32 %v632, %v633
  %v635 = vmul.f32 %v634, 0.0078125
  %v636 = vmul.f32 %v511, %v511
  %v637 = vmul.f32 %v514, %v514
  %v638 = vmul.f32 %v519, %v519
  %v639 = vmul.f32 %v522, %v522
  %640 = vmatprep.subr.mxu0 0.0
  %641 = vmatpush1.msra.mxu0 %v525
  %642 = vmatprep.subr.mxu0 0.0
  %643 = vmatpush1.msra.mxu0 %v526
  %644 = vmatprep.subr.mxu0 0.0
  %645 = vmatpush1.msra.mxu0 %v527
  %646 = vmatprep.subr.mxu0 0.0
  %647 = vmatpush1.msra.mxu0 %v528
  %648 = vmatprep.subr.mxu0 0.0
  %649 = vmatpush1.msra.mxu0 %v529
  %650 = vmatprep.subr.mxu0 0.0
  %651 = vmatpush1.msra.mxu0 %v530
  %652 = vmatprep.subr.mxu0 0.0
  %653 = vmatpush1.msra.mxu0 %v531
  %654 = vmatprep.subr.mxu0 0.0
  %655 = vmatpush1.msra.mxu0 %v532
  %656 = vmatprep.subr.mxu0 0.0
  %657 = vmatpush1.msra.mxu0 %v533
  %658 = vmatprep.subr.mxu0 0.0
  %659 = vmatpush1.msra.mxu0 %v534
  %660 = vmatprep.subr.mxu0 0.0
  %661 = vmatpush1.msra.mxu0 %v535
  %662 = vmatprep.subr.mxu0 0.0
  %663 = vmatpush1.msra.mxu0 %v536
  %664 = vmatprep.subr.mxu0 0.0
  %665 = vmatpush1.msra.mxu0 %v537
  %666 = vmatprep.subr.mxu0 0.0
  %667 = vmatpush1.msra.mxu0 %v538
  %668 = vmatprep.subr.mxu0 0.0
  %669 = vmatpush1.msra.mxu0 %v539
  %670 = vmatprep.subr.mxu0 0.0
  %671 = vmatpush1.msra.mxu0 %v540
  %672 = vmatprep.subr.mxu0 0.0
  %673 = vmatpush1.msra.mxu0 0.0
  %674 = vmatprep.subr.mxu0 0.0
  %675 = vmatpush1.msra.mxu0 0.0
  %676 = vmatprep.subr.mxu0 0.0
  %677 = vmatpush1.msra.mxu0 0.0
  %678 = vmatprep.subr.mxu0 0.0
  %679 = vmatpush1.msra.mxu0 0.0
  %680 = vmatprep.subr.mxu0 0.0
  %681 = vmatpush1.msra.mxu0 0.0
  %682 = vmatprep.subr.mxu0 0.0
  %683 = vmatpush1.msra.mxu0 0.0
  %684 = vmatprep.subr.mxu0 0.0
  %685 = vmatpush1.msra.mxu0 0.0
  %686 = vmatprep.subr.mxu0 0.0
  %687 = vmatpush1.msra.mxu0 0.0
  %688 = vmatprep.subr.mxu0 0.0
  %689 = vmatpush1.msra.mxu0 0.0
  %690 = vmatprep.subr.mxu0 0.0
  %691 = vmatpush1.msra.mxu0 0.0
  %692 = vmatprep.subr.mxu0 0.0
  %693 = vmatpush1.msra.mxu0 0.0
  %694 = vmatprep.subr.mxu0 0.0
  %695 = vmatpush1.msra.mxu0 0.0
  %696 = vmatprep.subr.mxu0 0.0
  %697 = vmatpush1.msra.mxu0 0.0
  %698 = vmatprep.subr.mxu0 0.0
  %699 = vmatpush1.msra.mxu0 0.0
  %700 = vmatprep.subr.mxu0 0.0
  %701 = vmatpush1.msra.mxu0 0.0
  %702 = vmatprep.subr.mxu0 0.0
  %703 = vmatpush1.msra.mxu0 0.0
  %704 = vmatprep.mubr.f32.mxu0 0.0
  %705 = vmatmul.mubr.f32.gmra.mrb[0].mxu0 %v636
  %v706 = vpop.f32.mrb[0].mxu0
  %v707 = vadd.f32 0.0, %v706
  %v708 = vpop.f32.mrb[0].mxu0
  %709 = vmatprep.mubr.f32.mxu0 0.0
  %710 = vmatmul.mubr.f32.gmra.mrb[0].mxu0 %v637
  %v711 = vpop.f32.mrb[0].mxu0
  %v712 = vadd.f32 0.0, %v711
  %v713 = vpop.f32.mrb[0].mxu0
  %714 = vmatprep.mubr.f32.mxu0 0.0
  %715 = vmatmul.mubr.f32.gmra.mrb[0].mxu0 %v638
  %v716 = vpop.f32.mrb[0].mxu0
  %v717 = vadd.f32 0.0, %v716
  %v718 = vpop.f32.mrb[0].mxu0
  %719 = vmatprep.mubr.f32.mxu0 0.0
  %720 = vmatmul.mubr.f32.gmra.mrb[0].mxu0 %v639
  %v721 = vpop.f32.mrb[0].mxu0
  %v722 = vadd.f32 0.0, %v721
  %v723 = vpop.f32.mrb[0].mxu0
  %724 = vdwg.mxu0
  %v725 = vadd.f32 %v707, %v712
  %v726 = vadd.f32 %v725, %v717
  %v727 = vadd.f32 %v726, %v722
  %v728 = vrot.slane %v727, 4
  %v729 = vadd.f32 %v727, %v728
  %v730 = vrot.slane %v729, 2
  %v731 = vadd.f32 %v729, %v730
  %v732 = vrot.slane %v731, 1
  %v733 = vadd.f32 %v731, %v732
  %v734 = vmul.f32 %v733, 0.0078125
  %v735 = vmul.f32 %v635, %v635
  %v736 = vsub.f32 %v734, %v735
  %v737 = vadd.f32 %v736, 1e-05
  %v738 = vrsqrt.pop %v737
  %v739 = vld [vmem:[%s3] sm:$0x1]
  %v740 = vmul.f32 %v739, %v738
  %v741 = vld [vmem:[%s4] sm:$0x1]
  %v742 = vmul.f32 %v635, %v740
  %v743 = vsub.f32 %v741, %v742
  %v745 = vlaneseq
  %v746 = vshrl.u32 %v745, 7
  %v747 = vsub.s32 0, %v746
  %v748 = vrot.slane %v740, %v747
  %v750 = vmul.f32 %v511, %v748
  %v751 = vmul.f32 %v514, %v748
  %v752 = vmul.f32 %v519, %v748
  %v753 = vmul.f32 %v522, %v748
  %v755 = vlaneseq
  %v756 = vshrl.u32 %v755, 7
  %v757 = vsub.s32 0, %v756
  %v758 = vrot.slane %v743, %v757
  %v760 = vadd.f32 %v750, %v758
  %v761 = vadd.f32 %v751, %v758
  %v762 = vadd.f32 %v752, %v758
  %v763 = vadd.f32 %v753, %v758
  %v764 = vmax.f32 %v760, 0.0
  %v765 = vmax.f32 %v761, 0.0
  %v766 = vmax.f32 %v762, 0.0
  %v767 = vmax.f32 %v763, 0.0
  %v768 = vpack.c.bf16 %v765, %v764
  %v769 = vpack.c.bf16 %v767, %v766
  %v772 = vunpack.c.l.b16 %v768
  %v773 = vunpack.c.h.b16 %v768
  %v774 = vunpack.c.l.b16 %v769
  %v775 = vunpack.c.h.b16 %v769
  %v776 = vpack.c.b16 %v772, %v772
  %v777 = vpack.c.b16 %v773, %v773
  %v778 = vpack.c.b16 %v774, %v774
  %v779 = vpack.c.b16 %v775, %v775
  %784 = vst [vmem:[%s5] sm:$0xf] %v776
  %785 = vst [vmem:[%s5 + $0x4] sm:$0xf] %v777
  %786 = vst [vmem:[%s5 + $0x8] sm:$0xf] %v778
  %787 = vst [vmem:[%s5 + $0xc] sm:$0xf] %v779
  // Predicated region
  $region22: #{pallas_decoder_forward.10} parent=0 // pred_check
    _
  $region23: #{pallas_decoder_forward.10} parent=0 // pred_check_branch
    %789 = sbr.rel (0) target = $region25
  $region24: #{pallas_decoder_forward.10} parent=0 // pred_region
    _
  $region25: #{pallas_decoder_forward.10} parent=0 // pred_fallthru
    _
  // Predicated region
  $region26: #{pallas_decoder_forward.10} parent=0 // pred_check
    _
  $region27: #{pallas_decoder_forward.10} parent=0 // pred_check_branch
    %791 = sbr.rel (0) target = $region29
  $region28: #{pallas_decoder_forward.10} parent=0 // pred_region
    _
  $region29: #{pallas_decoder_forward.10} parent=0 // pred_fallthru
    _

// kernel: pallas_decoder_forward.9
$region0: #{pallas_decoder_forward.9}
  #allocation0 [shape = 'u32[]', space=smem, size = 0x4, offset = 0x4, fixed_abs, tag = 'smem constant byte address 0x4 - core index']
  #allocation1 [shape = 'u32[144,128]{1,0:T(1,128)}', space=vmem, size = 0x12000, scoped, tag = 'internal scratch']
  %s0 = inlined_call_operand.vmem [shape: bf16[8,1152], index: 0, kind: input, shape index: {}]
  %s1 = inlined_call_operand.vmem [shape: bf16[1152,256], index: 1, kind: input, shape index: {}]
  %s2 = inlined_call_operand.vmem [shape: f32[256,256], index: 2, kind: input, shape index: {}]
  %s3 = inlined_call_operand.vmem [shape: f32[1,256], index: 3, kind: input, shape index: {}]
  %s4 = inlined_call_operand.vmem [shape: f32[1,256], index: 4, kind: input, shape index: {}]
  %s5 = inlined_call_operand.vmem [shape: bf16[8,256], index: 5, kind: output, shape index: {}]
  %s6 = sld [smem:[#allocation0]]
  $region30: #{pallas_decoder_forward.9} parent=0
    _
  %s8 = ssub.s32 1, %s6
  %s9 = scalar_select 0, %s8, %s6
  // Predicated region
  $region2: #{pallas_decoder_forward.9} parent=0 // pred_check
    _
  $region3: #{pallas_decoder_forward.9} parent=0 // pred_check_branch
    %11 = sbr.rel (0) target = $region5
  $region4: #{pallas_decoder_forward.9} parent=0 // pred_region
    _
  $region5: #{pallas_decoder_forward.9} parent=0 // pred_fallthru
    _
  // Predicated region
  $region6: #{pallas_decoder_forward.9} parent=0 // pred_check
    _
  $region7: #{pallas_decoder_forward.9} parent=0 // pred_check_branch
    %13 = sbr.rel (0) target = $region9
  $region8: #{pallas_decoder_forward.9} parent=0 // pred_region
    _
  $region9: #{pallas_decoder_forward.9} parent=0 // pred_fallthru
    _
  // Predicated region
  $region10: #{pallas_decoder_forward.9} parent=0 // pred_check
    _
  $region11: #{pallas_decoder_forward.9} parent=0 // pred_check_branch
    %15 = sbr.rel (0) target = $region13
  $region12: #{pallas_decoder_forward.9} parent=0 // pred_region
    _
  $region13: #{pallas_decoder_forward.9} parent=0 // pred_fallthru
    _
  // Predicated region
  $region14: #{pallas_decoder_forward.9} parent=0 // pred_check
    _
  $region15: #{pallas_decoder_forward.9} parent=0 // pred_check_branch
    %17 = sbr.rel (0) target = $region17
  $region16: #{pallas_decoder_forward.9} parent=0 // pred_region
    _
  $region17: #{pallas_decoder_forward.9} parent=0 // pred_fallthru
    _
  // Predicated region
  $region18: #{pallas_decoder_forward.9} parent=0 // pred_check
    _
  $region19: #{pallas_decoder_forward.9} parent=0 // pred_check_branch
    %19 = sbr.rel (0) target = $region21
  $region20: #{pallas_decoder_forward.9} parent=0 // pred_region
    _
  $region21: #{pallas_decoder_forward.9} parent=0 // pred_fallthru
    _
  %v21 = vld [vmem:[%s0] sm:$0xff]
  %v22 = vld [vmem:[%s0 + $0x8] sm:$0xff]
  %v23 = vld [vmem:[%s0 + $0x10] sm:$0xff]
  %v24 = vld [vmem:[%s0 + $0x18] sm:$0xff]
  %v25 = vld [vmem:[%s0 + $0x20] sm:$0xf]
  %v26 = vld [vmem:[%s1] sm:$0xff]
  %v27 = vld [vmem:[%s1 + $0x8] sm:$0xff]
  %v28 = vld [vmem:[%s1 + $0x10] sm:$0xff]
  %v29 = vld [vmem:[%s1 + $0x18] sm:$0xff]
  %v30 = vld [vmem:[%s1 + $0x20] sm:$0xff]
  %v31 = vld [vmem:[%s1 + $0x28] sm:$0xff]
  %v32 = vld [vmem:[%s1 + $0x30] sm:$0xff]
  %v33 = vld [vmem:[%s1 + $0x38] sm:$0xff]
  %v34 = vld [vmem:[%s1 + $0x40] sm:$0xff]
  %v35 = vld [vmem:[%s1 + $0x48] sm:$0xff]
  %v36 = vld [vmem:[%s1 + $0x50] sm:$0xff]
  %v37 = vld [vmem:[%s1 + $0x58] sm:$0xff]
  %v38 = vld [vmem:[%s1 + $0x60] sm:$0xff]
  %v39 = vld [vmem:[%s1 + $0x68] sm:$0xff]
  %v40 = vld [vmem:[%s1 + $0x70] sm:$0xff]
  %v41 = vld [vmem:[%s1 + $0x78] sm:$0xff]
  %v42 = vld [vmem:[%s1 + $0x80] sm:$0xff]
  %v43 = vld [vmem:[%s1 + $0x88] sm:$0xff]
  %v44 = vld [vmem:[%s1 + $0x90] sm:$0xff]
  %v45 = vld [vmem:[%s1 + $0x98] sm:$0xff]
  %v46 = vld [vmem:[%s1 + $0xa0] sm:$0xff]
  %v47 = vld [vmem:[%s1 + $0xa8] sm:$0xff]
  %v48 = vld [vmem:[%s1 + $0xb0] sm:$0xff]
  %v49 = vld [vmem:[%s1 + $0xb8] sm:$0xff]
  %v50 = vld [vmem:[%s1 + $0xc0] sm:$0xff]
  %v51 = vld [vmem:[%s1 + $0xc8] sm:$0xff]
  %v52 = vld [vmem:[%s1 + $0xd0] sm:$0xff]
  %v53 = vld [vmem:[%s1 + $0xd8] sm:$0xff]
  %v54 = vld [vmem:[%s1 + $0xe0] sm:$0xff]
  %v55 = vld [vmem:[%s1 + $0xe8] sm:$0xff]
  %v56 = vld [vmem:[%s1 + $0xf0] sm:$0xff]
  %v57 = vld [vmem:[%s1 + $0xf8] sm:$0xff]
  %v58 = vld [vmem:[%s1 + $0x100] sm:$0xff]
  %v59 = vld [vmem:[%s1 + $0x108] sm:$0xff]
  %v60 = vld [vmem:[%s1 + $0x110] sm:$0xff]
  %v61 = vld [vmem:[%s1 + $0x118] sm:$0xff]
  %v62 = vld [vmem:[%s1 + $0x120] sm:$0xff]
  %v63 = vld [vmem:[%s1 + $0x128] sm:$0xff]
  %v64 = vld [vmem:[%s1 + $0x130] sm:$0xff]
  %v65 = vld [vmem:[%s1 + $0x138] sm:$0xff]
  %v66 = vld [vmem:[%s1 + $0x140] sm:$0xff]
  %v67 = vld [vmem:[%s1 + $0x148] sm:$0xff]
  %v68 = vld [vmem:[%s1 + $0x150] sm:$0xff]
  %v69 = vld [vmem:[%s1 + $0x158] sm:$0xff]
  %v70 = vld [vmem:[%s1 + $0x160] sm:$0xff]
  %v71 = vld [vmem:[%s1 + $0x168] sm:$0xff]
  %v72 = vld [vmem:[%s1 + $0x170] sm:$0xff]
  %v73 = vld [vmem:[%s1 + $0x178] sm:$0xff]
  %v74 = vld [vmem:[%s1 + $0x180] sm:$0xff]
  %v75 = vld [vmem:[%s1 + $0x188] sm:$0xff]
  %v76 = vld [vmem:[%s1 + $0x190] sm:$0xff]
  %v77 = vld [vmem:[%s1 + $0x198] sm:$0xff]
  %v78 = vld [vmem:[%s1 + $0x1a0] sm:$0xff]
  %v79 = vld [vmem:[%s1 + $0x1a8] sm:$0xff]
  %v80 = vld [vmem:[%s1 + $0x1b0] sm:$0xff]
  %v81 = vld [vmem:[%s1 + $0x1b8] sm:$0xff]
  %v82 = vld [vmem:[%s1 + $0x1c0] sm:$0xff]
  %v83 = vld [vmem:[%s1 + $0x1c8] sm:$0xff]
  %v84 = vld [vmem:[%s1 + $0x1d0] sm:$0xff]
  %v85 = vld [vmem:[%s1 + $0x1d8] sm:$0xff]
  %v86 = vld [vmem:[%s1 + $0x1e0] sm:$0xff]
  %v87 = vld [vmem:[%s1 + $0x1e8] sm:$0xff]
  %v88 = vld [vmem:[%s1 + $0x1f0] sm:$0xff]
  %v89 = vld [vmem:[%s1 + $0x1f8] sm:$0xff]
  %v90 = vld [vmem:[%s1 + $0x200] sm:$0xff]
  %v91 = vld [vmem:[%s1 + $0x208] sm:$0xff]
  %v92 = vld [vmem:[%s1 + $0x210] sm:$0xff]
  %v93 = vld [vmem:[%s1 + $0x218] sm:$0xff]
  %v94 = vld [vmem:[%s1 + $0x220] sm:$0xff]
  %v95 = vld [vmem:[%s1 + $0x228] sm:$0xff]
  %v96 = vld [vmem:[%s1 + $0x230] sm:$0xff]
  %v97 = vld [vmem:[%s1 + $0x238] sm:$0xff]
  %v98 = vld [vmem:[%s1 + $0x240] sm:$0xff]
  %v99 = vld [vmem:[%s1 + $0x248] sm:$0xff]
  %v100 = vld [vmem:[%s1 + $0x250] sm:$0xff]
  %v101 = vld [vmem:[%s1 + $0x258] sm:$0xff]
  %v102 = vld [vmem:[%s1 + $0x260] sm:$0xff]
  %v103 = vld [vmem:[%s1 + $0x268] sm:$0xff]
  %v104 = vld [vmem:[%s1 + $0x270] sm:$0xff]
  %v105 = vld [vmem:[%s1 + $0x278] sm:$0xff]
  %v106 = vld [vmem:[%s1 + $0x280] sm:$0xff]
  %v107 = vld [vmem:[%s1 + $0x288] sm:$0xff]
  %v108 = vld [vmem:[%s1 + $0x290] sm:$0xff]
  %v109 = vld [vmem:[%s1 + $0x298] sm:$0xff]
  %v110 = vld [vmem:[%s1 + $0x2a0] sm:$0xff]
  %v111 = vld [vmem:[%s1 + $0x2a8] sm:$0xff]
  %v112 = vld [vmem:[%s1 + $0x2b0] sm:$0xff]
  %v113 = vld [vmem:[%s1 + $0x2b8] sm:$0xff]
  %v114 = vld [vmem:[%s1 + $0x2c0] sm:$0xff]
  %v115 = vld [vmem:[%s1 + $0x2c8] sm:$0xff]
  %v116 = vld [vmem:[%s1 + $0x2d0] sm:$0xff]
  %v117 = vld [vmem:[%s1 + $0x2d8] sm:$0xff]
  %v118 = vld [vmem:[%s1 + $0x2e0] sm:$0xff]
  %v119 = vld [vmem:[%s1 + $0x2e8] sm:$0xff]
  %v120 = vld [vmem:[%s1 + $0x2f0] sm:$0xff]
  %v121 = vld [vmem:[%s1 + $0x2f8] sm:$0xff]
  %v122 = vld [vmem:[%s1 + $0x300] sm:$0xff]
  %v123 = vld [vmem:[%s1 + $0x308] sm:$0xff]
  %v124 = vld [vmem:[%s1 + $0x310] sm:$0xff]
  %v125 = vld [vmem:[%s1 + $0x318] sm:$0xff]
  %v126 = vld [vmem:[%s1 + $0x320] sm:$0xff]
  %v127 = vld [vmem:[%s1 + $0x328] sm:$0xff]
  %v128 = vld [vmem:[%s1 + $0x330] sm:$0xff]
  %v129 = vld [vmem:[%s1 + $0x338] sm:$0xff]
  %v130 = vld [vmem:[%s1 + $0x340] sm:$0xff]
  %v131 = vld [vmem:[%s1 + $0x348] sm:$0xff]
  %v132 = vld [vmem:[%s1 + $0x350] sm:$0xff]
  %v133 = vld [vmem:[%s1 + $0x358] sm:$0xff]
  %v134 = vld [vmem:[%s1 + $0x360] sm:$0xff]
  %v135 = vld [vmem:[%s1 + $0x368] sm:$0xff]
  %v136 = vld [vmem:[%s1 + $0x370] sm:$0xff]
  %v137 = vld [vmem:[%s1 + $0x378] sm:$0xff]
  %v138 = vld [vmem:[%s1 + $0x380] sm:$0xff]
  %v139 = vld [vmem:[%s1 + $0x388] sm:$0xff]
  %v140 = vld [vmem:[%s1 + $0x390] sm:$0xff]
  %v141 = vld [vmem:[%s1 + $0x398] sm:$0xff]
  %v142 = vld [vmem:[%s1 + $0x3a0] sm:$0xff]
  %v143 = vld [vmem:[%s1 + $0x3a8] sm:$0xff]
  %v144 = vld [vmem:[%s1 + $0x3b0] sm:$0xff]
  %v145 = vld [vmem:[%s1 + $0x3b8] sm:$0xff]
  %v146 = vld [vmem:[%s1 + $0x3c0] sm:$0xff]
  %v147 = vld [vmem:[%s1 + $0x3c8] sm:$0xff]
  %v148 = vld [vmem:[%s1 + $0x3d0] sm:$0xff]
  %v149 = vld [vmem:[%s1 + $0x3d8] sm:$0xff]
  %v150 = vld [vmem:[%s1 + $0x3e0] sm:$0xff]
  %v151 = vld [vmem:[%s1 + $0x3e8] sm:$0xff]
  %v152 = vld [vmem:[%s1 + $0x3f0] sm:$0xff]
  %v153 = vld [vmem:[%s1 + $0x3f8] sm:$0xff]
  %v154 = vld [vmem:[%s1 + $0x400] sm:$0xff]
  %v155 = vld [vmem:[%s1 + $0x408] sm:$0xff]
  %v156 = vld [vmem:[%s1 + $0x410] sm:$0xff]
  %v157 = vld [vmem:[%s1 + $0x418] sm:$0xff]
  %v158 = vld [vmem:[%s1 + $0x420] sm:$0xff]
  %v159 = vld [vmem:[%s1 + $0x428] sm:$0xff]
  %v160 = vld [vmem:[%s1 + $0x430] sm:$0xff]
  %v161 = vld [vmem:[%s1 + $0x438] sm:$0xff]
  %v162 = vld [vmem:[%s1 + $0x440] sm:$0xff]
  %v163 = vld [vmem:[%s1 + $0x448] sm:$0xff]
  %v164 = vld [vmem:[%s1 + $0x450] sm:$0xff]
  %v165 = vld [vmem:[%s1 + $0x458] sm:$0xff]
  %v166 = vld [vmem:[%s1 + $0x460] sm:$0xff]
  %v167 = vld [vmem:[%s1 + $0x468] sm:$0xff]
  %v168 = vld [vmem:[%s1 + $0x470] sm:$0xff]
  %v169 = vld [vmem:[%s1 + $0x478] sm:$0xff]
  %v175 = vunpack.c.l.b16 %v21
  %v176 = vunpack.c.h.b16 %v21
  %v177 = vunpack.c.l.b16 %v22
  %v178 = vunpack.c.h.b16 %v22
  %v179 = vunpack.c.l.b16 %v23
  %v180 = vunpack.c.h.b16 %v23
  %v181 = vunpack.c.l.b16 %v24
  %v182 = vunpack.c.h.b16 %v24
  %v183 = vunpack.c.l.b16 %v25
  %v184 = vpack.c.b16 %v175, %v175
  %v185 = vpack.c.b16 %v176, %v176
  %v186 = vpack.c.b16 %v177, %v177
  %v187 = vpack.c.b16 %v178, %v178
  %v188 = vpack.c.b16 %v179, %v179
  %v189 = vpack.c.b16 %v180, %v180
  %v190 = vpack.c.b16 %v181, %v181
  %v191 = vpack.c.b16 %v182, %v182
  %v192 = vpack.c.b16 %v183, %v183
  %v346 = vunpack.c.l.b16 %v26
  %v347 = vunpack.c.h.b16 %v26
  %v348 = vunpack.c.l.b16 %v27
  %v349 = vunpack.c.h.b16 %v27
  %v350 = vunpack.c.l.b16 %v28
  %v351 = vunpack.c.h.b16 %v28
  %v352 = vunpack.c.l.b16 %v29
  %v353 = vunpack.c.h.b16 %v29
  %v354 = vunpack.c.l.b16 %v30
  %v355 = vunpack.c.h.b16 %v30
  %v356 = vunpack.c.l.b16 %v31
  %v357 = vunpack.c.h.b16 %v31
  %v358 = vunpack.c.l.b16 %v32
  %v359 = vunpack.c.h.b16 %v32
  %v360 = vunpack.c.l.b16 %v33
  %v361 = vunpack.c.h.b16 %v33
  %v362 = vunpack.c.l.b16 %v34
  %v363 = vunpack.c.h.b16 %v34
  %v364 = vunpack.c.l.b16 %v35
  %v365 = vunpack.c.h.b16 %v35
  %v366 = vunpack.c.l.b16 %v36
  %v367 = vunpack.c.h.b16 %v36
  %v368 = vunpack.c.l.b16 %v37
  %v369 = vunpack.c.h.b16 %v37
  %v370 = vunpack.c.l.b16 %v38
  %v371 = vunpack.c.h.b16 %v38
  %v372 = vunpack.c.l.b16 %v39
  %v373 = vunpack.c.h.b16 %v39
  %v374 = vunpack.c.l.b16 %v40
  %v375 = vunpack.c.h.b16 %v40
  %v376 = vunpack.c.l.b16 %v41
  %v377 = vunpack.c.h.b16 %v41
  %v378 = vunpack.c.l.b16 %v42
  %v379 = vunpack.c.h.b16 %v42
  %v380 = vunpack.c.l.b16 %v43
  %v381 = vunpack.c.h.b16 %v43
  %v382 = vunpack.c.l.b16 %v44
  %v383 = vunpack.c.h.b16 %v44
  %v384 = vunpack.c.l.b16 %v45
  %v385 = vunpack.c.h.b16 %v45
  %v386 = vunpack.c.l.b16 %v46
  %v387 = vunpack.c.h.b16 %v46
  %v388 = vunpack.c.l.b16 %v47
  %v389 = vunpack.c.h.b16 %v47
  %v390 = vunpack.c.l.b16 %v48
  %v391 = vunpack.c.h.b16 %v48
  %v392 = vunpack.c.l.b16 %v49
  %v393 = vunpack.c.h.b16 %v49
  %v394 = vunpack.c.l.b16 %v50
  %v395 = vunpack.c.h.b16 %v50
  %v396 = vunpack.c.l.b16 %v51
  %v397 = vunpack.c.h.b16 %v51
  %v398 = vunpack.c.l.b16 %v52
  %v399 = vunpack.c.h.b16 %v52
  %v400 = vunpack.c.l.b16 %v53
  %v401 = vunpack.c.h.b16 %v53
  %v402 = vunpack.c.l.b16 %v54
  %v403 = vunpack.c.h.b16 %v54
  %v404 = vunpack.c.l.b16 %v55
  %v405 = vunpack.c.h.b16 %v55
  %v406 = vunpack.c.l.b16 %v56
  %v407 = vunpack.c.h.b16 %v56
  %v408 = vunpack.c.l.b16 %v57
  %v409 = vunpack.c.h.b16 %v57
  %v410 = vunpack.c.l.b16 %v58
  %v411 = vunpack.c.h.b16 %v58
  %v412 = vunpack.c.l.b16 %v59
  %v413 = vunpack.c.h.b16 %v59
  %v414 = vunpack.c.l.b16 %v60
  %v415 = vunpack.c.h.b16 %v60
  %v416 = vunpack.c.l.b16 %v61
  %v417 = vunpack.c.h.b16 %v61
  %v418 = vunpack.c.l.b16 %v62
  %v419 = vunpack.c.h.b16 %v62
  %v420 = vunpack.c.l.b16 %v63
  %v421 = vunpack.c.h.b16 %v63
  %v422 = vunpack.c.l.b16 %v64
  %v423 = vunpack.c.h.b16 %v64
  %v424 = vunpack.c.l.b16 %v65
  %v425 = vunpack.c.h.b16 %v65
  %v426 = vunpack.c.l.b16 %v66
  %v427 = vunpack.c.h.b16 %v66
  %v428 = vunpack.c.l.b16 %v67
  %v429 = vunpack.c.h.b16 %v67
  %v430 = vunpack.c.l.b16 %v68
  %v431 = vunpack.c.h.b16 %v68
  %v432 = vunpack.c.l.b16 %v69
  %v433 = vunpack.c.h.b16 %v69
  %v434 = vunpack.c.l.b16 %v70
  %v435 = vunpack.c.h.b16 %v70
  %v436 = vunpack.c.l.b16 %v71
  %v437 = vunpack.c.h.b16 %v71
  %v438 = vunpack.c.l.b16 %v72
  %v439 = vunpack.c.h.b16 %v72
  %v440 = vunpack.c.l.b16 %v73
  %v441 = vunpack.c.h.b16 %v73
  %v442 = vunpack.c.l.b16 %v74
  %v443 = vunpack.c.h.b16 %v74
  %v444 = vunpack.c.l.b16 %v75
  %v445 = vunpack.c.h.b16 %v75
  %v446 = vunpack.c.l.b16 %v76
  %v447 = vunpack.c.h.b16 %v76
  %v448 = vunpack.c.l.b16 %v77
  %v449 = vunpack.c.h.b16 %v77
  %v450 = vunpack.c.l.b16 %v78
  %v451 = vunpack.c.h.b16 %v78
  %v452 = vunpack.c.l.b16 %v79
  %v453 = vunpack.c.h.b16 %v79
  %v454 = vunpack.c.l.b16 %v80
  %v455 = vunpack.c.h.b16 %v80
  %v456 = vunpack.c.l.b16 %v81
  %v457 = vunpack.c.h.b16 %v81
  %v458 = vunpack.c.l.b16 %v82
  %v459 = vunpack.c.h.b16 %v82
  %v460 = vunpack.c.l.b16 %v83
  %v461 = vunpack.c.h.b16 %v83
  %v462 = vunpack.c.l.b16 %v84
  %v463 = vunpack.c.h.b16 %v84
  %v464 = vunpack.c.l.b16 %v85
  %v465 = vunpack.c.h.b16 %v85
  %v466 = vunpack.c.l.b16 %v86
  %v467 = vunpack.c.h.b16 %v86
  %v468 = vunpack.c.l.b16 %v87
  %v469 = vunpack.c.h.b16 %v87
  %v470 = vunpack.c.l.b16 %v88
  %v471 = vunpack.c.h.b16 %v88
  %v472 = vunpack.c.l.b16 %v89
  %v473 = vunpack.c.h.b16 %v89
  %v474 = vunpack.c.l.b16 %v90
  %v475 = vunpack.c.h.b16 %v90
  %v476 = vunpack.c.l.b16 %v91
  %v477 = vunpack.c.h.b16 %v91
  %v478 = vunpack.c.l.b16 %v92
  %v479 = vunpack.c.h.b16 %v92
  %v480 = vunpack.c.l.b16 %v93
  %v481 = vunpack.c.h.b16 %v93
  %v482 = vunpack.c.l.b16 %v94
  %v483 = vunpack.c.h.b16 %v94
  %v484 = vunpack.c.l.b16 %v95
  %v485 = vunpack.c.h.b16 %v95
  %v486 = vunpack.c.l.b16 %v96
  %v487 = vunpack.c.h.b16 %v96
  %v488 = vunpack.c.l.b16 %v97
  %v489 = vunpack.c.h.b16 %v97
  %v490 = vunpack.c.l.b16 %v98
  %v491 = vunpack.c.h.b16 %v98
  %v492 = vunpack.c.l.b16 %v99
  %v493 = vunpack.c.h.b16 %v99
  %v494 = vunpack.c.l.b16 %v100
  %v495 = vunpack.c.h.b16 %v100
  %v496 = vunpack.c.l.b16 %v101
  %v497 = vunpack.c.h.b16 %v101
  %v498 = vunpack.c.l.b16 %v102
  %v499 = vunpack.c.h.b16 %v102
  %v500 = vunpack.c.l.b16 %v103
  %v501 = vunpack.c.h.b16 %v103
  %v502 = vunpack.c.l.b16 %v104
  %v503 = vunpack.c.h.b16 %v104
  %v504 = vunpack.c.l.b16 %v105
  %v505 = vunpack.c.h.b16 %v105
  %v506 = vunpack.c.l.b16 %v106
  %v507 = vunpack.c.h.b16 %v106
  %v508 = vunpack.c.l.b16 %v107
  %v509 = vunpack.c.h.b16 %v107
  %v510 = vunpack.c.l.b16 %v108
  %v511 = vunpack.c.h.b16 %v108
  %v512 = vunpack.c.l.b16 %v109
  %v513 = vunpack.c.h.b16 %v109
  %v514 = vunpack.c.l.b16 %v110
  %v515 = vunpack.c.h.b16 %v110
  %v516 = vunpack.c.l.b16 %v111
  %v517 = vunpack.c.h.b16 %v111
  %v518 = vunpack.c.l.b16 %v112
  %v519 = vunpack.c.h.b16 %v112
  %v520 = vunpack.c.l.b16 %v113
  %v521 = vunpack.c.h.b16 %v113
  %v522 = vunpack.c.l.b16 %v114
  %v523 = vunpack.c.h.b16 %v114
  %v524 = vunpack.c.l.b16 %v115
  %v525 = vunpack.c.h.b16 %v115
  %v526 = vunpack.c.l.b16 %v116
  %v527 = vunpack.c.h.b16 %v116
  %v528 = vunpack.c.l.b16 %v117
  %v529 = vunpack.c.h.b16 %v117
  %v530 = vunpack.c.l.b16 %v118
  %v531 = vunpack.c.h.b16 %v118
  %v532 = vunpack.c.l.b16 %v119
  %v533 = vunpack.c.h.b16 %v119
  %v534 = vunpack.c.l.b16 %v120
  %v535 = vunpack.c.h.b16 %v120
  %v536 = vunpack.c.l.b16 %v121
  %v537 = vunpack.c.h.b16 %v121
  %v538 = vunpack.c.l.b16 %v122
  %v539 = vunpack.c.h.b16 %v122
  %v540 = vunpack.c.l.b16 %v123
  %v541 = vunpack.c.h.b16 %v123
  %v542 = vunpack.c.l.b16 %v124
  %v543 = vunpack.c.h.b16 %v124
  %v544 = vunpack.c.l.b16 %v125
  %v545 = vunpack.c.h.b16 %v125
  %v546 = vunpack.c.l.b16 %v126
  %v547 = vunpack.c.h.b16 %v126
  %v548 = vunpack.c.l.b16 %v127
  %v549 = vunpack.c.h.b16 %v127
  %v550 = vunpack.c.l.b16 %v128
  %v551 = vunpack.c.h.b16 %v128
  %v552 = vunpack.c.l.b16 %v129
  %v553 = vunpack.c.h.b16 %v129
  %v554 = vunpack.c.l.b16 %v130
  %v555 = vunpack.c.h.b16 %v130
  %v556 = vunpack.c.l.b16 %v131
  %v557 = vunpack.c.h.b16 %v131
  %v558 = vunpack.c.l.b16 %v132
  %v559 = vunpack.c.h.b16 %v132
  %v560 = vunpack.c.l.b16 %v133
  %v561 = vunpack.c.h.b16 %v133
  %v562 = vunpack.c.l.b16 %v134
  %v563 = vunpack.c.h.b16 %v134
  %v564 = vunpack.c.l.b16 %v135
  %v565 = vunpack.c.h.b16 %v135
  %v566 = vunpack.c.l.b16 %v136
  %v567 = vunpack.c.h.b16 %v136
  %v568 = vunpack.c.l.b16 %v137
  %v569 = vunpack.c.h.b16 %v137
  %v570 = vunpack.c.l.b16 %v138
  %v571 = vunpack.c.h.b16 %v138
  %v572 = vunpack.c.l.b16 %v139
  %v573 = vunpack.c.h.b16 %v139
  %v574 = vunpack.c.l.b16 %v140
  %v575 = vunpack.c.h.b16 %v140
  %v576 = vunpack.c.l.b16 %v141
  %v577 = vunpack.c.h.b16 %v141
  %v578 = vunpack.c.l.b16 %v142
  %v579 = vunpack.c.h.b16 %v142
  %v580 = vunpack.c.l.b16 %v143
  %v581 = vunpack.c.h.b16 %v143
  %v582 = vunpack.c.l.b16 %v144
  %v583 = vunpack.c.h.b16 %v144
  %v584 = vunpack.c.l.b16 %v145
  %v585 = vunpack.c.h.b16 %v145
  %v586 = vunpack.c.l.b16 %v146
  %v587 = vunpack.c.h.b16 %v146
  %v588 = vunpack.c.l.b16 %v147
  %v589 = vunpack.c.h.b16 %v147
  %v590 = vunpack.c.l.b16 %v148
  %v591 = vunpack.c.h.b16 %v148
  %v592 = vunpack.c.l.b16 %v149
  %v593 = vunpack.c.h.b16 %v149
  %v594 = vunpack.c.l.b16 %v150
  %v595 = vunpack.c.h.b16 %v150
  %v596 = vunpack.c.l.b16 %v151
  %v597 = vunpack.c.h.b16 %v151
  %v598 = vunpack.c.l.b16 %v152
  %v599 = vunpack.c.h.b16 %v152
  %v600 = vunpack.c.l.b16 %v153
  %v601 = vunpack.c.h.b16 %v153
  %v602 = vunpack.c.l.b16 %v154
  %v603 = vunpack.c.h.b16 %v154
  %v604 = vunpack.c.l.b16 %v155
  %v605 = vunpack.c.h.b16 %v155
  %v606 = vunpack.c.l.b16 %v156
  %v607 = vunpack.c.h.b16 %v156
  %v608 = vunpack.c.l.b16 %v157
  %v609 = vunpack.c.h.b16 %v157
  %v610 = vunpack.c.l.b16 %v158
  %v611 = vunpack.c.h.b16 %v158
  %v612 = vunpack.c.l.b16 %v159
  %v613 = vunpack.c.h.b16 %v159
  %v614 = vunpack.c.l.b16 %v160
  %v615 = vunpack.c.h.b16 %v160
  %v616 = vunpack.c.l.b16 %v161
  %v617 = vunpack.c.h.b16 %v161
  %v618 = vunpack.c.l.b16 %v162
  %v619 = vunpack.c.h.b16 %v162
  %v620 = vunpack.c.l.b16 %v163
  %v621 = vunpack.c.h.b16 %v163
  %v622 = vunpack.c.l.b16 %v164
  %v623 = vunpack.c.h.b16 %v164
  %v624 = vunpack.c.l.b16 %v165
  %v625 = vunpack.c.h.b16 %v165
  %v626 = vunpack.c.l.b16 %v166
  %v627 = vunpack.c.h.b16 %v166
  %v628 = vunpack.c.l.b16 %v167
  %v629 = vunpack.c.h.b16 %v167
  %v630 = vunpack.c.l.b16 %v168
  %v631 = vunpack.c.h.b16 %v168
  %v632 = vunpack.c.l.b16 %v169
  %v633 = vunpack.c.h.b16 %v169
  %v634 = vpack.c.b16 %v348, %v346
  %v635 = vpack.c.b16 %v349, %v347
  %v636 = vpack.c.b16 %v352, %v350
  %v637 = vpack.c.b16 %v353, %v351
  %v638 = vpack.c.b16 %v356, %v354
  %v639 = vpack.c.b16 %v357, %v355
  %v640 = vpack.c.b16 %v360, %v358
  %v641 = vpack.c.b16 %v361, %v359
  %v642 = vpack.c.b16 %v364, %v362
  %v643 = vpack.c.b16 %v365, %v363
  %v644 = vpack.c.b16 %v368, %v366
  %v645 = vpack.c.b16 %v369, %v367
  %v646 = vpack.c.b16 %v372, %v370
  %v647 = vpack.c.b16 %v373, %v371
  %v648 = vpack.c.b16 %v376, %v374
  %v649 = vpack.c.b16 %v377, %v375
  %v650 = vpack.c.b16 %v380, %v378
  %v651 = vpack.c.b16 %v381, %v379
  %v652 = vpack.c.b16 %v384, %v382
  %v653 = vpack.c.b16 %v385, %v383
  %v654 = vpack.c.b16 %v388, %v386
  %v655 = vpack.c.b16 %v389, %v387
  %v656 = vpack.c.b16 %v392, %v390
  %v657 = vpack.c.b16 %v393, %v391
  %v658 = vpack.c.b16 %v396, %v394
  %v659 = vpack.c.b16 %v397, %v395
  %v660 = vpack.c.b16 %v400, %v398
  %v661 = vpack.c.b16 %v401, %v399
  %v662 = vpack.c.b16 %v404, %v402
  %v663 = vpack.c.b16 %v405, %v403
  %v664 = vpack.c.b16 %v408, %v406
  %v665 = vpack.c.b16 %v409, %v407
  %v666 = vpack.c.b16 %v412, %v410
  %v667 = vpack.c.b16 %v413, %v411
  %v668 = vpack.c.b16 %v416, %v414
  %v669 = vpack.c.b16 %v417, %v415
  %v670 = vpack.c.b16 %v420, %v418
  %v671 = vpack.c.b16 %v421, %v419
  %v672 = vpack.c.b16 %v424, %v422
  %v673 = vpack.c.b16 %v425, %v423
  %v674 = vpack.c.b16 %v428, %v426
  %v675 = vpack.c.b16 %v429, %v427
  %v676 = vpack.c.b16 %v432, %v430
  %v677 = vpack.c.b16 %v433, %v431
  %v678 = vpack.c.b16 %v436, %v434
  %v679 = vpack.c.b16 %v437, %v435
  %v680 = vpack.c.b16 %v440, %v438
  %v681 = vpack.c.b16 %v441, %v439
  %v682 = vpack.c.b16 %v444, %v442
  %v683 = vpack.c.b16 %v445, %v443
  %v684 = vpack.c.b16 %v448, %v446
  %v685 = vpack.c.b16 %v449, %v447
  %v686 = vpack.c.b16 %v452, %v450
  %v687 = vpack.c.b16 %v453, %v451
  %v688 = vpack.c.b16 %v456, %v454
  %v689 = vpack.c.b16 %v457, %v455
  %v690 = vpack.c.b16 %v460, %v458
  %v691 = vpack.c.b16 %v461, %v459
  %v692 = vpack.c.b16 %v464, %v462
  %v693 = vpack.c.b16 %v465, %v463
  %v694 = vpack.c.b16 %v468, %v466
  %v695 = vpack.c.b16 %v469, %v467
  %v696 = vpack.c.b16 %v472, %v470
  %v697 = vpack.c.b16 %v473, %v471
  %v698 = vpack.c.b16 %v476, %v474
  %v699 = vpack.c.b16 %v477, %v475
  %v700 = vpack.c.b16 %v480, %v478
  %v701 = vpack.c.b16 %v481, %v479
  %v702 = vpack.c.b16 %v484, %v482
  %v703 = vpack.c.b16 %v485, %v483
  %v704 = vpack.c.b16 %v488, %v486
  %v705 = vpack.c.b16 %v489, %v487
  %v706 = vpack.c.b16 %v492, %v490
  %v707 = vpack.c.b16 %v493, %v491
  %v708 = vpack.c.b16 %v496, %v494
  %v709 = vpack.c.b16 %v497, %v495
  %v710 = vpack.c.b16 %v500, %v498
  %v711 = vpack.c.b16 %v501, %v499
  %v712 = vpack.c.b16 %v504, %v502
  %v713 = vpack.c.b16 %v505, %v503
  %v714 = vpack.c.b16 %v508, %v506
  %v715 = vpack.c.b16 %v509, %v507
  %v716 = vpack.c.b16 %v512, %v510
  %v717 = vpack.c.b16 %v513, %v511
  %v718 = vpack.c.b16 %v516, %v514
  %v719 = vpack.c.b16 %v517, %v515
  %v720 = vpack.c.b16 %v520, %v518
  %v721 = vpack.c.b16 %v521, %v519
  %v722 = vpack.c.b16 %v524, %v522
  %v723 = vpack.c.b16 %v525, %v523
  %v724 = vpack.c.b16 %v528, %v526
  %v725 = vpack.c.b16 %v529, %v527
  %v726 = vpack.c.b16 %v532, %v530
  %v727 = vpack.c.b16 %v533, %v531
  %v728 = vpack.c.b16 %v536, %v534
  %v729 = vpack.c.b16 %v537, %v535
  %v730 = vpack.c.b16 %v540, %v538
  %v731 = vpack.c.b16 %v541, %v539
  %v732 = vpack.c.b16 %v544, %v542
  %v733 = vpack.c.b16 %v545, %v543
  %v734 = vpack.c.b16 %v548, %v546
  %v735 = vpack.c.b16 %v549, %v547
  %v736 = vpack.c.b16 %v552, %v550
  %v737 = vpack.c.b16 %v553, %v551
  %v738 = vpack.c.b16 %v556, %v554
  %v739 = vpack.c.b16 %v557, %v555
  %v740 = vpack.c.b16 %v560, %v558
  %v741 = vpack.c.b16 %v561, %v559
  %v742 = vpack.c.b16 %v564, %v562
  %v743 = vpack.c.b16 %v565, %v563
  %v744 = vpack.c.b16 %v568, %v566
  %v745 = vpack.c.b16 %v569, %v567
  %v746 = vpack.c.b16 %v572, %v570
  %v747 = vpack.c.b16 %v573, %v571
  %v748 = vpack.c.b16 %v576, %v574
  %v749 = vpack.c.b16 %v577, %v575
  %v750 = vpack.c.b16 %v580, %v578
  %v751 = vpack.c.b16 %v581, %v579
  %v752 = vpack.c.b16 %v584, %v582
  %v753 = vpack.c.b16 %v585, %v583
  %v754 = vpack.c.b16 %v588, %v586
  %v755 = vpack.c.b16 %v589, %v587
  %v756 = vpack.c.b16 %v592, %v590
  %v757 = vpack.c.b16 %v593, %v591
  %v758 = vpack.c.b16 %v596, %v594
  %v759 = vpack.c.b16 %v597, %v595
  %v760 = vpack.c.b16 %v600, %v598
  %v761 = vpack.c.b16 %v601, %v599
  %v762 = vpack.c.b16 %v604, %v602
  %v763 = vpack.c.b16 %v605, %v603
  %v764 = vpack.c.b16 %v608, %v606
  %v765 = vpack.c.b16 %v609, %v607
  %v766 = vpack.c.b16 %v612, %v610
  %v767 = vpack.c.b16 %v613, %v611
  %v768 = vpack.c.b16 %v616, %v614
  %v769 = vpack.c.b16 %v617, %v615
  %v770 = vpack.c.b16 %v620, %v618
  %v771 = vpack.c.b16 %v621, %v619
  %v772 = vpack.c.b16 %v624, %v622
  %v773 = vpack.c.b16 %v625, %v623
  %v774 = vpack.c.b16 %v628, %v626
  %v775 = vpack.c.b16 %v629, %v627
  %v776 = vpack.c.b16 %v632, %v630
  %v777 = vpack.c.b16 %v633, %v631
  %922 = vmatprep.subr.bf16.mxu0 %v635
  %923 = vmatpush1.bf16.msra.mxu0 %v634
  %924 = vmatprep.subr.bf16.mxu0 %v637
  %925 = vmatpush1.bf16.msra.mxu0 %v636
  %926 = vmatprep.subr.bf16.mxu0 %v639
  %927 = vmatpush1.bf16.msra.mxu0 %v638
  %928 = vmatprep.subr.bf16.mxu0 %v641
  %929 = vmatpush1.bf16.msra.mxu0 %v640
  %930 = vmatprep.subr.bf16.mxu0 %v643
  %931 = vmatpush1.bf16.msra.mxu0 %v642
  %932 = vmatprep.subr.bf16.mxu0 %v645
  %933 = vmatpush1.bf16.msra.mxu0 %v644
  %934 = vmatprep.subr.bf16.mxu0 %v647
  %935 = vmatpush1.bf16.msra.mxu0 %v646
  %936 = vmatprep.subr.bf16.mxu0 %v649
  %937 = vmatpush1.bf16.msra.mxu0 %v648
  %938 = vmatprep.subr.bf16.mxu0 %v651
  %939 = vmatpush1.bf16.msra.mxu0 %v650
  %940 = vmatprep.subr.bf16.mxu0 %v653
  %941 = vmatpush1.bf16.msra.mxu0 %v652
  %942 = vmatprep.subr.bf16.mxu0 %v655
  %943 = vmatpush1.bf16.msra.mxu0 %v654
  %944 = vmatprep.subr.bf16.mxu0 %v657
  %945 = vmatpush1.bf16.msra.mxu0 %v656
  %946 = vmatprep.subr.bf16.mxu0 %v659
  %947 = vmatpush1.bf16.msra.mxu0 %v658
  %948 = vmatprep.subr.bf16.mxu0 %v661
  %949 = vmatpush1.bf16.msra.mxu0 %v660
  %950 = vmatprep.subr.bf16.mxu0 %v663
  %951 = vmatpush1.bf16.msra.mxu0 %v662
  %952 = vmatprep.subr.bf16.mxu0 %v665
  %953 = vmatpush1.bf16.msra.mxu0 %v664
  %954 = vmatprep.mubr.bf16.mxu0 %v185
  %955 = vmatmul.mubr.bf16.gmra.mrb[0].mxu0 %v184
  %v956 = vpop.f32.mrb[0].mxu0
  %v957 = vadd.f32 0.0, %v956
  %v958 = vpop.f32.mrb[0].mxu0
  %v959 = vadd.f32 0.0, %v958
  %v960 = vpop.f32.mrb[0].mxu0
  %v961 = vpop.f32.mrb[0].mxu0
  %962 = vdwg.mxu0
  %963 = vmatprep.subr.bf16.mxu0 %v667
  %964 = vmatpush1.bf16.msra.mxu0 %v666
  %965 = vmatprep.subr.bf16.mxu0 %v669
  %966 = vmatpush1.bf16.msra.mxu0 %v668
  %967 = vmatprep.subr.bf16.mxu0 %v671
  %968 = vmatpush1.bf16.msra.mxu0 %v670
  %969 = vmatprep.subr.bf16.mxu0 %v673
  %970 = vmatpush1.bf16.msra.mxu0 %v672
  %971 = vmatprep.subr.bf16.mxu0 %v675
  %972 = vmatpush1.bf16.msra.mxu0 %v674
  %973 = vmatprep.subr.bf16.mxu0 %v677
  %974 = vmatpush1.bf16.msra.mxu0 %v676
  %975 = vmatprep.subr.bf16.mxu0 %v679
  %976 = vmatpush1.bf16.msra.mxu0 %v678
  %977 = vmatprep.subr.bf16.mxu0 %v681
  %978 = vmatpush1.bf16.msra.mxu0 %v680
  %979 = vmatprep.subr.bf16.mxu0 %v683
  %980 = vmatpush1.bf16.msra.mxu0 %v682
  %981 = vmatprep.subr.bf16.mxu0 %v685
  %982 = vmatpush1.bf16.msra.mxu0 %v684
  %983 = vmatprep.subr.bf16.mxu0 %v687
  %984 = vmatpush1.bf16.msra.mxu0 %v686
  %985 = vmatprep.subr.bf16.mxu0 %v689
  %986 = vmatpush1.bf16.msra.mxu0 %v688
  %987 = vmatprep.subr.bf16.mxu0 %v691
  %988 = vmatpush1.bf16.msra.mxu0 %v690
  %989 = vmatprep.subr.bf16.mxu0 %v693
  %990 = vmatpush1.bf16.msra.mxu0 %v692
  %991 = vmatprep.subr.bf16.mxu0 %v695
  %992 = vmatpush1.bf16.msra.mxu0 %v694
  %993 = vmatprep.subr.bf16.mxu0 %v697
  %994 = vmatpush1.bf16.msra.mxu0 %v696
  %995 = vmatprep.mubr.bf16.mxu0 %v187
  %996 = vmatmul.mubr.bf16.gmra.mrb[0].mxu0 %v186
  %v997 = vpop.f32.mrb[0].mxu0
  %v998 = vadd.f32 %v957, %v997
  %v999 = vpop.f32.mrb[0].mxu0
  %v1000 = vadd.f32 %v959, %v999
  %v1001 = vpop.f32.mrb[0].mxu0
  %v1002 = vpop.f32.mrb[0].mxu0
  %1003 = vdwg.mxu0
  %1004 = vmatprep.subr.bf16.mxu0 %v699
  %1005 = vmatpush1.bf16.msra.mxu0 %v698
  %1006 = vmatprep.subr.bf16.mxu0 %v701
  %1007 = vmatpush1.bf16.msra.mxu0 %v700
  %1008 = vmatprep.subr.bf16.mxu0 %v703
  %1009 = vmatpush1.bf16.msra.mxu0 %v702
  %1010 = vmatprep.subr.bf16.mxu0 %v705
  %1011 = vmatpush1.bf16.msra.mxu0 %v704
  %1012 = vmatprep.subr.bf16.mxu0 %v707
  %1013 = vmatpush1.bf16.msra.mxu0 %v706
  %1014 = vmatprep.subr.bf16.mxu0 %v709
  %1015 = vmatpush1.bf16.msra.mxu0 %v708
  %1016 = vmatprep.subr.bf16.mxu0 %v711
  %1017 = vmatpush1.bf16.msra.mxu0 %v710
  %1018 = vmatprep.subr.bf16.mxu0 %v713
  %1019 = vmatpush1.bf16.msra.mxu0 %v712
  %1020 = vmatprep.subr.bf16.mxu0 %v715
  %1021 = vmatpush1.bf16.msra.mxu0 %v714
  %1022 = vmatprep.subr.bf16.mxu0 %v717
  %1023 = vmatpush1.bf16.msra.mxu0 %v716
  %1024 = vmatprep.subr.bf16.mxu0 %v719
  %1025 = vmatpush1.bf16.msra.mxu0 %v718
  %1026 = vmatprep.subr.bf16.mxu0 %v721
  %1027 = vmatpush1.bf16.msra.mxu0 %v720
  %1028 = vmatprep.subr.bf16.mxu0 %v723
  %1029 = vmatpush1.bf16.msra.mxu0 %v722
  %1030 = vmatprep.subr.bf16.mxu0 %v725
  %1031 = vmatpush1.bf16.msra.mxu0 %v724
  %1032 = vmatprep.subr.bf16.mxu0 %v727
  %1033 = vmatpush1.bf16.msra.mxu0 %v726
  %1034 = vmatprep.subr.bf16.mxu0 %v729
  %1035 = vmatpush1.bf16.msra.mxu0 %v728
  %1036 = vmatprep.mubr.bf16.mxu0 %v189
  %1037 = vmatmul.mubr.bf16.gmra.mrb[0].mxu0 %v188
  %v1038 = vpop.f32.mrb[0].mxu0
  %v1039 = vadd.f32 %v998, %v1038
  %v1040 = vpop.f32.mrb[0].mxu0
  %v1041 = vadd.f32 %v1000, %v1040
  %v1042 = vpop.f32.mrb[0].mxu0
  %v1043 = vpop.f32.mrb[0].mxu0
  %1044 = vdwg.mxu0
  %1045 = vmatprep.subr.bf16.mxu0 %v731
  %1046 = vmatpush1.bf16.msra.mxu0 %v730
  %1047 = vmatprep.subr.bf16.mxu0 %v733
  %1048 = vmatpush1.bf16.msra.mxu0 %v732
  %1049 = vmatprep.subr.bf16.mxu0 %v735
  %1050 = vmatpush1.bf16.msra.mxu0 %v734
  %1051 = vmatprep.subr.bf16.mxu0 %v737
  %1052 = vmatpush1.bf16.msra.mxu0 %v736
  %1053 = vmatprep.subr.bf16.mxu0 %v739
  %1054 = vmatpush1.bf16.msra.mxu0 %v738
  %1055 = vmatprep.subr.bf16.mxu0 %v741
  %1056 = vmatpush1.bf16.msra.mxu0 %v740
  %1057 = vmatprep.subr.bf16.mxu0 %v743
  %1058 = vmatpush1.bf16.msra.mxu0 %v742
  %1059 = vmatprep.subr.bf16.mxu0 %v745
  %1060 = vmatpush1.bf16.msra.mxu0 %v744
  %1061 = vmatprep.subr.bf16.mxu0 %v747
  %1062 = vmatpush1.bf16.msra.mxu0 %v746
  %1063 = vmatprep.subr.bf16.mxu0 %v749
  %1064 = vmatpush1.bf16.msra.mxu0 %v748
  %1065 = vmatprep.subr.bf16.mxu0 %v751
  %1066 = vmatpush1.bf16.msra.mxu0 %v750
  %1067 = vmatprep.subr.bf16.mxu0 %v753
  %1068 = vmatpush1.bf16.msra.mxu0 %v752
  %1069 = vmatprep.subr.bf16.mxu0 %v755
  %1070 = vmatpush1.bf16.msra.mxu0 %v754
  %1071 = vmatprep.subr.bf16.mxu0 %v757
  %1072 = vmatpush1.bf16.msra.mxu0 %v756
  %1073 = vmatprep.subr.bf16.mxu0 %v759
  %1074 = vmatpush1.bf16.msra.mxu0 %v758
  %1075 = vmatprep.subr.bf16.mxu0 %v761
  %1076 = vmatpush1.bf16.msra.mxu0 %v760
  %1077 = vmatprep.mubr.bf16.mxu0 %v191
  %1078 = vmatmul.mubr.bf16.gmra.mrb[0].mxu0 %v190
  %v1079 = vpop.f32.mrb[0].mxu0
  %v1080 = vadd.f32 %v1039, %v1079
  %v1081 = vpop.f32.mrb[0].mxu0
  %v1082 = vadd.f32 %v1041, %v1081
  %v1083 = vpop.f32.mrb[0].mxu0
  %v1084 = vpop.f32.mrb[0].mxu0
  %1085 = vdwg.mxu0
  %1086 = vmatprep.subr.bf16.mxu0 %v763
  %1087 = vmatpush1.bf16.msra.mxu0 %v762
  %1088 = vmatprep.subr.bf16.mxu0 %v765
  %1089 = vmatpush1.bf16.msra.mxu0 %v764
  %1090 = vmatprep.subr.bf16.mxu0 %v767
  %1091 = vmatpush1.bf16.msra.mxu0 %v766
  %1092 = vmatprep.subr.bf16.mxu0 %v769
  %1093 = vmatpush1.bf16.msra.mxu0 %v768
  %1094 = vmatprep.subr.bf16.mxu0 %v771
  %1095 = vmatpush1.bf16.msra.mxu0 %v770
  %1096 = vmatprep.subr.bf16.mxu0 %v773
  %1097 = vmatpush1.bf16.msra.mxu0 %v772
  %1098 = vmatprep.subr.bf16.mxu0 %v775
  %1099 = vmatpush1.bf16.msra.mxu0 %v774
  %1100 = vmatprep.subr.bf16.mxu0 %v777
  %1101 = vmatpush1.bf16.msra.mxu0 %v776
  %1102 = vmatprep.subr.bf16.mxu0 0
  %1103 = vmatpush1.bf16.msra.mxu0 0
  %1104 = vmatprep.subr.bf16.mxu0 0
  %1105 = vmatpush1.bf16.msra.mxu0 0
  %1106 = vmatprep.subr.bf16.mxu0 0
  %1107 = vmatpush1.bf16.msra.mxu0 0
  %1108 = vmatprep.subr.bf16.mxu0 0
  %1109 = vmatpush1.bf16.msra.mxu0 0
  %1110 = vmatprep.subr.bf16.mxu0 0
  %1111 = vmatpush1.bf16.msra.mxu0 0
  %1112 = vmatprep.subr.bf16.mxu0 0
  %1113 = vmatpush1.bf16.msra.mxu0 0
  %1114 = vmatprep.subr.bf16.mxu0 0
  %1115 = vmatpush1.bf16.msra.mxu0 0
  %1116 = vmatprep.subr.bf16.mxu0 0
  %1117 = vmatpush1.bf16.msra.mxu0 0
  %1118 = vmatprep.mubr.bf16.mxu0 0
  %1119 = vmatmul.mubr.bf16.gmra.mrb[0].mxu0 %v192
  %v1120 = vpop.f32.mrb[0].mxu0
  %v1121 = vadd.f32 %v1080, %v1120
  %v1122 = vpop.f32.mrb[0].mxu0
  %v1123 = vadd.f32 %v1082, %v1122
  %v1124 = vpop.f32.mrb[0].mxu0
  %v1125 = vpop.f32.mrb[0].mxu0
  %1126 = vdwg.mxu0
  %v1127 = vld [vmem:[%s2] sm:$0xff]
  %v1128 = vld [vmem:[%s2 + $0x8] sm:$0xff]
  %v1129 = vld [vmem:[%s2 + $0x10] sm:$0xff]
  %v1130 = vld [vmem:[%s2 + $0x18] sm:$0xff]
  %v1131 = vld [vmem:[%s2 + $0x20] sm:$0xff]
  %v1132 = vld [vmem:[%s2 + $0x28] sm:$0xff]
  %v1133 = vld [vmem:[%s2 + $0x30] sm:$0xff]
  %v1134 = vld [vmem:[%s2 + $0x38] sm:$0xff]
  %v1135 = vld [vmem:[%s2 + $0x40] sm:$0xff]
  %v1136 = vld [vmem:[%s2 + $0x48] sm:$0xff]
  %v1137 = vld [vmem:[%s2 + $0x50] sm:$0xff]
  %v1138 = vld [vmem:[%s2 + $0x58] sm:$0xff]
  %v1139 = vld [vmem:[%s2 + $0x60] sm:$0xff]
  %v1140 = vld [vmem:[%s2 + $0x68] sm:$0xff]
  %v1141 = vld [vmem:[%s2 + $0x70] sm:$0xff]
  %v1142 = vld [vmem:[%s2 + $0x78] sm:$0xff]
  %v1143 = vld [vmem:[%s2 + $0x80] sm:$0xff]
  %v1144 = vld [vmem:[%s2 + $0x88] sm:$0xff]
  %v1145 = vld [vmem:[%s2 + $0x90] sm:$0xff]
  %v1146 = vld [vmem:[%s2 + $0x98] sm:$0xff]
  %v1147 = vld [vmem:[%s2 + $0xa0] sm:$0xff]
  %v1148 = vld [vmem:[%s2 + $0xa8] sm:$0xff]
  %v1149 = vld [vmem:[%s2 + $0xb0] sm:$0xff]
  %v1150 = vld [vmem:[%s2 + $0xb8] sm:$0xff]
  %v1151 = vld [vmem:[%s2 + $0xc0] sm:$0xff]
  %v1152 = vld [vmem:[%s2 + $0xc8] sm:$0xff]
  %v1153 = vld [vmem:[%s2 + $0xd0] sm:$0xff]
  %v1154 = vld [vmem:[%s2 + $0xd8] sm:$0xff]
  %v1155 = vld [vmem:[%s2 + $0xe0] sm:$0xff]
  %v1156 = vld [vmem:[%s2 + $0xe8] sm:$0xff]
  %v1157 = vld [vmem:[%s2 + $0xf0] sm:$0xff]
  %v1158 = vld [vmem:[%s2 + $0xf8] sm:$0xff]
  %v1159 = vld [vmem:[%s2 + $0x100] sm:$0xff]
  %v1160 = vld [vmem:[%s2 + $0x108] sm:$0xff]
  %v1161 = vld [vmem:[%s2 + $0x110] sm:$0xff]
  %v1162 = vld [vmem:[%s2 + $0x118] sm:$0xff]
  %v1163 = vld [vmem:[%s2 + $0x120] sm:$0xff]
  %v1164 = vld [vmem:[%s2 + $0x128] sm:$0xff]
  %v1165 = vld [vmem:[%s2 + $0x130] sm:$0xff]
  %v1166 = vld [vmem:[%s2 + $0x138] sm:$0xff]
  %v1167 = vld [vmem:[%s2 + $0x140] sm:$0xff]
  %v1168 = vld [vmem:[%s2 + $0x148] sm:$0xff]
  %v1169 = vld [vmem:[%s2 + $0x150] sm:$0xff]
  %v1170 = vld [vmem:[%s2 + $0x158] sm:$0xff]
  %v1171 = vld [vmem:[%s2 + $0x160] sm:$0xff]
  %v1172 = vld [vmem:[%s2 + $0x168] sm:$0xff]
  %v1173 = vld [vmem:[%s2 + $0x170] sm:$0xff]
  %v1174 = vld [vmem:[%s2 + $0x178] sm:$0xff]
  %v1175 = vld [vmem:[%s2 + $0x180] sm:$0xff]
  %v1176 = vld [vmem:[%s2 + $0x188] sm:$0xff]
  %v1177 = vld [vmem:[%s2 + $0x190] sm:$0xff]
  %v1178 = vld [vmem:[%s2 + $0x198] sm:$0xff]
  %v1179 = vld [vmem:[%s2 + $0x1a0] sm:$0xff]
  %v1180 = vld [vmem:[%s2 + $0x1a8] sm:$0xff]
  %v1181 = vld [vmem:[%s2 + $0x1b0] sm:$0xff]
  %v1182 = vld [vmem:[%s2 + $0x1b8] sm:$0xff]
  %v1183 = vld [vmem:[%s2 + $0x1c0] sm:$0xff]
  %v1184 = vld [vmem:[%s2 + $0x1c8] sm:$0xff]
  %v1185 = vld [vmem:[%s2 + $0x1d0] sm:$0xff]
  %v1186 = vld [vmem:[%s2 + $0x1d8] sm:$0xff]
  %v1187 = vld [vmem:[%s2 + $0x1e0] sm:$0xff]
  %v1188 = vld [vmem:[%s2 + $0x1e8] sm:$0xff]
  %v1189 = vld [vmem:[%s2 + $0x1f0] sm:$0xff]
  %v1190 = vld [vmem:[%s2 + $0x1f8] sm:$0xff]
  %1191 = vmatprep.subr.mxu0 %v1128
  %1192 = vmatpush1.msra.mxu0 %v1127
  %1193 = vmatprep.subr.mxu0 %v1130
  %1194 = vmatpush1.msra.mxu0 %v1129
  %1195 = vmatprep.subr.mxu0 %v1132
  %1196 = vmatpush1.msra.mxu0 %v1131
  %1197 = vmatprep.subr.mxu0 %v1134
  %1198 = vmatpush1.msra.mxu0 %v1133
  %1199 = vmatprep.subr.mxu0 %v1136
  %1200 = vmatpush1.msra.mxu0 %v1135
  %1201 = vmatprep.subr.mxu0 %v1138
  %1202 = vmatpush1.msra.mxu0 %v1137
  %1203 = vmatprep.subr.mxu0 %v1140
  %1204 = vmatpush1.msra.mxu0 %v1139
  %1205 = vmatprep.subr.mxu0 %v1142
  %1206 = vmatpush1.msra.mxu0 %v1141
  %1207 = vmatprep.subr.mxu0 %v1144
  %1208 = vmatpush1.msra.mxu0 %v1143
  %1209 = vmatprep.subr.mxu0 %v1146
  %1210 = vmatpush1.msra.mxu0 %v1145
  %1211 = vmatprep.subr.mxu0 %v1148
  %1212 = vmatpush1.msra.mxu0 %v1147
  %1213 = vmatprep.subr.mxu0 %v1150
  %1214 = vmatpush1.msra.mxu0 %v1149
  %1215 = vmatprep.subr.mxu0 %v1152
  %1216 = vmatpush1.msra.mxu0 %v1151
  %1217 = vmatprep.subr.mxu0 %v1154
  %1218 = vmatpush1.msra.mxu0 %v1153
  %1219 = vmatprep.subr.mxu0 %v1156
  %1220 = vmatpush1.msra.mxu0 %v1155
  %1221 = vmatprep.subr.mxu0 %v1158
  %1222 = vmatpush1.msra.mxu0 %v1157
  %1223 = vmatprep.subr.mxu0 %v1160
  %1224 = vmatpush1.msra.mxu0 %v1159
  %1225 = vmatprep.subr.mxu0 %v1162
  %1226 = vmatpush1.msra.mxu0 %v1161
  %1227 = vmatprep.subr.mxu0 %v1164
  %1228 = vmatpush1.msra.mxu0 %v1163
  %1229 = vmatprep.subr.mxu0 %v1166
  %1230 = vmatpush1.msra.mxu0 %v1165
  %1231 = vmatprep.subr.mxu0 %v1168
  %1232 = vmatpush1.msra.mxu0 %v1167
  %1233 = vmatprep.subr.mxu0 %v1170
  %1234 = vmatpush1.msra.mxu0 %v1169
  %1235 = vmatprep.subr.mxu0 %v1172
  %1236 = vmatpush1.msra.mxu0 %v1171
  %1237 = vmatprep.subr.mxu0 %v1174
  %1238 = vmatpush1.msra.mxu0 %v1173
  %1239 = vmatprep.subr.mxu0 %v1176
  %1240 = vmatpush1.msra.mxu0 %v1175
  %1241 = vmatprep.subr.mxu0 %v1178
  %1242 = vmatpush1.msra.mxu0 %v1177
  %1243 = vmatprep.subr.mxu0 %v1180
  %1244 = vmatpush1.msra.mxu0 %v1179
  %1245 = vmatprep.subr.mxu0 %v1182
  %1246 = vmatpush1.msra.mxu0 %v1181
  %1247 = vmatprep.subr.mxu0 %v1184
  %1248 = vmatpush1.msra.mxu0 %v1183
  %1249 = vmatprep.subr.mxu0 %v1186
  %1250 = vmatpush1.msra.mxu0 %v1185
  %1251 = vmatprep.subr.mxu0 %v1188
  %1252 = vmatpush1.msra.mxu0 %v1187
  %1253 = vmatprep.subr.mxu0 %v1190
  %1254 = vmatpush1.msra.mxu0 %v1189
  %1255 = vmatprep.mubr.f32.mxu0 %v1123
  %1256 = vmatmul.mubr.f32.gmra.mrb[0].mxu0 %v1121
  %v1257 = vpop.f32.mrb[0].mxu0
  %v1258 = vadd.f32 0.0, %v1257
  %v1259 = vpop.f32.mrb[0].mxu0
  %v1260 = vadd.f32 0.0, %v1259
  %1261 = vdwg.mxu0
  %v1262 = vrot.slane %v1258, 4
  %v1263 = vadd.f32 %v1258, %v1262
  %v1264 = vrot.slane %v1263, 2
  %v1265 = vadd.f32 %v1263, %v1264
  %v1266 = vrot.slane %v1265, 1
  %v1267 = vadd.f32 %v1265, %v1266
  %v1268 = vrot.slane %v1260, 4
  %v1269 = vadd.f32 %v1260, %v1268
  %v1270 = vrot.slane %v1269, 2
  %v1271 = vadd.f32 %v1269, %v1270
  %v1272 = vrot.slane %v1271, 1
  %v1273 = vadd.f32 %v1271, %v1272
  %v1274 = vmul.f32 %v1267, 0.03125
  %v1275 = vmul.f32 %v1273, 0.03125
  %v1276 = vmul.f32 %v1121, %v1121
  %v1277 = vmul.f32 %v1123, %v1123
  %1278 = vmatprep.subr.mxu0 %v1128
  %1279 = vmatpush1.msra.mxu0 %v1127
  %1280 = vmatprep.subr.mxu0 %v1130
  %1281 = vmatpush1.msra.mxu0 %v1129
  %1282 = vmatprep.subr.mxu0 %v1132
  %1283 = vmatpush1.msra.mxu0 %v1131
  %1284 = vmatprep.subr.mxu0 %v1134
  %1285 = vmatpush1.msra.mxu0 %v1133
  %1286 = vmatprep.subr.mxu0 %v1136
  %1287 = vmatpush1.msra.mxu0 %v1135
  %1288 = vmatprep.subr.mxu0 %v1138
  %1289 = vmatpush1.msra.mxu0 %v1137
  %1290 = vmatprep.subr.mxu0 %v1140
  %1291 = vmatpush1.msra.mxu0 %v1139
  %1292 = vmatprep.subr.mxu0 %v1142
  %1293 = vmatpush1.msra.mxu0 %v1141
  %1294 = vmatprep.subr.mxu0 %v1144
  %1295 = vmatpush1.msra.mxu0 %v1143
  %1296 = vmatprep.subr.mxu0 %v1146
  %1297 = vmatpush1.msra.mxu0 %v1145
  %1298 = vmatprep.subr.mxu0 %v1148
  %1299 = vmatpush1.msra.mxu0 %v1147
  %1300 = vmatprep.subr.mxu0 %v1150
  %1301 = vmatpush1.msra.mxu0 %v1149
  %1302 = vmatprep.subr.mxu0 %v1152
  %1303 = vmatpush1.msra.mxu0 %v1151
  %1304 = vmatprep.subr.mxu0 %v1154
  %1305 = vmatpush1.msra.mxu0 %v1153
  %1306 = vmatprep.subr.mxu0 %v1156
  %1307 = vmatpush1.msra.mxu0 %v1155
  %1308 = vmatprep.subr.mxu0 %v1158
  %1309 = vmatpush1.msra.mxu0 %v1157
  %1310 = vmatprep.subr.mxu0 %v1160
  %1311 = vmatpush1.msra.mxu0 %v1159
  %1312 = vmatprep.subr.mxu0 %v1162
  %1313 = vmatpush1.msra.mxu0 %v1161
  %1314 = vmatprep.subr.mxu0 %v1164
  %1315 = vmatpush1.msra.mxu0 %v1163
  %1316 = vmatprep.subr.mxu0 %v1166
  %1317 = vmatpush1.msra.mxu0 %v1165
  %1318 = vmatprep.subr.mxu0 %v1168
  %1319 = vmatpush1.msra.mxu0 %v1167
  %1320 = vmatprep.subr.mxu0 %v1170
  %1321 = vmatpush1.msra.mxu0 %v1169
  %1322 = vmatprep.subr.mxu0 %v1172
  %1323 = vmatpush1.msra.mxu0 %v1171
  %1324 = vmatprep.subr.mxu0 %v1174
  %1325 = vmatpush1.msra.mxu0 %v1173
  %1326 = vmatprep.subr.mxu0 %v1176
  %1327 = vmatpush1.msra.mxu0 %v1175
  %1328 = vmatprep.subr.mxu0 %v1178
  %1329 = vmatpush1.msra.mxu0 %v1177
  %1330 = vmatprep.subr.mxu0 %v1180
  %1331 = vmatpush1.msra.mxu0 %v1179
  %1332 = vmatprep.subr.mxu0 %v1182
  %1333 = vmatpush1.msra.mxu0 %v1181
  %1334 = vmatprep.subr.mxu0 %v1184
  %1335 = vmatpush1.msra.mxu0 %v1183
  %1336 = vmatprep.subr.mxu0 %v1186
  %1337 = vmatpush1.msra.mxu0 %v1185
  %1338 = vmatprep.subr.mxu0 %v1188
  %1339 = vmatpush1.msra.mxu0 %v1187
  %1340 = vmatprep.subr.mxu0 %v1190
  %1341 = vmatpush1.msra.mxu0 %v1189
  %1342 = vmatprep.mubr.f32.mxu0 %v1277
  %1343 = vmatmul.mubr.f32.gmra.mrb[0].mxu0 %v1276
  %v1344 = vpop.f32.mrb[0].mxu0
  %v1345 = vadd.f32 0.0, %v1344
  %v1346 = vpop.f32.mrb[0].mxu0
  %v1347 = vadd.f32 0.0, %v1346
  %1348 = vdwg.mxu0
  %v1349 = vrot.slane %v1345, 4
  %v1350 = vadd.f32 %v1345, %v1349
  %v1351 = vrot.slane %v1350, 2
  %v1352 = vadd.f32 %v1350, %v1351
  %v1353 = vrot.slane %v1352, 1
  %v1354 = vadd.f32 %v1352, %v1353
  %v1355 = vrot.slane %v1347, 4
  %v1356 = vadd.f32 %v1347, %v1355
  %v1357 = vrot.slane %v1356, 2
  %v1358 = vadd.f32 %v1356, %v1357
  %v1359 = vrot.slane %v1358, 1
  %v1360 = vadd.f32 %v1358, %v1359
  %v1361 = vmul.f32 %v1354, 0.03125
  %v1362 = vmul.f32 %v1360, 0.03125
  %v1363 = vmul.f32 %v1274, %v1274
  %v1364 = vmul.f32 %v1275, %v1275
  %v1365 = vsub.f32 %v1361, %v1363
  %v1366 = vsub.f32 %v1362, %v1364
  %v1367 = vadd.f32 %v1365, 1e-05
  %v1368 = vadd.f32 %v1366, 1e-05
  %v1369 = vrsqrt.pop %v1367
  %v1370 = vrsqrt.pop %v1368
  %v1371 = vld [vmem:[%s3] sm:$0x3]
  %v1374 = vcombine.low %v1369, %v1370
  %v1376 = vunpack.c.l.s4 1966171168
  %v1377 = vunpack.c.0.s8 %v1376
  %v1378 = vlaneseq
  %v1379 = vshrl.u32 %v1378, 7
  %v1380 = vsub.s32 %v1377, %v1379
  %v1381 = vrot.slane %v1374, %v1380
  %v1383 = vunpack.c.l.s4 1966171168
  %v1384 = vunpack.c.0.s8 %v1383
  %v1385 = vlaneseq
  %v1386 = vshrl.u32 %v1385, 7
  %v1387 = vsub.s32 %v1384, %v1386
  %v1388 = vrot.slane %v1381, %v1387
  %v1390 = vmul.f32 %v1371, %v1388
  %v1391 = vld [vmem:[%s4] sm:$0x3]
  %v1393 = vlaneseq
  %v1394 = vshrl.u32 %v1393, 7
  %v1395 = vsub.s32 0, %v1394
  %v1396 = vrot.slane %v1390, %v1395
  %v1397 = vlaneseq
  %v1398 = vshrl.u32 %v1397, 7
  %v1399 = vsub.s32 1, %v1398
  %v1400 = vrot.slane %v1390, %v1399
  %v1403 = vmul.f32 %v1274, %v1396
  %v1404 = vmul.f32 %v1275, %v1400
  %v1407 = vcombine.low %v1403, %v1404
  %v1409 = vunpack.c.l.s4 1966171168
  %v1410 = vunpack.c.0.s8 %v1409
  %v1411 = vlaneseq
  %v1412 = vshrl.u32 %v1411, 7
  %v1413 = vsub.s32 %v1410, %v1412
  %v1414 = vrot.slane %v1407, %v1413
  %v1416 = vunpack.c.l.s4 1966171168
  %v1417 = vunpack.c.0.s8 %v1416
  %v1418 = vlaneseq
  %v1419 = vshrl.u32 %v1418, 7
  %v1420 = vsub.s32 %v1417, %v1419
  %v1421 = vrot.slane %v1414, %v1420
  %v1423 = vsub.f32 %v1391, %v1421
  %v1424 = vmul.f32 %v1121, %v1396
  %v1425 = vmul.f32 %v1123, %v1400
  %v1427 = vlaneseq
  %v1428 = vshrl.u32 %v1427, 7
  %v1429 = vsub.s32 0, %v1428
  %v1430 = vrot.slane %v1423, %v1429
  %v1431 = vlaneseq
  %v1432 = vshrl.u32 %v1431, 7
  %v1433 = vsub.s32 1, %v1432
  %v1434 = vrot.slane %v1423, %v1433
  %v1437 = vadd.f32 %v1424, %v1430
  %v1438 = vadd.f32 %v1425, %v1434
  %v1439 = vmax.f32 %v1437, 0.0
  %v1440 = vmax.f32 %v1438, 0.0
  %v1441 = vpack.c.bf16 %v1439, %v1439
  %v1442 = vpack.c.bf16 %v1440, %v1440
  %v1445 = vunpack.c.l.b16 %v1441
  %v1446 = vunpack.c.l.b16 %v1442
  %v1447 = vpack.c.b16 %v1446, %v1445
  %1449 = vst [vmem:[%s5] sm:$0xff] %v1447
  // Predicated region
  $region22: #{pallas_decoder_forward.9} parent=0 // pred_check
    _
  $region23: #{pallas_decoder_forward.9} parent=0 // pred_check_branch
    %1451 = sbr.rel (0) target = $region25
  $region24: #{pallas_decoder_forward.9} parent=0 // pred_region
    _
  $region25: #{pallas_decoder_forward.9} parent=0 // pred_fallthru
    _
  // Predicated region
  $region26: #{pallas_decoder_forward.9} parent=0 // pred_check
    _
  $region27: #{pallas_decoder_forward.9} parent=0 // pred_check_branch
    %1453 = sbr.rel (0) target = $region29
  $region28: #{pallas_decoder_forward.9} parent=0 // pred_region
    _
  $region29: #{pallas_decoder_forward.9} parent=0 // pred_fallthru
    _

// kernel: pallas_decoder_forward.11
$region0: #{pallas_decoder_forward.11}
  #allocation0 [shape = 'u32[]', space=smem, size = 0x4, offset = 0x4, fixed_abs, tag = 'smem constant byte address 0x4 - core index']
  #allocation1 [shape = 'u32[144,128]{1,0:T(1,128)}', space=vmem, size = 0x12000, scoped, tag = 'internal scratch']
  %s0 = inlined_call_operand.vmem [shape: bf16[64,576], index: 0, kind: input, shape index: {}]
  %s1 = inlined_call_operand.vmem [shape: bf16[576,128], index: 1, kind: input, shape index: {}]
  %s2 = inlined_call_operand.vmem [shape: f32[128,128], index: 2, kind: input, shape index: {}]
  %s3 = inlined_call_operand.vmem [shape: f32[1,128], index: 3, kind: input, shape index: {}]
  %s4 = inlined_call_operand.vmem [shape: f32[1,128], index: 4, kind: input, shape index: {}]
  %s5 = inlined_call_operand.vmem [shape: bf16[64,128], index: 5, kind: output, shape index: {}]
  %s6 = sld [smem:[#allocation0]]
  $region30: #{pallas_decoder_forward.11} parent=0
    _
  %s8 = ssub.s32 1, %s6
  %s9 = scalar_select 0, %s8, %s6
  // Predicated region
  $region2: #{pallas_decoder_forward.11} parent=0 // pred_check
    _
  $region3: #{pallas_decoder_forward.11} parent=0 // pred_check_branch
    %11 = sbr.rel (0) target = $region5
  $region4: #{pallas_decoder_forward.11} parent=0 // pred_region
    _
  $region5: #{pallas_decoder_forward.11} parent=0 // pred_fallthru
    _
  // Predicated region
  $region6: #{pallas_decoder_forward.11} parent=0 // pred_check
    _
  $region7: #{pallas_decoder_forward.11} parent=0 // pred_check_branch
    %13 = sbr.rel (0) target = $region9
  $region8: #{pallas_decoder_forward.11} parent=0 // pred_region
    _
  $region9: #{pallas_decoder_forward.11} parent=0 // pred_fallthru
    _
  // Predicated region
  $region10: #{pallas_decoder_forward.11} parent=0 // pred_check
    _
  $region11: #{pallas_decoder_forward.11} parent=0 // pred_check_branch
    %15 = sbr.rel (0) target = $region13
  $region12: #{pallas_decoder_forward.11} parent=0 // pred_region
    _
  $region13: #{pallas_decoder_forward.11} parent=0 // pred_fallthru
    _
  // Predicated region
  $region14: #{pallas_decoder_forward.11} parent=0 // pred_check
    _
  $region15: #{pallas_decoder_forward.11} parent=0 // pred_check_branch
    %17 = sbr.rel (0) target = $region17
  $region16: #{pallas_decoder_forward.11} parent=0 // pred_region
    _
  $region17: #{pallas_decoder_forward.11} parent=0 // pred_fallthru
    _
  // Predicated region
  $region18: #{pallas_decoder_forward.11} parent=0 // pred_check
    _
  $region19: #{pallas_decoder_forward.11} parent=0 // pred_check_branch
    %19 = sbr.rel (0) target = $region21
  $region20: #{pallas_decoder_forward.11} parent=0 // pred_region
    _
  $region21: #{pallas_decoder_forward.11} parent=0 // pred_fallthru
    _
  %v21 = vld [vmem:[%s0] sm:$0xff]
  %v22 = vld [vmem:[%s0 + $0x8] sm:$0xff]
  %v23 = vld [vmem:[%s0 + $0x10] sm:$0xf]
  %v24 = vld [vmem:[%s0 + $0x14] sm:$0xff]
  %v25 = vld [vmem:[%s0 + $0x1c] sm:$0xff]
  %v26 = vld [vmem:[%s0 + $0x24] sm:$0xf]
  %v27 = vld [vmem:[%s0 + $0x28] sm:$0xff]
  %v28 = vld [vmem:[%s0 + $0x30] sm:$0xff]
  %v29 = vld [vmem:[%s0 + $0x38] sm:$0xf]
  %v30 = vld [vmem:[%s0 + $0x3c] sm:$0xff]
  %v31 = vld [vmem:[%s0 + $0x44] sm:$0xff]
  %v32 = vld [vmem:[%s0 + $0x4c] sm:$0xf]
  %v33 = vld [vmem:[%s0 + $0x50] sm:$0xff]
  %v34 = vld [vmem:[%s0 + $0x58] sm:$0xff]
  %v35 = vld [vmem:[%s0 + $0x60] sm:$0xf]
  %v36 = vld [vmem:[%s0 + $0x64] sm:$0xff]
  %v37 = vld [vmem:[%s0 + $0x6c] sm:$0xff]
  %v38 = vld [vmem:[%s0 + $0x74] sm:$0xf]
  %v39 = vld [vmem:[%s0 + $0x78] sm:$0xff]
  %v40 = vld [vmem:[%s0 + $0x80] sm:$0xff]
  %v41 = vld [vmem:[%s0 + $0x88] sm:$0xf]
  %v42 = vld [vmem:[%s0 + $0x8c] sm:$0xff]
  %v43 = vld [vmem:[%s0 + $0x94] sm:$0xff]
  %v44 = vld [vmem:[%s0 + $0x9c] sm:$0xf]
  %v45 = vld [vmem:[%s1] sm:$0xf]
  %v46 = vld [vmem:[%s1 + $0x4] sm:$0xf]
  %v47 = vld [vmem:[%s1 + $0x8] sm:$0xf]
  %v48 = vld [vmem:[%s1 + $0xc] sm:$0xf]
  %v49 = vld [vmem:[%s1 + $0x10] sm:$0xf]
  %v50 = vld [vmem:[%s1 + $0x14] sm:$0xf]
  %v51 = vld [vmem:[%s1 + $0x18] sm:$0xf]
  %v52 = vld [vmem:[%s1 + $0x1c] sm:$0xf]
  %v53 = vld [vmem:[%s1 + $0x20] sm:$0xf]
  %v54 = vld [vmem:[%s1 + $0x24] sm:$0xf]
  %v55 = vld [vmem:[%s1 + $0x28] sm:$0xf]
  %v56 = vld [vmem:[%s1 + $0x2c] sm:$0xf]
  %v57 = vld [vmem:[%s1 + $0x30] sm:$0xf]
  %v58 = vld [vmem:[%s1 + $0x34] sm:$0xf]
  %v59 = vld [vmem:[%s1 + $0x38] sm:$0xf]
  %v60 = vld [vmem:[%s1 + $0x3c] sm:$0xf]
  %v61 = vld [vmem:[%s1 + $0x40] sm:$0xf]
  %v62 = vld [vmem:[%s1 + $0x44] sm:$0xf]
  %v63 = vld [vmem:[%s1 + $0x48] sm:$0xf]
  %v64 = vld [vmem:[%s1 + $0x4c] sm:$0xf]
  %v65 = vld [vmem:[%s1 + $0x50] sm:$0xf]
  %v66 = vld [vmem:[%s1 + $0x54] sm:$0xf]
  %v67 = vld [vmem:[%s1 + $0x58] sm:$0xf]
  %v68 = vld [vmem:[%s1 + $0x5c] sm:$0xf]
  %v69 = vld [vmem:[%s1 + $0x60] sm:$0xf]
  %v70 = vld [vmem:[%s1 + $0x64] sm:$0xf]
  %v71 = vld [vmem:[%s1 + $0x68] sm:$0xf]
  %v72 = vld [vmem:[%s1 + $0x6c] sm:$0xf]
  %v73 = vld [vmem:[%s1 + $0x70] sm:$0xf]
  %v74 = vld [vmem:[%s1 + $0x74] sm:$0xf]
  %v75 = vld [vmem:[%s1 + $0x78] sm:$0xf]
  %v76 = vld [vmem:[%s1 + $0x7c] sm:$0xf]
  %v77 = vld [vmem:[%s1 + $0x80] sm:$0xf]
  %v78 = vld [vmem:[%s1 + $0x84] sm:$0xf]
  %v79 = vld [vmem:[%s1 + $0x88] sm:$0xf]
  %v80 = vld [vmem:[%s1 + $0x8c] sm:$0xf]
  %v81 = vld [vmem:[%s1 + $0x90] sm:$0xf]
  %v82 = vld [vmem:[%s1 + $0x94] sm:$0xf]
  %v83 = vld [vmem:[%s1 + $0x98] sm:$0xf]
  %v84 = vld [vmem:[%s1 + $0x9c] sm:$0xf]
  %v85 = vld [vmem:[%s1 + $0xa0] sm:$0xf]
  %v86 = vld [vmem:[%s1 + $0xa4] sm:$0xf]
  %v87 = vld [vmem:[%s1 + $0xa8] sm:$0xf]
  %v88 = vld [vmem:[%s1 + $0xac] sm:$0xf]
  %v89 = vld [vmem:[%s1 + $0xb0] sm:$0xf]
  %v90 = vld [vmem:[%s1 + $0xb4] sm:$0xf]
  %v91 = vld [vmem:[%s1 + $0xb8] sm:$0xf]
  %v92 = vld [vmem:[%s1 + $0xbc] sm:$0xf]
  %v93 = vld [vmem:[%s1 + $0xc0] sm:$0xf]
  %v94 = vld [vmem:[%s1 + $0xc4] sm:$0xf]
  %v95 = vld [vmem:[%s1 + $0xc8] sm:$0xf]
  %v96 = vld [vmem:[%s1 + $0xcc] sm:$0xf]
  %v97 = vld [vmem:[%s1 + $0xd0] sm:$0xf]
  %v98 = vld [vmem:[%s1 + $0xd4] sm:$0xf]
  %v99 = vld [vmem:[%s1 + $0xd8] sm:$0xf]
  %v100 = vld [vmem:[%s1 + $0xdc] sm:$0xf]
  %v101 = vld [vmem:[%s1 + $0xe0] sm:$0xf]
  %v102 = vld [vmem:[%s1 + $0xe4] sm:$0xf]
  %v103 = vld [vmem:[%s1 + $0xe8] sm:$0xf]
  %v104 = vld [vmem:[%s1 + $0xec] sm:$0xf]
  %v105 = vld [vmem:[%s1 + $0xf0] sm:$0xf]
  %v106 = vld [vmem:[%s1 + $0xf4] sm:$0xf]
  %v107 = vld [vmem:[%s1 + $0xf8] sm:$0xf]
  %v108 = vld [vmem:[%s1 + $0xfc] sm:$0xf]
  %v109 = vld [vmem:[%s1 + $0x100] sm:$0xf]
  %v110 = vld [vmem:[%s1 + $0x104] sm:$0xf]
  %v111 = vld [vmem:[%s1 + $0x108] sm:$0xf]
  %v112 = vld [vmem:[%s1 + $0x10c] sm:$0xf]
  %v113 = vld [vmem:[%s1 + $0x110] sm:$0xf]
  %v114 = vld [vmem:[%s1 + $0x114] sm:$0xf]
  %v115 = vld [vmem:[%s1 + $0x118] sm:$0xf]
  %v116 = vld [vmem:[%s1 + $0x11c] sm:$0xf]
  %v141 = vunpack.c.l.b16 %v21
  %v142 = vunpack.c.h.b16 %v21
  %v143 = vunpack.c.l.b16 %v22
  %v144 = vunpack.c.h.b16 %v22
  %v145 = vunpack.c.l.b16 %v23
  %v146 = vunpack.c.l.b16 %v24
  %v147 = vunpack.c.h.b16 %v24
  %v148 = vunpack.c.l.b16 %v25
  %v149 = vunpack.c.h.b16 %v25
  %v150 = vunpack.c.l.b16 %v26
  %v151 = vunpack.c.l.b16 %v27
  %v152 = vunpack.c.h.b16 %v27
  %v153 = vunpack.c.l.b16 %v28
  %v154 = vunpack.c.h.b16 %v28
  %v155 = vunpack.c.l.b16 %v29
  %v156 = vunpack.c.l.b16 %v30
  %v157 = vunpack.c.h.b16 %v30
  %v158 = vunpack.c.l.b16 %v31
  %v159 = vunpack.c.h.b16 %v31
  %v160 = vunpack.c.l.b16 %v32
  %v161 = vunpack.c.l.b16 %v33
  %v162 = vunpack.c.h.b16 %v33
  %v163 = vunpack.c.l.b16 %v34
  %v164 = vunpack.c.h.b16 %v34
  %v165 = vunpack.c.l.b16 %v35
  %v166 = vunpack.c.l.b16 %v36
  %v167 = vunpack.c.h.b16 %v36
  %v168 = vunpack.c.l.b16 %v37
  %v169 = vunpack.c.h.b16 %v37
  %v170 = vunpack.c.l.b16 %v38
  %v171 = vunpack.c.l.b16 %v39
  %v172 = vunpack.c.h.b16 %v39
  %v173 = vunpack.c.l.b16 %v40
  %v174 = vunpack.c.h.b16 %v40
  %v175 = vunpack.c.l.b16 %v41
  %v176 = vunpack.c.l.b16 %v42
  %v177 = vunpack.c.h.b16 %v42
  %v178 = vunpack.c.l.b16 %v43
  %v179 = vunpack.c.h.b16 %v43
  %v180 = vunpack.c.l.b16 %v44
  %v181 = vpack.c.b16 %v146, %v141
  %v182 = vpack.c.b16 %v147, %v142
  %v183 = vpack.c.b16 %v148, %v143
  %v184 = vpack.c.b16 %v149, %v144
  %v185 = vpack.c.b16 %v150, %v145
  %v186 = vpack.c.b16 %v156, %v151
  %v187 = vpack.c.b16 %v157, %v152
  %v188 = vpack.c.b16 %v158, %v153
  %v189 = vpack.c.b16 %v159, %v154
  %v190 = vpack.c.b16 %v160, %v155
  %v191 = vpack.c.b16 %v166, %v161
  %v192 = vpack.c.b16 %v167, %v162
  %v193 = vpack.c.b16 %v168, %v163
  %v194 = vpack.c.b16 %v169, %v164
  %v195 = vpack.c.b16 %v170, %v165
  %v196 = vpack.c.b16 %v176, %v171
  %v197 = vpack.c.b16 %v177, %v172
  %v198 = vpack.c.b16 %v178, %v173
  %v199 = vpack.c.b16 %v179, %v174
  %v200 = vpack.c.b16 %v180, %v175
  %v289 = vunpack.c.l.b16 %v45
  %v290 = vunpack.c.l.b16 %v46
  %v291 = vunpack.c.l.b16 %v47
  %v292 = vunpack.c.l.b16 %v48
  %v293 = vunpack.c.l.b16 %v49
  %v294 = vunpack.c.l.b16 %v50
  %v295 = vunpack.c.l.b16 %v51
  %v296 = vunpack.c.l.b16 %v52
  %v297 = vunpack.c.l.b16 %v53
  %v298 = vunpack.c.l.b16 %v54
  %v299 = vunpack.c.l.b16 %v55
  %v300 = vunpack.c.l.b16 %v56
  %v301 = vunpack.c.l.b16 %v57
  %v302 = vunpack.c.l.b16 %v58
  %v303 = vunpack.c.l.b16 %v59
  %v304 = vunpack.c.l.b16 %v60
  %v305 = vunpack.c.l.b16 %v61
  %v306 = vunpack.c.l.b16 %v62
  %v307 = vunpack.c.l.b16 %v63
  %v308 = vunpack.c.l.b16 %v64
  %v309 = vunpack.c.l.b16 %v65
  %v310 = vunpack.c.l.b16 %v66
  %v311 = vunpack.c.l.b16 %v67
  %v312 = vunpack.c.l.b16 %v68
  %v313 = vunpack.c.l.b16 %v69
  %v314 = vunpack.c.l.b16 %v70
  %v315 = vunpack.c.l.b16 %v71
  %v316 = vunpack.c.l.b16 %v72
  %v317 = vunpack.c.l.b16 %v73
  %v318 = vunpack.c.l.b16 %v74
  %v319 = vunpack.c.l.b16 %v75
  %v320 = vunpack.c.l.b16 %v76
  %v321 = vunpack.c.l.b16 %v77
  %v322 = vunpack.c.l.b16 %v78
  %v323 = vunpack.c.l.b16 %v79
  %v324 = vunpack.c.l.b16 %v80
  %v325 = vunpack.c.l.b16 %v81
  %v326 = vunpack.c.l.b16 %v82
  %v327 = vunpack.c.l.b16 %v83
  %v328 = vunpack.c.l.b16 %v84
  %v329 = vunpack.c.l.b16 %v85
  %v330 = vunpack.c.l.b16 %v86
  %v331 = vunpack.c.l.b16 %v87
  %v332 = vunpack.c.l.b16 %v88
  %v333 = vunpack.c.l.b16 %v89
  %v334 = vunpack.c.l.b16 %v90
  %v335 = vunpack.c.l.b16 %v91
  %v336 = vunpack.c.l.b16 %v92
  %v337 = vunpack.c.l.b16 %v93
  %v338 = vunpack.c.l.b16 %v94
  %v339 = vunpack.c.l.b16 %v95
  %v340 = vunpack.c.l.b16 %v96
  %v341 = vunpack.c.l.b16 %v97
  %v342 = vunpack.c.l.b16 %v98
  %v343 = vunpack.c.l.b16 %v99
  %v344 = vunpack.c.l.b16 %v100
  %v345 = vunpack.c.l.b16 %v101
  %v346 = vunpack.c.l.b16 %v102
  %v347 = vunpack.c.l.b16 %v103
  %v348 = vunpack.c.l.b16 %v104
  %v349 = vunpack.c.l.b16 %v105
  %v350 = vunpack.c.l.b16 %v106
  %v351 = vunpack.c.l.b16 %v107
  %v352 = vunpack.c.l.b16 %v108
  %v353 = vunpack.c.l.b16 %v109
  %v354 = vunpack.c.l.b16 %v110
  %v355 = vunpack.c.l.b16 %v111
  %v356 = vunpack.c.l.b16 %v112
  %v357 = vunpack.c.l.b16 %v113
  %v358 = vunpack.c.l.b16 %v114
  %v359 = vunpack.c.l.b16 %v115
  %v360 = vunpack.c.l.b16 %v116
  %v361 = vpack.c.b16 %v290, %v289
  %v362 = vpack.c.b16 %v292, %v291
  %v363 = vpack.c.b16 %v294, %v293
  %v364 = vpack.c.b16 %v296, %v295
  %v365 = vpack.c.b16 %v298, %v297
  %v366 = vpack.c.b16 %v300, %v299
  %v367 = vpack.c.b16 %v302, %v301
  %v368 = vpack.c.b16 %v304, %v303
  %v369 = vpack.c.b16 %v306, %v305
  %v370 = vpack.c.b16 %v308, %v307
  %v371 = vpack.c.b16 %v310, %v309
  %v372 = vpack.c.b16 %v312, %v311
  %v373 = vpack.c.b16 %v314, %v313
  %v374 = vpack.c.b16 %v316, %v315
  %v375 = vpack.c.b16 %v318, %v317
  %v376 = vpack.c.b16 %v320, %v319
  %v377 = vpack.c.b16 %v322, %v321
  %v378 = vpack.c.b16 %v324, %v323
  %v379 = vpack.c.b16 %v326, %v325
  %v380 = vpack.c.b16 %v328, %v327
  %v381 = vpack.c.b16 %v330, %v329
  %v382 = vpack.c.b16 %v332, %v331
  %v383 = vpack.c.b16 %v334, %v333
  %v384 = vpack.c.b16 %v336, %v335
  %v385 = vpack.c.b16 %v338, %v337
  %v386 = vpack.c.b16 %v340, %v339
  %v387 = vpack.c.b16 %v342, %v341
  %v388 = vpack.c.b16 %v344, %v343
  %v389 = vpack.c.b16 %v346, %v345
  %v390 = vpack.c.b16 %v348, %v347
  %v391 = vpack.c.b16 %v350, %v349
  %v392 = vpack.c.b16 %v352, %v351
  %v393 = vpack.c.b16 %v354, %v353
  %v394 = vpack.c.b16 %v356, %v355
  %v395 = vpack.c.b16 %v358, %v357
  %v396 = vpack.c.b16 %v360, %v359
  %vm433 = vcmask 523264
  %v435 = vsel %vm433, %v185, 0
  %v438 = vsel %vm433, %v190, 0
  %v441 = vsel %vm433, %v195, 0
  %v444 = vsel %vm433, %v200, 0
  %446 = vmatprep.subr.bf16.mxu0 0
  %447 = vmatpush1.bf16.msra.mxu0 %v361
  %448 = vmatprep.subr.bf16.mxu0 0
  %449 = vmatpush1.bf16.msra.mxu0 %v362
  %450 = vmatprep.subr.bf16.mxu0 0
  %451 = vmatpush1.bf16.msra.mxu0 %v363
  %452 = vmatprep.subr.bf16.mxu0 0
  %453 = vmatpush1.bf16.msra.mxu0 %v364
  %454 = vmatprep.subr.bf16.mxu0 0
  %455 = vmatpush1.bf16.msra.mxu0 %v365
  %456 = vmatprep.subr.bf16.mxu0 0
  %457 = vmatpush1.bf16.msra.mxu0 %v366
  %458 = vmatprep.subr.bf16.mxu0 0
  %459 = vmatpush1.bf16.msra.mxu0 %v367
  %460 = vmatprep.subr.bf16.mxu0 0
  %461 = vmatpush1.bf16.msra.mxu0 %v368
  %462 = vmatprep.subr.bf16.mxu0 0
  %463 = vmatpush1.bf16.msra.mxu0 %v369
  %464 = vmatprep.subr.bf16.mxu0 0
  %465 = vmatpush1.bf16.msra.mxu0 %v370
  %466 = vmatprep.subr.bf16.mxu0 0
  %467 = vmatpush1.bf16.msra.mxu0 %v371
  %468 = vmatprep.subr.bf16.mxu0 0
  %469 = vmatpush1.bf16.msra.mxu0 %v372
  %470 = vmatprep.subr.bf16.mxu0 0
  %471 = vmatpush1.bf16.msra.mxu0 %v373
  %472 = vmatprep.subr.bf16.mxu0 0
  %473 = vmatpush1.bf16.msra.mxu0 %v374
  %474 = vmatprep.subr.bf16.mxu0 0
  %475 = vmatpush1.bf16.msra.mxu0 %v375
  %476 = vmatprep.subr.bf16.mxu0 0
  %477 = vmatpush1.bf16.msra.mxu0 %v376
  %478 = vmatprep.mubr.bf16.mxu0 %v182
  %479 = vmatmul.mubr.bf16.gmra.mrb[0].mxu0 %v181
  %v480 = vpop.f32.mrb[0].mxu0
  %v481 = vadd.f32 0.0, %v480
  %v482 = vpop.f32.mrb[0].mxu0
  %v483 = vpop.f32.mrb[0].mxu0
  %v484 = vadd.f32 0.0, %v483
  %v485 = vpop.f32.mrb[0].mxu0
  %486 = vmatprep.mubr.bf16.mxu0 %v187
  %487 = vmatmul.mubr.bf16.gmra.mrb[0].mxu0 %v186
  %v488 = vpop.f32.mrb[0].mxu0
  %v489 = vadd.f32 0.0, %v488
  %v490 = vpop.f32.mrb[0].mxu0
  %v491 = vpop.f32.mrb[0].mxu0
  %v492 = vadd.f32 0.0, %v491
  %v493 = vpop.f32.mrb[0].mxu0
  %494 = vmatprep.mubr.bf16.mxu0 %v192
  %495 = vmatmul.mubr.bf16.gmra.mrb[0].mxu0 %v191
  %v496 = vpop.f32.mrb[0].mxu0
  %v497 = vadd.f32 0.0, %v496
  %v498 = vpop.f32.mrb[0].mxu0
  %v499 = vpop.f32.mrb[0].mxu0
  %v500 = vadd.f32 0.0, %v499
  %v501 = vpop.f32.mrb[0].mxu0
  %502 = vmatprep.mubr.bf16.mxu0 %v197
  %503 = vmatmul.mubr.bf16.gmra.mrb[0].mxu0 %v196
  %v504 = vpop.f32.mrb[0].mxu0
  %v505 = vadd.f32 0.0, %v504
  %v506 = vpop.f32.mrb[0].mxu0
  %v507 = vpop.f32.mrb[0].mxu0
  %v508 = vadd.f32 0.0, %v507
  %v509 = vpop.f32.mrb[0].mxu0
  %510 = vdwg.mxu0
  %511 = vmatprep.subr.bf16.mxu0 0
  %512 = vmatpush1.bf16.msra.mxu0 %v377
  %513 = vmatprep.subr.bf16.mxu0 0
  %514 = vmatpush1.bf16.msra.mxu0 %v378
  %515 = vmatprep.subr.bf16.mxu0 0
  %516 = vmatpush1.bf16.msra.mxu0 %v379
  %517 = vmatprep.subr.bf16.mxu0 0
  %518 = vmatpush1.bf16.msra.mxu0 %v380
  %519 = vmatprep.subr.bf16.mxu0 0
  %520 = vmatpush1.bf16.msra.mxu0 %v381
  %521 = vmatprep.subr.bf16.mxu0 0
  %522 = vmatpush1.bf16.msra.mxu0 %v382
  %523 = vmatprep.subr.bf16.mxu0 0
  %524 = vmatpush1.bf16.msra.mxu0 %v383
  %525 = vmatprep.subr.bf16.mxu0 0
  %526 = vmatpush1.bf16.msra.mxu0 %v384
  %527 = vmatprep.subr.bf16.mxu0 0
  %528 = vmatpush1.bf16.msra.mxu0 %v385
  %529 = vmatprep.subr.bf16.mxu0 0
  %530 = vmatpush1.bf16.msra.mxu0 %v386
  %531 = vmatprep.subr.bf16.mxu0 0
  %532 = vmatpush1.bf16.msra.mxu0 %v387
  %533 = vmatprep.subr.bf16.mxu0 0
  %534 = vmatpush1.bf16.msra.mxu0 %v388
  %535 = vmatprep.subr.bf16.mxu0 0
  %536 = vmatpush1.bf16.msra.mxu0 %v389
  %537 = vmatprep.subr.bf16.mxu0 0
  %538 = vmatpush1.bf16.msra.mxu0 %v390
  %539 = vmatprep.subr.bf16.mxu0 0
  %540 = vmatpush1.bf16.msra.mxu0 %v391
  %541 = vmatprep.subr.bf16.mxu0 0
  %542 = vmatpush1.bf16.msra.mxu0 %v392
  %543 = vmatprep.mubr.bf16.mxu0 %v184
  %544 = vmatmul.mubr.bf16.gmra.mrb[0].mxu0 %v183
  %v545 = vpop.f32.mrb[0].mxu0
  %v546 = vadd.f32 %v481, %v545
  %v547 = vpop.f32.mrb[0].mxu0
  %v548 = vpop.f32.mrb[0].mxu0
  %v549 = vadd.f32 %v484, %v548
  %v550 = vpop.f32.mrb[0].mxu0
  %551 = vmatprep.mubr.bf16.mxu0 %v189
  %552 = vmatmul.mubr.bf16.gmra.mrb[0].mxu0 %v188
  %v553 = vpop.f32.mrb[0].mxu0
  %v554 = vadd.f32 %v489, %v553
  %v555 = vpop.f32.mrb[0].mxu0
  %v556 = vpop.f32.mrb[0].mxu0
  %v557 = vadd.f32 %v492, %v556
  %v558 = vpop.f32.mrb[0].mxu0
  %559 = vmatprep.mubr.bf16.mxu0 %v194
  %560 = vmatmul.mubr.bf16.gmra.mrb[0].mxu0 %v193
  %v561 = vpop.f32.mrb[0].mxu0
  %v562 = vadd.f32 %v497, %v561
  %v563 = vpop.f32.mrb[0].mxu0
  %v564 = vpop.f32.mrb[0].mxu0
  %v565 = vadd.f32 %v500, %v564
  %v566 = vpop.f32.mrb[0].mxu0
  %567 = vmatprep.mubr.bf16.mxu0 %v199
  %568 = vmatmul.mubr.bf16.gmra.mrb[0].mxu0 %v198
  %v569 = vpop.f32.mrb[0].mxu0
  %v570 = vadd.f32 %v505, %v569
  %v571 = vpop.f32.mrb[0].mxu0
  %v572 = vpop.f32.mrb[0].mxu0
  %v573 = vadd.f32 %v508, %v572
  %v574 = vpop.f32.mrb[0].mxu0
  %575 = vdwg.mxu0
  %576 = vmatprep.subr.bf16.mxu0 0
  %577 = vmatpush1.bf16.msra.mxu0 %v393
  %578 = vmatprep.subr.bf16.mxu0 0
  %579 = vmatpush1.bf16.msra.mxu0 %v394
  %580 = vmatprep.subr.bf16.mxu0 0
  %581 = vmatpush1.bf16.msra.mxu0 %v395
  %582 = vmatprep.subr.bf16.mxu0 0
  %583 = vmatpush1.bf16.msra.mxu0 %v396
  %584 = vmatprep.subr.bf16.mxu0 0
  %585 = vmatpush1.bf16.msra.mxu0 0
  %586 = vmatprep.subr.bf16.mxu0 0
  %587 = vmatpush1.bf16.msra.mxu0 0
  %588 = vmatprep.subr.bf16.mxu0 0
  %589 = vmatpush1.bf16.msra.mxu0 0
  %590 = vmatprep.subr.bf16.mxu0 0
  %591 = vmatpush1.bf16.msra.mxu0 0
  %592 = vmatprep.subr.bf16.mxu0 0
  %593 = vmatpush1.bf16.msra.mxu0 0
  %594 = vmatprep.subr.bf16.mxu0 0
  %595 = vmatpush1.bf16.msra.mxu0 0
  %596 = vmatprep.subr.bf16.mxu0 0
  %597 = vmatpush1.bf16.msra.mxu0 0
  %598 = vmatprep.subr.bf16.mxu0 0
  %599 = vmatpush1.bf16.msra.mxu0 0
  %600 = vmatprep.subr.bf16.mxu0 0
  %601 = vmatpush1.bf16.msra.mxu0 0
  %602 = vmatprep.subr.bf16.mxu0 0
  %603 = vmatpush1.bf16.msra.mxu0 0
  %604 = vmatprep.subr.bf16.mxu0 0
  %605 = vmatpush1.bf16.msra.mxu0 0
  %606 = vmatprep.subr.bf16.mxu0 0
  %607 = vmatpush1.bf16.msra.mxu0 0
  %608 = vmatprep.mubr.bf16.mxu0 0
  %609 = vmatmul.mubr.bf16.gmra.mrb[0].mxu0 %v435
  %v610 = vpop.f32.mrb[0].mxu0
  %v611 = vadd.f32 %v546, %v610
  %v612 = vpop.f32.mrb[0].mxu0
  %v613 = vpop.f32.mrb[0].mxu0
  %v614 = vadd.f32 %v549, %v613
  %v615 = vpop.f32.mrb[0].mxu0
  %616 = vmatprep.mubr.bf16.mxu0 0
  %617 = vmatmul.mubr.bf16.gmra.mrb[0].mxu0 %v438
  %v618 = vpop.f32.mrb[0].mxu0
  %v619 = vadd.f32 %v554, %v618
  %v620 = vpop.f32.mrb[0].mxu0
  %v621 = vpop.f32.mrb[0].mxu0
  %v622 = vadd.f32 %v557, %v621
  %v623 = vpop.f32.mrb[0].mxu0
  %624 = vmatprep.mubr.bf16.mxu0 0
  %625 = vmatmul.mubr.bf16.gmra.mrb[0].mxu0 %v441
  %v626 = vpop.f32.mrb[0].mxu0
  %v627 = vadd.f32 %v562, %v626
  %v628 = vpop.f32.mrb[0].mxu0
  %v629 = vpop.f32.mrb[0].mxu0
  %v630 = vadd.f32 %v565, %v629
  %v631 = vpop.f32.mrb[0].mxu0
  %632 = vmatprep.mubr.bf16.mxu0 0
  %633 = vmatmul.mubr.bf16.gmra.mrb[0].mxu0 %v444
  %v634 = vpop.f32.mrb[0].mxu0
  %v635 = vadd.f32 %v570, %v634
  %v636 = vpop.f32.mrb[0].mxu0
  %v637 = vpop.f32.mrb[0].mxu0
  %v638 = vadd.f32 %v573, %v637
  %v639 = vpop.f32.mrb[0].mxu0
  %640 = vdwg.mxu0
  %v641 = vld [vmem:[%s2] sm:$0xff]
  %v642 = vld [vmem:[%s2 + $0x8] sm:$0xff]
  %v643 = vld [vmem:[%s2 + $0x10] sm:$0xff]
  %v644 = vld [vmem:[%s2 + $0x18] sm:$0xff]
  %v645 = vld [vmem:[%s2 + $0x20] sm:$0xff]
  %v646 = vld [vmem:[%s2 + $0x28] sm:$0xff]
  %v647 = vld [vmem:[%s2 + $0x30] sm:$0xff]
  %v648 = vld [vmem:[%s2 + $0x38] sm:$0xff]
  %v649 = vld [vmem:[%s2 + $0x40] sm:$0xff]
  %v650 = vld [vmem:[%s2 + $0x48] sm:$0xff]
  %v651 = vld [vmem:[%s2 + $0x50] sm:$0xff]
  %v652 = vld [vmem:[%s2 + $0x58] sm:$0xff]
  %v653 = vld [vmem:[%s2 + $0x60] sm:$0xff]
  %v654 = vld [vmem:[%s2 + $0x68] sm:$0xff]
  %v655 = vld [vmem:[%s2 + $0x70] sm:$0xff]
  %v656 = vld [vmem:[%s2 + $0x78] sm:$0xff]
  %657 = vmatprep.subr.mxu0 0.0
  %658 = vmatpush1.msra.mxu0 %v641
  %659 = vmatprep.subr.mxu0 0.0
  %660 = vmatpush1.msra.mxu0 %v642
  %661 = vmatprep.subr.mxu0 0.0
  %662 = vmatpush1.msra.mxu0 %v643
  %663 = vmatprep.subr.mxu0 0.0
  %664 = vmatpush1.msra.mxu0 %v644
  %665 = vmatprep.subr.mxu0 0.0
  %666 = vmatpush1.msra.mxu0 %v645
  %667 = vmatprep.subr.mxu0 0.0
  %668 = vmatpush1.msra.mxu0 %v646
  %669 = vmatprep.subr.mxu0 0.0
  %670 = vmatpush1.msra.mxu0 %v647
  %671 = vmatprep.subr.mxu0 0.0
  %672 = vmatpush1.msra.mxu0 %v648
  %673 = vmatprep.subr.mxu0 0.0
  %674 = vmatpush1.msra.mxu0 %v649
  %675 = vmatprep.subr.mxu0 0.0
  %676 = vmatpush1.msra.mxu0 %v650
  %677 = vmatprep.subr.mxu0 0.0
  %678 = vmatpush1.msra.mxu0 %v651
  %679 = vmatprep.subr.mxu0 0.0
  %680 = vmatpush1.msra.mxu0 %v652
  %681 = vmatprep.subr.mxu0 0.0
  %682 = vmatpush1.msra.mxu0 %v653
  %683 = vmatprep.subr.mxu0 0.0
  %684 = vmatpush1.msra.mxu0 %v654
  %685 = vmatprep.subr.mxu0 0.0
  %686 = vmatpush1.msra.mxu0 %v655
  %687 = vmatprep.subr.mxu0 0.0
  %688 = vmatpush1.msra.mxu0 %v656
  %689 = vmatprep.subr.mxu0 0.0
  %690 = vmatpush1.msra.mxu0 0.0
  %691 = vmatprep.subr.mxu0 0.0
  %692 = vmatpush1.msra.mxu0 0.0
  %693 = vmatprep.subr.mxu0 0.0
  %694 = vmatpush1.msra.mxu0 0.0
  %695 = vmatprep.subr.mxu0 0.0
  %696 = vmatpush1.msra.mxu0 0.0
  %697 = vmatprep.subr.mxu0 0.0
  %698 = vmatpush1.msra.mxu0 0.0
  %699 = vmatprep.subr.mxu0 0.0
  %700 = vmatpush1.msra.mxu0 0.0
  %701 = vmatprep.subr.mxu0 0.0
  %702 = vmatpush1.msra.mxu0 0.0
  %703 = vmatprep.subr.mxu0 0.0
  %704 = vmatpush1.msra.mxu0 0.0
  %705 = vmatprep.subr.mxu0 0.0
  %706 = vmatpush1.msra.mxu0 0.0
  %707 = vmatprep.subr.mxu0 0.0
  %708 = vmatpush1.msra.mxu0 0.0
  %709 = vmatprep.subr.mxu0 0.0
  %710 = vmatpush1.msra.mxu0 0.0
  %711 = vmatprep.subr.mxu0 0.0
  %712 = vmatpush1.msra.mxu0 0.0
  %713 = vmatprep.subr.mxu0 0.0
  %714 = vmatpush1.msra.mxu0 0.0
  %715 = vmatprep.subr.mxu0 0.0
  %716 = vmatpush1.msra.mxu0 0.0
  %717 = vmatprep.subr.mxu0 0.0
  %718 = vmatpush1.msra.mxu0 0.0
  %719 = vmatprep.subr.mxu0 0.0
  %720 = vmatpush1.msra.mxu0 0.0
  %721 = vmatprep.mubr.f32.mxu0 0.0
  %722 = vmatmul.mubr.f32.gmra.mrb[0].mxu0 %v611
  %v723 = vpop.f32.mrb[0].mxu0
  %v724 = vadd.f32 0.0, %v723
  %v725 = vpop.f32.mrb[0].mxu0
  %726 = vmatprep.mubr.f32.mxu0 0.0
  %727 = vmatmul.mubr.f32.gmra.mrb[0].mxu0 %v614
  %v728 = vpop.f32.mrb[0].mxu0
  %v729 = vadd.f32 0.0, %v728
  %v730 = vpop.f32.mrb[0].mxu0
  %731 = vmatprep.mubr.f32.mxu0 0.0
  %732 = vmatmul.mubr.f32.gmra.mrb[0].mxu0 %v619
  %v733 = vpop.f32.mrb[0].mxu0
  %v734 = vadd.f32 0.0, %v733
  %v735 = vpop.f32.mrb[0].mxu0
  %736 = vmatprep.mubr.f32.mxu0 0.0
  %737 = vmatmul.mubr.f32.gmra.mrb[0].mxu0 %v622
  %v738 = vpop.f32.mrb[0].mxu0
  %v739 = vadd.f32 0.0, %v738
  %v740 = vpop.f32.mrb[0].mxu0
  %741 = vmatprep.mubr.f32.mxu0 0.0
  %742 = vmatmul.mubr.f32.gmra.mrb[0].mxu0 %v627
  %v743 = vpop.f32.mrb[0].mxu0
  %v744 = vadd.f32 0.0, %v743
  %v745 = vpop.f32.mrb[0].mxu0
  %746 = vmatprep.mubr.f32.mxu0 0.0
  %747 = vmatmul.mubr.f32.gmra.mrb[0].mxu0 %v630
  %v748 = vpop.f32.mrb[0].mxu0
  %v749 = vadd.f32 0.0, %v748
  %v750 = vpop.f32.mrb[0].mxu0
  %751 = vmatprep.mubr.f32.mxu0 0.0
  %752 = vmatmul.mubr.f32.gmra.mrb[0].mxu0 %v635
  %v753 = vpop.f32.mrb[0].mxu0
  %v754 = vadd.f32 0.0, %v753
  %v755 = vpop.f32.mrb[0].mxu0
  %756 = vmatprep.mubr.f32.mxu0 0.0
  %757 = vmatmul.mubr.f32.gmra.mrb[0].mxu0 %v638
  %v758 = vpop.f32.mrb[0].mxu0
  %v759 = vadd.f32 0.0, %v758
  %v760 = vpop.f32.mrb[0].mxu0
  %761 = vdwg.mxu0
  %v762 = vadd.f32 %v724, %v729
  %v763 = vadd.f32 %v762, %v734
  %v764 = vadd.f32 %v763, %v739
  %v765 = vadd.f32 %v764, %v744
  %v766 = vadd.f32 %v765, %v749
  %v767 = vadd.f32 %v766, %v754
  %v768 = vadd.f32 %v767, %v759
  %v769 = vrot.slane %v768, 4
  %v770 = vadd.f32 %v768, %v769
  %v771 = vrot.slane %v770, 2
  %v772 = vadd.f32 %v770, %v771
  %v773 = vrot.slane %v772, 1
  %v774 = vadd.f32 %v772, %v773
  %v775 = vmul.f32 %v774, 0.001953125
  %v776 = vmul.f32 %v611, %v611
  %v777 = vmul.f32 %v614, %v614
  %v778 = vmul.f32 %v619, %v619
  %v779 = vmul.f32 %v622, %v622
  %v780 = vmul.f32 %v627, %v627
  %v781 = vmul.f32 %v630, %v630
  %v782 = vmul.f32 %v635, %v635
  %v783 = vmul.f32 %v638, %v638
  %784 = vmatprep.subr.mxu0 0.0
  %785 = vmatpush1.msra.mxu0 %v641
  %786 = vmatprep.subr.mxu0 0.0
  %787 = vmatpush1.msra.mxu0 %v642
  %788 = vmatprep.subr.mxu0 0.0
  %789 = vmatpush1.msra.mxu0 %v643
  %790 = vmatprep.subr.mxu0 0.0
  %791 = vmatpush1.msra.mxu0 %v644
  %792 = vmatprep.subr.mxu0 0.0
  %793 = vmatpush1.msra.mxu0 %v645
  %794 = vmatprep.subr.mxu0 0.0
  %795 = vmatpush1.msra.mxu0 %v646
  %796 = vmatprep.subr.mxu0 0.0
  %797 = vmatpush1.msra.mxu0 %v647
  %798 = vmatprep.subr.mxu0 0.0
  %799 = vmatpush1.msra.mxu0 %v648
  %800 = vmatprep.subr.mxu0 0.0
  %801 = vmatpush1.msra.mxu0 %v649
  %802 = vmatprep.subr.mxu0 0.0
  %803 = vmatpush1.msra.mxu0 %v650
  %804 = vmatprep.subr.mxu0 0.0
  %805 = vmatpush1.msra.mxu0 %v651
  %806 = vmatprep.subr.mxu0 0.0
  %807 = vmatpush1.msra.mxu0 %v652
  %808 = vmatprep.subr.mxu0 0.0
  %809 = vmatpush1.msra.mxu0 %v653
  %810 = vmatprep.subr.mxu0 0.0
  %811 = vmatpush1.msra.mxu0 %v654
  %812 = vmatprep.subr.mxu0 0.0
  %813 = vmatpush1.msra.mxu0 %v655
  %814 = vmatprep.subr.mxu0 0.0
  %815 = vmatpush1.msra.mxu0 %v656
  %816 = vmatprep.subr.mxu0 0.0
  %817 = vmatpush1.msra.mxu0 0.0
  %818 = vmatprep.subr.mxu0 0.0
  %819 = vmatpush1.msra.mxu0 0.0
  %820 = vmatprep.subr.mxu0 0.0
  %821 = vmatpush1.msra.mxu0 0.0
  %822 = vmatprep.subr.mxu0 0.0
  %823 = vmatpush1.msra.mxu0 0.0
  %824 = vmatprep.subr.mxu0 0.0
  %825 = vmatpush1.msra.mxu0 0.0
  %826 = vmatprep.subr.mxu0 0.0
  %827 = vmatpush1.msra.mxu0 0.0
  %828 = vmatprep.subr.mxu0 0.0
  %829 = vmatpush1.msra.mxu0 0.0
  %830 = vmatprep.subr.mxu0 0.0
  %831 = vmatpush1.msra.mxu0 0.0
  %832 = vmatprep.subr.mxu0 0.0
  %833 = vmatpush1.msra.mxu0 0.0
  %834 = vmatprep.subr.mxu0 0.0
  %835 = vmatpush1.msra.mxu0 0.0
  %836 = vmatprep.subr.mxu0 0.0
  %837 = vmatpush1.msra.mxu0 0.0
  %838 = vmatprep.subr.mxu0 0.0
  %839 = vmatpush1.msra.mxu0 0.0
  %840 = vmatprep.subr.mxu0 0.0
  %841 = vmatpush1.msra.mxu0 0.0
  %842 = vmatprep.subr.mxu0 0.0
  %843 = vmatpush1.msra.mxu0 0.0
  %844 = vmatprep.subr.mxu0 0.0
  %845 = vmatpush1.msra.mxu0 0.0
  %846 = vmatprep.subr.mxu0 0.0
  %847 = vmatpush1.msra.mxu0 0.0
  %848 = vmatprep.mubr.f32.mxu0 0.0
  %849 = vmatmul.mubr.f32.gmra.mrb[0].mxu0 %v776
  %v850 = vpop.f32.mrb[0].mxu0
  %v851 = vadd.f32 0.0, %v850
  %v852 = vpop.f32.mrb[0].mxu0
  %853 = vmatprep.mubr.f32.mxu0 0.0
  %854 = vmatmul.mubr.f32.gmra.mrb[0].mxu0 %v777
  %v855 = vpop.f32.mrb[0].mxu0
  %v856 = vadd.f32 0.0, %v855
  %v857 = vpop.f32.mrb[0].mxu0
  %858 = vmatprep.mubr.f32.mxu0 0.0
  %859 = vmatmul.mubr.f32.gmra.mrb[0].mxu0 %v778
  %v860 = vpop.f32.mrb[0].mxu0
  %v861 = vadd.f32 0.0, %v860
  %v862 = vpop.f32.mrb[0].mxu0
  %863 = vmatprep.mubr.f32.mxu0 0.0
  %864 = vmatmul.mubr.f32.gmra.mrb[0].mxu0 %v779
  %v865 = vpop.f32.mrb[0].mxu0
  %v866 = vadd.f32 0.0, %v865
  %v867 = vpop.f32.mrb[0].mxu0
  %868 = vmatprep.mubr.f32.mxu0 0.0
  %869 = vmatmul.mubr.f32.gmra.mrb[0].mxu0 %v780
  %v870 = vpop.f32.mrb[0].mxu0
  %v871 = vadd.f32 0.0, %v870
  %v872 = vpop.f32.mrb[0].mxu0
  %873 = vmatprep.mubr.f32.mxu0 0.0
  %874 = vmatmul.mubr.f32.gmra.mrb[0].mxu0 %v781
  %v875 = vpop.f32.mrb[0].mxu0
  %v876 = vadd.f32 0.0, %v875
  %v877 = vpop.f32.mrb[0].mxu0
  %878 = vmatprep.mubr.f32.mxu0 0.0
  %879 = vmatmul.mubr.f32.gmra.mrb[0].mxu0 %v782
  %v880 = vpop.f32.mrb[0].mxu0
  %v881 = vadd.f32 0.0, %v880
  %v882 = vpop.f32.mrb[0].mxu0
  %883 = vmatprep.mubr.f32.mxu0 0.0
  %884 = vmatmul.mubr.f32.gmra.mrb[0].mxu0 %v783
  %v885 = vpop.f32.mrb[0].mxu0
  %v886 = vadd.f32 0.0, %v885
  %v887 = vpop.f32.mrb[0].mxu0
  %888 = vdwg.mxu0
  %v889 = vadd.f32 %v851, %v856
  %v890 = vadd.f32 %v889, %v861
  %v891 = vadd.f32 %v890, %v866
  %v892 = vadd.f32 %v891, %v871
  %v893 = vadd.f32 %v892, %v876
  %v894 = vadd.f32 %v893, %v881
  %v895 = vadd.f32 %v894, %v886
  %v896 = vrot.slane %v895, 4
  %v897 = vadd.f32 %v895, %v896
  %v898 = vrot.slane %v897, 2
  %v899 = vadd.f32 %v897, %v898
  %v900 = vrot.slane %v899, 1
  %v901 = vadd.f32 %v899, %v900
  %v902 = vmul.f32 %v901, 0.001953125
  %v903 = vmul.f32 %v775, %v775
  %v904 = vsub.f32 %v902, %v903
  %v905 = vadd.f32 %v904, 1e-05
  %v906 = vrsqrt.pop %v905
  %v907 = vld [vmem:[%s3] sm:$0x1]
  %v908 = vmul.f32 %v907, %v906
  %v909 = vld [vmem:[%s4] sm:$0x1]
  %v910 = vmul.f32 %v775, %v908
  %v911 = vsub.f32 %v909, %v910
  %v913 = vlaneseq
  %v914 = vshrl.u32 %v913, 7
  %v915 = vsub.s32 0, %v914
  %v916 = vrot.slane %v908, %v915
  %v918 = vmul.f32 %v611, %v916
  %v919 = vmul.f32 %v614, %v916
  %v920 = vmul.f32 %v619, %v916
  %v921 = vmul.f32 %v622, %v916
  %v922 = vmul.f32 %v627, %v916
  %v923 = vmul.f32 %v630, %v916
  %v924 = vmul.f32 %v635, %v916
  %v925 = vmul.f32 %v638, %v916
  %v927 = vlaneseq
  %v928 = vshrl.u32 %v927, 7
  %v929 = vsub.s32 0, %v928
  %v930 = vrot.slane %v911, %v929
  %v932 = vadd.f32 %v918, %v930
  %v933 = vadd.f32 %v919, %v930
  %v934 = vadd.f32 %v920, %v930
  %v935 = vadd.f32 %v921, %v930
  %v936 = vadd.f32 %v922, %v930
  %v937 = vadd.f32 %v923, %v930
  %v938 = vadd.f32 %v924, %v930
  %v939 = vadd.f32 %v925, %v930
  %v940 = vmax.f32 %v932, 0.0
  %v941 = vmax.f32 %v933, 0.0
  %v942 = vmax.f32 %v934, 0.0
  %v943 = vmax.f32 %v935, 0.0
  %v944 = vmax.f32 %v936, 0.0
  %v945 = vmax.f32 %v937, 0.0
  %v946 = vmax.f32 %v938, 0.0
  %v947 = vmax.f32 %v939, 0.0
  %v948 = vpack.c.bf16 %v941, %v940
  %v949 = vpack.c.bf16 %v943, %v942
  %v950 = vpack.c.bf16 %v945, %v944
  %v951 = vpack.c.bf16 %v947, %v946
  %v956 = vunpack.c.l.b16 %v948
  %v957 = vunpack.c.h.b16 %v948
  %v958 = vunpack.c.l.b16 %v949
  %v959 = vunpack.c.h.b16 %v949
  %v960 = vunpack.c.l.b16 %v950
  %v961 = vunpack.c.h.b16 %v950
  %v962 = vunpack.c.l.b16 %v951
  %v963 = vunpack.c.h.b16 %v951
  %v964 = vpack.c.b16 %v956, %v956
  %v965 = vpack.c.b16 %v957, %v957
  %v966 = vpack.c.b16 %v958, %v958
  %v967 = vpack.c.b16 %v959, %v959
  %v968 = vpack.c.b16 %v960, %v960
  %v969 = vpack.c.b16 %v961, %v961
  %v970 = vpack.c.b16 %v962, %v962
  %v971 = vpack.c.b16 %v963, %v963
  %980 = vst [vmem:[%s5] sm:$0xf] %v964
  %981 = vst [vmem:[%s5 + $0x4] sm:$0xf] %v965
  %982 = vst [vmem:[%s5 + $0x8] sm:$0xf] %v966
  %983 = vst [vmem:[%s5 + $0xc] sm:$0xf] %v967
  %984 = vst [vmem:[%s5 + $0x10] sm:$0xf] %v968
  %985 = vst [vmem:[%s5 + $0x14] sm:$0xf] %v969
  %986 = vst [vmem:[%s5 + $0x18] sm:$0xf] %v970
  %987 = vst [vmem:[%s5 + $0x1c] sm:$0xf] %v971
  // Predicated region
  $region22: #{pallas_decoder_forward.11} parent=0 // pred_check
    _
  $region23: #{pallas_decoder_forward.11} parent=0 // pred_check_branch
    %989 = sbr.rel (0) target = $region25
  $region24: #{pallas_decoder_forward.11} parent=0 // pred_region
    _
  $region25: #{pallas_decoder_forward.11} parent=0 // pred_fallthru
    _
  // Predicated region
  $region26: #{pallas_decoder_forward.11} parent=0 // pred_check
    _
  $region27: #{pallas_decoder_forward.11} parent=0 // pred_check_branch
    %991 = sbr.rel (0) target = $region29
  $region28: #{pallas_decoder_forward.11} parent=0 // pred_region
    _
  $region29: #{pallas_decoder_forward.11} parent=0 // pred_fallthru
    _

// kernel: pallas_decoder_forward.12
$region0: #{pallas_decoder_forward.12}
  #allocation0 [shape = 'u32[]', space=smem, size = 0x4, offset = 0x4, fixed_abs, tag = 'smem constant byte address 0x4 - core index']
  #allocation1 [shape = 'u32[144,128]{1,0:T(1,128)}', space=vmem, size = 0x12000, scoped, tag = 'internal scratch']
  %s0 = inlined_call_operand.vmem [shape: bf16[128,576], index: 0, kind: input, shape index: {}]
  %s1 = inlined_call_operand.vmem [shape: bf16[576,128], index: 1, kind: input, shape index: {}]
  %s2 = inlined_call_operand.vmem [shape: f32[128,128], index: 2, kind: input, shape index: {}]
  %s3 = inlined_call_operand.vmem [shape: f32[1,128], index: 3, kind: input, shape index: {}]
  %s4 = inlined_call_operand.vmem [shape: f32[1,128], index: 4, kind: input, shape index: {}]
  %s5 = inlined_call_operand.vmem [shape: bf16[128,128], index: 5, kind: output, shape index: {}]
  %s6 = sld [smem:[#allocation0]]
  $region30: #{pallas_decoder_forward.12} parent=0
    _
  %s8 = ssub.s32 1, %s6
  %s9 = scalar_select 0, %s8, %s6
  // Predicated region
  $region2: #{pallas_decoder_forward.12} parent=0 // pred_check
    _
  $region3: #{pallas_decoder_forward.12} parent=0 // pred_check_branch
    %11 = sbr.rel (0) target = $region5
  $region4: #{pallas_decoder_forward.12} parent=0 // pred_region
    _
  $region5: #{pallas_decoder_forward.12} parent=0 // pred_fallthru
    _
  // Predicated region
  $region6: #{pallas_decoder_forward.12} parent=0 // pred_check
    _
  $region7: #{pallas_decoder_forward.12} parent=0 // pred_check_branch
    %13 = sbr.rel (0) target = $region9
  $region8: #{pallas_decoder_forward.12} parent=0 // pred_region
    _
  $region9: #{pallas_decoder_forward.12} parent=0 // pred_fallthru
    _
  // Predicated region
  $region10: #{pallas_decoder_forward.12} parent=0 // pred_check
    _
  $region11: #{pallas_decoder_forward.12} parent=0 // pred_check_branch
    %15 = sbr.rel (0) target = $region13
  $region12: #{pallas_decoder_forward.12} parent=0 // pred_region
    _
  $region13: #{pallas_decoder_forward.12} parent=0 // pred_fallthru
    _
  // Predicated region
  $region14: #{pallas_decoder_forward.12} parent=0 // pred_check
    _
  $region15: #{pallas_decoder_forward.12} parent=0 // pred_check_branch
    %17 = sbr.rel (0) target = $region17
  $region16: #{pallas_decoder_forward.12} parent=0 // pred_region
    _
  $region17: #{pallas_decoder_forward.12} parent=0 // pred_fallthru
    _
  // Predicated region
  $region18: #{pallas_decoder_forward.12} parent=0 // pred_check
    _
  $region19: #{pallas_decoder_forward.12} parent=0 // pred_check_branch
    %19 = sbr.rel (0) target = $region21
  $region20: #{pallas_decoder_forward.12} parent=0 // pred_region
    _
  $region21: #{pallas_decoder_forward.12} parent=0 // pred_fallthru
    _
  %v21 = vld [vmem:[%s0] sm:$0xff]
  %v22 = vld [vmem:[%s0 + $0x8] sm:$0xff]
  %v23 = vld [vmem:[%s0 + $0x10] sm:$0xf]
  %v24 = vld [vmem:[%s0 + $0x14] sm:$0xff]
  %v25 = vld [vmem:[%s0 + $0x1c] sm:$0xff]
  %v26 = vld [vmem:[%s0 + $0x24] sm:$0xf]
  %v27 = vld [vmem:[%s0 + $0x28] sm:$0xff]
  %v28 = vld [vmem:[%s0 + $0x30] sm:$0xff]
  %v29 = vld [vmem:[%s0 + $0x38] sm:$0xf]
  %v30 = vld [vmem:[%s0 + $0x3c] sm:$0xff]
  %v31 = vld [vmem:[%s0 + $0x44] sm:$0xff]
  %v32 = vld [vmem:[%s0 + $0x4c] sm:$0xf]
  %v33 = vld [vmem:[%s0 + $0x50] sm:$0xff]
  %v34 = vld [vmem:[%s0 + $0x58] sm:$0xff]
  %v35 = vld [vmem:[%s0 + $0x60] sm:$0xf]
  %v36 = vld [vmem:[%s0 + $0x64] sm:$0xff]
  %v37 = vld [vmem:[%s0 + $0x6c] sm:$0xff]
  %v38 = vld [vmem:[%s0 + $0x74] sm:$0xf]
  %v39 = vld [vmem:[%s0 + $0x78] sm:$0xff]
  %v40 = vld [vmem:[%s0 + $0x80] sm:$0xff]
  %v41 = vld [vmem:[%s0 + $0x88] sm:$0xf]
  %v42 = vld [vmem:[%s0 + $0x8c] sm:$0xff]
  %v43 = vld [vmem:[%s0 + $0x94] sm:$0xff]
  %v44 = vld [vmem:[%s0 + $0x9c] sm:$0xf]
  %v45 = vld [vmem:[%s0 + $0xa0] sm:$0xff]
  %v46 = vld [vmem:[%s0 + $0xa8] sm:$0xff]
  %v47 = vld [vmem:[%s0 + $0xb0] sm:$0xf]
  %v48 = vld [vmem:[%s0 + $0xb4] sm:$0xff]
  %v49 = vld [vmem:[%s0 + $0xbc] sm:$0xff]
  %v50 = vld [vmem:[%s0 + $0xc4] sm:$0xf]
  %v51 = vld [vmem:[%s0 + $0xc8] sm:$0xff]
  %v52 = vld [vmem:[%s0 + $0xd0] sm:$0xff]
  %v53 = vld [vmem:[%s0 + $0xd8] sm:$0xf]
  %v54 = vld [vmem:[%s0 + $0xdc] sm:$0xff]
  %v55 = vld [vmem:[%s0 + $0xe4] sm:$0xff]
  %v56 = vld [vmem:[%s0 + $0xec] sm:$0xf]
  %v57 = vld [vmem:[%s0 + $0xf0] sm:$0xff]
  %v58 = vld [vmem:[%s0 + $0xf8] sm:$0xff]
  %v59 = vld [vmem:[%s0 + $0x100] sm:$0xf]
  %v60 = vld [vmem:[%s0 + $0x104] sm:$0xff]
  %v61 = vld [vmem:[%s0 + $0x10c] sm:$0xff]
  %v62 = vld [vmem:[%s0 + $0x114] sm:$0xf]
  %v63 = vld [vmem:[%s0 + $0x118] sm:$0xff]
  %v64 = vld [vmem:[%s0 + $0x120] sm:$0xff]
  %v65 = vld [vmem:[%s0 + $0x128] sm:$0xf]
  %v66 = vld [vmem:[%s0 + $0x12c] sm:$0xff]
  %v67 = vld [vmem:[%s0 + $0x134] sm:$0xff]
  %v68 = vld [vmem:[%s0 + $0x13c] sm:$0xf]
  %v69 = vld [vmem:[%s1] sm:$0xf]
  %v70 = vld [vmem:[%s1 + $0x4] sm:$0xf]
  %v71 = vld [vmem:[%s1 + $0x8] sm:$0xf]
  %v72 = vld [vmem:[%s1 + $0xc] sm:$0xf]
  %v73 = vld [vmem:[%s1 + $0x10] sm:$0xf]
  %v74 = vld [vmem:[%s1 + $0x14] sm:$0xf]
  %v75 = vld [vmem:[%s1 + $0x18] sm:$0xf]
  %v76 = vld [vmem:[%s1 + $0x1c] sm:$0xf]
  %v77 = vld [vmem:[%s1 + $0x20] sm:$0xf]
  %v78 = vld [vmem:[%s1 + $0x24] sm:$0xf]
  %v79 = vld [vmem:[%s1 + $0x28] sm:$0xf]
  %v80 = vld [vmem:[%s1 + $0x2c] sm:$0xf]
  %v81 = vld [vmem:[%s1 + $0x30] sm:$0xf]
  %v82 = vld [vmem:[%s1 + $0x34] sm:$0xf]
  %v83 = vld [vmem:[%s1 + $0x38] sm:$0xf]
  %v84 = vld [vmem:[%s1 + $0x3c] sm:$0xf]
  %v85 = vld [vmem:[%s1 + $0x40] sm:$0xf]
  %v86 = vld [vmem:[%s1 + $0x44] sm:$0xf]
  %v87 = vld [vmem:[%s1 + $0x48] sm:$0xf]
  %v88 = vld [vmem:[%s1 + $0x4c] sm:$0xf]
  %v89 = vld [vmem:[%s1 + $0x50] sm:$0xf]
  %v90 = vld [vmem:[%s1 + $0x54] sm:$0xf]
  %v91 = vld [vmem:[%s1 + $0x58] sm:$0xf]
  %v92 = vld [vmem:[%s1 + $0x5c] sm:$0xf]
  %v93 = vld [vmem:[%s1 + $0x60] sm:$0xf]
  %v94 = vld [vmem:[%s1 + $0x64] sm:$0xf]
  %v95 = vld [vmem:[%s1 + $0x68] sm:$0xf]
  %v96 = vld [vmem:[%s1 + $0x6c] sm:$0xf]
  %v97 = vld [vmem:[%s1 + $0x70] sm:$0xf]
  %v98 = vld [vmem:[%s1 + $0x74] sm:$0xf]
  %v99 = vld [vmem:[%s1 + $0x78] sm:$0xf]
  %v100 = vld [vmem:[%s1 + $0x7c] sm:$0xf]
  %v101 = vld [vmem:[%s1 + $0x80] sm:$0xf]
  %v102 = vld [vmem:[%s1 + $0x84] sm:$0xf]
  %v103 = vld [vmem:[%s1 + $0x88] sm:$0xf]
  %v104 = vld [vmem:[%s1 + $0x8c] sm:$0xf]
  %v105 = vld [vmem:[%s1 + $0x90] sm:$0xf]
  %v106 = vld [vmem:[%s1 + $0x94] sm:$0xf]
  %v107 = vld [vmem:[%s1 + $0x98] sm:$0xf]
  %v108 = vld [vmem:[%s1 + $0x9c] sm:$0xf]
  %v109 = vld [vmem:[%s1 + $0xa0] sm:$0xf]
  %v110 = vld [vmem:[%s1 + $0xa4] sm:$0xf]
  %v111 = vld [vmem:[%s1 + $0xa8] sm:$0xf]
  %v112 = vld [vmem:[%s1 + $0xac] sm:$0xf]
  %v113 = vld [vmem:[%s1 + $0xb0] sm:$0xf]
  %v114 = vld [vmem:[%s1 + $0xb4] sm:$0xf]
  %v115 = vld [vmem:[%s1 + $0xb8] sm:$0xf]
  %v116 = vld [vmem:[%s1 + $0xbc] sm:$0xf]
  %v117 = vld [vmem:[%s1 + $0xc0] sm:$0xf]
  %v118 = vld [vmem:[%s1 + $0xc4] sm:$0xf]
  %v119 = vld [vmem:[%s1 + $0xc8] sm:$0xf]
  %v120 = vld [vmem:[%s1 + $0xcc] sm:$0xf]
  %v121 = vld [vmem:[%s1 + $0xd0] sm:$0xf]
  %v122 = vld [vmem:[%s1 + $0xd4] sm:$0xf]
  %v123 = vld [vmem:[%s1 + $0xd8] sm:$0xf]
  %v124 = vld [vmem:[%s1 + $0xdc] sm:$0xf]
  %v125 = vld [vmem:[%s1 + $0xe0] sm:$0xf]
  %v126 = vld [vmem:[%s1 + $0xe4] sm:$0xf]
  %v127 = vld [vmem:[%s1 + $0xe8] sm:$0xf]
  %v128 = vld [vmem:[%s1 + $0xec] sm:$0xf]
  %v129 = vld [vmem:[%s1 + $0xf0] sm:$0xf]
  %v130 = vld [vmem:[%s1 + $0xf4] sm:$0xf]
  %v131 = vld [vmem:[%s1 + $0xf8] sm:$0xf]
  %v132 = vld [vmem:[%s1 + $0xfc] sm:$0xf]
  %v133 = vld [vmem:[%s1 + $0x100] sm:$0xf]
  %v134 = vld [vmem:[%s1 + $0x104] sm:$0xf]
  %v135 = vld [vmem:[%s1 + $0x108] sm:$0xf]
  %v136 = vld [vmem:[%s1 + $0x10c] sm:$0xf]
  %v137 = vld [vmem:[%s1 + $0x110] sm:$0xf]
  %v138 = vld [vmem:[%s1 + $0x114] sm:$0xf]
  %v139 = vld [vmem:[%s1 + $0x118] sm:$0xf]
  %v140 = vld [vmem:[%s1 + $0x11c] sm:$0xf]
  %v189 = vunpack.c.l.b16 %v21
  %v190 = vunpack.c.h.b16 %v21
  %v191 = vunpack.c.l.b16 %v22
  %v192 = vunpack.c.h.b16 %v22
  %v193 = vunpack.c.l.b16 %v23
  %v194 = vunpack.c.l.b16 %v24
  %v195 = vunpack.c.h.b16 %v24
  %v196 = vunpack.c.l.b16 %v25
  %v197 = vunpack.c.h.b16 %v25
  %v198 = vunpack.c.l.b16 %v26
  %v199 = vunpack.c.l.b16 %v27
  %v200 = vunpack.c.h.b16 %v27
  %v201 = vunpack.c.l.b16 %v28
  %v202 = vunpack.c.h.b16 %v28
  %v203 = vunpack.c.l.b16 %v29
  %v204 = vunpack.c.l.b16 %v30
  %v205 = vunpack.c.h.b16 %v30
  %v206 = vunpack.c.l.b16 %v31
  %v207 = vunpack.c.h.b16 %v31
  %v208 = vunpack.c.l.b16 %v32
  %v209 = vunpack.c.l.b16 %v33
  %v210 = vunpack.c.h.b16 %v33
  %v211 = vunpack.c.l.b16 %v34
  %v212 = vunpack.c.h.b16 %v34
  %v213 = vunpack.c.l.b16 %v35
  %v214 = vunpack.c.l.b16 %v36
  %v215 = vunpack.c.h.b16 %v36
  %v216 = vunpack.c.l.b16 %v37
  %v217 = vunpack.c.h.b16 %v37
  %v218 = vunpack.c.l.b16 %v38
  %v219 = vunpack.c.l.b16 %v39
  %v220 = vunpack.c.h.b16 %v39
  %v221 = vunpack.c.l.b16 %v40
  %v222 = vunpack.c.h.b16 %v40
  %v223 = vunpack.c.l.b16 %v41
  %v224 = vunpack.c.l.b16 %v42
  %v225 = vunpack.c.h.b16 %v42
  %v226 = vunpack.c.l.b16 %v43
  %v227 = vunpack.c.h.b16 %v43
  %v228 = vunpack.c.l.b16 %v44
  %v229 = vunpack.c.l.b16 %v45
  %v230 = vunpack.c.h.b16 %v45
  %v231 = vunpack.c.l.b16 %v46
  %v232 = vunpack.c.h.b16 %v46
  %v233 = vunpack.c.l.b16 %v47
  %v234 = vunpack.c.l.b16 %v48
  %v235 = vunpack.c.h.b16 %v48
  %v236 = vunpack.c.l.b16 %v49
  %v237 = vunpack.c.h.b16 %v49
  %v238 = vunpack.c.l.b16 %v50
  %v239 = vunpack.c.l.b16 %v51
  %v240 = vunpack.c.h.b16 %v51
  %v241 = vunpack.c.l.b16 %v52
  %v242 = vunpack.c.h.b16 %v52
  %v243 = vunpack.c.l.b16 %v53
  %v244 = vunpack.c.l.b16 %v54
  %v245 = vunpack.c.h.b16 %v54
  %v246 = vunpack.c.l.b16 %v55
  %v247 = vunpack.c.h.b16 %v55
  %v248 = vunpack.c.l.b16 %v56
  %v249 = vunpack.c.l.b16 %v57
  %v250 = vunpack.c.h.b16 %v57
  %v251 = vunpack.c.l.b16 %v58
  %v252 = vunpack.c.h.b16 %v58
  %v253 = vunpack.c.l.b16 %v59
  %v254 = vunpack.c.l.b16 %v60
  %v255 = vunpack.c.h.b16 %v60
  %v256 = vunpack.c.l.b16 %v61
  %v257 = vunpack.c.h.b16 %v61
  %v258 = vunpack.c.l.b16 %v62
  %v259 = vunpack.c.l.b16 %v63
  %v260 = vunpack.c.h.b16 %v63
  %v261 = vunpack.c.l.b16 %v64
  %v262 = vunpack.c.h.b16 %v64
  %v263 = vunpack.c.l.b16 %v65
  %v264 = vunpack.c.l.b16 %v66
  %v265 = vunpack.c.h.b16 %v66
  %v266 = vunpack.c.l.b16 %v67
  %v267 = vunpack.c.h.b16 %v67
  %v268 = vunpack.c.l.b16 %v68
  %v269 = vpack.c.b16 %v194, %v189
  %v270 = vpack.c.b16 %v195, %v190
  %v271 = vpack.c.b16 %v196, %v191
  %v272 = vpack.c.b16 %v197, %v192
  %v273 = vpack.c.b16 %v198, %v193
  %v274 = vpack.c.b16 %v204, %v199
  %v275 = vpack.c.b16 %v205, %v200
  %v276 = vpack.c.b16 %v206, %v201
  %v277 = vpack.c.b16 %v207, %v202
  %v278 = vpack.c.b16 %v208, %v203
  %v279 = vpack.c.b16 %v214, %v209
  %v280 = vpack.c.b16 %v215, %v210
  %v281 = vpack.c.b16 %v216, %v211
  %v282 = vpack.c.b16 %v217, %v212
  %v283 = vpack.c.b16 %v218, %v213
  %v284 = vpack.c.b16 %v224, %v219
  %v285 = vpack.c.b16 %v225, %v220
  %v286 = vpack.c.b16 %v226, %v221
  %v287 = vpack.c.b16 %v227, %v222
  %v288 = vpack.c.b16 %v228, %v223
  %v289 = vpack.c.b16 %v234, %v229
  %v290 = vpack.c.b16 %v235, %v230
  %v291 = vpack.c.b16 %v236, %v231
  %v292 = vpack.c.b16 %v237, %v232
  %v293 = vpack.c.b16 %v238, %v233
  %v294 = vpack.c.b16 %v244, %v239
  %v295 = vpack.c.b16 %v245, %v240
  %v296 = vpack.c.b16 %v246, %v241
  %v297 = vpack.c.b16 %v247, %v242
  %v298 = vpack.c.b16 %v248, %v243
  %v299 = vpack.c.b16 %v254, %v249
  %v300 = vpack.c.b16 %v255, %v250
  %v301 = vpack.c.b16 %v256, %v251
  %v302 = vpack.c.b16 %v257, %v252
  %v303 = vpack.c.b16 %v258, %v253
  %v304 = vpack.c.b16 %v264, %v259
  %v305 = vpack.c.b16 %v265, %v260
  %v306 = vpack.c.b16 %v266, %v261
  %v307 = vpack.c.b16 %v267, %v262
  %v308 = vpack.c.b16 %v268, %v263
  %v413 = vunpack.c.l.b16 %v69
  %v414 = vunpack.c.l.b16 %v70
  %v415 = vunpack.c.l.b16 %v71
  %v416 = vunpack.c.l.b16 %v72
  %v417 = vunpack.c.l.b16 %v73
  %v418 = vunpack.c.l.b16 %v74
  %v419 = vunpack.c.l.b16 %v75
  %v420 = vunpack.c.l.b16 %v76
  %v421 = vunpack.c.l.b16 %v77
  %v422 = vunpack.c.l.b16 %v78
  %v423 = vunpack.c.l.b16 %v79
  %v424 = vunpack.c.l.b16 %v80
  %v425 = vunpack.c.l.b16 %v81
  %v426 = vunpack.c.l.b16 %v82
  %v427 = vunpack.c.l.b16 %v83
  %v428 = vunpack.c.l.b16 %v84
  %v429 = vunpack.c.l.b16 %v85
  %v430 = vunpack.c.l.b16 %v86
  %v431 = vunpack.c.l.b16 %v87
  %v432 = vunpack.c.l.b16 %v88
  %v433 = vunpack.c.l.b16 %v89
  %v434 = vunpack.c.l.b16 %v90
  %v435 = vunpack.c.l.b16 %v91
  %v436 = vunpack.c.l.b16 %v92
  %v437 = vunpack.c.l.b16 %v93
  %v438 = vunpack.c.l.b16 %v94
  %v439 = vunpack.c.l.b16 %v95
  %v440 = vunpack.c.l.b16 %v96
  %v441 = vunpack.c.l.b16 %v97
  %v442 = vunpack.c.l.b16 %v98
  %v443 = vunpack.c.l.b16 %v99
  %v444 = vunpack.c.l.b16 %v100
  %v445 = vunpack.c.l.b16 %v101
  %v446 = vunpack.c.l.b16 %v102
  %v447 = vunpack.c.l.b16 %v103
  %v448 = vunpack.c.l.b16 %v104
  %v449 = vunpack.c.l.b16 %v105
  %v450 = vunpack.c.l.b16 %v106
  %v451 = vunpack.c.l.b16 %v107
  %v452 = vunpack.c.l.b16 %v108
  %v453 = vunpack.c.l.b16 %v109
  %v454 = vunpack.c.l.b16 %v110
  %v455 = vunpack.c.l.b16 %v111
  %v456 = vunpack.c.l.b16 %v112
  %v457 = vunpack.c.l.b16 %v113
  %v458 = vunpack.c.l.b16 %v114
  %v459 = vunpack.c.l.b16 %v115
  %v460 = vunpack.c.l.b16 %v116
  %v461 = vunpack.c.l.b16 %v117
  %v462 = vunpack.c.l.b16 %v118
  %v463 = vunpack.c.l.b16 %v119
  %v464 = vunpack.c.l.b16 %v120
  %v465 = vunpack.c.l.b16 %v121
  %v466 = vunpack.c.l.b16 %v122
  %v467 = vunpack.c.l.b16 %v123
  %v468 = vunpack.c.l.b16 %v124
  %v469 = vunpack.c.l.b16 %v125
  %v470 = vunpack.c.l.b16 %v126
  %v471 = vunpack.c.l.b16 %v127
  %v472 = vunpack.c.l.b16 %v128
  %v473 = vunpack.c.l.b16 %v129
  %v474 = vunpack.c.l.b16 %v130
  %v475 = vunpack.c.l.b16 %v131
  %v476 = vunpack.c.l.b16 %v132
  %v477 = vunpack.c.l.b16 %v133
  %v478 = vunpack.c.l.b16 %v134
  %v479 = vunpack.c.l.b16 %v135
  %v480 = vunpack.c.l.b16 %v136
  %v481 = vunpack.c.l.b16 %v137
  %v482 = vunpack.c.l.b16 %v138
  %v483 = vunpack.c.l.b16 %v139
  %v484 = vunpack.c.l.b16 %v140
  %v485 = vpack.c.b16 %v414, %v413
  %v486 = vpack.c.b16 %v416, %v415
  %v487 = vpack.c.b16 %v418, %v417
  %v488 = vpack.c.b16 %v420, %v419
  %v489 = vpack.c.b16 %v422, %v421
  %v490 = vpack.c.b16 %v424, %v423
  %v491 = vpack.c.b16 %v426, %v425
  %v492 = vpack.c.b16 %v428, %v427
  %v493 = vpack.c.b16 %v430, %v429
  %v494 = vpack.c.b16 %v432, %v431
  %v495 = vpack.c.b16 %v434, %v433
  %v496 = vpack.c.b16 %v436, %v435
  %v497 = vpack.c.b16 %v438, %v437
  %v498 = vpack.c.b16 %v440, %v439
  %v499 = vpack.c.b16 %v442, %v441
  %v500 = vpack.c.b16 %v444, %v443
  %v501 = vpack.c.b16 %v446, %v445
  %v502 = vpack.c.b16 %v448, %v447
  %v503 = vpack.c.b16 %v450, %v449
  %v504 = vpack.c.b16 %v452, %v451
  %v505 = vpack.c.b16 %v454, %v453
  %v506 = vpack.c.b16 %v456, %v455
  %v507 = vpack.c.b16 %v458, %v457
  %v508 = vpack.c.b16 %v460, %v459
  %v509 = vpack.c.b16 %v462, %v461
  %v510 = vpack.c.b16 %v464, %v463
  %v511 = vpack.c.b16 %v466, %v465
  %v512 = vpack.c.b16 %v468, %v467
  %v513 = vpack.c.b16 %v470, %v469
  %v514 = vpack.c.b16 %v472, %v471
  %v515 = vpack.c.b16 %v474, %v473
  %v516 = vpack.c.b16 %v476, %v475
  %v517 = vpack.c.b16 %v478, %v477
  %v518 = vpack.c.b16 %v480, %v479
  %v519 = vpack.c.b16 %v482, %v481
  %v520 = vpack.c.b16 %v484, %v483
  %vm557 = vcmask 523264
  %v559 = vsel %vm557, %v273, 0
  %v562 = vsel %vm557, %v278, 0
  %v565 = vsel %vm557, %v283, 0
  %v568 = vsel %vm557, %v288, 0
  %v571 = vsel %vm557, %v293, 0
  %v574 = vsel %vm557, %v298, 0
  %v577 = vsel %vm557, %v303, 0
  %v580 = vsel %vm557, %v308, 0
  %582 = vmatprep.subr.bf16.mxu0 0
  %583 = vmatpush1.bf16.msra.mxu0 %v485
  %584 = vmatprep.subr.bf16.mxu0 0
  %585 = vmatpush1.bf16.msra.mxu0 %v486
  %586 = vmatprep.subr.bf16.mxu0 0
  %587 = vmatpush1.bf16.msra.mxu0 %v487
  %588 = vmatprep.subr.bf16.mxu0 0
  %589 = vmatpush1.bf16.msra.mxu0 %v488
  %590 = vmatprep.subr.bf16.mxu0 0
  %591 = vmatpush1.bf16.msra.mxu0 %v489
  %592 = vmatprep.subr.bf16.mxu0 0
  %593 = vmatpush1.bf16.msra.mxu0 %v490
  %594 = vmatprep.subr.bf16.mxu0 0
  %595 = vmatpush1.bf16.msra.mxu0 %v491
  %596 = vmatprep.subr.bf16.mxu0 0
  %597 = vmatpush1.bf16.msra.mxu0 %v492
  %598 = vmatprep.subr.bf16.mxu0 0
  %599 = vmatpush1.bf16.msra.mxu0 %v493
  %600 = vmatprep.subr.bf16.mxu0 0
  %601 = vmatpush1.bf16.msra.mxu0 %v494
  %602 = vmatprep.subr.bf16.mxu0 0
  %603 = vmatpush1.bf16.msra.mxu0 %v495
  %604 = vmatprep.subr.bf16.mxu0 0
  %605 = vmatpush1.bf16.msra.mxu0 %v496
  %606 = vmatprep.subr.bf16.mxu0 0
  %607 = vmatpush1.bf16.msra.mxu0 %v497
  %608 = vmatprep.subr.bf16.mxu0 0
  %609 = vmatpush1.bf16.msra.mxu0 %v498
  %610 = vmatprep.subr.bf16.mxu0 0
  %611 = vmatpush1.bf16.msra.mxu0 %v499
  %612 = vmatprep.subr.bf16.mxu0 0
  %613 = vmatpush1.bf16.msra.mxu0 %v500
  %614 = vmatprep.mubr.bf16.mxu0 %v270
  %615 = vmatmul.mubr.bf16.gmra.mrb[0].mxu0 %v269
  %v616 = vpop.f32.mrb[0].mxu0
  %v617 = vadd.f32 0.0, %v616
  %v618 = vpop.f32.mrb[0].mxu0
  %v619 = vpop.f32.mrb[0].mxu0
  %v620 = vadd.f32 0.0, %v619
  %v621 = vpop.f32.mrb[0].mxu0
  %622 = vmatprep.mubr.bf16.mxu0 %v275
  %623 = vmatmul.mubr.bf16.gmra.mrb[0].mxu0 %v274
  %v624 = vpop.f32.mrb[0].mxu0
  %v625 = vadd.f32 0.0, %v624
  %v626 = vpop.f32.mrb[0].mxu0
  %v627 = vpop.f32.mrb[0].mxu0
  %v628 = vadd.f32 0.0, %v627
  %v629 = vpop.f32.mrb[0].mxu0
  %630 = vmatprep.mubr.bf16.mxu0 %v280
  %631 = vmatmul.mubr.bf16.gmra.mrb[0].mxu0 %v279
  %v632 = vpop.f32.mrb[0].mxu0
  %v633 = vadd.f32 0.0, %v632
  %v634 = vpop.f32.mrb[0].mxu0
  %v635 = vpop.f32.mrb[0].mxu0
  %v636 = vadd.f32 0.0, %v635
  %v637 = vpop.f32.mrb[0].mxu0
  %638 = vmatprep.mubr.bf16.mxu0 %v285
  %639 = vmatmul.mubr.bf16.gmra.mrb[0].mxu0 %v284
  %v640 = vpop.f32.mrb[0].mxu0
  %v641 = vadd.f32 0.0, %v640
  %v642 = vpop.f32.mrb[0].mxu0
  %v643 = vpop.f32.mrb[0].mxu0
  %v644 = vadd.f32 0.0, %v643
  %v645 = vpop.f32.mrb[0].mxu0
  %646 = vmatprep.mubr.bf16.mxu0 %v290
  %647 = vmatmul.mubr.bf16.gmra.mrb[0].mxu0 %v289
  %v648 = vpop.f32.mrb[0].mxu0
  %v649 = vadd.f32 0.0, %v648
  %v650 = vpop.f32.mrb[0].mxu0
  %v651 = vpop.f32.mrb[0].mxu0
  %v652 = vadd.f32 0.0, %v651
  %v653 = vpop.f32.mrb[0].mxu0
  %654 = vmatprep.mubr.bf16.mxu0 %v295
  %655 = vmatmul.mubr.bf16.gmra.mrb[0].mxu0 %v294
  %v656 = vpop.f32.mrb[0].mxu0
  %v657 = vadd.f32 0.0, %v656
  %v658 = vpop.f32.mrb[0].mxu0
  %v659 = vpop.f32.mrb[0].mxu0
  %v660 = vadd.f32 0.0, %v659
  %v661 = vpop.f32.mrb[0].mxu0
  %662 = vmatprep.mubr.bf16.mxu0 %v300
  %663 = vmatmul.mubr.bf16.gmra.mrb[0].mxu0 %v299
  %v664 = vpop.f32.mrb[0].mxu0
  %v665 = vadd.f32 0.0, %v664
  %v666 = vpop.f32.mrb[0].mxu0
  %v667 = vpop.f32.mrb[0].mxu0
  %v668 = vadd.f32 0.0, %v667
  %v669 = vpop.f32.mrb[0].mxu0
  %670 = vmatprep.mubr.bf16.mxu0 %v305
  %671 = vmatmul.mubr.bf16.gmra.mrb[0].mxu0 %v304
  %v672 = vpop.f32.mrb[0].mxu0
  %v673 = vadd.f32 0.0, %v672
  %v674 = vpop.f32.mrb[0].mxu0
  %v675 = vpop.f32.mrb[0].mxu0
  %v676 = vadd.f32 0.0, %v675
  %v677 = vpop.f32.mrb[0].mxu0
  %678 = vdwg.mxu0
  %679 = vmatprep.subr.bf16.mxu0 0
  %680 = vmatpush1.bf16.msra.mxu0 %v501
  %681 = vmatprep.subr.bf16.mxu0 0
  %682 = vmatpush1.bf16.msra.mxu0 %v502
  %683 = vmatprep.subr.bf16.mxu0 0
  %684 = vmatpush1.bf16.msra.mxu0 %v503
  %685 = vmatprep.subr.bf16.mxu0 0
  %686 = vmatpush1.bf16.msra.mxu0 %v504
  %687 = vmatprep.subr.bf16.mxu0 0
  %688 = vmatpush1.bf16.msra.mxu0 %v505
  %689 = vmatprep.subr.bf16.mxu0 0
  %690 = vmatpush1.bf16.msra.mxu0 %v506
  %691 = vmatprep.subr.bf16.mxu0 0
  %692 = vmatpush1.bf16.msra.mxu0 %v507
  %693 = vmatprep.subr.bf16.mxu0 0
  %694 = vmatpush1.bf16.msra.mxu0 %v508
  %695 = vmatprep.subr.bf16.mxu0 0
  %696 = vmatpush1.bf16.msra.mxu0 %v509
  %697 = vmatprep.subr.bf16.mxu0 0
  %698 = vmatpush1.bf16.msra.mxu0 %v510
  %699 = vmatprep.subr.bf16.mxu0 0
  %700 = vmatpush1.bf16.msra.mxu0 %v511
  %701 = vmatprep.subr.bf16.mxu0 0
  %702 = vmatpush1.bf16.msra.mxu0 %v512
  %703 = vmatprep.subr.bf16.mxu0 0
  %704 = vmatpush1.bf16.msra.mxu0 %v513
  %705 = vmatprep.subr.bf16.mxu0 0
  %706 = vmatpush1.bf16.msra.mxu0 %v514
  %707 = vmatprep.subr.bf16.mxu0 0
  %708 = vmatpush1.bf16.msra.mxu0 %v515
  %709 = vmatprep.subr.bf16.mxu0 0
  %710 = vmatpush1.bf16.msra.mxu0 %v516
  %711 = vmatprep.mubr.bf16.mxu0 %v272
  %712 = vmatmul.mubr.bf16.gmra.mrb[0].mxu0 %v271
  %v713 = vpop.f32.mrb[0].mxu0
  %v714 = vadd.f32 %v617, %v713
  %v715 = vpop.f32.mrb[0].mxu0
  %v716 = vpop.f32.mrb[0].mxu0
  %v717 = vadd.f32 %v620, %v716
  %v718 = vpop.f32.mrb[0].mxu0
  %719 = vmatprep.mubr.bf16.mxu0 %v277
  %720 = vmatmul.mubr.bf16.gmra.mrb[0].mxu0 %v276
  %v721 = vpop.f32.mrb[0].mxu0
  %v722 = vadd.f32 %v625, %v721
  %v723 = vpop.f32.mrb[0].mxu0
  %v724 = vpop.f32.mrb[0].mxu0
  %v725 = vadd.f32 %v628, %v724
  %v726 = vpop.f32.mrb[0].mxu0
  %727 = vmatprep.mubr.bf16.mxu0 %v282
  %728 = vmatmul.mubr.bf16.gmra.mrb[0].mxu0 %v281
  %v729 = vpop.f32.mrb[0].mxu0
  %v730 = vadd.f32 %v633, %v729
  %v731 = vpop.f32.mrb[0].mxu0
  %v732 = vpop.f32.mrb[0].mxu0
  %v733 = vadd.f32 %v636, %v732
  %v734 = vpop.f32.mrb[0].mxu0
  %735 = vmatprep.mubr.bf16.mxu0 %v287
  %736 = vmatmul.mubr.bf16.gmra.mrb[0].mxu0 %v286
  %v737 = vpop.f32.mrb[0].mxu0
  %v738 = vadd.f32 %v641, %v737
  %v739 = vpop.f32.mrb[0].mxu0
  %v740 = vpop.f32.mrb[0].mxu0
  %v741 = vadd.f32 %v644, %v740
  %v742 = vpop.f32.mrb[0].mxu0
  %743 = vmatprep.mubr.bf16.mxu0 %v292
  %744 = vmatmul.mubr.bf16.gmra.mrb[0].mxu0 %v291
  %v745 = vpop.f32.mrb[0].mxu0
  %v746 = vadd.f32 %v649, %v745
  %v747 = vpop.f32.mrb[0].mxu0
  %v748 = vpop.f32.mrb[0].mxu0
  %v749 = vadd.f32 %v652, %v748
  %v750 = vpop.f32.mrb[0].mxu0
  %751 = vmatprep.mubr.bf16.mxu0 %v297
  %752 = vmatmul.mubr.bf16.gmra.mrb[0].mxu0 %v296
  %v753 = vpop.f32.mrb[0].mxu0
  %v754 = vadd.f32 %v657, %v753
  %v755 = vpop.f32.mrb[0].mxu0
  %v756 = vpop.f32.mrb[0].mxu0
  %v757 = vadd.f32 %v660, %v756
  %v758 = vpop.f32.mrb[0].mxu0
  %759 = vmatprep.mubr.bf16.mxu0 %v302
  %760 = vmatmul.mubr.bf16.gmra.mrb[0].mxu0 %v301
  %v761 = vpop.f32.mrb[0].mxu0
  %v762 = vadd.f32 %v665, %v761
  %v763 = vpop.f32.mrb[0].mxu0
  %v764 = vpop.f32.mrb[0].mxu0
  %v765 = vadd.f32 %v668, %v764
  %v766 = vpop.f32.mrb[0].mxu0
  %767 = vmatprep.mubr.bf16.mxu0 %v307
  %768 = vmatmul.mubr.bf16.gmra.mrb[0].mxu0 %v306
  %v769 = vpop.f32.mrb[0].mxu0
  %v770 = vadd.f32 %v673, %v769
  %v771 = vpop.f32.mrb[0].mxu0
  %v772 = vpop.f32.mrb[0].mxu0
  %v773 = vadd.f32 %v676, %v772
  %v774 = vpop.f32.mrb[0].mxu0
  %775 = vdwg.mxu0
  %776 = vmatprep.subr.bf16.mxu0 0
  %777 = vmatpush1.bf16.msra.mxu0 %v517
  %778 = vmatprep.subr.bf16.mxu0 0
  %779 = vmatpush1.bf16.msra.mxu0 %v518
  %780 = vmatprep.subr.bf16.mxu0 0
  %781 = vmatpush1.bf16.msra.mxu0 %v519
  %782 = vmatprep.subr.bf16.mxu0 0
  %783 = vmatpush1.bf16.msra.mxu0 %v520
  %784 = vmatprep.subr.bf16.mxu0 0
  %785 = vmatpush1.bf16.msra.mxu0 0
  %786 = vmatprep.subr.bf16.mxu0 0
  %787 = vmatpush1.bf16.msra.mxu0 0
  %788 = vmatprep.subr.bf16.mxu0 0
  %789 = vmatpush1.bf16.msra.mxu0 0
  %790 = vmatprep.subr.bf16.mxu0 0
  %791 = vmatpush1.bf16.msra.mxu0 0
  %792 = vmatprep.subr.bf16.mxu0 0
  %793 = vmatpush1.bf16.msra.mxu0 0
  %794 = vmatprep.subr.bf16.mxu0 0
  %795 = vmatpush1.bf16.msra.mxu0 0
  %796 = vmatprep.subr.bf16.mxu0 0
  %797 = vmatpush1.bf16.msra.mxu0 0
  %798 = vmatprep.subr.bf16.mxu0 0
  %799 = vmatpush1.bf16.msra.mxu0 0
  %800 = vmatprep.subr.bf16.mxu0 0
  %801 = vmatpush1.bf16.msra.mxu0 0
  %802 = vmatprep.subr.bf16.mxu0 0
  %803 = vmatpush1.bf16.msra.mxu0 0
  %804 = vmatprep.subr.bf16.mxu0 0
  %805 = vmatpush1.bf16.msra.mxu0 0
  %806 = vmatprep.subr.bf16.mxu0 0
  %807 = vmatpush1.bf16.msra.mxu0 0
  %808 = vmatprep.mubr.bf16.mxu0 0
  %809 = vmatmul.mubr.bf16.gmra.mrb[0].mxu0 %v559
  %v810 = vpop.f32.mrb[0].mxu0
  %v811 = vadd.f32 %v714, %v810
  %v812 = vpop.f32.mrb[0].mxu0
  %v813 = vpop.f32.mrb[0].mxu0
  %v814 = vadd.f32 %v717, %v813
  %v815 = vpop.f32.mrb[0].mxu0
  %816 = vmatprep.mubr.bf16.mxu0 0
  %817 = vmatmul.mubr.bf16.gmra.mrb[0].mxu0 %v562
  %v818 = vpop.f32.mrb[0].mxu0
  %v819 = vadd.f32 %v722, %v818
  %v820 = vpop.f32.mrb[0].mxu0
  %v821 = vpop.f32.mrb[0].mxu0
  %v822 = vadd.f32 %v725, %v821
  %v823 = vpop.f32.mrb[0].mxu0
  %824 = vmatprep.mubr.bf16.mxu0 0
  %825 = vmatmul.mubr.bf16.gmra.mrb[0].mxu0 %v565
  %v826 = vpop.f32.mrb[0].mxu0
  %v827 = vadd.f32 %v730, %v826
  %v828 = vpop.f32.mrb[0].mxu0
  %v829 = vpop.f32.mrb[0].mxu0
  %v830 = vadd.f32 %v733, %v829
  %v831 = vpop.f32.mrb[0].mxu0
  %832 = vmatprep.mubr.bf16.mxu0 0
  %833 = vmatmul.mubr.bf16.gmra.mrb[0].mxu0 %v568
  %v834 = vpop.f32.mrb[0].mxu0
  %v835 = vadd.f32 %v738, %v834
  %v836 = vpop.f32.mrb[0].mxu0
  %v837 = vpop.f32.mrb[0].mxu0
  %v838 = vadd.f32 %v741, %v837
  %v839 = vpop.f32.mrb[0].mxu0
  %840 = vmatprep.mubr.bf16.mxu0 0
  %841 = vmatmul.mubr.bf16.gmra.mrb[0].mxu0 %v571
  %v842 = vpop.f32.mrb[0].mxu0
  %v843 = vadd.f32 %v746, %v842
  %v844 = vpop.f32.mrb[0].mxu0
  %v845 = vpop.f32.mrb[0].mxu0
  %v846 = vadd.f32 %v749, %v845
  %v847 = vpop.f32.mrb[0].mxu0
  %848 = vmatprep.mubr.bf16.mxu0 0
  %849 = vmatmul.mubr.bf16.gmra.mrb[0].mxu0 %v574
  %v850 = vpop.f32.mrb[0].mxu0
  %v851 = vadd.f32 %v754, %v850
  %v852 = vpop.f32.mrb[0].mxu0
  %v853 = vpop.f32.mrb[0].mxu0
  %v854 = vadd.f32 %v757, %v853
  %v855 = vpop.f32.mrb[0].mxu0
  %856 = vmatprep.mubr.bf16.mxu0 0
  %857 = vmatmul.mubr.bf16.gmra.mrb[0].mxu0 %v577
  %v858 = vpop.f32.mrb[0].mxu0
  %v859 = vadd.f32 %v762, %v858
  %v860 = vpop.f32.mrb[0].mxu0
  %v861 = vpop.f32.mrb[0].mxu0
  %v862 = vadd.f32 %v765, %v861
  %v863 = vpop.f32.mrb[0].mxu0
  %864 = vmatprep.mubr.bf16.mxu0 0
  %865 = vmatmul.mubr.bf16.gmra.mrb[0].mxu0 %v580
  %v866 = vpop.f32.mrb[0].mxu0
  %v867 = vadd.f32 %v770, %v866
  %v868 = vpop.f32.mrb[0].mxu0
  %v869 = vpop.f32.mrb[0].mxu0
  %v870 = vadd.f32 %v773, %v869
  %v871 = vpop.f32.mrb[0].mxu0
  %872 = vdwg.mxu0
  %v873 = vld [vmem:[%s2] sm:$0xff]
  %v874 = vld [vmem:[%s2 + $0x8] sm:$0xff]
  %v875 = vld [vmem:[%s2 + $0x10] sm:$0xff]
  %v876 = vld [vmem:[%s2 + $0x18] sm:$0xff]
  %v877 = vld [vmem:[%s2 + $0x20] sm:$0xff]
  %v878 = vld [vmem:[%s2 + $0x28] sm:$0xff]
  %v879 = vld [vmem:[%s2 + $0x30] sm:$0xff]
  %v880 = vld [vmem:[%s2 + $0x38] sm:$0xff]
  %v881 = vld [vmem:[%s2 + $0x40] sm:$0xff]
  %v882 = vld [vmem:[%s2 + $0x48] sm:$0xff]
  %v883 = vld [vmem:[%s2 + $0x50] sm:$0xff]
  %v884 = vld [vmem:[%s2 + $0x58] sm:$0xff]
  %v885 = vld [vmem:[%s2 + $0x60] sm:$0xff]
  %v886 = vld [vmem:[%s2 + $0x68] sm:$0xff]
  %v887 = vld [vmem:[%s2 + $0x70] sm:$0xff]
  %v888 = vld [vmem:[%s2 + $0x78] sm:$0xff]
  %889 = vmatprep.subr.mxu0 0.0
  %890 = vmatpush1.msra.mxu0 %v873
  %891 = vmatprep.subr.mxu0 0.0
  %892 = vmatpush1.msra.mxu0 %v874
  %893 = vmatprep.subr.mxu0 0.0
  %894 = vmatpush1.msra.mxu0 %v875
  %895 = vmatprep.subr.mxu0 0.0
  %896 = vmatpush1.msra.mxu0 %v876
  %897 = vmatprep.subr.mxu0 0.0
  %898 = vmatpush1.msra.mxu0 %v877
  %899 = vmatprep.subr.mxu0 0.0
  %900 = vmatpush1.msra.mxu0 %v878
  %901 = vmatprep.subr.mxu0 0.0
  %902 = vmatpush1.msra.mxu0 %v879
  %903 = vmatprep.subr.mxu0 0.0
  %904 = vmatpush1.msra.mxu0 %v880
  %905 = vmatprep.subr.mxu0 0.0
  %906 = vmatpush1.msra.mxu0 %v881
  %907 = vmatprep.subr.mxu0 0.0
  %908 = vmatpush1.msra.mxu0 %v882
  %909 = vmatprep.subr.mxu0 0.0
  %910 = vmatpush1.msra.mxu0 %v883
  %911 = vmatprep.subr.mxu0 0.0
  %912 = vmatpush1.msra.mxu0 %v884
  %913 = vmatprep.subr.mxu0 0.0
  %914 = vmatpush1.msra.mxu0 %v885
  %915 = vmatprep.subr.mxu0 0.0
  %916 = vmatpush1.msra.mxu0 %v886
  %917 = vmatprep.subr.mxu0 0.0
  %918 = vmatpush1.msra.mxu0 %v887
  %919 = vmatprep.subr.mxu0 0.0
  %920 = vmatpush1.msra.mxu0 %v888
  %921 = vmatprep.subr.mxu0 0.0
  %922 = vmatpush1.msra.mxu0 0.0
  %923 = vmatprep.subr.mxu0 0.0
  %924 = vmatpush1.msra.mxu0 0.0
  %925 = vmatprep.subr.mxu0 0.0
  %926 = vmatpush1.msra.mxu0 0.0
  %927 = vmatprep.subr.mxu0 0.0
  %928 = vmatpush1.msra.mxu0 0.0
  %929 = vmatprep.subr.mxu0 0.0
  %930 = vmatpush1.msra.mxu0 0.0
  %931 = vmatprep.subr.mxu0 0.0
  %932 = vmatpush1.msra.mxu0 0.0
  %933 = vmatprep.subr.mxu0 0.0
  %934 = vmatpush1.msra.mxu0 0.0
  %935 = vmatprep.subr.mxu0 0.0
  %936 = vmatpush1.msra.mxu0 0.0
  %937 = vmatprep.subr.mxu0 0.0
  %938 = vmatpush1.msra.mxu0 0.0
  %939 = vmatprep.subr.mxu0 0.0
  %940 = vmatpush1.msra.mxu0 0.0
  %941 = vmatprep.subr.mxu0 0.0
  %942 = vmatpush1.msra.mxu0 0.0
  %943 = vmatprep.subr.mxu0 0.0
  %944 = vmatpush1.msra.mxu0 0.0
  %945 = vmatprep.subr.mxu0 0.0
  %946 = vmatpush1.msra.mxu0 0.0
  %947 = vmatprep.subr.mxu0 0.0
  %948 = vmatpush1.msra.mxu0 0.0
  %949 = vmatprep.subr.mxu0 0.0
  %950 = vmatpush1.msra.mxu0 0.0
  %951 = vmatprep.subr.mxu0 0.0
  %952 = vmatpush1.msra.mxu0 0.0
  %953 = vmatprep.mubr.f32.mxu0 0.0
  %954 = vmatmul.mubr.f32.gmra.mrb[0].mxu0 %v811
  %v955 = vpop.f32.mrb[0].mxu0
  %v956 = vadd.f32 0.0, %v955
  %v957 = vpop.f32.mrb[0].mxu0
  %958 = vmatprep.mubr.f32.mxu0 0.0
  %959 = vmatmul.mubr.f32.gmra.mrb[0].mxu0 %v814
  %v960 = vpop.f32.mrb[0].mxu0
  %v961 = vadd.f32 0.0, %v960
  %v962 = vpop.f32.mrb[0].mxu0
  %963 = vmatprep.mubr.f32.mxu0 0.0
  %964 = vmatmul.mubr.f32.gmra.mrb[0].mxu0 %v819
  %v965 = vpop.f32.mrb[0].mxu0
  %v966 = vadd.f32 0.0, %v965
  %v967 = vpop.f32.mrb[0].mxu0
  %968 = vmatprep.mubr.f32.mxu0 0.0
  %969 = vmatmul.mubr.f32.gmra.mrb[0].mxu0 %v822
  %v970 = vpop.f32.mrb[0].mxu0
  %v971 = vadd.f32 0.0, %v970
  %v972 = vpop.f32.mrb[0].mxu0
  %973 = vmatprep.mubr.f32.mxu0 0.0
  %974 = vmatmul.mubr.f32.gmra.mrb[0].mxu0 %v827
  %v975 = vpop.f32.mrb[0].mxu0
  %v976 = vadd.f32 0.0, %v975
  %v977 = vpop.f32.mrb[0].mxu0
  %978 = vmatprep.mubr.f32.mxu0 0.0
  %979 = vmatmul.mubr.f32.gmra.mrb[0].mxu0 %v830
  %v980 = vpop.f32.mrb[0].mxu0
  %v981 = vadd.f32 0.0, %v980
  %v982 = vpop.f32.mrb[0].mxu0
  %983 = vmatprep.mubr.f32.mxu0 0.0
  %984 = vmatmul.mubr.f32.gmra.mrb[0].mxu0 %v835
  %v985 = vpop.f32.mrb[0].mxu0
  %v986 = vadd.f32 0.0, %v985
  %v987 = vpop.f32.mrb[0].mxu0
  %988 = vmatprep.mubr.f32.mxu0 0.0
  %989 = vmatmul.mubr.f32.gmra.mrb[0].mxu0 %v838
  %v990 = vpop.f32.mrb[0].mxu0
  %v991 = vadd.f32 0.0, %v990
  %v992 = vpop.f32.mrb[0].mxu0
  %993 = vmatprep.mubr.f32.mxu0 0.0
  %994 = vmatmul.mubr.f32.gmra.mrb[0].mxu0 %v843
  %v995 = vpop.f32.mrb[0].mxu0
  %v996 = vadd.f32 0.0, %v995
  %v997 = vpop.f32.mrb[0].mxu0
  %998 = vmatprep.mubr.f32.mxu0 0.0
  %999 = vmatmul.mubr.f32.gmra.mrb[0].mxu0 %v846
  %v1000 = vpop.f32.mrb[0].mxu0
  %v1001 = vadd.f32 0.0, %v1000
  %v1002 = vpop.f32.mrb[0].mxu0
  %1003 = vmatprep.mubr.f32.mxu0 0.0
  %1004 = vmatmul.mubr.f32.gmra.mrb[0].mxu0 %v851
  %v1005 = vpop.f32.mrb[0].mxu0
  %v1006 = vadd.f32 0.0, %v1005
  %v1007 = vpop.f32.mrb[0].mxu0
  %1008 = vmatprep.mubr.f32.mxu0 0.0
  %1009 = vmatmul.mubr.f32.gmra.mrb[0].mxu0 %v854
  %v1010 = vpop.f32.mrb[0].mxu0
  %v1011 = vadd.f32 0.0, %v1010
  %v1012 = vpop.f32.mrb[0].mxu0
  %1013 = vmatprep.mubr.f32.mxu0 0.0
  %1014 = vmatmul.mubr.f32.gmra.mrb[0].mxu0 %v859
  %v1015 = vpop.f32.mrb[0].mxu0
  %v1016 = vadd.f32 0.0, %v1015
  %v1017 = vpop.f32.mrb[0].mxu0
  %1018 = vmatprep.mubr.f32.mxu0 0.0
  %1019 = vmatmul.mubr.f32.gmra.mrb[0].mxu0 %v862
  %v1020 = vpop.f32.mrb[0].mxu0
  %v1021 = vadd.f32 0.0, %v1020
  %v1022 = vpop.f32.mrb[0].mxu0
  %1023 = vmatprep.mubr.f32.mxu0 0.0
  %1024 = vmatmul.mubr.f32.gmra.mrb[0].mxu0 %v867
  %v1025 = vpop.f32.mrb[0].mxu0
  %v1026 = vadd.f32 0.0, %v1025
  %v1027 = vpop.f32.mrb[0].mxu0
  %1028 = vmatprep.mubr.f32.mxu0 0.0
  %1029 = vmatmul.mubr.f32.gmra.mrb[0].mxu0 %v870
  %v1030 = vpop.f32.mrb[0].mxu0
  %v1031 = vadd.f32 0.0, %v1030
  %v1032 = vpop.f32.mrb[0].mxu0
  %1033 = vdwg.mxu0
  %v1034 = vadd.f32 %v956, %v961
  %v1035 = vadd.f32 %v1034, %v966
  %v1036 = vadd.f32 %v1035, %v971
  %v1037 = vadd.f32 %v1036, %v976
  %v1038 = vadd.f32 %v1037, %v981
  %v1039 = vadd.f32 %v1038, %v986
  %v1040 = vadd.f32 %v1039, %v991
  %v1041 = vadd.f32 %v1040, %v996
  %v1042 = vadd.f32 %v1041, %v1001
  %v1043 = vadd.f32 %v1042, %v1006
  %v1044 = vadd.f32 %v1043, %v1011
  %v1045 = vadd.f32 %v1044, %v1016
  %v1046 = vadd.f32 %v1045, %v1021
  %v1047 = vadd.f32 %v1046, %v1026
  %v1048 = vadd.f32 %v1047, %v1031
  %v1049 = vrot.slane %v1048, 4
  %v1050 = vadd.f32 %v1048, %v1049
  %v1051 = vrot.slane %v1050, 2
  %v1052 = vadd.f32 %v1050, %v1051
  %v1053 = vrot.slane %v1052, 1
  %v1054 = vadd.f32 %v1052, %v1053
  %v1055 = vmul.f32 %v1054, 0.00048828125
  %v1056 = vmul.f32 %v811, %v811
  %v1057 = vmul.f32 %v814, %v814
  %v1058 = vmul.f32 %v819, %v819
  %v1059 = vmul.f32 %v822, %v822
  %v1060 = vmul.f32 %v827, %v827
  %v1061 = vmul.f32 %v830, %v830
  %v1062 = vmul.f32 %v835, %v835
  %v1063 = vmul.f32 %v838, %v838
  %v1064 = vmul.f32 %v843, %v843
  %v1065 = vmul.f32 %v846, %v846
  %v1066 = vmul.f32 %v851, %v851
  %v1067 = vmul.f32 %v854, %v854
  %v1068 = vmul.f32 %v859, %v859
  %v1069 = vmul.f32 %v862, %v862
  %v1070 = vmul.f32 %v867, %v867
  %v1071 = vmul.f32 %v870, %v870
  %1072 = vmatprep.subr.mxu0 0.0
  %1073 = vmatpush1.msra.mxu0 %v873
  %1074 = vmatprep.subr.mxu0 0.0
  %1075 = vmatpush1.msra.mxu0 %v874
  %1076 = vmatprep.subr.mxu0 0.0
  %1077 = vmatpush1.msra.mxu0 %v875
  %1078 = vmatprep.subr.mxu0 0.0
  %1079 = vmatpush1.msra.mxu0 %v876
  %1080 = vmatprep.subr.mxu0 0.0
  %1081 = vmatpush1.msra.mxu0 %v877
  %1082 = vmatprep.subr.mxu0 0.0
  %1083 = vmatpush1.msra.mxu0 %v878
  %1084 = vmatprep.subr.mxu0 0.0
  %1085 = vmatpush1.msra.mxu0 %v879
  %1086 = vmatprep.subr.mxu0 0.0
  %1087 = vmatpush1.msra.mxu0 %v880
  %1088 = vmatprep.subr.mxu0 0.0
  %1089 = vmatpush1.msra.mxu0 %v881
  %1090 = vmatprep.subr.mxu0 0.0
  %1091 = vmatpush1.msra.mxu0 %v882
  %1092 = vmatprep.subr.mxu0 0.0
  %1093 = vmatpush1.msra.mxu0 %v883
  %1094 = vmatprep.subr.mxu0 0.0
  %1095 = vmatpush1.msra.mxu0 %v884
  %1096 = vmatprep.subr.mxu0 0.0
  %1097 = vmatpush1.msra.mxu0 %v885
  %1098 = vmatprep.subr.mxu0 0.0
  %1099 = vmatpush1.msra.mxu0 %v886
  %1100 = vmatprep.subr.mxu0 0.0
  %1101 = vmatpush1.msra.mxu0 %v887
  %1102 = vmatprep.subr.mxu0 0.0
  %1103 = vmatpush1.msra.mxu0 %v888
  %1104 = vmatprep.subr.mxu0 0.0
  %1105 = vmatpush1.msra.mxu0 0.0
  %1106 = vmatprep.subr.mxu0 0.0
  %1107 = vmatpush1.msra.mxu0 0.0
  %1108 = vmatprep.subr.mxu0 0.0
  %1109 = vmatpush1.msra.mxu0 0.0
  %1110 = vmatprep.subr.mxu0 0.0
  %1111 = vmatpush1.msra.mxu0 0.0
  %1112 = vmatprep.subr.mxu0 0.0
  %1113 = vmatpush1.msra.mxu0 0.0
  %1114 = vmatprep.subr.mxu0 0.0
  %1115 = vmatpush1.msra.mxu0 0.0
  %1116 = vmatprep.subr.mxu0 0.0
  %1117 = vmatpush1.msra.mxu0 0.0
  %1118 = vmatprep.subr.mxu0 0.0
  %1119 = vmatpush1.msra.mxu0 0.0
  %1120 = vmatprep.subr.mxu0 0.0
  %1121 = vmatpush1.msra.mxu0 0.0
  %1122 = vmatprep.subr.mxu0 0.0
  %1123 = vmatpush1.msra.mxu0 0.0
  %1124 = vmatprep.subr.mxu0 0.0
  %1125 = vmatpush1.msra.mxu0 0.0
  %1126 = vmatprep.subr.mxu0 0.0
  %1127 = vmatpush1.msra.mxu0 0.0
  %1128 = vmatprep.subr.mxu0 0.0
  %1129 = vmatpush1.msra.mxu0 0.0
  %1130 = vmatprep.subr.mxu0 0.0
  %1131 = vmatpush1.msra.mxu0 0.0
  %1132 = vmatprep.subr.mxu0 0.0
  %1133 = vmatpush1.msra.mxu0 0.0
  %1134 = vmatprep.subr.mxu0 0.0
  %1135 = vmatpush1.msra.mxu0 0.0
  %1136 = vmatprep.mubr.f32.mxu0 0.0
  %1137 = vmatmul.mubr.f32.gmra.mrb[0].mxu0 %v1056
  %v1138 = vpop.f32.mrb[0].mxu0
  %v1139 = vadd.f32 0.0, %v1138
  %v1140 = vpop.f32.mrb[0].mxu0
  %1141 = vmatprep.mubr.f32.mxu0 0.0
  %1142 = vmatmul.mubr.f32.gmra.mrb[0].mxu0 %v1057
  %v1143 = vpop.f32.mrb[0].mxu0
  %v1144 = vadd.f32 0.0, %v1143
  %v1145 = vpop.f32.mrb[0].mxu0
  %1146 = vmatprep.mubr.f32.mxu0 0.0
  %1147 = vmatmul.mubr.f32.gmra.mrb[0].mxu0 %v1058
  %v1148 = vpop.f32.mrb[0].mxu0
  %v1149 = vadd.f32 0.0, %v1148
  %v1150 = vpop.f32.mrb[0].mxu0
  %1151 = vmatprep.mubr.f32.mxu0 0.0
  %1152 = vmatmul.mubr.f32.gmra.mrb[0].mxu0 %v1059
  %v1153 = vpop.f32.mrb[0].mxu0
  %v1154 = vadd.f32 0.0, %v1153
  %v1155 = vpop.f32.mrb[0].mxu0
  %1156 = vmatprep.mubr.f32.mxu0 0.0
  %1157 = vmatmul.mubr.f32.gmra.mrb[0].mxu0 %v1060
  %v1158 = vpop.f32.mrb[0].mxu0
  %v1159 = vadd.f32 0.0, %v1158
  %v1160 = vpop.f32.mrb[0].mxu0
  %1161 = vmatprep.mubr.f32.mxu0 0.0
  %1162 = vmatmul.mubr.f32.gmra.mrb[0].mxu0 %v1061
  %v1163 = vpop.f32.mrb[0].mxu0
  %v1164 = vadd.f32 0.0, %v1163
  %v1165 = vpop.f32.mrb[0].mxu0
  %1166 = vmatprep.mubr.f32.mxu0 0.0
  %1167 = vmatmul.mubr.f32.gmra.mrb[0].mxu0 %v1062
  %v1168 = vpop.f32.mrb[0].mxu0
  %v1169 = vadd.f32 0.0, %v1168
  %v1170 = vpop.f32.mrb[0].mxu0
  %1171 = vmatprep.mubr.f32.mxu0 0.0
  %1172 = vmatmul.mubr.f32.gmra.mrb[0].mxu0 %v1063
  %v1173 = vpop.f32.mrb[0].mxu0
  %v1174 = vadd.f32 0.0, %v1173
  %v1175 = vpop.f32.mrb[0].mxu0
  %1176 = vmatprep.mubr.f32.mxu0 0.0
  %1177 = vmatmul.mubr.f32.gmra.mrb[0].mxu0 %v1064
  %v1178 = vpop.f32.mrb[0].mxu0
  %v1179 = vadd.f32 0.0, %v1178
  %v1180 = vpop.f32.mrb[0].mxu0
  %1181 = vmatprep.mubr.f32.mxu0 0.0
  %1182 = vmatmul.mubr.f32.gmra.mrb[0].mxu0 %v1065
  %v1183 = vpop.f32.mrb[0].mxu0
  %v1184 = vadd.f32 0.0, %v1183
  %v1185 = vpop.f32.mrb[0].mxu0
  %1186 = vmatprep.mubr.f32.mxu0 0.0
  %1187 = vmatmul.mubr.f32.gmra.mrb[0].mxu0 %v1066
  %v1188 = vpop.f32.mrb[0].mxu0
  %v1189 = vadd.f32 0.0, %v1188
  %v1190 = vpop.f32.mrb[0].mxu0
  %1191 = vmatprep.mubr.f32.mxu0 0.0
  %1192 = vmatmul.mubr.f32.gmra.mrb[0].mxu0 %v1067
  %v1193 = vpop.f32.mrb[0].mxu0
  %v1194 = vadd.f32 0.0, %v1193
  %v1195 = vpop.f32.mrb[0].mxu0
  %1196 = vmatprep.mubr.f32.mxu0 0.0
  %1197 = vmatmul.mubr.f32.gmra.mrb[0].mxu0 %v1068
  %v1198 = vpop.f32.mrb[0].mxu0
  %v1199 = vadd.f32 0.0, %v1198
  %v1200 = vpop.f32.mrb[0].mxu0
  %1201 = vmatprep.mubr.f32.mxu0 0.0
  %1202 = vmatmul.mubr.f32.gmra.mrb[0].mxu0 %v1069
  %v1203 = vpop.f32.mrb[0].mxu0
  %v1204 = vadd.f32 0.0, %v1203
  %v1205 = vpop.f32.mrb[0].mxu0
  %1206 = vmatprep.mubr.f32.mxu0 0.0
  %1207 = vmatmul.mubr.f32.gmra.mrb[0].mxu0 %v1070
  %v1208 = vpop.f32.mrb[0].mxu0
  %v1209 = vadd.f32 0.0, %v1208
  %v1210 = vpop.f32.mrb[0].mxu0
  %1211 = vmatprep.mubr.f32.mxu0 0.0
  %1212 = vmatmul.mubr.f32.gmra.mrb[0].mxu0 %v1071
  %v1213 = vpop.f32.mrb[0].mxu0
  %v1214 = vadd.f32 0.0, %v1213
  %v1215 = vpop.f32.mrb[0].mxu0
  %1216 = vdwg.mxu0
  %v1217 = vadd.f32 %v1139, %v1144
  %v1218 = vadd.f32 %v1217, %v1149
  %v1219 = vadd.f32 %v1218, %v1154
  %v1220 = vadd.f32 %v1219, %v1159
  %v1221 = vadd.f32 %v1220, %v1164
  %v1222 = vadd.f32 %v1221, %v1169
  %v1223 = vadd.f32 %v1222, %v1174
  %v1224 = vadd.f32 %v1223, %v1179
  %v1225 = vadd.f32 %v1224, %v1184
  %v1226 = vadd.f32 %v1225, %v1189
  %v1227 = vadd.f32 %v1226, %v1194
  %v1228 = vadd.f32 %v1227, %v1199
  %v1229 = vadd.f32 %v1228, %v1204
  %v1230 = vadd.f32 %v1229, %v1209
  %v1231 = vadd.f32 %v1230, %v1214
  %v1232 = vrot.slane %v1231, 4
  %v1233 = vadd.f32 %v1231, %v1232
  %v1234 = vrot.slane %v1233, 2
  %v1235 = vadd.f32 %v1233, %v1234
  %v1236 = vrot.slane %v1235, 1
  %v1237 = vadd.f32 %v1235, %v1236
  %v1238 = vmul.f32 %v1237, 0.00048828125
  %v1239 = vmul.f32 %v1055, %v1055
  %v1240 = vsub.f32 %v1238, %v1239
  %v1241 = vadd.f32 %v1240, 1e-05
  %v1242 = vrsqrt.pop %v1241
  %v1243 = vld [vmem:[%s3] sm:$0x1]
  %v1244 = vmul.f32 %v1243, %v1242
  %v1245 = vld [vmem:[%s4] sm:$0x1]
  %v1246 = vmul.f32 %v1055, %v1244
  %v1247 = vsub.f32 %v1245, %v1246
  %v1249 = vlaneseq
  %v1250 = vshrl.u32 %v1249, 7
  %v1251 = vsub.s32 0, %v1250
  %v1252 = vrot.slane %v1244, %v1251
  %v1254 = vmul.f32 %v811, %v1252
  %v1255 = vmul.f32 %v814, %v1252
  %v1256 = vmul.f32 %v819, %v1252
  %v1257 = vmul.f32 %v822, %v1252
  %v1258 = vmul.f32 %v827, %v1252
  %v1259 = vmul.f32 %v830, %v1252
  %v1260 = vmul.f32 %v835, %v1252
  %v1261 = vmul.f32 %v838, %v1252
  %v1262 = vmul.f32 %v843, %v1252
  %v1263 = vmul.f32 %v846, %v1252
  %v1264 = vmul.f32 %v851, %v1252
  %v1265 = vmul.f32 %v854, %v1252
  %v1266 = vmul.f32 %v859, %v1252
  %v1267 = vmul.f32 %v862, %v1252
  %v1268 = vmul.f32 %v867, %v1252
  %v1269 = vmul.f32 %v870, %v1252
  %v1271 = vlaneseq
  %v1272 = vshrl.u32 %v1271, 7
  %v1273 = vsub.s32 0, %v1272
  %v1274 = vrot.slane %v1247, %v1273
  %v1276 = vadd.f32 %v1254, %v1274
  %v1277 = vadd.f32 %v1255, %v1274
  %v1278 = vadd.f32 %v1256, %v1274
  %v1279 = vadd.f32 %v1257, %v1274
  %v1280 = vadd.f32 %v1258, %v1274
  %v1281 = vadd.f32 %v1259, %v1274
  %v1282 = vadd.f32 %v1260, %v1274
  %v1283 = vadd.f32 %v1261, %v1274
  %v1284 = vadd.f32 %v1262, %v1274
  %v1285 = vadd.f32 %v1263, %v1274
  %v1286 = vadd.f32 %v1264, %v1274
  %v1287 = vadd.f32 %v1265, %v1274
  %v1288 = vadd.f32 %v1266, %v1274
  %v1289 = vadd.f32 %v1267, %v1274
  %v1290 = vadd.f32 %v1268, %v1274
  %v1291 = vadd.f32 %v1269, %v1274
  %v1292 = vmax.f32 %v1276, 0.0
  %v1293 = vmax.f32 %v1277, 0.0
  %v1294 = vmax.f32 %v1278, 0.0
  %v1295 = vmax.f32 %v1279, 0.0
  %v1296 = vmax.f32 %v1280, 0.0
  %v1297 = vmax.f32 %v1281, 0.0
  %v1298 = vmax.f32 %v1282, 0.0
  %v1299 = vmax.f32 %v1283, 0.0
  %v1300 = vmax.f32 %v1284, 0.0
  %v1301 = vmax.f32 %v1285, 0.0
  %v1302 = vmax.f32 %v1286, 0.0
  %v1303 = vmax.f32 %v1287, 0.0
  %v1304 = vmax.f32 %v1288, 0.0
  %v1305 = vmax.f32 %v1289, 0.0
  %v1306 = vmax.f32 %v1290, 0.0
  %v1307 = vmax.f32 %v1291, 0.0
  %v1308 = vpack.c.bf16 %v1293, %v1292
  %v1309 = vpack.c.bf16 %v1295, %v1294
  %v1310 = vpack.c.bf16 %v1297, %v1296
  %v1311 = vpack.c.bf16 %v1299, %v1298
  %v1312 = vpack.c.bf16 %v1301, %v1300
  %v1313 = vpack.c.bf16 %v1303, %v1302
  %v1314 = vpack.c.bf16 %v1305, %v1304
  %v1315 = vpack.c.bf16 %v1307, %v1306
  %v1324 = vunpack.c.l.b16 %v1308
  %v1325 = vunpack.c.h.b16 %v1308
  %v1326 = vunpack.c.l.b16 %v1309
  %v1327 = vunpack.c.h.b16 %v1309
  %v1328 = vunpack.c.l.b16 %v1310
  %v1329 = vunpack.c.h.b16 %v1310
  %v1330 = vunpack.c.l.b16 %v1311
  %v1331 = vunpack.c.h.b16 %v1311
  %v1332 = vunpack.c.l.b16 %v1312
  %v1333 = vunpack.c.h.b16 %v1312
  %v1334 = vunpack.c.l.b16 %v1313
  %v1335 = vunpack.c.h.b16 %v1313
  %v1336 = vunpack.c.l.b16 %v1314
  %v1337 = vunpack.c.h.b16 %v1314
  %v1338 = vunpack.c.l.b16 %v1315
  %v1339 = vunpack.c.h.b16 %v1315
  %v1340 = vpack.c.b16 %v1324, %v1324
  %v1341 = vpack.c.b16 %v1325, %v1325
  %v1342 = vpack.c.b16 %v1326, %v1326
  %v1343 = vpack.c.b16 %v1327, %v1327
  %v1344 = vpack.c.b16 %v1328, %v1328
  %v1345 = vpack.c.b16 %v1329, %v1329
  %v1346 = vpack.c.b16 %v1330, %v1330
  %v1347 = vpack.c.b16 %v1331, %v1331
  %v1348 = vpack.c.b16 %v1332, %v1332
  %v1349 = vpack.c.b16 %v1333, %v1333
  %v1350 = vpack.c.b16 %v1334, %v1334
  %v1351 = vpack.c.b16 %v1335, %v1335
  %v1352 = vpack.c.b16 %v1336, %v1336
  %v1353 = vpack.c.b16 %v1337, %v1337
  %v1354 = vpack.c.b16 %v1338, %v1338
  %v1355 = vpack.c.b16 %v1339, %v1339
  %1372 = vst [vmem:[%s5] sm:$0xf] %v1340
  %1373 = vst [vmem:[%s5 + $0x4] sm:$0xf] %v1341
  %1374 = vst [vmem:[%s5 + $0x8] sm:$0xf] %v1342
  %1375 = vst [vmem:[%s5 + $0xc] sm:$0xf] %v1343
  %1376 = vst [vmem:[%s5 + $0x10] sm:$0xf] %v1344
  %1377 = vst [vmem:[%s5 + $0x14] sm:$0xf] %v1345
  %1378 = vst [vmem:[%s5 + $0x18] sm:$0xf] %v1346
  %1379 = vst [vmem:[%s5 + $0x1c] sm:$0xf] %v1347
  %1380 = vst [vmem:[%s5 + $0x20] sm:$0xf] %v1348
  %1381 = vst [vmem:[%s5 + $0x24] sm:$0xf] %v1349
  %1382 = vst [vmem:[%s5 + $0x28] sm:$0xf] %v1350
  %1383 = vst [vmem:[%s5 + $0x2c] sm:$0xf] %v1351
  %1384 = vst [vmem:[%s5 + $0x30] sm:$0xf] %v1352
  %1385 = vst [vmem:[%s5 + $0x34] sm:$0xf] %v1353
  %1386 = vst [vmem:[%s5 + $0x38] sm:$0xf] %v1354
  %1387 = vst [vmem:[%s5 + $0x3c] sm:$0xf] %v1355
  // Predicated region
  $region22: #{pallas_decoder_forward.12} parent=0 // pred_check
    _
  $region23: #{pallas_decoder_forward.12} parent=0 // pred_check_branch
    %1389 = sbr.rel (0) target = $region25
  $region24: #{pallas_decoder_forward.12} parent=0 // pred_region
    _
  $region25: #{pallas_decoder_forward.12} parent=0 // pred_fallthru
    _
  // Predicated region
  $region26: #{pallas_decoder_forward.12} parent=0 // pred_check
    _
  $region27: #{pallas_decoder_forward.12} parent=0 // pred_check_branch
    %1391 = sbr.rel (0) target = $region29
  $region28: #{pallas_decoder_forward.12} parent=0 // pred_region
    _
  $region29: #{pallas_decoder_forward.12} parent=0 // pred_fallthru
    _

// kernel: pallas_decoder_forward.13
$region0: #{pallas_decoder_forward.13}
  #allocation0 [shape = 'u32[]', space=smem, size = 0x4, offset = 0x4, fixed_abs, tag = 'smem constant byte address 0x4 - core index']
  #allocation1 [shape = 'u32[144,128]{1,0:T(1,128)}', space=vmem, size = 0x12000, scoped, tag = 'internal scratch']
  %s0 = inlined_call_operand.vmem [shape: bf16[256,576], index: 0, kind: input, shape index: {}]
  %s1 = inlined_call_operand.vmem [shape: bf16[576,128], index: 1, kind: input, shape index: {}]
  %s2 = inlined_call_operand.vmem [shape: f32[128,128], index: 2, kind: input, shape index: {}]
  %s3 = inlined_call_operand.vmem [shape: f32[1,128], index: 3, kind: input, shape index: {}]
  %s4 = inlined_call_operand.vmem [shape: f32[1,128], index: 4, kind: input, shape index: {}]
  %s5 = inlined_call_operand.vmem [shape: bf16[256,128], index: 5, kind: output, shape index: {}]
  %s6 = sld [smem:[#allocation0]]
  $region30: #{pallas_decoder_forward.13} parent=0
    _
  %s8 = ssub.s32 1, %s6
  %s9 = scalar_select 0, %s8, %s6
  // Predicated region
  $region2: #{pallas_decoder_forward.13} parent=0 // pred_check
    _
  $region3: #{pallas_decoder_forward.13} parent=0 // pred_check_branch
    %11 = sbr.rel (0) target = $region5
  $region4: #{pallas_decoder_forward.13} parent=0 // pred_region
    _
  $region5: #{pallas_decoder_forward.13} parent=0 // pred_fallthru
    _
  // Predicated region
  $region6: #{pallas_decoder_forward.13} parent=0 // pred_check
    _
  $region7: #{pallas_decoder_forward.13} parent=0 // pred_check_branch
    %13 = sbr.rel (0) target = $region9
  $region8: #{pallas_decoder_forward.13} parent=0 // pred_region
    _
  $region9: #{pallas_decoder_forward.13} parent=0 // pred_fallthru
    _
  // Predicated region
  $region10: #{pallas_decoder_forward.13} parent=0 // pred_check
    _
  $region11: #{pallas_decoder_forward.13} parent=0 // pred_check_branch
    %15 = sbr.rel (0) target = $region13
  $region12: #{pallas_decoder_forward.13} parent=0 // pred_region
    _
  $region13: #{pallas_decoder_forward.13} parent=0 // pred_fallthru
    _
  // Predicated region
  $region14: #{pallas_decoder_forward.13} parent=0 // pred_check
    _
  $region15: #{pallas_decoder_forward.13} parent=0 // pred_check_branch
    %17 = sbr.rel (0) target = $region17
  $region16: #{pallas_decoder_forward.13} parent=0 // pred_region
    _
  $region17: #{pallas_decoder_forward.13} parent=0 // pred_fallthru
    _
  // Predicated region
  $region18: #{pallas_decoder_forward.13} parent=0 // pred_check
    _
  $region19: #{pallas_decoder_forward.13} parent=0 // pred_check_branch
    %19 = sbr.rel (0) target = $region21
  $region20: #{pallas_decoder_forward.13} parent=0 // pred_region
    _
  $region21: #{pallas_decoder_forward.13} parent=0 // pred_fallthru
    _
  %v21 = vld [vmem:[%s0] sm:$0xff]
  %v22 = vld [vmem:[%s0 + $0x8] sm:$0xff]
  %v23 = vld [vmem:[%s0 + $0x10] sm:$0xf]
  %v24 = vld [vmem:[%s0 + $0x14] sm:$0xff]
  %v25 = vld [vmem:[%s0 + $0x1c] sm:$0xff]
  %v26 = vld [vmem:[%s0 + $0x24] sm:$0xf]
  %v27 = vld [vmem:[%s0 + $0x28] sm:$0xff]
  %v28 = vld [vmem:[%s0 + $0x30] sm:$0xff]
  %v29 = vld [vmem:[%s0 + $0x38] sm:$0xf]
  %v30 = vld [vmem:[%s0 + $0x3c] sm:$0xff]
  %v31 = vld [vmem:[%s0 + $0x44] sm:$0xff]
  %v32 = vld [vmem:[%s0 + $0x4c] sm:$0xf]
  %v33 = vld [vmem:[%s0 + $0x50] sm:$0xff]
  %v34 = vld [vmem:[%s0 + $0x58] sm:$0xff]
  %v35 = vld [vmem:[%s0 + $0x60] sm:$0xf]
  %v36 = vld [vmem:[%s0 + $0x64] sm:$0xff]
  %v37 = vld [vmem:[%s0 + $0x6c] sm:$0xff]
  %v38 = vld [vmem:[%s0 + $0x74] sm:$0xf]
  %v39 = vld [vmem:[%s0 + $0x78] sm:$0xff]
  %v40 = vld [vmem:[%s0 + $0x80] sm:$0xff]
  %v41 = vld [vmem:[%s0 + $0x88] sm:$0xf]
  %v42 = vld [vmem:[%s0 + $0x8c] sm:$0xff]
  %v43 = vld [vmem:[%s0 + $0x94] sm:$0xff]
  %v44 = vld [vmem:[%s0 + $0x9c] sm:$0xf]
  %v45 = vld [vmem:[%s0 + $0xa0] sm:$0xff]
  %v46 = vld [vmem:[%s0 + $0xa8] sm:$0xff]
  %v47 = vld [vmem:[%s0 + $0xb0] sm:$0xf]
  %v48 = vld [vmem:[%s0 + $0xb4] sm:$0xff]
  %v49 = vld [vmem:[%s0 + $0xbc] sm:$0xff]
  %v50 = vld [vmem:[%s0 + $0xc4] sm:$0xf]
  %v51 = vld [vmem:[%s0 + $0xc8] sm:$0xff]
  %v52 = vld [vmem:[%s0 + $0xd0] sm:$0xff]
  %v53 = vld [vmem:[%s0 + $0xd8] sm:$0xf]
  %v54 = vld [vmem:[%s0 + $0xdc] sm:$0xff]
  %v55 = vld [vmem:[%s0 + $0xe4] sm:$0xff]
  %v56 = vld [vmem:[%s0 + $0xec] sm:$0xf]
  %v57 = vld [vmem:[%s0 + $0xf0] sm:$0xff]
  %v58 = vld [vmem:[%s0 + $0xf8] sm:$0xff]
  %v59 = vld [vmem:[%s0 + $0x100] sm:$0xf]
  %v60 = vld [vmem:[%s0 + $0x104] sm:$0xff]
  %v61 = vld [vmem:[%s0 + $0x10c] sm:$0xff]
  %v62 = vld [vmem:[%s0 + $0x114] sm:$0xf]
  %v63 = vld [vmem:[%s0 + $0x118] sm:$0xff]
  %v64 = vld [vmem:[%s0 + $0x120] sm:$0xff]
  %v65 = vld [vmem:[%s0 + $0x128] sm:$0xf]
  %v66 = vld [vmem:[%s0 + $0x12c] sm:$0xff]
  %v67 = vld [vmem:[%s0 + $0x134] sm:$0xff]
  %v68 = vld [vmem:[%s0 + $0x13c] sm:$0xf]
  %v69 = vld [vmem:[%s0 + $0x140] sm:$0xff]
  %v70 = vld [vmem:[%s0 + $0x148] sm:$0xff]
  %v71 = vld [vmem:[%s0 + $0x150] sm:$0xf]
  %v72 = vld [vmem:[%s0 + $0x154] sm:$0xff]
  %v73 = vld [vmem:[%s0 + $0x15c] sm:$0xff]
  %v74 = vld [vmem:[%s0 + $0x164] sm:$0xf]
  %v75 = vld [vmem:[%s0 + $0x168] sm:$0xff]
  %v76 = vld [vmem:[%s0 + $0x170] sm:$0xff]
  %v77 = vld [vmem:[%s0 + $0x178] sm:$0xf]
  %v78 = vld [vmem:[%s0 + $0x17c] sm:$0xff]
  %v79 = vld [vmem:[%s0 + $0x184] sm:$0xff]
  %v80 = vld [vmem:[%s0 + $0x18c] sm:$0xf]
  %v81 = vld [vmem:[%s0 + $0x190] sm:$0xff]
  %v82 = vld [vmem:[%s0 + $0x198] sm:$0xff]
  %v83 = vld [vmem:[%s0 + $0x1a0] sm:$0xf]
  %v84 = vld [vmem:[%s0 + $0x1a4] sm:$0xff]
  %v85 = vld [vmem:[%s0 + $0x1ac] sm:$0xff]
  %v86 = vld [vmem:[%s0 + $0x1b4] sm:$0xf]
  %v87 = vld [vmem:[%s0 + $0x1b8] sm:$0xff]
  %v88 = vld [vmem:[%s0 + $0x1c0] sm:$0xff]
  %v89 = vld [vmem:[%s0 + $0x1c8] sm:$0xf]
  %v90 = vld [vmem:[%s0 + $0x1cc] sm:$0xff]
  %v91 = vld [vmem:[%s0 + $0x1d4] sm:$0xff]
  %v92 = vld [vmem:[%s0 + $0x1dc] sm:$0xf]
  %v93 = vld [vmem:[%s0 + $0x1e0] sm:$0xff]
  %v94 = vld [vmem:[%s0 + $0x1e8] sm:$0xff]
  %v95 = vld [vmem:[%s0 + $0x1f0] sm:$0xf]
  %v96 = vld [vmem:[%s0 + $0x1f4] sm:$0xff]
  %v97 = vld [vmem:[%s0 + $0x1fc] sm:$0xff]
  %v98 = vld [vmem:[%s0 + $0x204] sm:$0xf]
  %v99 = vld [vmem:[%s0 + $0x208] sm:$0xff]
  %v100 = vld [vmem:[%s0 + $0x210] sm:$0xff]
  %v101 = vld [vmem:[%s0 + $0x218] sm:$0xf]
  %v102 = vld [vmem:[%s0 + $0x21c] sm:$0xff]
  %v103 = vld [vmem:[%s0 + $0x224] sm:$0xff]
  %v104 = vld [vmem:[%s0 + $0x22c] sm:$0xf]
  %v105 = vld [vmem:[%s0 + $0x230] sm:$0xff]
  %v106 = vld [vmem:[%s0 + $0x238] sm:$0xff]
  %v107 = vld [vmem:[%s0 + $0x240] sm:$0xf]
  %v108 = vld [vmem:[%s0 + $0x244] sm:$0xff]
  %v109 = vld [vmem:[%s0 + $0x24c] sm:$0xff]
  %v110 = vld [vmem:[%s0 + $0x254] sm:$0xf]
  %v111 = vld [vmem:[%s0 + $0x258] sm:$0xff]
  %v112 = vld [vmem:[%s0 + $0x260] sm:$0xff]
  %v113 = vld [vmem:[%s0 + $0x268] sm:$0xf]
  %v114 = vld [vmem:[%s0 + $0x26c] sm:$0xff]
  %v115 = vld [vmem:[%s0 + $0x274] sm:$0xff]
  %v116 = vld [vmem:[%s0 + $0x27c] sm:$0xf]
  %v117 = vld [vmem:[%s1] sm:$0xf]
  %v118 = vld [vmem:[%s1 + $0x4] sm:$0xf]
  %v119 = vld [vmem:[%s1 + $0x8] sm:$0xf]
  %v120 = vld [vmem:[%s1 + $0xc] sm:$0xf]
  %v121 = vld [vmem:[%s1 + $0x10] sm:$0xf]
  %v122 = vld [vmem:[%s1 + $0x14] sm:$0xf]
  %v123 = vld [vmem:[%s1 + $0x18] sm:$0xf]
  %v124 = vld [vmem:[%s1 + $0x1c] sm:$0xf]
  %v125 = vld [vmem:[%s1 + $0x20] sm:$0xf]
  %v126 = vld [vmem:[%s1 + $0x24] sm:$0xf]
  %v127 = vld [vmem:[%s1 + $0x28] sm:$0xf]
  %v128 = vld [vmem:[%s1 + $0x2c] sm:$0xf]
  %v129 = vld [vmem:[%s1 + $0x30] sm:$0xf]
  %v130 = vld [vmem:[%s1 + $0x34] sm:$0xf]
  %v131 = vld [vmem:[%s1 + $0x38] sm:$0xf]
  %v132 = vld [vmem:[%s1 + $0x3c] sm:$0xf]
  %v133 = vld [vmem:[%s1 + $0x40] sm:$0xf]
  %v134 = vld [vmem:[%s1 + $0x44] sm:$0xf]
  %v135 = vld [vmem:[%s1 + $0x48] sm:$0xf]
  %v136 = vld [vmem:[%s1 + $0x4c] sm:$0xf]
  %v137 = vld [vmem:[%s1 + $0x50] sm:$0xf]
  %v138 = vld [vmem:[%s1 + $0x54] sm:$0xf]
  %v139 = vld [vmem:[%s1 + $0x58] sm:$0xf]
  %v140 = vld [vmem:[%s1 + $0x5c] sm:$0xf]
  %v141 = vld [vmem:[%s1 + $0x60] sm:$0xf]
  %v142 = vld [vmem:[%s1 + $0x64] sm:$0xf]
  %v143 = vld [vmem:[%s1 + $0x68] sm:$0xf]
  %v144 = vld [vmem:[%s1 + $0x6c] sm:$0xf]
  %v145 = vld [vmem:[%s1 + $0x70] sm:$0xf]
  %v146 = vld [vmem:[%s1 + $0x74] sm:$0xf]
  %v147 = vld [vmem:[%s1 + $0x78] sm:$0xf]
  %v148 = vld [vmem:[%s1 + $0x7c] sm:$0xf]
  %v149 = vld [vmem:[%s1 + $0x80] sm:$0xf]
  %v150 = vld [vmem:[%s1 + $0x84] sm:$0xf]
  %v151 = vld [vmem:[%s1 + $0x88] sm:$0xf]
  %v152 = vld [vmem:[%s1 + $0x8c] sm:$0xf]
  %v153 = vld [vmem:[%s1 + $0x90] sm:$0xf]
  %v154 = vld [vmem:[%s1 + $0x94] sm:$0xf]
  %v155 = vld [vmem:[%s1 + $0x98] sm:$0xf]
  %v156 = vld [vmem:[%s1 + $0x9c] sm:$0xf]
  %v157 = vld [vmem:[%s1 + $0xa0] sm:$0xf]
  %v158 = vld [vmem:[%s1 + $0xa4] sm:$0xf]
  %v159 = vld [vmem:[%s1 + $0xa8] sm:$0xf]
  %v160 = vld [vmem:[%s1 + $0xac] sm:$0xf]
  %v161 = vld [vmem:[%s1 + $0xb0] sm:$0xf]
  %v162 = vld [vmem:[%s1 + $0xb4] sm:$0xf]
  %v163 = vld [vmem:[%s1 + $0xb8] sm:$0xf]
  %v164 = vld [vmem:[%s1 + $0xbc] sm:$0xf]
  %v165 = vld [vmem:[%s1 + $0xc0] sm:$0xf]
  %v166 = vld [vmem:[%s1 + $0xc4] sm:$0xf]
  %v167 = vld [vmem:[%s1 + $0xc8] sm:$0xf]
  %v168 = vld [vmem:[%s1 + $0xcc] sm:$0xf]
  %v169 = vld [vmem:[%s1 + $0xd0] sm:$0xf]
  %v170 = vld [vmem:[%s1 + $0xd4] sm:$0xf]
  %v171 = vld [vmem:[%s1 + $0xd8] sm:$0xf]
  %v172 = vld [vmem:[%s1 + $0xdc] sm:$0xf]
  %v173 = vld [vmem:[%s1 + $0xe0] sm:$0xf]
  %v174 = vld [vmem:[%s1 + $0xe4] sm:$0xf]
  %v175 = vld [vmem:[%s1 + $0xe8] sm:$0xf]
  %v176 = vld [vmem:[%s1 + $0xec] sm:$0xf]
  %v177 = vld [vmem:[%s1 + $0xf0] sm:$0xf]
  %v178 = vld [vmem:[%s1 + $0xf4] sm:$0xf]
  %v179 = vld [vmem:[%s1 + $0xf8] sm:$0xf]
  %v180 = vld [vmem:[%s1 + $0xfc] sm:$0xf]
  %v181 = vld [vmem:[%s1 + $0x100] sm:$0xf]
  %v182 = vld [vmem:[%s1 + $0x104] sm:$0xf]
  %v183 = vld [vmem:[%s1 + $0x108] sm:$0xf]
  %v184 = vld [vmem:[%s1 + $0x10c] sm:$0xf]
  %v185 = vld [vmem:[%s1 + $0x110] sm:$0xf]
  %v186 = vld [vmem:[%s1 + $0x114] sm:$0xf]
  %v187 = vld [vmem:[%s1 + $0x118] sm:$0xf]
  %v188 = vld [vmem:[%s1 + $0x11c] sm:$0xf]
  %v285 = vunpack.c.l.b16 %v21
  %v286 = vunpack.c.h.b16 %v21
  %v287 = vunpack.c.l.b16 %v22
  %v288 = vunpack.c.h.b16 %v22
  %v289 = vunpack.c.l.b16 %v23
  %v290 = vunpack.c.l.b16 %v24
  %v291 = vunpack.c.h.b16 %v24
  %v292 = vunpack.c.l.b16 %v25
  %v293 = vunpack.c.h.b16 %v25
  %v294 = vunpack.c.l.b16 %v26
  %v295 = vunpack.c.l.b16 %v27
  %v296 = vunpack.c.h.b16 %v27
  %v297 = vunpack.c.l.b16 %v28
  %v298 = vunpack.c.h.b16 %v28
  %v299 = vunpack.c.l.b16 %v29
  %v300 = vunpack.c.l.b16 %v30
  %v301 = vunpack.c.h.b16 %v30
  %v302 = vunpack.c.l.b16 %v31
  %v303 = vunpack.c.h.b16 %v31
  %v304 = vunpack.c.l.b16 %v32
  %v305 = vunpack.c.l.b16 %v33
  %v306 = vunpack.c.h.b16 %v33
  %v307 = vunpack.c.l.b16 %v34
  %v308 = vunpack.c.h.b16 %v34
  %v309 = vunpack.c.l.b16 %v35
  %v310 = vunpack.c.l.b16 %v36
  %v311 = vunpack.c.h.b16 %v36
  %v312 = vunpack.c.l.b16 %v37
  %v313 = vunpack.c.h.b16 %v37
  %v314 = vunpack.c.l.b16 %v38
  %v315 = vunpack.c.l.b16 %v39
  %v316 = vunpack.c.h.b16 %v39
  %v317 = vunpack.c.l.b16 %v40
  %v318 = vunpack.c.h.b16 %v40
  %v319 = vunpack.c.l.b16 %v41
  %v320 = vunpack.c.l.b16 %v42
  %v321 = vunpack.c.h.b16 %v42
  %v322 = vunpack.c.l.b16 %v43
  %v323 = vunpack.c.h.b16 %v43
  %v324 = vunpack.c.l.b16 %v44
  %v325 = vunpack.c.l.b16 %v45
  %v326 = vunpack.c.h.b16 %v45
  %v327 = vunpack.c.l.b16 %v46
  %v328 = vunpack.c.h.b16 %v46
  %v329 = vunpack.c.l.b16 %v47
  %v330 = vunpack.c.l.b16 %v48
  %v331 = vunpack.c.h.b16 %v48
  %v332 = vunpack.c.l.b16 %v49
  %v333 = vunpack.c.h.b16 %v49
  %v334 = vunpack.c.l.b16 %v50
  %v335 = vunpack.c.l.b16 %v51
  %v336 = vunpack.c.h.b16 %v51
  %v337 = vunpack.c.l.b16 %v52
  %v338 = vunpack.c.h.b16 %v52
  %v339 = vunpack.c.l.b16 %v53
  %v340 = vunpack.c.l.b16 %v54
  %v341 = vunpack.c.h.b16 %v54
  %v342 = vunpack.c.l.b16 %v55
  %v343 = vunpack.c.h.b16 %v55
  %v344 = vunpack.c.l.b16 %v56
  %v345 = vunpack.c.l.b16 %v57
  %v346 = vunpack.c.h.b16 %v57
  %v347 = vunpack.c.l.b16 %v58
  %v348 = vunpack.c.h.b16 %v58
  %v349 = vunpack.c.l.b16 %v59
  %v350 = vunpack.c.l.b16 %v60
  %v351 = vunpack.c.h.b16 %v60
  %v352 = vunpack.c.l.b16 %v61
  %v353 = vunpack.c.h.b16 %v61
  %v354 = vunpack.c.l.b16 %v62
  %v355 = vunpack.c.l.b16 %v63
  %v356 = vunpack.c.h.b16 %v63
  %v357 = vunpack.c.l.b16 %v64
  %v358 = vunpack.c.h.b16 %v64
  %v359 = vunpack.c.l.b16 %v65
  %v360 = vunpack.c.l.b16 %v66
  %v361 = vunpack.c.h.b16 %v66
  %v362 = vunpack.c.l.b16 %v67
  %v363 = vunpack.c.h.b16 %v67
  %v364 = vunpack.c.l.b16 %v68
  %v365 = vunpack.c.l.b16 %v69
  %v366 = vunpack.c.h.b16 %v69
  %v367 = vunpack.c.l.b16 %v70
  %v368 = vunpack.c.h.b16 %v70
  %v369 = vunpack.c.l.b16 %v71
  %v370 = vunpack.c.l.b16 %v72
  %v371 = vunpack.c.h.b16 %v72
  %v372 = vunpack.c.l.b16 %v73
  %v373 = vunpack.c.h.b16 %v73
  %v374 = vunpack.c.l.b16 %v74
  %v375 = vunpack.c.l.b16 %v75
  %v376 = vunpack.c.h.b16 %v75
  %v377 = vunpack.c.l.b16 %v76
  %v378 = vunpack.c.h.b16 %v76
  %v379 = vunpack.c.l.b16 %v77
  %v380 = vunpack.c.l.b16 %v78
  %v381 = vunpack.c.h.b16 %v78
  %v382 = vunpack.c.l.b16 %v79
  %v383 = vunpack.c.h.b16 %v79
  %v384 = vunpack.c.l.b16 %v80
  %v385 = vunpack.c.l.b16 %v81
  %v386 = vunpack.c.h.b16 %v81
  %v387 = vunpack.c.l.b16 %v82
  %v388 = vunpack.c.h.b16 %v82
  %v389 = vunpack.c.l.b16 %v83
  %v390 = vunpack.c.l.b16 %v84
  %v391 = vunpack.c.h.b16 %v84
  %v392 = vunpack.c.l.b16 %v85
  %v393 = vunpack.c.h.b16 %v85
  %v394 = vunpack.c.l.b16 %v86
  %v395 = vunpack.c.l.b16 %v87
  %v396 = vunpack.c.h.b16 %v87
  %v397 = vunpack.c.l.b16 %v88
  %v398 = vunpack.c.h.b16 %v88
  %v399 = vunpack.c.l.b16 %v89
  %v400 = vunpack.c.l.b16 %v90
  %v401 = vunpack.c.h.b16 %v90
  %v402 = vunpack.c.l.b16 %v91
  %v403 = vunpack.c.h.b16 %v91
  %v404 = vunpack.c.l.b16 %v92
  %v405 = vunpack.c.l.b16 %v93
  %v406 = vunpack.c.h.b16 %v93
  %v407 = vunpack.c.l.b16 %v94
  %v408 = vunpack.c.h.b16 %v94
  %v409 = vunpack.c.l.b16 %v95
  %v410 = vunpack.c.l.b16 %v96
  %v411 = vunpack.c.h.b16 %v96
  %v412 = vunpack.c.l.b16 %v97
  %v413 = vunpack.c.h.b16 %v97
  %v414 = vunpack.c.l.b16 %v98
  %v415 = vunpack.c.l.b16 %v99
  %v416 = vunpack.c.h.b16 %v99
  %v417 = vunpack.c.l.b16 %v100
  %v418 = vunpack.c.h.b16 %v100
  %v419 = vunpack.c.l.b16 %v101
  %v420 = vunpack.c.l.b16 %v102
  %v421 = vunpack.c.h.b16 %v102
  %v422 = vunpack.c.l.b16 %v103
  %v423 = vunpack.c.h.b16 %v103
  %v424 = vunpack.c.l.b16 %v104
  %v425 = vunpack.c.l.b16 %v105
  %v426 = vunpack.c.h.b16 %v105
  %v427 = vunpack.c.l.b16 %v106
  %v428 = vunpack.c.h.b16 %v106
  %v429 = vunpack.c.l.b16 %v107
  %v430 = vunpack.c.l.b16 %v108
  %v431 = vunpack.c.h.b16 %v108
  %v432 = vunpack.c.l.b16 %v109
  %v433 = vunpack.c.h.b16 %v109
  %v434 = vunpack.c.l.b16 %v110
  %v435 = vunpack.c.l.b16 %v111
  %v436 = vunpack.c.h.b16 %v111
  %v437 = vunpack.c.l.b16 %v112
  %v438 = vunpack.c.h.b16 %v112
  %v439 = vunpack.c.l.b16 %v113
  %v440 = vunpack.c.l.b16 %v114
  %v441 = vunpack.c.h.b16 %v114
  %v442 = vunpack.c.l.b16 %v115
  %v443 = vunpack.c.h.b16 %v115
  %v444 = vunpack.c.l.b16 %v116
  %v445 = vpack.c.b16 %v290, %v285
  %v446 = vpack.c.b16 %v291, %v286
  %v447 = vpack.c.b16 %v292, %v287
  %v448 = vpack.c.b16 %v293, %v288
  %v449 = vpack.c.b16 %v294, %v289
  %v450 = vpack.c.b16 %v300, %v295
  %v451 = vpack.c.b16 %v301, %v296
  %v452 = vpack.c.b16 %v302, %v297
  %v453 = vpack.c.b16 %v303, %v298
  %v454 = vpack.c.b16 %v304, %v299
  %v455 = vpack.c.b16 %v310, %v305
  %v456 = vpack.c.b16 %v311, %v306
  %v457 = vpack.c.b16 %v312, %v307
  %v458 = vpack.c.b16 %v313, %v308
  %v459 = vpack.c.b16 %v314, %v309
  %v460 = vpack.c.b16 %v320, %v315
  %v461 = vpack.c.b16 %v321, %v316
  %v462 = vpack.c.b16 %v322, %v317
  %v463 = vpack.c.b16 %v323, %v318
  %v464 = vpack.c.b16 %v324, %v319
  %v465 = vpack.c.b16 %v330, %v325
  %v466 = vpack.c.b16 %v331, %v326
  %v467 = vpack.c.b16 %v332, %v327
  %v468 = vpack.c.b16 %v333, %v328
  %v469 = vpack.c.b16 %v334, %v329
  %v470 = vpack.c.b16 %v340, %v335
  %v471 = vpack.c.b16 %v341, %v336
  %v472 = vpack.c.b16 %v342, %v337
  %v473 = vpack.c.b16 %v343, %v338
  %v474 = vpack.c.b16 %v344, %v339
  %v475 = vpack.c.b16 %v350, %v345
  %v476 = vpack.c.b16 %v351, %v346
  %v477 = vpack.c.b16 %v352, %v347
  %v478 = vpack.c.b16 %v353, %v348
  %v479 = vpack.c.b16 %v354, %v349
  %v480 = vpack.c.b16 %v360, %v355
  %v481 = vpack.c.b16 %v361, %v356
  %v482 = vpack.c.b16 %v362, %v357
  %v483 = vpack.c.b16 %v363, %v358
  %v484 = vpack.c.b16 %v364, %v359
  %v485 = vpack.c.b16 %v370, %v365
  %v486 = vpack.c.b16 %v371, %v366
  %v487 = vpack.c.b16 %v372, %v367
  %v488 = vpack.c.b16 %v373, %v368
  %v489 = vpack.c.b16 %v374, %v369
  %v490 = vpack.c.b16 %v380, %v375
  %v491 = vpack.c.b16 %v381, %v376
  %v492 = vpack.c.b16 %v382, %v377
  %v493 = vpack.c.b16 %v383, %v378
  %v494 = vpack.c.b16 %v384, %v379
  %v495 = vpack.c.b16 %v390, %v385
  %v496 = vpack.c.b16 %v391, %v386
  %v497 = vpack.c.b16 %v392, %v387
  %v498 = vpack.c.b16 %v393, %v388
  %v499 = vpack.c.b16 %v394, %v389
  %v500 = vpack.c.b16 %v400, %v395
  %v501 = vpack.c.b16 %v401, %v396
  %v502 = vpack.c.b16 %v402, %v397
  %v503 = vpack.c.b16 %v403, %v398
  %v504 = vpack.c.b16 %v404, %v399
  %v505 = vpack.c.b16 %v410, %v405
  %v506 = vpack.c.b16 %v411, %v406
  %v507 = vpack.c.b16 %v412, %v407
  %v508 = vpack.c.b16 %v413, %v408
  %v509 = vpack.c.b16 %v414, %v409
  %v510 = vpack.c.b16 %v420, %v415
  %v511 = vpack.c.b16 %v421, %v416
  %v512 = vpack.c.b16 %v422, %v417
  %v513 = vpack.c.b16 %v423, %v418
  %v514 = vpack.c.b16 %v424, %v419
  %v515 = vpack.c.b16 %v430, %v425
  %v516 = vpack.c.b16 %v431, %v426
  %v517 = vpack.c.b16 %v432, %v427
  %v518 = vpack.c.b16 %v433, %v428
  %v519 = vpack.c.b16 %v434, %v429
  %v520 = vpack.c.b16 %v440, %v435
  %v521 = vpack.c.b16 %v441, %v436
  %v522 = vpack.c.b16 %v442, %v437
  %v523 = vpack.c.b16 %v443, %v438
  %v524 = vpack.c.b16 %v444, %v439
  %v661 = vunpack.c.l.b16 %v117
  %v662 = vunpack.c.l.b16 %v118
  %v663 = vunpack.c.l.b16 %v119
  %v664 = vunpack.c.l.b16 %v120
  %v665 = vunpack.c.l.b16 %v121
  %v666 = vunpack.c.l.b16 %v122
  %v667 = vunpack.c.l.b16 %v123
  %v668 = vunpack.c.l.b16 %v124
  %v669 = vunpack.c.l.b16 %v125
  %v670 = vunpack.c.l.b16 %v126
  %v671 = vunpack.c.l.b16 %v127
  %v672 = vunpack.c.l.b16 %v128
  %v673 = vunpack.c.l.b16 %v129
  %v674 = vunpack.c.l.b16 %v130
  %v675 = vunpack.c.l.b16 %v131
  %v676 = vunpack.c.l.b16 %v132
  %v677 = vunpack.c.l.b16 %v133
  %v678 = vunpack.c.l.b16 %v134
  %v679 = vunpack.c.l.b16 %v135
  %v680 = vunpack.c.l.b16 %v136
  %v681 = vunpack.c.l.b16 %v137
  %v682 = vunpack.c.l.b16 %v138
  %v683 = vunpack.c.l.b16 %v139
  %v684 = vunpack.c.l.b16 %v140
  %v685 = vunpack.c.l.b16 %v141
  %v686 = vunpack.c.l.b16 %v142
  %v687 = vunpack.c.l.b16 %v143
  %v688 = vunpack.c.l.b16 %v144
  %v689 = vunpack.c.l.b16 %v145
  %v690 = vunpack.c.l.b16 %v146
  %v691 = vunpack.c.l.b16 %v147
  %v692 = vunpack.c.l.b16 %v148
  %v693 = vunpack.c.l.b16 %v149
  %v694 = vunpack.c.l.b16 %v150
  %v695 = vunpack.c.l.b16 %v151
  %v696 = vunpack.c.l.b16 %v152
  %v697 = vunpack.c.l.b16 %v153
  %v698 = vunpack.c.l.b16 %v154
  %v699 = vunpack.c.l.b16 %v155
  %v700 = vunpack.c.l.b16 %v156
  %v701 = vunpack.c.l.b16 %v157
  %v702 = vunpack.c.l.b16 %v158
  %v703 = vunpack.c.l.b16 %v159
  %v704 = vunpack.c.l.b16 %v160
  %v705 = vunpack.c.l.b16 %v161
  %v706 = vunpack.c.l.b16 %v162
  %v707 = vunpack.c.l.b16 %v163
  %v708 = vunpack.c.l.b16 %v164
  %v709 = vunpack.c.l.b16 %v165
  %v710 = vunpack.c.l.b16 %v166
  %v711 = vunpack.c.l.b16 %v167
  %v712 = vunpack.c.l.b16 %v168
  %v713 = vunpack.c.l.b16 %v169
  %v714 = vunpack.c.l.b16 %v170
  %v715 = vunpack.c.l.b16 %v171
  %v716 = vunpack.c.l.b16 %v172
  %v717 = vunpack.c.l.b16 %v173
  %v718 = vunpack.c.l.b16 %v174
  %v719 = vunpack.c.l.b16 %v175
  %v720 = vunpack.c.l.b16 %v176
  %v721 = vunpack.c.l.b16 %v177
  %v722 = vunpack.c.l.b16 %v178
  %v723 = vunpack.c.l.b16 %v179
  %v724 = vunpack.c.l.b16 %v180
  %v725 = vunpack.c.l.b16 %v181
  %v726 = vunpack.c.l.b16 %v182
  %v727 = vunpack.c.l.b16 %v183
  %v728 = vunpack.c.l.b16 %v184
  %v729 = vunpack.c.l.b16 %v185
  %v730 = vunpack.c.l.b16 %v186
  %v731 = vunpack.c.l.b16 %v187
  %v732 = vunpack.c.l.b16 %v188
  %v733 = vpack.c.b16 %v662, %v661
  %v734 = vpack.c.b16 %v664, %v663
  %v735 = vpack.c.b16 %v666, %v665
  %v736 = vpack.c.b16 %v668, %v667
  %v737 = vpack.c.b16 %v670, %v669
  %v738 = vpack.c.b16 %v672, %v671
  %v739 = vpack.c.b16 %v674, %v673
  %v740 = vpack.c.b16 %v676, %v675
  %v741 = vpack.c.b16 %v678, %v677
  %v742 = vpack.c.b16 %v680, %v679
  %v743 = vpack.c.b16 %v682, %v681
  %v744 = vpack.c.b16 %v684, %v683
  %v745 = vpack.c.b16 %v686, %v685
  %v746 = vpack.c.b16 %v688, %v687
  %v747 = vpack.c.b16 %v690, %v689
  %v748 = vpack.c.b16 %v692, %v691
  %v749 = vpack.c.b16 %v694, %v693
  %v750 = vpack.c.b16 %v696, %v695
  %v751 = vpack.c.b16 %v698, %v697
  %v752 = vpack.c.b16 %v700, %v699
  %v753 = vpack.c.b16 %v702, %v701
  %v754 = vpack.c.b16 %v704, %v703
  %v755 = vpack.c.b16 %v706, %v705
  %v756 = vpack.c.b16 %v708, %v707
  %v757 = vpack.c.b16 %v710, %v709
  %v758 = vpack.c.b16 %v712, %v711
  %v759 = vpack.c.b16 %v714, %v713
  %v760 = vpack.c.b16 %v716, %v715
  %v761 = vpack.c.b16 %v718, %v717
  %v762 = vpack.c.b16 %v720, %v719
  %v763 = vpack.c.b16 %v722, %v721
  %v764 = vpack.c.b16 %v724, %v723
  %v765 = vpack.c.b16 %v726, %v725
  %v766 = vpack.c.b16 %v728, %v727
  %v767 = vpack.c.b16 %v730, %v729
  %v768 = vpack.c.b16 %v732, %v731
  %vm805 = vcmask 523264
  %v807 = vsel %vm805, %v449, 0
  %v810 = vsel %vm805, %v454, 0
  %v813 = vsel %vm805, %v459, 0
  %v816 = vsel %vm805, %v464, 0
  %v819 = vsel %vm805, %v469, 0
  %v822 = vsel %vm805, %v474, 0
  %v825 = vsel %vm805, %v479, 0
  %v828 = vsel %vm805, %v484, 0
  %v831 = vsel %vm805, %v489, 0
  %v834 = vsel %vm805, %v494, 0
  %v837 = vsel %vm805, %v499, 0
  %v840 = vsel %vm805, %v504, 0
  %v843 = vsel %vm805, %v509, 0
  %v846 = vsel %vm805, %v514, 0
  %v849 = vsel %vm805, %v519, 0
  %v852 = vsel %vm805, %v524, 0
  %854 = vmatprep.subr.bf16.mxu0 0
  %855 = vmatpush1.bf16.msra.mxu0 %v733
  %856 = vmatprep.subr.bf16.mxu0 0
  %857 = vmatpush1.bf16.msra.mxu0 %v734
  %858 = vmatprep.subr.bf16.mxu0 0
  %859 = vmatpush1.bf16.msra.mxu0 %v735
  %860 = vmatprep.subr.bf16.mxu0 0
  %861 = vmatpush1.bf16.msra.mxu0 %v736
  %862 = vmatprep.subr.bf16.mxu0 0
  %863 = vmatpush1.bf16.msra.mxu0 %v737
  %864 = vmatprep.subr.bf16.mxu0 0
  %865 = vmatpush1.bf16.msra.mxu0 %v738
  %866 = vmatprep.subr.bf16.mxu0 0
  %867 = vmatpush1.bf16.msra.mxu0 %v739
  %868 = vmatprep.subr.bf16.mxu0 0
  %869 = vmatpush1.bf16.msra.mxu0 %v740
  %870 = vmatprep.subr.bf16.mxu0 0
  %871 = vmatpush1.bf16.msra.mxu0 %v741
  %872 = vmatprep.subr.bf16.mxu0 0
  %873 = vmatpush1.bf16.msra.mxu0 %v742
  %874 = vmatprep.subr.bf16.mxu0 0
  %875 = vmatpush1.bf16.msra.mxu0 %v743
  %876 = vmatprep.subr.bf16.mxu0 0
  %877 = vmatpush1.bf16.msra.mxu0 %v744
  %878 = vmatprep.subr.bf16.mxu0 0
  %879 = vmatpush1.bf16.msra.mxu0 %v745
  %880 = vmatprep.subr.bf16.mxu0 0
  %881 = vmatpush1.bf16.msra.mxu0 %v746
  %882 = vmatprep.subr.bf16.mxu0 0
  %883 = vmatpush1.bf16.msra.mxu0 %v747
  %884 = vmatprep.subr.bf16.mxu0 0
  %885 = vmatpush1.bf16.msra.mxu0 %v748
  %886 = vmatprep.mubr.bf16.mxu0 %v446
  %887 = vmatmul.mubr.bf16.gmra.mrb[0].mxu0 %v445
  %v888 = vpop.f32.mrb[0].mxu0
  %v889 = vadd.f32 0.0, %v888
  %v890 = vpop.f32.mrb[0].mxu0
  %v891 = vpop.f32.mrb[0].mxu0
  %v892 = vadd.f32 0.0, %v891
  %v893 = vpop.f32.mrb[0].mxu0
  %894 = vmatprep.mubr.bf16.mxu0 %v451
  %895 = vmatmul.mubr.bf16.gmra.mrb[0].mxu0 %v450
  %v896 = vpop.f32.mrb[0].mxu0
  %v897 = vadd.f32 0.0, %v896
  %v898 = vpop.f32.mrb[0].mxu0
  %v899 = vpop.f32.mrb[0].mxu0
  %v900 = vadd.f32 0.0, %v899
  %v901 = vpop.f32.mrb[0].mxu0
  %902 = vmatprep.mubr.bf16.mxu0 %v456
  %903 = vmatmul.mubr.bf16.gmra.mrb[0].mxu0 %v455
  %v904 = vpop.f32.mrb[0].mxu0
  %v905 = vadd.f32 0.0, %v904
  %v906 = vpop.f32.mrb[0].mxu0
  %v907 = vpop.f32.mrb[0].mxu0
  %v908 = vadd.f32 0.0, %v907
  %v909 = vpop.f32.mrb[0].mxu0
  %910 = vmatprep.mubr.bf16.mxu0 %v461
  %911 = vmatmul.mubr.bf16.gmra.mrb[0].mxu0 %v460
  %v912 = vpop.f32.mrb[0].mxu0
  %v913 = vadd.f32 0.0, %v912
  %v914 = vpop.f32.mrb[0].mxu0
  %v915 = vpop.f32.mrb[0].mxu0
  %v916 = vadd.f32 0.0, %v915
  %v917 = vpop.f32.mrb[0].mxu0
  %918 = vmatprep.mubr.bf16.mxu0 %v466
  %919 = vmatmul.mubr.bf16.gmra.mrb[0].mxu0 %v465
  %v920 = vpop.f32.mrb[0].mxu0
  %v921 = vadd.f32 0.0, %v920
  %v922 = vpop.f32.mrb[0].mxu0
  %v923 = vpop.f32.mrb[0].mxu0
  %v924 = vadd.f32 0.0, %v923
  %v925 = vpop.f32.mrb[0].mxu0
  %926 = vmatprep.mubr.bf16.mxu0 %v471
  %927 = vmatmul.mubr.bf16.gmra.mrb[0].mxu0 %v470
  %v928 = vpop.f32.mrb[0].mxu0
  %v929 = vadd.f32 0.0, %v928
  %v930 = vpop.f32.mrb[0].mxu0
  %v931 = vpop.f32.mrb[0].mxu0
  %v932 = vadd.f32 0.0, %v931
  %v933 = vpop.f32.mrb[0].mxu0
  %934 = vmatprep.mubr.bf16.mxu0 %v476
  %935 = vmatmul.mubr.bf16.gmra.mrb[0].mxu0 %v475
  %v936 = vpop.f32.mrb[0].mxu0
  %v937 = vadd.f32 0.0, %v936
  %v938 = vpop.f32.mrb[0].mxu0
  %v939 = vpop.f32.mrb[0].mxu0
  %v940 = vadd.f32 0.0, %v939
  %v941 = vpop.f32.mrb[0].mxu0
  %942 = vmatprep.mubr.bf16.mxu0 %v481
  %943 = vmatmul.mubr.bf16.gmra.mrb[0].mxu0 %v480
  %v944 = vpop.f32.mrb[0].mxu0
  %v945 = vadd.f32 0.0, %v944
  %v946 = vpop.f32.mrb[0].mxu0
  %v947 = vpop.f32.mrb[0].mxu0
  %v948 = vadd.f32 0.0, %v947
  %v949 = vpop.f32.mrb[0].mxu0
  %950 = vmatprep.mubr.bf16.mxu0 %v486
  %951 = vmatmul.mubr.bf16.gmra.mrb[0].mxu0 %v485
  %v952 = vpop.f32.mrb[0].mxu0
  %v953 = vadd.f32 0.0, %v952
  %v954 = vpop.f32.mrb[0].mxu0
  %v955 = vpop.f32.mrb[0].mxu0
  %v956 = vadd.f32 0.0, %v955
  %v957 = vpop.f32.mrb[0].mxu0
  %958 = vmatprep.mubr.bf16.mxu0 %v491
  %959 = vmatmul.mubr.bf16.gmra.mrb[0].mxu0 %v490
  %v960 = vpop.f32.mrb[0].mxu0
  %v961 = vadd.f32 0.0, %v960
  %v962 = vpop.f32.mrb[0].mxu0
  %v963 = vpop.f32.mrb[0].mxu0
  %v964 = vadd.f32 0.0, %v963
  %v965 = vpop.f32.mrb[0].mxu0
  %966 = vmatprep.mubr.bf16.mxu0 %v496
  %967 = vmatmul.mubr.bf16.gmra.mrb[0].mxu0 %v495
  %v968 = vpop.f32.mrb[0].mxu0
  %v969 = vadd.f32 0.0, %v968
  %v970 = vpop.f32.mrb[0].mxu0
  %v971 = vpop.f32.mrb[0].mxu0
  %v972 = vadd.f32 0.0, %v971
  %v973 = vpop.f32.mrb[0].mxu0
  %974 = vmatprep.mubr.bf16.mxu0 %v501
  %975 = vmatmul.mubr.bf16.gmra.mrb[0].mxu0 %v500
  %v976 = vpop.f32.mrb[0].mxu0
  %v977 = vadd.f32 0.0, %v976
  %v978 = vpop.f32.mrb[0].mxu0
  %v979 = vpop.f32.mrb[0].mxu0
  %v980 = vadd.f32 0.0, %v979
  %v981 = vpop.f32.mrb[0].mxu0
  %982 = vmatprep.mubr.bf16.mxu0 %v506
  %983 = vmatmul.mubr.bf16.gmra.mrb[0].mxu0 %v505
  %v984 = vpop.f32.mrb[0].mxu0
  %v985 = vadd.f32 0.0, %v984
  %v986 = vpop.f32.mrb[0].mxu0
  %v987 = vpop.f32.mrb[0].mxu0
  %v988 = vadd.f32 0.0, %v987
  %v989 = vpop.f32.mrb[0].mxu0
  %990 = vmatprep.mubr.bf16.mxu0 %v511
  %991 = vmatmul.mubr.bf16.gmra.mrb[0].mxu0 %v510
  %v992 = vpop.f32.mrb[0].mxu0
  %v993 = vadd.f32 0.0, %v992
  %v994 = vpop.f32.mrb[0].mxu0
  %v995 = vpop.f32.mrb[0].mxu0
  %v996 = vadd.f32 0.0, %v995
  %v997 = vpop.f32.mrb[0].mxu0
  %998 = vmatprep.mubr.bf16.mxu0 %v516
  %999 = vmatmul.mubr.bf16.gmra.mrb[0].mxu0 %v515
  %v1000 = vpop.f32.mrb[0].mxu0
  %v1001 = vadd.f32 0.0, %v1000
  %v1002 = vpop.f32.mrb[0].mxu0
  %v1003 = vpop.f32.mrb[0].mxu0
  %v1004 = vadd.f32 0.0, %v1003
  %v1005 = vpop.f32.mrb[0].mxu0
  %1006 = vmatprep.mubr.bf16.mxu0 %v521
  %1007 = vmatmul.mubr.bf16.gmra.mrb[0].mxu0 %v520
  %v1008 = vpop.f32.mrb[0].mxu0
  %v1009 = vadd.f32 0.0, %v1008
  %v1010 = vpop.f32.mrb[0].mxu0
  %v1011 = vpop.f32.mrb[0].mxu0
  %v1012 = vadd.f32 0.0, %v1011
  %v1013 = vpop.f32.mrb[0].mxu0
  %1014 = vdwg.mxu0
  %1015 = vmatprep.subr.bf16.mxu0 0
  %1016 = vmatpush1.bf16.msra.mxu0 %v749
  %1017 = vmatprep.subr.bf16.mxu0 0
  %1018 = vmatpush1.bf16.msra.mxu0 %v750
  %1019 = vmatprep.subr.bf16.mxu0 0
  %1020 = vmatpush1.bf16.msra.mxu0 %v751
  %1021 = vmatprep.subr.bf16.mxu0 0
  %1022 = vmatpush1.bf16.msra.mxu0 %v752
  %1023 = vmatprep.subr.bf16.mxu0 0
  %1024 = vmatpush1.bf16.msra.mxu0 %v753
  %1025 = vmatprep.subr.bf16.mxu0 0
  %1026 = vmatpush1.bf16.msra.mxu0 %v754
  %1027 = vmatprep.subr.bf16.mxu0 0
  %1028 = vmatpush1.bf16.msra.mxu0 %v755
  %1029 = vmatprep.subr.bf16.mxu0 0
  %1030 = vmatpush1.bf16.msra.mxu0 %v756
  %1031 = vmatprep.subr.bf16.mxu0 0
  %1032 = vmatpush1.bf16.msra.mxu0 %v757
  %1033 = vmatprep.subr.bf16.mxu0 0
  %1034 = vmatpush1.bf16.msra.mxu0 %v758
  %1035 = vmatprep.subr.bf16.mxu0 0
  %1036 = vmatpush1.bf16.msra.mxu0 %v759
  %1037 = vmatprep.subr.bf16.mxu0 0
  %1038 = vmatpush1.bf16.msra.mxu0 %v760
  %1039 = vmatprep.subr.bf16.mxu0 0
  %1040 = vmatpush1.bf16.msra.mxu0 %v761
  %1041 = vmatprep.subr.bf16.mxu0 0
  %1042 = vmatpush1.bf16.msra.mxu0 %v762
  %1043 = vmatprep.subr.bf16.mxu0 0
  %1044 = vmatpush1.bf16.msra.mxu0 %v763
  %1045 = vmatprep.subr.bf16.mxu0 0
  %1046 = vmatpush1.bf16.msra.mxu0 %v764
  %1047 = vmatprep.mubr.bf16.mxu0 %v448
  %1048 = vmatmul.mubr.bf16.gmra.mrb[0].mxu0 %v447
  %v1049 = vpop.f32.mrb[0].mxu0
  %v1050 = vadd.f32 %v889, %v1049
  %v1051 = vpop.f32.mrb[0].mxu0
  %v1052 = vpop.f32.mrb[0].mxu0
  %v1053 = vadd.f32 %v892, %v1052
  %v1054 = vpop.f32.mrb[0].mxu0
  %1055 = vmatprep.mubr.bf16.mxu0 %v453
  %1056 = vmatmul.mubr.bf16.gmra.mrb[0].mxu0 %v452
  %v1057 = vpop.f32.mrb[0].mxu0
  %v1058 = vadd.f32 %v897, %v1057
  %v1059 = vpop.f32.mrb[0].mxu0
  %v1060 = vpop.f32.mrb[0].mxu0
  %v1061 = vadd.f32 %v900, %v1060
  %v1062 = vpop.f32.mrb[0].mxu0
  %1063 = vmatprep.mubr.bf16.mxu0 %v458
  %1064 = vmatmul.mubr.bf16.gmra.mrb[0].mxu0 %v457
  %v1065 = vpop.f32.mrb[0].mxu0
  %v1066 = vadd.f32 %v905, %v1065
  %v1067 = vpop.f32.mrb[0].mxu0
  %v1068 = vpop.f32.mrb[0].mxu0
  %v1069 = vadd.f32 %v908, %v1068
  %v1070 = vpop.f32.mrb[0].mxu0
  %1071 = vmatprep.mubr.bf16.mxu0 %v463
  %1072 = vmatmul.mubr.bf16.gmra.mrb[0].mxu0 %v462
  %v1073 = vpop.f32.mrb[0].mxu0
  %v1074 = vadd.f32 %v913, %v1073
  %v1075 = vpop.f32.mrb[0].mxu0
  %v1076 = vpop.f32.mrb[0].mxu0
  %v1077 = vadd.f32 %v916, %v1076
  %v1078 = vpop.f32.mrb[0].mxu0
  %1079 = vmatprep.mubr.bf16.mxu0 %v468
  %1080 = vmatmul.mubr.bf16.gmra.mrb[0].mxu0 %v467
  %v1081 = vpop.f32.mrb[0].mxu0
  %v1082 = vadd.f32 %v921, %v1081
  %v1083 = vpop.f32.mrb[0].mxu0
  %v1084 = vpop.f32.mrb[0].mxu0
  %v1085 = vadd.f32 %v924, %v1084
  %v1086 = vpop.f32.mrb[0].mxu0
  %1087 = vmatprep.mubr.bf16.mxu0 %v473
  %1088 = vmatmul.mubr.bf16.gmra.mrb[0].mxu0 %v472
  %v1089 = vpop.f32.mrb[0].mxu0
  %v1090 = vadd.f32 %v929, %v1089
  %v1091 = vpop.f32.mrb[0].mxu0
  %v1092 = vpop.f32.mrb[0].mxu0
  %v1093 = vadd.f32 %v932, %v1092
  %v1094 = vpop.f32.mrb[0].mxu0
  %1095 = vmatprep.mubr.bf16.mxu0 %v478
  %1096 = vmatmul.mubr.bf16.gmra.mrb[0].mxu0 %v477
  %v1097 = vpop.f32.mrb[0].mxu0
  %v1098 = vadd.f32 %v937, %v1097
  %v1099 = vpop.f32.mrb[0].mxu0
  %v1100 = vpop.f32.mrb[0].mxu0
  %v1101 = vadd.f32 %v940, %v1100
  %v1102 = vpop.f32.mrb[0].mxu0
  %1103 = vmatprep.mubr.bf16.mxu0 %v483
  %1104 = vmatmul.mubr.bf16.gmra.mrb[0].mxu0 %v482
  %v1105 = vpop.f32.mrb[0].mxu0
  %v1106 = vadd.f32 %v945, %v1105
  %v1107 = vpop.f32.mrb[0].mxu0
  %v1108 = vpop.f32.mrb[0].mxu0
  %v1109 = vadd.f32 %v948, %v1108
  %v1110 = vpop.f32.mrb[0].mxu0
  %1111 = vmatprep.mubr.bf16.mxu0 %v488
  %1112 = vmatmul.mubr.bf16.gmra.mrb[0].mxu0 %v487
  %v1113 = vpop.f32.mrb[0].mxu0
  %v1114 = vadd.f32 %v953, %v1113
  %v1115 = vpop.f32.mrb[0].mxu0
  %v1116 = vpop.f32.mrb[0].mxu0
  %v1117 = vadd.f32 %v956, %v1116
  %v1118 = vpop.f32.mrb[0].mxu0
  %1119 = vmatprep.mubr.bf16.mxu0 %v493
  %1120 = vmatmul.mubr.bf16.gmra.mrb[0].mxu0 %v492
  %v1121 = vpop.f32.mrb[0].mxu0
  %v1122 = vadd.f32 %v961, %v1121
  %v1123 = vpop.f32.mrb[0].mxu0
  %v1124 = vpop.f32.mrb[0].mxu0
  %v1125 = vadd.f32 %v964, %v1124
  %v1126 = vpop.f32.mrb[0].mxu0
  %1127 = vmatprep.mubr.bf16.mxu0 %v498
  %1128 = vmatmul.mubr.bf16.gmra.mrb[0].mxu0 %v497
  %v1129 = vpop.f32.mrb[0].mxu0
  %v1130 = vadd.f32 %v969, %v1129
  %v1131 = vpop.f32.mrb[0].mxu0
  %v1132 = vpop.f32.mrb[0].mxu0
  %v1133 = vadd.f32 %v972, %v1132
  %v1134 = vpop.f32.mrb[0].mxu0
  %1135 = vmatprep.mubr.bf16.mxu0 %v503
  %1136 = vmatmul.mubr.bf16.gmra.mrb[0].mxu0 %v502
  %v1137 = vpop.f32.mrb[0].mxu0
  %v1138 = vadd.f32 %v977, %v1137
  %v1139 = vpop.f32.mrb[0].mxu0
  %v1140 = vpop.f32.mrb[0].mxu0
  %v1141 = vadd.f32 %v980, %v1140
  %v1142 = vpop.f32.mrb[0].mxu0
  %1143 = vmatprep.mubr.bf16.mxu0 %v508
  %1144 = vmatmul.mubr.bf16.gmra.mrb[0].mxu0 %v507
  %v1145 = vpop.f32.mrb[0].mxu0
  %v1146 = vadd.f32 %v985, %v1145
  %v1147 = vpop.f32.mrb[0].mxu0
  %v1148 = vpop.f32.mrb[0].mxu0
  %v1149 = vadd.f32 %v988, %v1148
  %v1150 = vpop.f32.mrb[0].mxu0
  %1151 = vmatprep.mubr.bf16.mxu0 %v513
  %1152 = vmatmul.mubr.bf16.gmra.mrb[0].mxu0 %v512
  %v1153 = vpop.f32.mrb[0].mxu0
  %v1154 = vadd.f32 %v993, %v1153
  %v1155 = vpop.f32.mrb[0].mxu0
  %v1156 = vpop.f32.mrb[0].mxu0
  %v1157 = vadd.f32 %v996, %v1156
  %v1158 = vpop.f32.mrb[0].mxu0
  %1159 = vmatprep.mubr.bf16.mxu0 %v518
  %1160 = vmatmul.mubr.bf16.gmra.mrb[0].mxu0 %v517
  %v1161 = vpop.f32.mrb[0].mxu0
  %v1162 = vadd.f32 %v1001, %v1161
  %v1163 = vpop.f32.mrb[0].mxu0
  %v1164 = vpop.f32.mrb[0].mxu0
  %v1165 = vadd.f32 %v1004, %v1164
  %v1166 = vpop.f32.mrb[0].mxu0
  %1167 = vmatprep.mubr.bf16.mxu0 %v523
  %1168 = vmatmul.mubr.bf16.gmra.mrb[0].mxu0 %v522
  %v1169 = vpop.f32.mrb[0].mxu0
  %v1170 = vadd.f32 %v1009, %v1169
  %v1171 = vpop.f32.mrb[0].mxu0
  %v1172 = vpop.f32.mrb[0].mxu0
  %v1173 = vadd.f32 %v1012, %v1172
  %v1174 = vpop.f32.mrb[0].mxu0
  %1175 = vdwg.mxu0
  %1176 = vmatprep.subr.bf16.mxu0 0
  %1177 = vmatpush1.bf16.msra.mxu0 %v765
  %1178 = vmatprep.subr.bf16.mxu0 0
  %1179 = vmatpush1.bf16.msra.mxu0 %v766
  %1180 = vmatprep.subr.bf16.mxu0 0
  %1181 = vmatpush1.bf16.msra.mxu0 %v767
  %1182 = vmatprep.subr.bf16.mxu0 0
  %1183 = vmatpush1.bf16.msra.mxu0 %v768
  %1184 = vmatprep.subr.bf16.mxu0 0
  %1185 = vmatpush1.bf16.msra.mxu0 0
  %1186 = vmatprep.subr.bf16.mxu0 0
  %1187 = vmatpush1.bf16.msra.mxu0 0
  %1188 = vmatprep.subr.bf16.mxu0 0
  %1189 = vmatpush1.bf16.msra.mxu0 0
  %1190 = vmatprep.subr.bf16.mxu0 0
  %1191 = vmatpush1.bf16.msra.mxu0 0
  %1192 = vmatprep.subr.bf16.mxu0 0
  %1193 = vmatpush1.bf16.msra.mxu0 0
  %1194 = vmatprep.subr.bf16.mxu0 0
  %1195 = vmatpush1.bf16.msra.mxu0 0
  %1196 = vmatprep.subr.bf16.mxu0 0
  %1197 = vmatpush1.bf16.msra.mxu0 0
  %1198 = vmatprep.subr.bf16.mxu0 0
  %1199 = vmatpush1.bf16.msra.mxu0 0
  %1200 = vmatprep.subr.bf16.mxu0 0
  %1201 = vmatpush1.bf16.msra.mxu0 0
  %1202 = vmatprep.subr.bf16.mxu0 0
  %1203 = vmatpush1.bf16.msra.mxu0 0
  %1204 = vmatprep.subr.bf16.mxu0 0
  %1205 = vmatpush1.bf16.msra.mxu0 0
  %1206 = vmatprep.subr.bf16.mxu0 0
  %1207 = vmatpush1.bf16.msra.mxu0 0
  %1208 = vmatprep.mubr.bf16.mxu0 0
  %1209 = vmatmul.mubr.bf16.gmra.mrb[0].mxu0 %v807
  %v1210 = vpop.f32.mrb[0].mxu0
  %v1211 = vadd.f32 %v1050, %v1210
  %v1212 = vpop.f32.mrb[0].mxu0
  %v1213 = vpop.f32.mrb[0].mxu0
  %v1214 = vadd.f32 %v1053, %v1213
  %v1215 = vpop.f32.mrb[0].mxu0
  %1216 = vmatprep.mubr.bf16.mxu0 0
  %1217 = vmatmul.mubr.bf16.gmra.mrb[0].mxu0 %v810
  %v1218 = vpop.f32.mrb[0].mxu0
  %v1219 = vadd.f32 %v1058, %v1218
  %v1220 = vpop.f32.mrb[0].mxu0
  %v1221 = vpop.f32.mrb[0].mxu0
  %v1222 = vadd.f32 %v1061, %v1221
  %v1223 = vpop.f32.mrb[0].mxu0
  %1224 = vmatprep.mubr.bf16.mxu0 0
  %1225 = vmatmul.mubr.bf16.gmra.mrb[0].mxu0 %v813
  %v1226 = vpop.f32.mrb[0].mxu0
  %v1227 = vadd.f32 %v1066, %v1226
  %v1228 = vpop.f32.mrb[0].mxu0
  %v1229 = vpop.f32.mrb[0].mxu0
  %v1230 = vadd.f32 %v1069, %v1229
  %v1231 = vpop.f32.mrb[0].mxu0
  %1232 = vmatprep.mubr.bf16.mxu0 0
  %1233 = vmatmul.mubr.bf16.gmra.mrb[0].mxu0 %v816
  %v1234 = vpop.f32.mrb[0].mxu0
  %v1235 = vadd.f32 %v1074, %v1234
  %v1236 = vpop.f32.mrb[0].mxu0
  %v1237 = vpop.f32.mrb[0].mxu0
  %v1238 = vadd.f32 %v1077, %v1237
  %v1239 = vpop.f32.mrb[0].mxu0
  %1240 = vmatprep.mubr.bf16.mxu0 0
  %1241 = vmatmul.mubr.bf16.gmra.mrb[0].mxu0 %v819
  %v1242 = vpop.f32.mrb[0].mxu0
  %v1243 = vadd.f32 %v1082, %v1242
  %v1244 = vpop.f32.mrb[0].mxu0
  %v1245 = vpop.f32.mrb[0].mxu0
  %v1246 = vadd.f32 %v1085, %v1245
  %v1247 = vpop.f32.mrb[0].mxu0
  %1248 = vmatprep.mubr.bf16.mxu0 0
  %1249 = vmatmul.mubr.bf16.gmra.mrb[0].mxu0 %v822
  %v1250 = vpop.f32.mrb[0].mxu0
  %v1251 = vadd.f32 %v1090, %v1250
  %v1252 = vpop.f32.mrb[0].mxu0
  %v1253 = vpop.f32.mrb[0].mxu0
  %v1254 = vadd.f32 %v1093, %v1253
  %v1255 = vpop.f32.mrb[0].mxu0
  %1256 = vmatprep.mubr.bf16.mxu0 0
  %1257 = vmatmul.mubr.bf16.gmra.mrb[0].mxu0 %v825
  %v1258 = vpop.f32.mrb[0].mxu0
  %v1259 = vadd.f32 %v1098, %v1258
  %v1260 = vpop.f32.mrb[0].mxu0
  %v1261 = vpop.f32.mrb[0].mxu0
  %v1262 = vadd.f32 %v1101, %v1261
  %v1263 = vpop.f32.mrb[0].mxu0
  %1264 = vmatprep.mubr.bf16.mxu0 0
  %1265 = vmatmul.mubr.bf16.gmra.mrb[0].mxu0 %v828
  %v1266 = vpop.f32.mrb[0].mxu0
  %v1267 = vadd.f32 %v1106, %v1266
  %v1268 = vpop.f32.mrb[0].mxu0
  %v1269 = vpop.f32.mrb[0].mxu0
  %v1270 = vadd.f32 %v1109, %v1269
  %v1271 = vpop.f32.mrb[0].mxu0
  %1272 = vmatprep.mubr.bf16.mxu0 0
  %1273 = vmatmul.mubr.bf16.gmra.mrb[0].mxu0 %v831
  %v1274 = vpop.f32.mrb[0].mxu0
  %v1275 = vadd.f32 %v1114, %v1274
  %v1276 = vpop.f32.mrb[0].mxu0
  %v1277 = vpop.f32.mrb[0].mxu0
  %v1278 = vadd.f32 %v1117, %v1277
  %v1279 = vpop.f32.mrb[0].mxu0
  %1280 = vmatprep.mubr.bf16.mxu0 0
  %1281 = vmatmul.mubr.bf16.gmra.mrb[0].mxu0 %v834
  %v1282 = vpop.f32.mrb[0].mxu0
  %v1283 = vadd.f32 %v1122, %v1282
  %v1284 = vpop.f32.mrb[0].mxu0
  %v1285 = vpop.f32.mrb[0].mxu0
  %v1286 = vadd.f32 %v1125, %v1285
  %v1287 = vpop.f32.mrb[0].mxu0
  %1288 = vmatprep.mubr.bf16.mxu0 0
  %1289 = vmatmul.mubr.bf16.gmra.mrb[0].mxu0 %v837
  %v1290 = vpop.f32.mrb[0].mxu0
  %v1291 = vadd.f32 %v1130, %v1290
  %v1292 = vpop.f32.mrb[0].mxu0
  %v1293 = vpop.f32.mrb[0].mxu0
  %v1294 = vadd.f32 %v1133, %v1293
  %v1295 = vpop.f32.mrb[0].mxu0
  %1296 = vmatprep.mubr.bf16.mxu0 0
  %1297 = vmatmul.mubr.bf16.gmra.mrb[0].mxu0 %v840
  %v1298 = vpop.f32.mrb[0].mxu0
  %v1299 = vadd.f32 %v1138, %v1298
  %v1300 = vpop.f32.mrb[0].mxu0
  %v1301 = vpop.f32.mrb[0].mxu0
  %v1302 = vadd.f32 %v1141, %v1301
  %v1303 = vpop.f32.mrb[0].mxu0
  %1304 = vmatprep.mubr.bf16.mxu0 0
  %1305 = vmatmul.mubr.bf16.gmra.mrb[0].mxu0 %v843
  %v1306 = vpop.f32.mrb[0].mxu0
  %v1307 = vadd.f32 %v1146, %v1306
  %v1308 = vpop.f32.mrb[0].mxu0
  %v1309 = vpop.f32.mrb[0].mxu0
  %v1310 = vadd.f32 %v1149, %v1309
  %v1311 = vpop.f32.mrb[0].mxu0
  %1312 = vmatprep.mubr.bf16.mxu0 0
  %1313 = vmatmul.mubr.bf16.gmra.mrb[0].mxu0 %v846
  %v1314 = vpop.f32.mrb[0].mxu0
  %v1315 = vadd.f32 %v1154, %v1314
  %v1316 = vpop.f32.mrb[0].mxu0
  %v1317 = vpop.f32.mrb[0].mxu0
  %v1318 = vadd.f32 %v1157, %v1317
  %v1319 = vpop.f32.mrb[0].mxu0
  %1320 = vmatprep.mubr.bf16.mxu0 0
  %1321 = vmatmul.mubr.bf16.gmra.mrb[0].mxu0 %v849
  %v1322 = vpop.f32.mrb[0].mxu0
  %v1323 = vadd.f32 %v1162, %v1322
  %v1324 = vpop.f32.mrb[0].mxu0
  %v1325 = vpop.f32.mrb[0].mxu0
  %v1326 = vadd.f32 %v1165, %v1325
  %v1327 = vpop.f32.mrb[0].mxu0
  %1328 = vmatprep.mubr.bf16.mxu0 0
  %1329 = vmatmul.mubr.bf16.gmra.mrb[0].mxu0 %v852
  %v1330 = vpop.f32.mrb[0].mxu0
  %v1331 = vadd.f32 %v1170, %v1330
  %v1332 = vpop.f32.mrb[0].mxu0
  %v1333 = vpop.f32.mrb[0].mxu0
  %v1334 = vadd.f32 %v1173, %v1333
  %v1335 = vpop.f32.mrb[0].mxu0
  %1336 = vdwg.mxu0
  %v1337 = vld [vmem:[%s2] sm:$0xff]
  %v1338 = vld [vmem:[%s2 + $0x8] sm:$0xff]
  %v1339 = vld [vmem:[%s2 + $0x10] sm:$0xff]
  %v1340 = vld [vmem:[%s2 + $0x18] sm:$0xff]
  %v1341 = vld [vmem:[%s2 + $0x20] sm:$0xff]
  %v1342 = vld [vmem:[%s2 + $0x28] sm:$0xff]
  %v1343 = vld [vmem:[%s2 + $0x30] sm:$0xff]
  %v1344 = vld [vmem:[%s2 + $0x38] sm:$0xff]
  %v1345 = vld [vmem:[%s2 + $0x40] sm:$0xff]
  %v1346 = vld [vmem:[%s2 + $0x48] sm:$0xff]
  %v1347 = vld [vmem:[%s2 + $0x50] sm:$0xff]
  %v1348 = vld [vmem:[%s2 + $0x58] sm:$0xff]
  %v1349 = vld [vmem:[%s2 + $0x60] sm:$0xff]
  %v1350 = vld [vmem:[%s2 + $0x68] sm:$0xff]
  %v1351 = vld [vmem:[%s2 + $0x70] sm:$0xff]
  %v1352 = vld [vmem:[%s2 + $0x78] sm:$0xff]
  %1353 = vmatprep.subr.mxu0 0.0
  %1354 = vmatpush1.msra.mxu0 %v1337
  %1355 = vmatprep.subr.mxu0 0.0
  %1356 = vmatpush1.msra.mxu0 %v1338
  %1357 = vmatprep.subr.mxu0 0.0
  %1358 = vmatpush1.msra.mxu0 %v1339
  %1359 = vmatprep.subr.mxu0 0.0
  %1360 = vmatpush1.msra.mxu0 %v1340
  %1361 = vmatprep.subr.mxu0 0.0
  %1362 = vmatpush1.msra.mxu0 %v1341
  %1363 = vmatprep.subr.mxu0 0.0
  %1364 = vmatpush1.msra.mxu0 %v1342
  %1365 = vmatprep.subr.mxu0 0.0
  %1366 = vmatpush1.msra.mxu0 %v1343
  %1367 = vmatprep.subr.mxu0 0.0
  %1368 = vmatpush1.msra.mxu0 %v1344
  %1369 = vmatprep.subr.mxu0 0.0
  %1370 = vmatpush1.msra.mxu0 %v1345
  %1371 = vmatprep.subr.mxu0 0.0
  %1372 = vmatpush1.msra.mxu0 %v1346
  %1373 = vmatprep.subr.mxu0 0.0
  %1374 = vmatpush1.msra.mxu0 %v1347
  %1375 = vmatprep.subr.mxu0 0.0
  %1376 = vmatpush1.msra.mxu0 %v1348
  %1377 = vmatprep.subr.mxu0 0.0
  %1378 = vmatpush1.msra.mxu0 %v1349
  %1379 = vmatprep.subr.mxu0 0.0
  %1380 = vmatpush1.msra.mxu0 %v1350
  %1381 = vmatprep.subr.mxu0 0.0
  %1382 = vmatpush1.msra.mxu0 %v1351
  %1383 = vmatprep.subr.mxu0 0.0
  %1384 = vmatpush1.msra.mxu0 %v1352
  %1385 = vmatprep.subr.mxu0 0.0
  %1386 = vmatpush1.msra.mxu0 0.0
  %1387 = vmatprep.subr.mxu0 0.0
  %1388 = vmatpush1.msra.mxu0 0.0
  %1389 = vmatprep.subr.mxu0 0.0
  %1390 = vmatpush1.msra.mxu0 0.0
  %1391 = vmatprep.subr.mxu0 0.0
  %1392 = vmatpush1.msra.mxu0 0.0
  %1393 = vmatprep.subr.mxu0 0.0
  %1394 = vmatpush1.msra.mxu0 0.0
  %1395 = vmatprep.subr.mxu0 0.0
  %1396 = vmatpush1.msra.mxu0 0.0
  %1397 = vmatprep.subr.mxu0 0.0
  %1398 = vmatpush1.msra.mxu0 0.0
  %1399 = vmatprep.subr.mxu0 0.0
  %1400 = vmatpush1.msra.mxu0 0.0
  %1401 = vmatprep.subr.mxu0 0.0
  %1402 = vmatpush1.msra.mxu0 0.0
  %1403 = vmatprep.subr.mxu0 0.0
  %1404 = vmatpush1.msra.mxu0 0.0
  %1405 = vmatprep.subr.mxu0 0.0
  %1406 = vmatpush1.msra.mxu0 0.0
  %1407 = vmatprep.subr.mxu0 0.0
  %1408 = vmatpush1.msra.mxu0 0.0
  %1409 = vmatprep.subr.mxu0 0.0
  %1410 = vmatpush1.msra.mxu0 0.0
  %1411 = vmatprep.subr.mxu0 0.0
  %1412 = vmatpush1.msra.mxu0 0.0
  %1413 = vmatprep.subr.mxu0 0.0
  %1414 = vmatpush1.msra.mxu0 0.0
  %1415 = vmatprep.subr.mxu0 0.0
  %1416 = vmatpush1.msra.mxu0 0.0
  %1417 = vmatprep.mubr.f32.mxu0 0.0
  %1418 = vmatmul.mubr.f32.gmra.mrb[0].mxu0 %v1211
  %v1419 = vpop.f32.mrb[0].mxu0
  %v1420 = vadd.f32 0.0, %v1419
  %v1421 = vpop.f32.mrb[0].mxu0
  %1422 = vmatprep.mubr.f32.mxu0 0.0
  %1423 = vmatmul.mubr.f32.gmra.mrb[0].mxu0 %v1214
  %v1424 = vpop.f32.mrb[0].mxu0
  %v1425 = vadd.f32 0.0, %v1424
  %v1426 = vpop.f32.mrb[0].mxu0
  %1427 = vmatprep.mubr.f32.mxu0 0.0
  %1428 = vmatmul.mubr.f32.gmra.mrb[0].mxu0 %v1219
  %v1429 = vpop.f32.mrb[0].mxu0
  %v1430 = vadd.f32 0.0, %v1429
  %v1431 = vpop.f32.mrb[0].mxu0
  %1432 = vmatprep.mubr.f32.mxu0 0.0
  %1433 = vmatmul.mubr.f32.gmra.mrb[0].mxu0 %v1222
  %v1434 = vpop.f32.mrb[0].mxu0
  %v1435 = vadd.f32 0.0, %v1434
  %v1436 = vpop.f32.mrb[0].mxu0
  %1437 = vmatprep.mubr.f32.mxu0 0.0
  %1438 = vmatmul.mubr.f32.gmra.mrb[0].mxu0 %v1227
  %v1439 = vpop.f32.mrb[0].mxu0
  %v1440 = vadd.f32 0.0, %v1439
  %v1441 = vpop.f32.mrb[0].mxu0
  %1442 = vmatprep.mubr.f32.mxu0 0.0
  %1443 = vmatmul.mubr.f32.gmra.mrb[0].mxu0 %v1230
  %v1444 = vpop.f32.mrb[0].mxu0
  %v1445 = vadd.f32 0.0, %v1444
  %v1446 = vpop.f32.mrb[0].mxu0
  %1447 = vmatprep.mubr.f32.mxu0 0.0
  %1448 = vmatmul.mubr.f32.gmra.mrb[0].mxu0 %v1235
  %v1449 = vpop.f32.mrb[0].mxu0
  %v1450 = vadd.f32 0.0, %v1449
  %v1451 = vpop.f32.mrb[0].mxu0
  %1452 = vmatprep.mubr.f32.mxu0 0.0
  %1453 = vmatmul.mubr.f32.gmra.mrb[0].mxu0 %v1238
  %v1454 = vpop.f32.mrb[0].mxu0
  %v1455 = vadd.f32 0.0, %v1454
  %v1456 = vpop.f32.mrb[0].mxu0
  %1457 = vmatprep.mubr.f32.mxu0 0.0
  %1458 = vmatmul.mubr.f32.gmra.mrb[0].mxu0 %v1243
  %v1459 = vpop.f32.mrb[0].mxu0
  %v1460 = vadd.f32 0.0, %v1459
  %v1461 = vpop.f32.mrb[0].mxu0
  %1462 = vmatprep.mubr.f32.mxu0 0.0
  %1463 = vmatmul.mubr.f32.gmra.mrb[0].mxu0 %v1246
  %v1464 = vpop.f32.mrb[0].mxu0
  %v1465 = vadd.f32 0.0, %v1464
  %v1466 = vpop.f32.mrb[0].mxu0
  %1467 = vmatprep.mubr.f32.mxu0 0.0
  %1468 = vmatmul.mubr.f32.gmra.mrb[0].mxu0 %v1251
  %v1469 = vpop.f32.mrb[0].mxu0
  %v1470 = vadd.f32 0.0, %v1469
  %v1471 = vpop.f32.mrb[0].mxu0
  %1472 = vmatprep.mubr.f32.mxu0 0.0
  %1473 = vmatmul.mubr.f32.gmra.mrb[0].mxu0 %v1254
  %v1474 = vpop.f32.mrb[0].mxu0
  %v1475 = vadd.f32 0.0, %v1474
  %v1476 = vpop.f32.mrb[0].mxu0
  %1477 = vmatprep.mubr.f32.mxu0 0.0
  %1478 = vmatmul.mubr.f32.gmra.mrb[0].mxu0 %v1259
  %v1479 = vpop.f32.mrb[0].mxu0
  %v1480 = vadd.f32 0.0, %v1479
  %v1481 = vpop.f32.mrb[0].mxu0
  %1482 = vmatprep.mubr.f32.mxu0 0.0
  %1483 = vmatmul.mubr.f32.gmra.mrb[0].mxu0 %v1262
  %v1484 = vpop.f32.mrb[0].mxu0
  %v1485 = vadd.f32 0.0, %v1484
  %v1486 = vpop.f32.mrb[0].mxu0
  %1487 = vmatprep.mubr.f32.mxu0 0.0
  %1488 = vmatmul.mubr.f32.gmra.mrb[0].mxu0 %v1267
  %v1489 = vpop.f32.mrb[0].mxu0
  %v1490 = vadd.f32 0.0, %v1489
  %v1491 = vpop.f32.mrb[0].mxu0
  %1492 = vmatprep.mubr.f32.mxu0 0.0
  %1493 = vmatmul.mubr.f32.gmra.mrb[0].mxu0 %v1270
  %v1494 = vpop.f32.mrb[0].mxu0
  %v1495 = vadd.f32 0.0, %v1494
  %v1496 = vpop.f32.mrb[0].mxu0
  %1497 = vmatprep.mubr.f32.mxu0 0.0
  %1498 = vmatmul.mubr.f32.gmra.mrb[0].mxu0 %v1275
  %v1499 = vpop.f32.mrb[0].mxu0
  %v1500 = vadd.f32 0.0, %v1499
  %v1501 = vpop.f32.mrb[0].mxu0
  %1502 = vmatprep.mubr.f32.mxu0 0.0
  %1503 = vmatmul.mubr.f32.gmra.mrb[0].mxu0 %v1278
  %v1504 = vpop.f32.mrb[0].mxu0
  %v1505 = vadd.f32 0.0, %v1504
  %v1506 = vpop.f32.mrb[0].mxu0
  %1507 = vmatprep.mubr.f32.mxu0 0.0
  %1508 = vmatmul.mubr.f32.gmra.mrb[0].mxu0 %v1283
  %v1509 = vpop.f32.mrb[0].mxu0
  %v1510 = vadd.f32 0.0, %v1509
  %v1511 = vpop.f32.mrb[0].mxu0
  %1512 = vmatprep.mubr.f32.mxu0 0.0
  %1513 = vmatmul.mubr.f32.gmra.mrb[0].mxu0 %v1286
  %v1514 = vpop.f32.mrb[0].mxu0
  %v1515 = vadd.f32 0.0, %v1514
  %v1516 = vpop.f32.mrb[0].mxu0
  %1517 = vmatprep.mubr.f32.mxu0 0.0
  %1518 = vmatmul.mubr.f32.gmra.mrb[0].mxu0 %v1291
  %v1519 = vpop.f32.mrb[0].mxu0
  %v1520 = vadd.f32 0.0, %v1519
  %v1521 = vpop.f32.mrb[0].mxu0
  %1522 = vmatprep.mubr.f32.mxu0 0.0
  %1523 = vmatmul.mubr.f32.gmra.mrb[0].mxu0 %v1294
  %v1524 = vpop.f32.mrb[0].mxu0
  %v1525 = vadd.f32 0.0, %v1524
  %v1526 = vpop.f32.mrb[0].mxu0
  %1527 = vmatprep.mubr.f32.mxu0 0.0
  %1528 = vmatmul.mubr.f32.gmra.mrb[0].mxu0 %v1299
  %v1529 = vpop.f32.mrb[0].mxu0
  %v1530 = vadd.f32 0.0, %v1529
  %v1531 = vpop.f32.mrb[0].mxu0
  %1532 = vmatprep.mubr.f32.mxu0 0.0
  %1533 = vmatmul.mubr.f32.gmra.mrb[0].mxu0 %v1302
  %v1534 = vpop.f32.mrb[0].mxu0
  %v1535 = vadd.f32 0.0, %v1534
  %v1536 = vpop.f32.mrb[0].mxu0
  %1537 = vmatprep.mubr.f32.mxu0 0.0
  %1538 = vmatmul.mubr.f32.gmra.mrb[0].mxu0 %v1307
  %v1539 = vpop.f32.mrb[0].mxu0
  %v1540 = vadd.f32 0.0, %v1539
  %v1541 = vpop.f32.mrb[0].mxu0
  %1542 = vmatprep.mubr.f32.mxu0 0.0
  %1543 = vmatmul.mubr.f32.gmra.mrb[0].mxu0 %v1310
  %v1544 = vpop.f32.mrb[0].mxu0
  %v1545 = vadd.f32 0.0, %v1544
  %v1546 = vpop.f32.mrb[0].mxu0
  %1547 = vmatprep.mubr.f32.mxu0 0.0
  %1548 = vmatmul.mubr.f32.gmra.mrb[0].mxu0 %v1315
  %v1549 = vpop.f32.mrb[0].mxu0
  %v1550 = vadd.f32 0.0, %v1549
  %v1551 = vpop.f32.mrb[0].mxu0
  %1552 = vmatprep.mubr.f32.mxu0 0.0
  %1553 = vmatmul.mubr.f32.gmra.mrb[0].mxu0 %v1318
  %v1554 = vpop.f32.mrb[0].mxu0
  %v1555 = vadd.f32 0.0, %v1554
  %v1556 = vpop.f32.mrb[0].mxu0
  %1557 = vmatprep.mubr.f32.mxu0 0.0
  %1558 = vmatmul.mubr.f32.gmra.mrb[0].mxu0 %v1323
  %v1559 = vpop.f32.mrb[0].mxu0
  %v1560 = vadd.f32 0.0, %v1559
  %v1561 = vpop.f32.mrb[0].mxu0
  %1562 = vmatprep.mubr.f32.mxu0 0.0
  %1563 = vmatmul.mubr.f32.gmra.mrb[0].mxu0 %v1326
  %v1564 = vpop.f32.mrb[0].mxu0
  %v1565 = vadd.f32 0.0, %v1564
  %v1566 = vpop.f32.mrb[0].mxu0
  %1567 = vmatprep.mubr.f32.mxu0 0.0
  %1568 = vmatmul.mubr.f32.gmra.mrb[0].mxu0 %v1331
  %v1569 = vpop.f32.mrb[0].mxu0
  %v1570 = vadd.f32 0.0, %v1569
  %v1571 = vpop.f32.mrb[0].mxu0
  %1572 = vmatprep.mubr.f32.mxu0 0.0
  %1573 = vmatmul.mubr.f32.gmra.mrb[0].mxu0 %v1334
  %v1574 = vpop.f32.mrb[0].mxu0
  %v1575 = vadd.f32 0.0, %v1574
  %v1576 = vpop.f32.mrb[0].mxu0
  %1577 = vdwg.mxu0
  %v1578 = vadd.f32 %v1420, %v1425
  %v1579 = vadd.f32 %v1578, %v1430
  %v1580 = vadd.f32 %v1579, %v1435
  %v1581 = vadd.f32 %v1580, %v1440
  %v1582 = vadd.f32 %v1581, %v1445
  %v1583 = vadd.f32 %v1582, %v1450
  %v1584 = vadd.f32 %v1583, %v1455
  %v1585 = vadd.f32 %v1584, %v1460
  %v1586 = vadd.f32 %v1585, %v1465
  %v1587 = vadd.f32 %v1586, %v1470
  %v1588 = vadd.f32 %v1587, %v1475
  %v1589 = vadd.f32 %v1588, %v1480
  %v1590 = vadd.f32 %v1589, %v1485
  %v1591 = vadd.f32 %v1590, %v1490
  %v1592 = vadd.f32 %v1591, %v1495
  %v1593 = vadd.f32 %v1592, %v1500
  %v1594 = vadd.f32 %v1593, %v1505
  %v1595 = vadd.f32 %v1594, %v1510
  %v1596 = vadd.f32 %v1595, %v1515
  %v1597 = vadd.f32 %v1596, %v1520
  %v1598 = vadd.f32 %v1597, %v1525
  %v1599 = vadd.f32 %v1598, %v1530
  %v1600 = vadd.f32 %v1599, %v1535
  %v1601 = vadd.f32 %v1600, %v1540
  %v1602 = vadd.f32 %v1601, %v1545
  %v1603 = vadd.f32 %v1602, %v1550
  %v1604 = vadd.f32 %v1603, %v1555
  %v1605 = vadd.f32 %v1604, %v1560
  %v1606 = vadd.f32 %v1605, %v1565
  %v1607 = vadd.f32 %v1606, %v1570
  %v1608 = vadd.f32 %v1607, %v1575
  %v1609 = vrot.slane %v1608, 4
  %v1610 = vadd.f32 %v1608, %v1609
  %v1611 = vrot.slane %v1610, 2
  %v1612 = vadd.f32 %v1610, %v1611
  %v1613 = vrot.slane %v1612, 1
  %v1614 = vadd.f32 %v1612, %v1613
  %v1615 = vmul.f32 %v1614, 0.00012207031
  %v1616 = vmul.f32 %v1211, %v1211
  %v1617 = vmul.f32 %v1214, %v1214
  %v1618 = vmul.f32 %v1219, %v1219
  %v1619 = vmul.f32 %v1222, %v1222
  %v1620 = vmul.f32 %v1227, %v1227
  %v1621 = vmul.f32 %v1230, %v1230
  %v1622 = vmul.f32 %v1235, %v1235
  %v1623 = vmul.f32 %v1238, %v1238
  %v1624 = vmul.f32 %v1243, %v1243
  %v1625 = vmul.f32 %v1246, %v1246
  %v1626 = vmul.f32 %v1251, %v1251
  %v1627 = vmul.f32 %v1254, %v1254
  %v1628 = vmul.f32 %v1259, %v1259
  %v1629 = vmul.f32 %v1262, %v1262
  %v1630 = vmul.f32 %v1267, %v1267
  %v1631 = vmul.f32 %v1270, %v1270
  %v1632 = vmul.f32 %v1275, %v1275
  %v1633 = vmul.f32 %v1278, %v1278
  %v1634 = vmul.f32 %v1283, %v1283
  %v1635 = vmul.f32 %v1286, %v1286
  %v1636 = vmul.f32 %v1291, %v1291
  %v1637 = vmul.f32 %v1294, %v1294
  %v1638 = vmul.f32 %v1299, %v1299
  %v1639 = vmul.f32 %v1302, %v1302
  %v1640 = vmul.f32 %v1307, %v1307
  %v1641 = vmul.f32 %v1310, %v1310
  %v1642 = vmul.f32 %v1315, %v1315
  %v1643 = vmul.f32 %v1318, %v1318
  %v1644 = vmul.f32 %v1323, %v1323
  %v1645 = vmul.f32 %v1326, %v1326
  %v1646 = vmul.f32 %v1331, %v1331
  %v1647 = vmul.f32 %v1334, %v1334
  %1648 = vmatprep.subr.mxu0 0.0
  %1649 = vmatpush1.msra.mxu0 %v1337
  %1650 = vmatprep.subr.mxu0 0.0
  %1651 = vmatpush1.msra.mxu0 %v1338
  %1652 = vmatprep.subr.mxu0 0.0
  %1653 = vmatpush1.msra.mxu0 %v1339
  %1654 = vmatprep.subr.mxu0 0.0
  %1655 = vmatpush1.msra.mxu0 %v1340
  %1656 = vmatprep.subr.mxu0 0.0
  %1657 = vmatpush1.msra.mxu0 %v1341
  %1658 = vmatprep.subr.mxu0 0.0
  %1659 = vmatpush1.msra.mxu0 %v1342
  %1660 = vmatprep.subr.mxu0 0.0
  %1661 = vmatpush1.msra.mxu0 %v1343
  %1662 = vmatprep.subr.mxu0 0.0
  %1663 = vmatpush1.msra.mxu0 %v1344
  %1664 = vmatprep.subr.mxu0 0.0
  %1665 = vmatpush1.msra.mxu0 %v1345
  %1666 = vmatprep.subr.mxu0 0.0
  %1667 = vmatpush1.msra.mxu0 %v1346
  %1668 = vmatprep.subr.mxu0 0.0
  %1669 = vmatpush1.msra.mxu0 %v1347
  %1670 = vmatprep.subr.mxu0 0.0
  %1671 = vmatpush1.msra.mxu0 %v1348
  %1672 = vmatprep.subr.mxu0 0.0
  %1673 = vmatpush1.msra.mxu0 %v1349
  %1674 = vmatprep.subr.mxu0 0.0
  %1675 = vmatpush1.msra.mxu0 %v1350
  %1676 = vmatprep.subr.mxu0 0.0
  %1677 = vmatpush1.msra.mxu0 %v1351
  %1678 = vmatprep.subr.mxu0 0.0
  %1679 = vmatpush1.msra.mxu0 %v1352
  %1680 = vmatprep.subr.mxu0 0.0
  %1681 = vmatpush1.msra.mxu0 0.0
  %1682 = vmatprep.subr.mxu0 0.0
  %1683 = vmatpush1.msra.mxu0 0.0
  %1684 = vmatprep.subr.mxu0 0.0
  %1685 = vmatpush1.msra.mxu0 0.0
  %1686 = vmatprep.subr.mxu0 0.0
  %1687 = vmatpush1.msra.mxu0 0.0
  %1688 = vmatprep.subr.mxu0 0.0
  %1689 = vmatpush1.msra.mxu0 0.0
  %1690 = vmatprep.subr.mxu0 0.0
  %1691 = vmatpush1.msra.mxu0 0.0
  %1692 = vmatprep.subr.mxu0 0.0
  %1693 = vmatpush1.msra.mxu0 0.0
  %1694 = vmatprep.subr.mxu0 0.0
  %1695 = vmatpush1.msra.mxu0 0.0
  %1696 = vmatprep.subr.mxu0 0.0
  %1697 = vmatpush1.msra.mxu0 0.0
  %1698 = vmatprep.subr.mxu0 0.0
  %1699 = vmatpush1.msra.mxu0 0.0
  %1700 = vmatprep.subr.mxu0 0.0
  %1701 = vmatpush1.msra.mxu0 0.0
  %1702 = vmatprep.subr.mxu0 0.0
  %1703 = vmatpush1.msra.mxu0 0.0
  %1704 = vmatprep.subr.mxu0 0.0
  %1705 = vmatpush1.msra.mxu0 0.0
  %1706 = vmatprep.subr.mxu0 0.0
  %1707 = vmatpush1.msra.mxu0 0.0
  %1708 = vmatprep.subr.mxu0 0.0
  %1709 = vmatpush1.msra.mxu0 0.0
  %1710 = vmatprep.subr.mxu0 0.0
  %1711 = vmatpush1.msra.mxu0 0.0
  %1712 = vmatprep.mubr.f32.mxu0 0.0
  %1713 = vmatmul.mubr.f32.gmra.mrb[0].mxu0 %v1616
  %v1714 = vpop.f32.mrb[0].mxu0
  %v1715 = vadd.f32 0.0, %v1714
  %v1716 = vpop.f32.mrb[0].mxu0
  %1717 = vmatprep.mubr.f32.mxu0 0.0
  %1718 = vmatmul.mubr.f32.gmra.mrb[0].mxu0 %v1617
  %v1719 = vpop.f32.mrb[0].mxu0
  %v1720 = vadd.f32 0.0, %v1719
  %v1721 = vpop.f32.mrb[0].mxu0
  %1722 = vmatprep.mubr.f32.mxu0 0.0
  %1723 = vmatmul.mubr.f32.gmra.mrb[0].mxu0 %v1618
  %v1724 = vpop.f32.mrb[0].mxu0
  %v1725 = vadd.f32 0.0, %v1724
  %v1726 = vpop.f32.mrb[0].mxu0
  %1727 = vmatprep.mubr.f32.mxu0 0.0
  %1728 = vmatmul.mubr.f32.gmra.mrb[0].mxu0 %v1619
  %v1729 = vpop.f32.mrb[0].mxu0
  %v1730 = vadd.f32 0.0, %v1729
  %v1731 = vpop.f32.mrb[0].mxu0
  %1732 = vmatprep.mubr.f32.mxu0 0.0
  %1733 = vmatmul.mubr.f32.gmra.mrb[0].mxu0 %v1620
  %v1734 = vpop.f32.mrb[0].mxu0
  %v1735 = vadd.f32 0.0, %v1734
  %v1736 = vpop.f32.mrb[0].mxu0
  %1737 = vmatprep.mubr.f32.mxu0 0.0
  %1738 = vmatmul.mubr.f32.gmra.mrb[0].mxu0 %v1621
  %v1739 = vpop.f32.mrb[0].mxu0
  %v1740 = vadd.f32 0.0, %v1739
  %v1741 = vpop.f32.mrb[0].mxu0
  %1742 = vmatprep.mubr.f32.mxu0 0.0
  %1743 = vmatmul.mubr.f32.gmra.mrb[0].mxu0 %v1622
  %v1744 = vpop.f32.mrb[0].mxu0
  %v1745 = vadd.f32 0.0, %v1744
  %v1746 = vpop.f32.mrb[0].mxu0
  %1747 = vmatprep.mubr.f32.mxu0 0.0
  %1748 = vmatmul.mubr.f32.gmra.mrb[0].mxu0 %v1623
  %v1749 = vpop.f32.mrb[0].mxu0
  %v1750 = vadd.f32 0.0, %v1749
  %v1751 = vpop.f32.mrb[0].mxu0
  %1752 = vmatprep.mubr.f32.mxu0 0.0
  %1753 = vmatmul.mubr.f32.gmra.mrb[0].mxu0 %v1624
  %v1754 = vpop.f32.mrb[0].mxu0
  %v1755 = vadd.f32 0.0, %v1754
  %v1756 = vpop.f32.mrb[0].mxu0
  %1757 = vmatprep.mubr.f32.mxu0 0.0
  %1758 = vmatmul.mubr.f32.gmra.mrb[0].mxu0 %v1625
  %v1759 = vpop.f32.mrb[0].mxu0
  %v1760 = vadd.f32 0.0, %v1759
  %v1761 = vpop.f32.mrb[0].mxu0
  %1762 = vmatprep.mubr.f32.mxu0 0.0
  %1763 = vmatmul.mubr.f32.gmra.mrb[0].mxu0 %v1626
  %v1764 = vpop.f32.mrb[0].mxu0
  %v1765 = vadd.f32 0.0, %v1764
  %v1766 = vpop.f32.mrb[0].mxu0
  %1767 = vmatprep.mubr.f32.mxu0 0.0
  %1768 = vmatmul.mubr.f32.gmra.mrb[0].mxu0 %v1627
  %v1769 = vpop.f32.mrb[0].mxu0
  %v1770 = vadd.f32 0.0, %v1769
  %v1771 = vpop.f32.mrb[0].mxu0
  %1772 = vmatprep.mubr.f32.mxu0 0.0
  %1773 = vmatmul.mubr.f32.gmra.mrb[0].mxu0 %v1628
  %v1774 = vpop.f32.mrb[0].mxu0
  %v1775 = vadd.f32 0.0, %v1774
  %v1776 = vpop.f32.mrb[0].mxu0
  %1777 = vmatprep.mubr.f32.mxu0 0.0
  %1778 = vmatmul.mubr.f32.gmra.mrb[0].mxu0 %v1629
  %v1779 = vpop.f32.mrb[0].mxu0
  %v1780 = vadd.f32 0.0, %v1779
  %v1781 = vpop.f32.mrb[0].mxu0
  %1782 = vmatprep.mubr.f32.mxu0 0.0
  %1783 = vmatmul.mubr.f32.gmra.mrb[0].mxu0 %v1630
  %v1784 = vpop.f32.mrb[0].mxu0
  %v1785 = vadd.f32 0.0, %v1784
  %v1786 = vpop.f32.mrb[0].mxu0
  %1787 = vmatprep.mubr.f32.mxu0 0.0
  %1788 = vmatmul.mubr.f32.gmra.mrb[0].mxu0 %v1631
  %v1789 = vpop.f32.mrb[0].mxu0
  %v1790 = vadd.f32 0.0, %v1789
  %v1791 = vpop.f32.mrb[0].mxu0
  %1792 = vmatprep.mubr.f32.mxu0 0.0
  %1793 = vmatmul.mubr.f32.gmra.mrb[0].mxu0 %v1632
  %v1794 = vpop.f32.mrb[0].mxu0
  %v1795 = vadd.f32 0.0, %v1794
  %v1796 = vpop.f32.mrb[0].mxu0
  %1797 = vmatprep.mubr.f32.mxu0 0.0
  %1798 = vmatmul.mubr.f32.gmra.mrb[0].mxu0 %v1633
  %v1799 = vpop.f32.mrb[0].mxu0
  %v1800 = vadd.f32 0.0, %v1799
  %v1801 = vpop.f32.mrb[0].mxu0
  %1802 = vmatprep.mubr.f32.mxu0 0.0
  %1803 = vmatmul.mubr.f32.gmra.mrb[0].mxu0 %v1634
  %v1804 = vpop.f32.mrb[0].mxu0
  %v1805 = vadd.f32 0.0, %v1804
  %v1806 = vpop.f32.mrb[0].mxu0
  %1807 = vmatprep.mubr.f32.mxu0 0.0
  %1808 = vmatmul.mubr.f32.gmra.mrb[0].mxu0 %v1635
  %v1809 = vpop.f32.mrb[0].mxu0
  %v1810 = vadd.f32 0.0, %v1809
  %v1811 = vpop.f32.mrb[0].mxu0
  %1812 = vmatprep.mubr.f32.mxu0 0.0
  %1813 = vmatmul.mubr.f32.gmra.mrb[0].mxu0 %v1636
  %v1814 = vpop.f32.mrb[0].mxu0
  %v1815 = vadd.f32 0.0, %v1814
  %v1816 = vpop.f32.mrb[0].mxu0
  %1817 = vmatprep.mubr.f32.mxu0 0.0
  %1818 = vmatmul.mubr.f32.gmra.mrb[0].mxu0 %v1637
  %v1819 = vpop.f32.mrb[0].mxu0
  %v1820 = vadd.f32 0.0, %v1819
  %v1821 = vpop.f32.mrb[0].mxu0
  %1822 = vmatprep.mubr.f32.mxu0 0.0
  %1823 = vmatmul.mubr.f32.gmra.mrb[0].mxu0 %v1638
  %v1824 = vpop.f32.mrb[0].mxu0
  %v1825 = vadd.f32 0.0, %v1824
  %v1826 = vpop.f32.mrb[0].mxu0
  %1827 = vmatprep.mubr.f32.mxu0 0.0
  %1828 = vmatmul.mubr.f32.gmra.mrb[0].mxu0 %v1639
  %v1829 = vpop.f32.mrb[0].mxu0
  %v1830 = vadd.f32 0.0, %v1829
  %v1831 = vpop.f32.mrb[0].mxu0
  %1832 = vmatprep.mubr.f32.mxu0 0.0
  %1833 = vmatmul.mubr.f32.gmra.mrb[0].mxu0 %v1640
  %v1834 = vpop.f32.mrb[0].mxu0
  %v1835 = vadd.f32 0.0, %v1834
  %v1836 = vpop.f32.mrb[0].mxu0
  %1837 = vmatprep.mubr.f32.mxu0 0.0
  %1838 = vmatmul.mubr.f32.gmra.mrb[0].mxu0 %v1641
  %v1839 = vpop.f32.mrb[0].mxu0
  %v1840 = vadd.f32 0.0, %v1839
  %v1841 = vpop.f32.mrb[0].mxu0
  %1842 = vmatprep.mubr.f32.mxu0 0.0
  %1843 = vmatmul.mubr.f32.gmra.mrb[0].mxu0 %v1642
  %v1844 = vpop.f32.mrb[0].mxu0
  %v1845 = vadd.f32 0.0, %v1844
  %v1846 = vpop.f32.mrb[0].mxu0
  %1847 = vmatprep.mubr.f32.mxu0 0.0
  %1848 = vmatmul.mubr.f32.gmra.mrb[0].mxu0 %v1643
  %v1849 = vpop.f32.mrb[0].mxu0
  %v1850 = vadd.f32 0.0, %v1849
  %v1851 = vpop.f32.mrb[0].mxu0
  %1852 = vmatprep.mubr.f32.mxu0 0.0
  %1853 = vmatmul.mubr.f32.gmra.mrb[0].mxu0 %v1644
  %v1854 = vpop.f32.mrb[0].mxu0
  %v1855 = vadd.f32 0.0, %v1854
  %v1856 = vpop.f32.mrb[0].mxu0
  %1857 = vmatprep.mubr.f32.mxu0 0.0
  %1858 = vmatmul.mubr.f32.gmra.mrb[0].mxu0 %v1645
  %v1859 = vpop.f32.mrb[0].mxu0
  %v1860 = vadd.f32 0.0, %v1859
  %v1861 = vpop.f32.mrb[0].mxu0
  %1862 = vmatprep.mubr.f32.mxu0 0.0
  %1863 = vmatmul.mubr.f32.gmra.mrb[0].mxu0 %v1646
  %v1864 = vpop.f32.mrb[0].mxu0
  %v1865 = vadd.f32 0.0, %v1864
  %v1866 = vpop.f32.mrb[0].mxu0
  %1867 = vmatprep.mubr.f32.mxu0 0.0
  %1868 = vmatmul.mubr.f32.gmra.mrb[0].mxu0 %v1647
  %v1869 = vpop.f32.mrb[0].mxu0
  %v1870 = vadd.f32 0.0, %v1869
  %v1871 = vpop.f32.mrb[0].mxu0
  %1872 = vdwg.mxu0
  %v1873 = vadd.f32 %v1715, %v1720
  %v1874 = vadd.f32 %v1873, %v1725
  %v1875 = vadd.f32 %v1874, %v1730
  %v1876 = vadd.f32 %v1875, %v1735
  %v1877 = vadd.f32 %v1876, %v1740
  %v1878 = vadd.f32 %v1877, %v1745
  %v1879 = vadd.f32 %v1878, %v1750
  %v1880 = vadd.f32 %v1879, %v1755
  %v1881 = vadd.f32 %v1880, %v1760
  %v1882 = vadd.f32 %v1881, %v1765
  %v1883 = vadd.f32 %v1882, %v1770
  %v1884 = vadd.f32 %v1883, %v1775
  %v1885 = vadd.f32 %v1884, %v1780
  %v1886 = vadd.f32 %v1885, %v1785
  %v1887 = vadd.f32 %v1886, %v1790
  %v1888 = vadd.f32 %v1887, %v1795
  %v1889 = vadd.f32 %v1888, %v1800
  %v1890 = vadd.f32 %v1889, %v1805
  %v1891 = vadd.f32 %v1890, %v1810
  %v1892 = vadd.f32 %v1891, %v1815
  %v1893 = vadd.f32 %v1892, %v1820
  %v1894 = vadd.f32 %v1893, %v1825
  %v1895 = vadd.f32 %v1894, %v1830
  %v1896 = vadd.f32 %v1895, %v1835
  %v1897 = vadd.f32 %v1896, %v1840
  %v1898 = vadd.f32 %v1897, %v1845
  %v1899 = vadd.f32 %v1898, %v1850
  %v1900 = vadd.f32 %v1899, %v1855
  %v1901 = vadd.f32 %v1900, %v1860
  %v1902 = vadd.f32 %v1901, %v1865
  %v1903 = vadd.f32 %v1902, %v1870
  %v1904 = vrot.slane %v1903, 4
  %v1905 = vadd.f32 %v1903, %v1904
  %v1906 = vrot.slane %v1905, 2
  %v1907 = vadd.f32 %v1905, %v1906
  %v1908 = vrot.slane %v1907, 1
  %v1909 = vadd.f32 %v1907, %v1908
  %v1910 = vmul.f32 %v1909, 0.00012207031
  %v1911 = vmul.f32 %v1615, %v1615
  %v1912 = vsub.f32 %v1910, %v1911
  %v1913 = vadd.f32 %v1912, 1e-05
  %v1914 = vrsqrt.pop %v1913
  %v1915 = vld [vmem:[%s3] sm:$0x1]
  %v1916 = vmul.f32 %v1915, %v1914
  %v1917 = vld [vmem:[%s4] sm:$0x1]
  %v1918 = vmul.f32 %v1615, %v1916
  %v1919 = vsub.f32 %v1917, %v1918
  %v1921 = vlaneseq
  %v1922 = vshrl.u32 %v1921, 7
  %v1923 = vsub.s32 0, %v1922
  %v1924 = vrot.slane %v1916, %v1923
  %v1926 = vmul.f32 %v1211, %v1924
  %v1927 = vmul.f32 %v1214, %v1924
  %v1928 = vmul.f32 %v1219, %v1924
  %v1929 = vmul.f32 %v1222, %v1924
  %v1930 = vmul.f32 %v1227, %v1924
  %v1931 = vmul.f32 %v1230, %v1924
  %v1932 = vmul.f32 %v1235, %v1924
  %v1933 = vmul.f32 %v1238, %v1924
  %v1934 = vmul.f32 %v1243, %v1924
  %v1935 = vmul.f32 %v1246, %v1924
  %v1936 = vmul.f32 %v1251, %v1924
  %v1937 = vmul.f32 %v1254, %v1924
  %v1938 = vmul.f32 %v1259, %v1924
  %v1939 = vmul.f32 %v1262, %v1924
  %v1940 = vmul.f32 %v1267, %v1924
  %v1941 = vmul.f32 %v1270, %v1924
  %v1942 = vmul.f32 %v1275, %v1924
  %v1943 = vmul.f32 %v1278, %v1924
  %v1944 = vmul.f32 %v1283, %v1924
  %v1945 = vmul.f32 %v1286, %v1924
  %v1946 = vmul.f32 %v1291, %v1924
  %v1947 = vmul.f32 %v1294, %v1924
  %v1948 = vmul.f32 %v1299, %v1924
  %v1949 = vmul.f32 %v1302, %v1924
  %v1950 = vmul.f32 %v1307, %v1924
  %v1951 = vmul.f32 %v1310, %v1924
  %v1952 = vmul.f32 %v1315, %v1924
  %v1953 = vmul.f32 %v1318, %v1924
  %v1954 = vmul.f32 %v1323, %v1924
  %v1955 = vmul.f32 %v1326, %v1924
  %v1956 = vmul.f32 %v1331, %v1924
  %v1957 = vmul.f32 %v1334, %v1924
  %v1959 = vlaneseq
  %v1960 = vshrl.u32 %v1959, 7
  %v1961 = vsub.s32 0, %v1960
  %v1962 = vrot.slane %v1919, %v1961
  %v1964 = vadd.f32 %v1926, %v1962
  %v1965 = vadd.f32 %v1927, %v1962
  %v1966 = vadd.f32 %v1928, %v1962
  %v1967 = vadd.f32 %v1929, %v1962
  %v1968 = vadd.f32 %v1930, %v1962
  %v1969 = vadd.f32 %v1931, %v1962
  %v1970 = vadd.f32 %v1932, %v1962
  %v1971 = vadd.f32 %v1933, %v1962
  %v1972 = vadd.f32 %v1934, %v1962
  %v1973 = vadd.f32 %v1935, %v1962
  %v1974 = vadd.f32 %v1936, %v1962
  %v1975 = vadd.f32 %v1937, %v1962
  %v1976 = vadd.f32 %v1938, %v1962
  %v1977 = vadd.f32 %v1939, %v1962
  %v1978 = vadd.f32 %v1940, %v1962
  %v1979 = vadd.f32 %v1941, %v1962
  %v1980 = vadd.f32 %v1942, %v1962
  %v1981 = vadd.f32 %v1943, %v1962
  %v1982 = vadd.f32 %v1944, %v1962
  %v1983 = vadd.f32 %v1945, %v1962
  %v1984 = vadd.f32 %v1946, %v1962
  %v1985 = vadd.f32 %v1947, %v1962
  %v1986 = vadd.f32 %v1948, %v1962
  %v1987 = vadd.f32 %v1949, %v1962
  %v1988 = vadd.f32 %v1950, %v1962
  %v1989 = vadd.f32 %v1951, %v1962
  %v1990 = vadd.f32 %v1952, %v1962
  %v1991 = vadd.f32 %v1953, %v1962
  %v1992 = vadd.f32 %v1954, %v1962
  %v1993 = vadd.f32 %v1955, %v1962
  %v1994 = vadd.f32 %v1956, %v1962
  %v1995 = vadd.f32 %v1957, %v1962
  %v1996 = vmax.f32 %v1964, 0.0
  %v1997 = vmax.f32 %v1965, 0.0
  %v1998 = vmax.f32 %v1966, 0.0
  %v1999 = vmax.f32 %v1967, 0.0
  %v2000 = vmax.f32 %v1968, 0.0
  %v2001 = vmax.f32 %v1969, 0.0
  %v2002 = vmax.f32 %v1970, 0.0
  %v2003 = vmax.f32 %v1971, 0.0
  %v2004 = vmax.f32 %v1972, 0.0
  %v2005 = vmax.f32 %v1973, 0.0
  %v2006 = vmax.f32 %v1974, 0.0
  %v2007 = vmax.f32 %v1975, 0.0
  %v2008 = vmax.f32 %v1976, 0.0
  %v2009 = vmax.f32 %v1977, 0.0
  %v2010 = vmax.f32 %v1978, 0.0
  %v2011 = vmax.f32 %v1979, 0.0
  %v2012 = vmax.f32 %v1980, 0.0
  %v2013 = vmax.f32 %v1981, 0.0
  %v2014 = vmax.f32 %v1982, 0.0
  %v2015 = vmax.f32 %v1983, 0.0
  %v2016 = vmax.f32 %v1984, 0.0
  %v2017 = vmax.f32 %v1985, 0.0
  %v2018 = vmax.f32 %v1986, 0.0
  %v2019 = vmax.f32 %v1987, 0.0
  %v2020 = vmax.f32 %v1988, 0.0
  %v2021 = vmax.f32 %v1989, 0.0
  %v2022 = vmax.f32 %v1990, 0.0
  %v2023 = vmax.f32 %v1991, 0.0
  %v2024 = vmax.f32 %v1992, 0.0
  %v2025 = vmax.f32 %v1993, 0.0
  %v2026 = vmax.f32 %v1994, 0.0
  %v2027 = vmax.f32 %v1995, 0.0
  %v2028 = vpack.c.bf16 %v1997, %v1996
  %v2029 = vpack.c.bf16 %v1999, %v1998
  %v2030 = vpack.c.bf16 %v2001, %v2000
  %v2031 = vpack.c.bf16 %v2003, %v2002
  %v2032 = vpack.c.bf16 %v2005, %v2004
  %v2033 = vpack.c.bf16 %v2007, %v2006
  %v2034 = vpack.c.bf16 %v2009, %v2008
  %v2035 = vpack.c.bf16 %v2011, %v2010
  %v2036 = vpack.c.bf16 %v2013, %v2012
  %v2037 = vpack.c.bf16 %v2015, %v2014
  %v2038 = vpack.c.bf16 %v2017, %v2016
  %v2039 = vpack.c.bf16 %v2019, %v2018
  %v2040 = vpack.c.bf16 %v2021, %v2020
  %v2041 = vpack.c.bf16 %v2023, %v2022
  %v2042 = vpack.c.bf16 %v2025, %v2024
  %v2043 = vpack.c.bf16 %v2027, %v2026
  %v2060 = vunpack.c.l.b16 %v2028
  %v2061 = vunpack.c.h.b16 %v2028
  %v2062 = vunpack.c.l.b16 %v2029
  %v2063 = vunpack.c.h.b16 %v2029
  %v2064 = vunpack.c.l.b16 %v2030
  %v2065 = vunpack.c.h.b16 %v2030
  %v2066 = vunpack.c.l.b16 %v2031
  %v2067 = vunpack.c.h.b16 %v2031
  %v2068 = vunpack.c.l.b16 %v2032
  %v2069 = vunpack.c.h.b16 %v2032
  %v2070 = vunpack.c.l.b16 %v2033
  %v2071 = vunpack.c.h.b16 %v2033
  %v2072 = vunpack.c.l.b16 %v2034
  %v2073 = vunpack.c.h.b16 %v2034
  %v2074 = vunpack.c.l.b16 %v2035
  %v2075 = vunpack.c.h.b16 %v2035
  %v2076 = vunpack.c.l.b16 %v2036
  %v2077 = vunpack.c.h.b16 %v2036
  %v2078 = vunpack.c.l.b16 %v2037
  %v2079 = vunpack.c.h.b16 %v2037
  %v2080 = vunpack.c.l.b16 %v2038
  %v2081 = vunpack.c.h.b16 %v2038
  %v2082 = vunpack.c.l.b16 %v2039
  %v2083 = vunpack.c.h.b16 %v2039
  %v2084 = vunpack.c.l.b16 %v2040
  %v2085 = vunpack.c.h.b16 %v2040
  %v2086 = vunpack.c.l.b16 %v2041
  %v2087 = vunpack.c.h.b16 %v2041
  %v2088 = vunpack.c.l.b16 %v2042
  %v2089 = vunpack.c.h.b16 %v2042
  %v2090 = vunpack.c.l.b16 %v2043
  %v2091 = vunpack.c.h.b16 %v2043
  %v2092 = vpack.c.b16 %v2060, %v2060
  %v2093 = vpack.c.b16 %v2061, %v2061
  %v2094 = vpack.c.b16 %v2062, %v2062
  %v2095 = vpack.c.b16 %v2063, %v2063
  %v2096 = vpack.c.b16 %v2064, %v2064
  %v2097 = vpack.c.b16 %v2065, %v2065
  %v2098 = vpack.c.b16 %v2066, %v2066
  %v2099 = vpack.c.b16 %v2067, %v2067
  %v2100 = vpack.c.b16 %v2068, %v2068
  %v2101 = vpack.c.b16 %v2069, %v2069
  %v2102 = vpack.c.b16 %v2070, %v2070
  %v2103 = vpack.c.b16 %v2071, %v2071
  %v2104 = vpack.c.b16 %v2072, %v2072
  %v2105 = vpack.c.b16 %v2073, %v2073
  %v2106 = vpack.c.b16 %v2074, %v2074
  %v2107 = vpack.c.b16 %v2075, %v2075
  %v2108 = vpack.c.b16 %v2076, %v2076
  %v2109 = vpack.c.b16 %v2077, %v2077
  %v2110 = vpack.c.b16 %v2078, %v2078
  %v2111 = vpack.c.b16 %v2079, %v2079
  %v2112 = vpack.c.b16 %v2080, %v2080
  %v2113 = vpack.c.b16 %v2081, %v2081
  %v2114 = vpack.c.b16 %v2082, %v2082
  %v2115 = vpack.c.b16 %v2083, %v2083
  %v2116 = vpack.c.b16 %v2084, %v2084
  %v2117 = vpack.c.b16 %v2085, %v2085
  %v2118 = vpack.c.b16 %v2086, %v2086
  %v2119 = vpack.c.b16 %v2087, %v2087
  %v2120 = vpack.c.b16 %v2088, %v2088
  %v2121 = vpack.c.b16 %v2089, %v2089
  %v2122 = vpack.c.b16 %v2090, %v2090
  %v2123 = vpack.c.b16 %v2091, %v2091
  %2156 = vst [vmem:[%s5] sm:$0xf] %v2092
  %2157 = vst [vmem:[%s5 + $0x4] sm:$0xf] %v2093
  %2158 = vst [vmem:[%s5 + $0x8] sm:$0xf] %v2094
  %2159 = vst [vmem:[%s5 + $0xc] sm:$0xf] %v2095
  %2160 = vst [vmem:[%s5 + $0x10] sm:$0xf] %v2096
  %2161 = vst [vmem:[%s5 + $0x14] sm:$0xf] %v2097
  %2162 = vst [vmem:[%s5 + $0x18] sm:$0xf] %v2098
  %2163 = vst [vmem:[%s5 + $0x1c] sm:$0xf] %v2099
  %2164 = vst [vmem:[%s5 + $0x20] sm:$0xf] %v2100
  %2165 = vst [vmem:[%s5 + $0x24] sm:$0xf] %v2101
  %2166 = vst [vmem:[%s5 + $0x28] sm:$0xf] %v2102
  %2167 = vst [vmem:[%s5 + $0x2c] sm:$0xf] %v2103
  %2168 = vst [vmem:[%s5 + $0x30] sm:$0xf] %v2104
  %2169 = vst [vmem:[%s5 + $0x34] sm:$0xf] %v2105
  %2170 = vst [vmem:[%s5 + $0x38] sm:$0xf] %v2106
  %2171 = vst [vmem:[%s5 + $0x3c] sm:$0xf] %v2107
  %2172 = vst [vmem:[%s5 + $0x40] sm:$0xf] %v2108
  %2173 = vst [vmem:[%s5 + $0x44] sm:$0xf] %v2109
  %2174 = vst [vmem:[%s5 + $0x48] sm:$0xf] %v2110
  %2175 = vst [vmem:[%s5 + $0x4c] sm:$0xf] %v2111
  %2176 = vst [vmem:[%s5 + $0x50] sm:$0xf] %v2112
  %2177 = vst [vmem:[%s5 + $0x54] sm:$0xf] %v2113
  %2178 = vst [vmem:[%s5 + $0x58] sm:$0xf] %v2114
  %2179 = vst [vmem:[%s5 + $0x5c] sm:$0xf] %v2115
  %2180 = vst [vmem:[%s5 + $0x60] sm:$0xf] %v2116
  %2181 = vst [vmem:[%s5 + $0x64] sm:$0xf] %v2117
  %2182 = vst [vmem:[%s5 + $0x68] sm:$0xf] %v2118
  %2183 = vst [vmem:[%s5 + $0x6c] sm:$0xf] %v2119
  %2184 = vst [vmem:[%s5 + $0x70] sm:$0xf] %v2120
  %2185 = vst [vmem:[%s5 + $0x74] sm:$0xf] %v2121
  %2186 = vst [vmem:[%s5 + $0x78] sm:$0xf] %v2122
  %2187 = vst [vmem:[%s5 + $0x7c] sm:$0xf] %v2123
  // Predicated region
  $region22: #{pallas_decoder_forward.13} parent=0 // pred_check
    _
  $region23: #{pallas_decoder_forward.13} parent=0 // pred_check_branch
    %2189 = sbr.rel (0) target = $region25
  $region24: #{pallas_decoder_forward.13} parent=0 // pred_region
    _
  $region25: #{pallas_decoder_forward.13} parent=0 // pred_fallthru
    _
  // Predicated region
  $region26: #{pallas_decoder_forward.13} parent=0 // pred_check
    _
  $region27: #{pallas_decoder_forward.13} parent=0 // pred_check_branch
    %2191 = sbr.rel (0) target = $region29
  $region28: #{pallas_decoder_forward.13} parent=0 // pred_region
    _
  $region29: #{pallas_decoder_forward.13} parent=0 // pred_fallthru
    _

// kernel: pallas_decoder_forward.14
$region0: #{pallas_decoder_forward.14}
  #allocation0 [shape = 'u32[]', space=smem, size = 0x4, offset = 0x4, fixed_abs, tag = 'smem constant byte address 0x4 - core index']
  #allocation1 [shape = 'u32[144,128]{1,0:T(1,128)}', space=vmem, size = 0x12000, scoped, tag = 'internal scratch']
  %s0 = inlined_call_operand.vmem [shape: bf16[512,576], index: 0, kind: input, shape index: {}]
  %s1 = inlined_call_operand.vmem [shape: bf16[576,128], index: 1, kind: input, shape index: {}]
  %s2 = inlined_call_operand.vmem [shape: f32[128,128], index: 2, kind: input, shape index: {}]
  %s3 = inlined_call_operand.vmem [shape: f32[1,128], index: 3, kind: input, shape index: {}]
  %s4 = inlined_call_operand.vmem [shape: f32[1,128], index: 4, kind: input, shape index: {}]
  %s5 = inlined_call_operand.vmem [shape: bf16[512,128], index: 5, kind: output, shape index: {}]
  %s6 = sld [smem:[#allocation0]]
  $region30: #{pallas_decoder_forward.14} parent=0
    _
  %s8 = ssub.s32 1, %s6
  %s9 = scalar_select 0, %s8, %s6
  // Predicated region
  $region2: #{pallas_decoder_forward.14} parent=0 // pred_check
    _
  $region3: #{pallas_decoder_forward.14} parent=0 // pred_check_branch
    %11 = sbr.rel (0) target = $region5
  $region4: #{pallas_decoder_forward.14} parent=0 // pred_region
    _
  $region5: #{pallas_decoder_forward.14} parent=0 // pred_fallthru
    _
  // Predicated region
  $region6: #{pallas_decoder_forward.14} parent=0 // pred_check
    _
  $region7: #{pallas_decoder_forward.14} parent=0 // pred_check_branch
    %13 = sbr.rel (0) target = $region9
  $region8: #{pallas_decoder_forward.14} parent=0 // pred_region
    _
  $region9: #{pallas_decoder_forward.14} parent=0 // pred_fallthru
    _
  // Predicated region
  $region10: #{pallas_decoder_forward.14} parent=0 // pred_check
    _
  $region11: #{pallas_decoder_forward.14} parent=0 // pred_check_branch
    %15 = sbr.rel (0) target = $region13
  $region12: #{pallas_decoder_forward.14} parent=0 // pred_region
    _
  $region13: #{pallas_decoder_forward.14} parent=0 // pred_fallthru
    _
  // Predicated region
  $region14: #{pallas_decoder_forward.14} parent=0 // pred_check
    _
  $region15: #{pallas_decoder_forward.14} parent=0 // pred_check_branch
    %17 = sbr.rel (0) target = $region17
  $region16: #{pallas_decoder_forward.14} parent=0 // pred_region
    _
  $region17: #{pallas_decoder_forward.14} parent=0 // pred_fallthru
    _
  // Predicated region
  $region18: #{pallas_decoder_forward.14} parent=0 // pred_check
    _
  $region19: #{pallas_decoder_forward.14} parent=0 // pred_check_branch
    %19 = sbr.rel (0) target = $region21
  $region20: #{pallas_decoder_forward.14} parent=0 // pred_region
    _
  $region21: #{pallas_decoder_forward.14} parent=0 // pred_fallthru
    _
  %v21 = vld [vmem:[%s0] sm:$0xff]
  %v22 = vld [vmem:[%s0 + $0x8] sm:$0xff]
  %v23 = vld [vmem:[%s0 + $0x10] sm:$0xf]
  %v24 = vld [vmem:[%s0 + $0x14] sm:$0xff]
  %v25 = vld [vmem:[%s0 + $0x1c] sm:$0xff]
  %v26 = vld [vmem:[%s0 + $0x24] sm:$0xf]
  %v27 = vld [vmem:[%s0 + $0x28] sm:$0xff]
  %v28 = vld [vmem:[%s0 + $0x30] sm:$0xff]
  %v29 = vld [vmem:[%s0 + $0x38] sm:$0xf]
  %v30 = vld [vmem:[%s0 + $0x3c] sm:$0xff]
  %v31 = vld [vmem:[%s0 + $0x44] sm:$0xff]
  %v32 = vld [vmem:[%s0 + $0x4c] sm:$0xf]
  %v33 = vld [vmem:[%s0 + $0x50] sm:$0xff]
  %v34 = vld [vmem:[%s0 + $0x58] sm:$0xff]
  %v35 = vld [vmem:[%s0 + $0x60] sm:$0xf]
  %v36 = vld [vmem:[%s0 + $0x64] sm:$0xff]
  %v37 = vld [vmem:[%s0 + $0x6c] sm:$0xff]
  %v38 = vld [vmem:[%s0 + $0x74] sm:$0xf]
  %v39 = vld [vmem:[%s0 + $0x78] sm:$0xff]
  %v40 = vld [vmem:[%s0 + $0x80] sm:$0xff]
  %v41 = vld [vmem:[%s0 + $0x88] sm:$0xf]
  %v42 = vld [vmem:[%s0 + $0x8c] sm:$0xff]
  %v43 = vld [vmem:[%s0 + $0x94] sm:$0xff]
  %v44 = vld [vmem:[%s0 + $0x9c] sm:$0xf]
  %v45 = vld [vmem:[%s0 + $0xa0] sm:$0xff]
  %v46 = vld [vmem:[%s0 + $0xa8] sm:$0xff]
  %v47 = vld [vmem:[%s0 + $0xb0] sm:$0xf]
  %v48 = vld [vmem:[%s0 + $0xb4] sm:$0xff]
  %v49 = vld [vmem:[%s0 + $0xbc] sm:$0xff]
  %v50 = vld [vmem:[%s0 + $0xc4] sm:$0xf]
  %v51 = vld [vmem:[%s0 + $0xc8] sm:$0xff]
  %v52 = vld [vmem:[%s0 + $0xd0] sm:$0xff]
  %v53 = vld [vmem:[%s0 + $0xd8] sm:$0xf]
  %v54 = vld [vmem:[%s0 + $0xdc] sm:$0xff]
  %v55 = vld [vmem:[%s0 + $0xe4] sm:$0xff]
  %v56 = vld [vmem:[%s0 + $0xec] sm:$0xf]
  %v57 = vld [vmem:[%s0 + $0xf0] sm:$0xff]
  %v58 = vld [vmem:[%s0 + $0xf8] sm:$0xff]
  %v59 = vld [vmem:[%s0 + $0x100] sm:$0xf]
  %v60 = vld [vmem:[%s0 + $0x104] sm:$0xff]
  %v61 = vld [vmem:[%s0 + $0x10c] sm:$0xff]
  %v62 = vld [vmem:[%s0 + $0x114] sm:$0xf]
  %v63 = vld [vmem:[%s0 + $0x118] sm:$0xff]
  %v64 = vld [vmem:[%s0 + $0x120] sm:$0xff]
  %v65 = vld [vmem:[%s0 + $0x128] sm:$0xf]
  %v66 = vld [vmem:[%s0 + $0x12c] sm:$0xff]
  %v67 = vld [vmem:[%s0 + $0x134] sm:$0xff]
  %v68 = vld [vmem:[%s0 + $0x13c] sm:$0xf]
  %v69 = vld [vmem:[%s0 + $0x140] sm:$0xff]
  %v70 = vld [vmem:[%s0 + $0x148] sm:$0xff]
  %v71 = vld [vmem:[%s0 + $0x150] sm:$0xf]
  %v72 = vld [vmem:[%s0 + $0x154] sm:$0xff]
  %v73 = vld [vmem:[%s0 + $0x15c] sm:$0xff]
  %v74 = vld [vmem:[%s0 + $0x164] sm:$0xf]
  %v75 = vld [vmem:[%s0 + $0x168] sm:$0xff]
  %v76 = vld [vmem:[%s0 + $0x170] sm:$0xff]
  %v77 = vld [vmem:[%s0 + $0x178] sm:$0xf]
  %v78 = vld [vmem:[%s0 + $0x17c] sm:$0xff]
  %v79 = vld [vmem:[%s0 + $0x184] sm:$0xff]
  %v80 = vld [vmem:[%s0 + $0x18c] sm:$0xf]
  %v81 = vld [vmem:[%s0 + $0x190] sm:$0xff]
  %v82 = vld [vmem:[%s0 + $0x198] sm:$0xff]
  %v83 = vld [vmem:[%s0 + $0x1a0] sm:$0xf]
  %v84 = vld [vmem:[%s0 + $0x1a4] sm:$0xff]
  %v85 = vld [vmem:[%s0 + $0x1ac] sm:$0xff]
  %v86 = vld [vmem:[%s0 + $0x1b4] sm:$0xf]
  %v87 = vld [vmem:[%s0 + $0x1b8] sm:$0xff]
  %v88 = vld [vmem:[%s0 + $0x1c0] sm:$0xff]
  %v89 = vld [vmem:[%s0 + $0x1c8] sm:$0xf]
  %v90 = vld [vmem:[%s0 + $0x1cc] sm:$0xff]
  %v91 = vld [vmem:[%s0 + $0x1d4] sm:$0xff]
  %v92 = vld [vmem:[%s0 + $0x1dc] sm:$0xf]
  %v93 = vld [vmem:[%s0 + $0x1e0] sm:$0xff]
  %v94 = vld [vmem:[%s0 + $0x1e8] sm:$0xff]
  %v95 = vld [vmem:[%s0 + $0x1f0] sm:$0xf]
  %v96 = vld [vmem:[%s0 + $0x1f4] sm:$0xff]
  %v97 = vld [vmem:[%s0 + $0x1fc] sm:$0xff]
  %v98 = vld [vmem:[%s0 + $0x204] sm:$0xf]
  %v99 = vld [vmem:[%s0 + $0x208] sm:$0xff]
  %v100 = vld [vmem:[%s0 + $0x210] sm:$0xff]
  %v101 = vld [vmem:[%s0 + $0x218] sm:$0xf]
  %v102 = vld [vmem:[%s0 + $0x21c] sm:$0xff]
  %v103 = vld [vmem:[%s0 + $0x224] sm:$0xff]
  %v104 = vld [vmem:[%s0 + $0x22c] sm:$0xf]
  %v105 = vld [vmem:[%s0 + $0x230] sm:$0xff]
  %v106 = vld [vmem:[%s0 + $0x238] sm:$0xff]
  %v107 = vld [vmem:[%s0 + $0x240] sm:$0xf]
  %v108 = vld [vmem:[%s0 + $0x244] sm:$0xff]
  %v109 = vld [vmem:[%s0 + $0x24c] sm:$0xff]
  %v110 = vld [vmem:[%s0 + $0x254] sm:$0xf]
  %v111 = vld [vmem:[%s0 + $0x258] sm:$0xff]
  %v112 = vld [vmem:[%s0 + $0x260] sm:$0xff]
  %v113 = vld [vmem:[%s0 + $0x268] sm:$0xf]
  %v114 = vld [vmem:[%s0 + $0x26c] sm:$0xff]
  %v115 = vld [vmem:[%s0 + $0x274] sm:$0xff]
  %v116 = vld [vmem:[%s0 + $0x27c] sm:$0xf]
  %v117 = vld [vmem:[%s0 + $0x280] sm:$0xff]
  %v118 = vld [vmem:[%s0 + $0x288] sm:$0xff]
  %v119 = vld [vmem:[%s0 + $0x290] sm:$0xf]
  %v120 = vld [vmem:[%s0 + $0x294] sm:$0xff]
  %v121 = vld [vmem:[%s0 + $0x29c] sm:$0xff]
  %v122 = vld [vmem:[%s0 + $0x2a4] sm:$0xf]
  %v123 = vld [vmem:[%s0 + $0x2a8] sm:$0xff]
  %v124 = vld [vmem:[%s0 + $0x2b0] sm:$0xff]
  %v125 = vld [vmem:[%s0 + $0x2b8] sm:$0xf]
  %v126 = vld [vmem:[%s0 + $0x2bc] sm:$0xff]
  %v127 = vld [vmem:[%s0 + $0x2c4] sm:$0xff]
  %v128 = vld [vmem:[%s0 + $0x2cc] sm:$0xf]
  %v129 = vld [vmem:[%s0 + $0x2d0] sm:$0xff]
  %v130 = vld [vmem:[%s0 + $0x2d8] sm:$0xff]
  %v131 = vld [vmem:[%s0 + $0x2e0] sm:$0xf]
  %v132 = vld [vmem:[%s0 + $0x2e4] sm:$0xff]
  %v133 = vld [vmem:[%s0 + $0x2ec] sm:$0xff]
  %v134 = vld [vmem:[%s0 + $0x2f4] sm:$0xf]
  %v135 = vld [vmem:[%s0 + $0x2f8] sm:$0xff]
  %v136 = vld [vmem:[%s0 + $0x300] sm:$0xff]
  %v137 = vld [vmem:[%s0 + $0x308] sm:$0xf]
  %v138 = vld [vmem:[%s0 + $0x30c] sm:$0xff]
  %v139 = vld [vmem:[%s0 + $0x314] sm:$0xff]
  %v140 = vld [vmem:[%s0 + $0x31c] sm:$0xf]
  %v141 = vld [vmem:[%s0 + $0x320] sm:$0xff]
  %v142 = vld [vmem:[%s0 + $0x328] sm:$0xff]
  %v143 = vld [vmem:[%s0 + $0x330] sm:$0xf]
  %v144 = vld [vmem:[%s0 + $0x334] sm:$0xff]
  %v145 = vld [vmem:[%s0 + $0x33c] sm:$0xff]
  %v146 = vld [vmem:[%s0 + $0x344] sm:$0xf]
  %v147 = vld [vmem:[%s0 + $0x348] sm:$0xff]
  %v148 = vld [vmem:[%s0 + $0x350] sm:$0xff]
  %v149 = vld [vmem:[%s0 + $0x358] sm:$0xf]
  %v150 = vld [vmem:[%s0 + $0x35c] sm:$0xff]
  %v151 = vld [vmem:[%s0 + $0x364] sm:$0xff]
  %v152 = vld [vmem:[%s0 + $0x36c] sm:$0xf]
  %v153 = vld [vmem:[%s0 + $0x370] sm:$0xff]
  %v154 = vld [vmem:[%s0 + $0x378] sm:$0xff]
  %v155 = vld [vmem:[%s0 + $0x380] sm:$0xf]
  %v156 = vld [vmem:[%s0 + $0x384] sm:$0xff]
  %v157 = vld [vmem:[%s0 + $0x38c] sm:$0xff]
  %v158 = vld [vmem:[%s0 + $0x394] sm:$0xf]
  %v159 = vld [vmem:[%s0 + $0x398] sm:$0xff]
  %v160 = vld [vmem:[%s0 + $0x3a0] sm:$0xff]
  %v161 = vld [vmem:[%s0 + $0x3a8] sm:$0xf]
  %v162 = vld [vmem:[%s0 + $0x3ac] sm:$0xff]
  %v163 = vld [vmem:[%s0 + $0x3b4] sm:$0xff]
  %v164 = vld [vmem:[%s0 + $0x3bc] sm:$0xf]
  %v165 = vld [vmem:[%s0 + $0x3c0] sm:$0xff]
  %v166 = vld [vmem:[%s0 + $0x3c8] sm:$0xff]
  %v167 = vld [vmem:[%s0 + $0x3d0] sm:$0xf]
  %v168 = vld [vmem:[%s0 + $0x3d4] sm:$0xff]
  %v169 = vld [vmem:[%s0 + $0x3dc] sm:$0xff]
  %v170 = vld [vmem:[%s0 + $0x3e4] sm:$0xf]
  %v171 = vld [vmem:[%s0 + $0x3e8] sm:$0xff]
  %v172 = vld [vmem:[%s0 + $0x3f0] sm:$0xff]
  %v173 = vld [vmem:[%s0 + $0x3f8] sm:$0xf]
  %v174 = vld [vmem:[%s0 + $0x3fc] sm:$0xff]
  %v175 = vld [vmem:[%s0 + $0x404] sm:$0xff]
  %v176 = vld [vmem:[%s0 + $0x40c] sm:$0xf]
  %v177 = vld [vmem:[%s0 + $0x410] sm:$0xff]
  %v178 = vld [vmem:[%s0 + $0x418] sm:$0xff]
  %v179 = vld [vmem:[%s0 + $0x420] sm:$0xf]
  %v180 = vld [vmem:[%s0 + $0x424] sm:$0xff]
  %v181 = vld [vmem:[%s0 + $0x42c] sm:$0xff]
  %v182 = vld [vmem:[%s0 + $0x434] sm:$0xf]
  %v183 = vld [vmem:[%s0 + $0x438] sm:$0xff]
  %v184 = vld [vmem:[%s0 + $0x440] sm:$0xff]
  %v185 = vld [vmem:[%s0 + $0x448] sm:$0xf]
  %v186 = vld [vmem:[%s0 + $0x44c] sm:$0xff]
  %v187 = vld [vmem:[%s0 + $0x454] sm:$0xff]
  %v188 = vld [vmem:[%s0 + $0x45c] sm:$0xf]
  %v189 = vld [vmem:[%s0 + $0x460] sm:$0xff]
  %v190 = vld [vmem:[%s0 + $0x468] sm:$0xff]
  %v191 = vld [vmem:[%s0 + $0x470] sm:$0xf]
  %v192 = vld [vmem:[%s0 + $0x474] sm:$0xff]
  %v193 = vld [vmem:[%s0 + $0x47c] sm:$0xff]
  %v194 = vld [vmem:[%s0 + $0x484] sm:$0xf]
  %v195 = vld [vmem:[%s0 + $0x488] sm:$0xff]
  %v196 = vld [vmem:[%s0 + $0x490] sm:$0xff]
  %v197 = vld [vmem:[%s0 + $0x498] sm:$0xf]
  %v198 = vld [vmem:[%s0 + $0x49c] sm:$0xff]
  %v199 = vld [vmem:[%s0 + $0x4a4] sm:$0xff]
  %v200 = vld [vmem:[%s0 + $0x4ac] sm:$0xf]
  %v201 = vld [vmem:[%s0 + $0x4b0] sm:$0xff]
  %v202 = vld [vmem:[%s0 + $0x4b8] sm:$0xff]
  %v203 = vld [vmem:[%s0 + $0x4c0] sm:$0xf]
  %v204 = vld [vmem:[%s0 + $0x4c4] sm:$0xff]
  %v205 = vld [vmem:[%s0 + $0x4cc] sm:$0xff]
  %v206 = vld [vmem:[%s0 + $0x4d4] sm:$0xf]
  %v207 = vld [vmem:[%s0 + $0x4d8] sm:$0xff]
  %v208 = vld [vmem:[%s0 + $0x4e0] sm:$0xff]
  %v209 = vld [vmem:[%s0 + $0x4e8] sm:$0xf]
  %v210 = vld [vmem:[%s0 + $0x4ec] sm:$0xff]
  %v211 = vld [vmem:[%s0 + $0x4f4] sm:$0xff]
  %v212 = vld [vmem:[%s0 + $0x4fc] sm:$0xf]
  %v213 = vld [vmem:[%s1] sm:$0xf]
  %v214 = vld [vmem:[%s1 + $0x4] sm:$0xf]
  %v215 = vld [vmem:[%s1 + $0x8] sm:$0xf]
  %v216 = vld [vmem:[%s1 + $0xc] sm:$0xf]
  %v217 = vld [vmem:[%s1 + $0x10] sm:$0xf]
  %v218 = vld [vmem:[%s1 + $0x14] sm:$0xf]
  %v219 = vld [vmem:[%s1 + $0x18] sm:$0xf]
  %v220 = vld [vmem:[%s1 + $0x1c] sm:$0xf]
  %v221 = vld [vmem:[%s1 + $0x20] sm:$0xf]
  %v222 = vld [vmem:[%s1 + $0x24] sm:$0xf]
  %v223 = vld [vmem:[%s1 + $0x28] sm:$0xf]
  %v224 = vld [vmem:[%s1 + $0x2c] sm:$0xf]
  %v225 = vld [vmem:[%s1 + $0x30] sm:$0xf]
  %v226 = vld [vmem:[%s1 + $0x34] sm:$0xf]
  %v227 = vld [vmem:[%s1 + $0x38] sm:$0xf]
  %v228 = vld [vmem:[%s1 + $0x3c] sm:$0xf]
  %v229 = vld [vmem:[%s1 + $0x40] sm:$0xf]
  %v230 = vld [vmem:[%s1 + $0x44] sm:$0xf]
  %v231 = vld [vmem:[%s1 + $0x48] sm:$0xf]
  %v232 = vld [vmem:[%s1 + $0x4c] sm:$0xf]
  %v233 = vld [vmem:[%s1 + $0x50] sm:$0xf]
  %v234 = vld [vmem:[%s1 + $0x54] sm:$0xf]
  %v235 = vld [vmem:[%s1 + $0x58] sm:$0xf]
  %v236 = vld [vmem:[%s1 + $0x5c] sm:$0xf]
  %v237 = vld [vmem:[%s1 + $0x60] sm:$0xf]
  %v238 = vld [vmem:[%s1 + $0x64] sm:$0xf]
  %v239 = vld [vmem:[%s1 + $0x68] sm:$0xf]
  %v240 = vld [vmem:[%s1 + $0x6c] sm:$0xf]
  %v241 = vld [vmem:[%s1 + $0x70] sm:$0xf]
  %v242 = vld [vmem:[%s1 + $0x74] sm:$0xf]
  %v243 = vld [vmem:[%s1 + $0x78] sm:$0xf]
  %v244 = vld [vmem:[%s1 + $0x7c] sm:$0xf]
  %v245 = vld [vmem:[%s1 + $0x80] sm:$0xf]
  %v246 = vld [vmem:[%s1 + $0x84] sm:$0xf]
  %v247 = vld [vmem:[%s1 + $0x88] sm:$0xf]
  %v248 = vld [vmem:[%s1 + $0x8c] sm:$0xf]
  %v249 = vld [vmem:[%s1 + $0x90] sm:$0xf]
  %v250 = vld [vmem:[%s1 + $0x94] sm:$0xf]
  %v251 = vld [vmem:[%s1 + $0x98] sm:$0xf]
  %v252 = vld [vmem:[%s1 + $0x9c] sm:$0xf]
  %v253 = vld [vmem:[%s1 + $0xa0] sm:$0xf]
  %v254 = vld [vmem:[%s1 + $0xa4] sm:$0xf]
  %v255 = vld [vmem:[%s1 + $0xa8] sm:$0xf]
  %v256 = vld [vmem:[%s1 + $0xac] sm:$0xf]
  %v257 = vld [vmem:[%s1 + $0xb0] sm:$0xf]
  %v258 = vld [vmem:[%s1 + $0xb4] sm:$0xf]
  %v259 = vld [vmem:[%s1 + $0xb8] sm:$0xf]
  %v260 = vld [vmem:[%s1 + $0xbc] sm:$0xf]
  %v261 = vld [vmem:[%s1 + $0xc0] sm:$0xf]
  %v262 = vld [vmem:[%s1 + $0xc4] sm:$0xf]
  %v263 = vld [vmem:[%s1 + $0xc8] sm:$0xf]
  %v264 = vld [vmem:[%s1 + $0xcc] sm:$0xf]
  %v265 = vld [vmem:[%s1 + $0xd0] sm:$0xf]
  %v266 = vld [vmem:[%s1 + $0xd4] sm:$0xf]
  %v267 = vld [vmem:[%s1 + $0xd8] sm:$0xf]
  %v268 = vld [vmem:[%s1 + $0xdc] sm:$0xf]
  %v269 = vld [vmem:[%s1 + $0xe0] sm:$0xf]
  %v270 = vld [vmem:[%s1 + $0xe4] sm:$0xf]
  %v271 = vld [vmem:[%s1 + $0xe8] sm:$0xf]
  %v272 = vld [vmem:[%s1 + $0xec] sm:$0xf]
  %v273 = vld [vmem:[%s1 + $0xf0] sm:$0xf]
  %v274 = vld [vmem:[%s1 + $0xf4] sm:$0xf]
  %v275 = vld [vmem:[%s1 + $0xf8] sm:$0xf]
  %v276 = vld [vmem:[%s1 + $0xfc] sm:$0xf]
  %v277 = vld [vmem:[%s1 + $0x100] sm:$0xf]
  %v278 = vld [vmem:[%s1 + $0x104] sm:$0xf]
  %v279 = vld [vmem:[%s1 + $0x108] sm:$0xf]
  %v280 = vld [vmem:[%s1 + $0x10c] sm:$0xf]
  %v281 = vld [vmem:[%s1 + $0x110] sm:$0xf]
  %v282 = vld [vmem:[%s1 + $0x114] sm:$0xf]
  %v283 = vld [vmem:[%s1 + $0x118] sm:$0xf]
  %v284 = vld [vmem:[%s1 + $0x11c] sm:$0xf]
  %v477 = vunpack.c.l.b16 %v21
  %v478 = vunpack.c.h.b16 %v21
  %v479 = vunpack.c.l.b16 %v22
  %v480 = vunpack.c.h.b16 %v22
  %v481 = vunpack.c.l.b16 %v23
  %v482 = vunpack.c.l.b16 %v24
  %v483 = vunpack.c.h.b16 %v24
  %v484 = vunpack.c.l.b16 %v25
  %v485 = vunpack.c.h.b16 %v25
  %v486 = vunpack.c.l.b16 %v26
  %v487 = vunpack.c.l.b16 %v27
  %v488 = vunpack.c.h.b16 %v27
  %v489 = vunpack.c.l.b16 %v28
  %v490 = vunpack.c.h.b16 %v28
  %v491 = vunpack.c.l.b16 %v29
  %v492 = vunpack.c.l.b16 %v30
  %v493 = vunpack.c.h.b16 %v30
  %v494 = vunpack.c.l.b16 %v31
  %v495 = vunpack.c.h.b16 %v31
  %v496 = vunpack.c.l.b16 %v32
  %v497 = vunpack.c.l.b16 %v33
  %v498 = vunpack.c.h.b16 %v33
  %v499 = vunpack.c.l.b16 %v34
  %v500 = vunpack.c.h.b16 %v34
  %v501 = vunpack.c.l.b16 %v35
  %v502 = vunpack.c.l.b16 %v36
  %v503 = vunpack.c.h.b16 %v36
  %v504 = vunpack.c.l.b16 %v37
  %v505 = vunpack.c.h.b16 %v37
  %v506 = vunpack.c.l.b16 %v38
  %v507 = vunpack.c.l.b16 %v39
  %v508 = vunpack.c.h.b16 %v39
  %v509 = vunpack.c.l.b16 %v40
  %v510 = vunpack.c.h.b16 %v40
  %v511 = vunpack.c.l.b16 %v41
  %v512 = vunpack.c.l.b16 %v42
  %v513 = vunpack.c.h.b16 %v42
  %v514 = vunpack.c.l.b16 %v43
  %v515 = vunpack.c.h.b16 %v43
  %v516 = vunpack.c.l.b16 %v44
  %v517 = vunpack.c.l.b16 %v45
  %v518 = vunpack.c.h.b16 %v45
  %v519 = vunpack.c.l.b16 %v46
  %v520 = vunpack.c.h.b16 %v46
  %v521 = vunpack.c.l.b16 %v47
  %v522 = vunpack.c.l.b16 %v48
  %v523 = vunpack.c.h.b16 %v48
  %v524 = vunpack.c.l.b16 %v49
  %v525 = vunpack.c.h.b16 %v49
  %v526 = vunpack.c.l.b16 %v50
  %v527 = vunpack.c.l.b16 %v51
  %v528 = vunpack.c.h.b16 %v51
  %v529 = vunpack.c.l.b16 %v52
  %v530 = vunpack.c.h.b16 %v52
  %v531 = vunpack.c.l.b16 %v53
  %v532 = vunpack.c.l.b16 %v54
  %v533 = vunpack.c.h.b16 %v54
  %v534 = vunpack.c.l.b16 %v55
  %v535 = vunpack.c.h.b16 %v55
  %v536 = vunpack.c.l.b16 %v56
  %v537 = vunpack.c.l.b16 %v57
  %v538 = vunpack.c.h.b16 %v57
  %v539 = vunpack.c.l.b16 %v58
  %v540 = vunpack.c.h.b16 %v58
  %v541 = vunpack.c.l.b16 %v59
  %v542 = vunpack.c.l.b16 %v60
  %v543 = vunpack.c.h.b16 %v60
  %v544 = vunpack.c.l.b16 %v61
  %v545 = vunpack.c.h.b16 %v61
  %v546 = vunpack.c.l.b16 %v62
  %v547 = vunpack.c.l.b16 %v63
  %v548 = vunpack.c.h.b16 %v63
  %v549 = vunpack.c.l.b16 %v64
  %v550 = vunpack.c.h.b16 %v64
  %v551 = vunpack.c.l.b16 %v65
  %v552 = vunpack.c.l.b16 %v66
  %v553 = vunpack.c.h.b16 %v66
  %v554 = vunpack.c.l.b16 %v67
  %v555 = vunpack.c.h.b16 %v67
  %v556 = vunpack.c.l.b16 %v68
  %v557 = vunpack.c.l.b16 %v69
  %v558 = vunpack.c.h.b16 %v69
  %v559 = vunpack.c.l.b16 %v70
  %v560 = vunpack.c.h.b16 %v70
  %v561 = vunpack.c.l.b16 %v71
  %v562 = vunpack.c.l.b16 %v72
  %v563 = vunpack.c.h.b16 %v72
  %v564 = vunpack.c.l.b16 %v73
  %v565 = vunpack.c.h.b16 %v73
  %v566 = vunpack.c.l.b16 %v74
  %v567 = vunpack.c.l.b16 %v75
  %v568 = vunpack.c.h.b16 %v75
  %v569 = vunpack.c.l.b16 %v76
  %v570 = vunpack.c.h.b16 %v76
  %v571 = vunpack.c.l.b16 %v77
  %v572 = vunpack.c.l.b16 %v78
  %v573 = vunpack.c.h.b16 %v78
  %v574 = vunpack.c.l.b16 %v79
  %v575 = vunpack.c.h.b16 %v79
  %v576 = vunpack.c.l.b16 %v80
  %v577 = vunpack.c.l.b16 %v81
  %v578 = vunpack.c.h.b16 %v81
  %v579 = vunpack.c.l.b16 %v82
  %v580 = vunpack.c.h.b16 %v82
  %v581 = vunpack.c.l.b16 %v83
  %v582 = vunpack.c.l.b16 %v84
  %v583 = vunpack.c.h.b16 %v84
  %v584 = vunpack.c.l.b16 %v85
  %v585 = vunpack.c.h.b16 %v85
  %v586 = vunpack.c.l.b16 %v86
  %v587 = vunpack.c.l.b16 %v87
  %v588 = vunpack.c.h.b16 %v87
  %v589 = vunpack.c.l.b16 %v88
  %v590 = vunpack.c.h.b16 %v88
  %v591 = vunpack.c.l.b16 %v89
  %v592 = vunpack.c.l.b16 %v90
  %v593 = vunpack.c.h.b16 %v90
  %v594 = vunpack.c.l.b16 %v91
  %v595 = vunpack.c.h.b16 %v91
  %v596 = vunpack.c.l.b16 %v92
  %v597 = vunpack.c.l.b16 %v93
  %v598 = vunpack.c.h.b16 %v93
  %v599 = vunpack.c.l.b16 %v94
  %v600 = vunpack.c.h.b16 %v94
  %v601 = vunpack.c.l.b16 %v95
  %v602 = vunpack.c.l.b16 %v96
  %v603 = vunpack.c.h.b16 %v96
  %v604 = vunpack.c.l.b16 %v97
  %v605 = vunpack.c.h.b16 %v97
  %v606 = vunpack.c.l.b16 %v98
  %v607 = vunpack.c.l.b16 %v99
  %v608 = vunpack.c.h.b16 %v99
  %v609 = vunpack.c.l.b16 %v100
  %v610 = vunpack.c.h.b16 %v100
  %v611 = vunpack.c.l.b16 %v101
  %v612 = vunpack.c.l.b16 %v102
  %v613 = vunpack.c.h.b16 %v102
  %v614 = vunpack.c.l.b16 %v103
  %v615 = vunpack.c.h.b16 %v103
  %v616 = vunpack.c.l.b16 %v104
  %v617 = vunpack.c.l.b16 %v105
  %v618 = vunpack.c.h.b16 %v105
  %v619 = vunpack.c.l.b16 %v106
  %v620 = vunpack.c.h.b16 %v106
  %v621 = vunpack.c.l.b16 %v107
  %v622 = vunpack.c.l.b16 %v108
  %v623 = vunpack.c.h.b16 %v108
  %v624 = vunpack.c.l.b16 %v109
  %v625 = vunpack.c.h.b16 %v109
  %v626 = vunpack.c.l.b16 %v110
  %v627 = vunpack.c.l.b16 %v111
  %v628 = vunpack.c.h.b16 %v111
  %v629 = vunpack.c.l.b16 %v112
  %v630 = vunpack.c.h.b16 %v112
  %v631 = vunpack.c.l.b16 %v113
  %v632 = vunpack.c.l.b16 %v114
  %v633 = vunpack.c.h.b16 %v114
  %v634 = vunpack.c.l.b16 %v115
  %v635 = vunpack.c.h.b16 %v115
  %v636 = vunpack.c.l.b16 %v116
  %v637 = vunpack.c.l.b16 %v117
  %v638 = vunpack.c.h.b16 %v117
  %v639 = vunpack.c.l.b16 %v118
  %v640 = vunpack.c.h.b16 %v118
  %v641 = vunpack.c.l.b16 %v119
  %v642 = vunpack.c.l.b16 %v120
  %v643 = vunpack.c.h.b16 %v120
  %v644 = vunpack.c.l.b16 %v121
  %v645 = vunpack.c.h.b16 %v121
  %v646 = vunpack.c.l.b16 %v122
  %v647 = vunpack.c.l.b16 %v123
  %v648 = vunpack.c.h.b16 %v123
  %v649 = vunpack.c.l.b16 %v124
  %v650 = vunpack.c.h.b16 %v124
  %v651 = vunpack.c.l.b16 %v125
  %v652 = vunpack.c.l.b16 %v126
  %v653 = vunpack.c.h.b16 %v126
  %v654 = vunpack.c.l.b16 %v127
  %v655 = vunpack.c.h.b16 %v127
  %v656 = vunpack.c.l.b16 %v128
  %v657 = vunpack.c.l.b16 %v129
  %v658 = vunpack.c.h.b16 %v129
  %v659 = vunpack.c.l.b16 %v130
  %v660 = vunpack.c.h.b16 %v130
  %v661 = vunpack.c.l.b16 %v131
  %v662 = vunpack.c.l.b16 %v132
  %v663 = vunpack.c.h.b16 %v132
  %v664 = vunpack.c.l.b16 %v133
  %v665 = vunpack.c.h.b16 %v133
  %v666 = vunpack.c.l.b16 %v134
  %v667 = vunpack.c.l.b16 %v135
  %v668 = vunpack.c.h.b16 %v135
  %v669 = vunpack.c.l.b16 %v136
  %v670 = vunpack.c.h.b16 %v136
  %v671 = vunpack.c.l.b16 %v137
  %v672 = vunpack.c.l.b16 %v138
  %v673 = vunpack.c.h.b16 %v138
  %v674 = vunpack.c.l.b16 %v139
  %v675 = vunpack.c.h.b16 %v139
  %v676 = vunpack.c.l.b16 %v140
  %v677 = vunpack.c.l.b16 %v141
  %v678 = vunpack.c.h.b16 %v141
  %v679 = vunpack.c.l.b16 %v142
  %v680 = vunpack.c.h.b16 %v142
  %v681 = vunpack.c.l.b16 %v143
  %v682 = vunpack.c.l.b16 %v144
  %v683 = vunpack.c.h.b16 %v144
  %v684 = vunpack.c.l.b16 %v145
  %v685 = vunpack.c.h.b16 %v145
  %v686 = vunpack.c.l.b16 %v146
  %v687 = vunpack.c.l.b16 %v147
  %v688 = vunpack.c.h.b16 %v147
  %v689 = vunpack.c.l.b16 %v148
  %v690 = vunpack.c.h.b16 %v148
  %v691 = vunpack.c.l.b16 %v149
  %v692 = vunpack.c.l.b16 %v150
  %v693 = vunpack.c.h.b16 %v150
  %v694 = vunpack.c.l.b16 %v151
  %v695 = vunpack.c.h.b16 %v151
  %v696 = vunpack.c.l.b16 %v152
  %v697 = vunpack.c.l.b16 %v153
  %v698 = vunpack.c.h.b16 %v153
  %v699 = vunpack.c.l.b16 %v154
  %v700 = vunpack.c.h.b16 %v154
  %v701 = vunpack.c.l.b16 %v155
  %v702 = vunpack.c.l.b16 %v156
  %v703 = vunpack.c.h.b16 %v156
  %v704 = vunpack.c.l.b16 %v157
  %v705 = vunpack.c.h.b16 %v157
  %v706 = vunpack.c.l.b16 %v158
  %v707 = vunpack.c.l.b16 %v159
  %v708 = vunpack.c.h.b16 %v159
  %v709 = vunpack.c.l.b16 %v160
  %v710 = vunpack.c.h.b16 %v160
  %v711 = vunpack.c.l.b16 %v161
  %v712 = vunpack.c.l.b16 %v162
  %v713 = vunpack.c.h.b16 %v162
  %v714 = vunpack.c.l.b16 %v163
  %v715 = vunpack.c.h.b16 %v163
  %v716 = vunpack.c.l.b16 %v164
  %v717 = vunpack.c.l.b16 %v165
  %v718 = vunpack.c.h.b16 %v165
  %v719 = vunpack.c.l.b16 %v166
  %v720 = vunpack.c.h.b16 %v166
  %v721 = vunpack.c.l.b16 %v167
  %v722 = vunpack.c.l.b16 %v168
  %v723 = vunpack.c.h.b16 %v168
  %v724 = vunpack.c.l.b16 %v169
  %v725 = vunpack.c.h.b16 %v169
  %v726 = vunpack.c.l.b16 %v170
  %v727 = vunpack.c.l.b16 %v171
  %v728 = vunpack.c.h.b16 %v171
  %v729 = vunpack.c.l.b16 %v172
  %v730 = vunpack.c.h.b16 %v172
  %v731 = vunpack.c.l.b16 %v173
  %v732 = vunpack.c.l.b16 %v174
  %v733 = vunpack.c.h.b16 %v174
  %v734 = vunpack.c.l.b16 %v175
  %v735 = vunpack.c.h.b16 %v175
  %v736 = vunpack.c.l.b16 %v176
  %v737 = vunpack.c.l.b16 %v177
  %v738 = vunpack.c.h.b16 %v177
  %v739 = vunpack.c.l.b16 %v178
  %v740 = vunpack.c.h.b16 %v178
  %v741 = vunpack.c.l.b16 %v179
  %v742 = vunpack.c.l.b16 %v180
  %v743 = vunpack.c.h.b16 %v180
  %v744 = vunpack.c.l.b16 %v181
  %v745 = vunpack.c.h.b16 %v181
  %v746 = vunpack.c.l.b16 %v182
  %v747 = vunpack.c.l.b16 %v183
  %v748 = vunpack.c.h.b16 %v183
  %v749 = vunpack.c.l.b16 %v184
  %v750 = vunpack.c.h.b16 %v184
  %v751 = vunpack.c.l.b16 %v185
  %v752 = vunpack.c.l.b16 %v186
  %v753 = vunpack.c.h.b16 %v186
  %v754 = vunpack.c.l.b16 %v187
  %v755 = vunpack.c.h.b16 %v187
  %v756 = vunpack.c.l.b16 %v188
  %v757 = vunpack.c.l.b16 %v189
  %v758 = vunpack.c.h.b16 %v189
  %v759 = vunpack.c.l.b16 %v190
  %v760 = vunpack.c.h.b16 %v190
  %v761 = vunpack.c.l.b16 %v191
  %v762 = vunpack.c.l.b16 %v192
  %v763 = vunpack.c.h.b16 %v192
  %v764 = vunpack.c.l.b16 %v193
  %v765 = vunpack.c.h.b16 %v193
  %v766 = vunpack.c.l.b16 %v194
  %v767 = vunpack.c.l.b16 %v195
  %v768 = vunpack.c.h.b16 %v195
  %v769 = vunpack.c.l.b16 %v196
  %v770 = vunpack.c.h.b16 %v196
  %v771 = vunpack.c.l.b16 %v197
  %v772 = vunpack.c.l.b16 %v198
  %v773 = vunpack.c.h.b16 %v198
  %v774 = vunpack.c.l.b16 %v199
  %v775 = vunpack.c.h.b16 %v199
  %v776 = vunpack.c.l.b16 %v200
  %v777 = vunpack.c.l.b16 %v201
  %v778 = vunpack.c.h.b16 %v201
  %v779 = vunpack.c.l.b16 %v202
  %v780 = vunpack.c.h.b16 %v202
  %v781 = vunpack.c.l.b16 %v203
  %v782 = vunpack.c.l.b16 %v204
  %v783 = vunpack.c.h.b16 %v204
  %v784 = vunpack.c.l.b16 %v205
  %v785 = vunpack.c.h.b16 %v205
  %v786 = vunpack.c.l.b16 %v206
  %v787 = vunpack.c.l.b16 %v207
  %v788 = vunpack.c.h.b16 %v207
  %v789 = vunpack.c.l.b16 %v208
  %v790 = vunpack.c.h.b16 %v208
  %v791 = vunpack.c.l.b16 %v209
  %v792 = vunpack.c.l.b16 %v210
  %v793 = vunpack.c.h.b16 %v210
  %v794 = vunpack.c.l.b16 %v211
  %v795 = vunpack.c.h.b16 %v211
  %v796 = vunpack.c.l.b16 %v212
  %v797 = vpack.c.b16 %v482, %v477
  %v798 = vpack.c.b16 %v483, %v478
  %v799 = vpack.c.b16 %v484, %v479
  %v800 = vpack.c.b16 %v485, %v480
  %v801 = vpack.c.b16 %v486, %v481
  %v802 = vpack.c.b16 %v492, %v487
  %v803 = vpack.c.b16 %v493, %v488
  %v804 = vpack.c.b16 %v494, %v489
  %v805 = vpack.c.b16 %v495, %v490
  %v806 = vpack.c.b16 %v496, %v491
  %v807 = vpack.c.b16 %v502, %v497
  %v808 = vpack.c.b16 %v503, %v498
  %v809 = vpack.c.b16 %v504, %v499
  %v810 = vpack.c.b16 %v505, %v500
  %v811 = vpack.c.b16 %v506, %v501
  %v812 = vpack.c.b16 %v512, %v507
  %v813 = vpack.c.b16 %v513, %v508
  %v814 = vpack.c.b16 %v514, %v509
  %v815 = vpack.c.b16 %v515, %v510
  %v816 = vpack.c.b16 %v516, %v511
  %v817 = vpack.c.b16 %v522, %v517
  %v818 = vpack.c.b16 %v523, %v518
  %v819 = vpack.c.b16 %v524, %v519
  %v820 = vpack.c.b16 %v525, %v520
  %v821 = vpack.c.b16 %v526, %v521
  %v822 = vpack.c.b16 %v532, %v527
  %v823 = vpack.c.b16 %v533, %v528
  %v824 = vpack.c.b16 %v534, %v529
  %v825 = vpack.c.b16 %v535, %v530
  %v826 = vpack.c.b16 %v536, %v531
  %v827 = vpack.c.b16 %v542, %v537
  %v828 = vpack.c.b16 %v543, %v538
  %v829 = vpack.c.b16 %v544, %v539
  %v830 = vpack.c.b16 %v545, %v540
  %v831 = vpack.c.b16 %v546, %v541
  %v832 = vpack.c.b16 %v552, %v547
  %v833 = vpack.c.b16 %v553, %v548
  %v834 = vpack.c.b16 %v554, %v549
  %v835 = vpack.c.b16 %v555, %v550
  %v836 = vpack.c.b16 %v556, %v551
  %v837 = vpack.c.b16 %v562, %v557
  %v838 = vpack.c.b16 %v563, %v558
  %v839 = vpack.c.b16 %v564, %v559
  %v840 = vpack.c.b16 %v565, %v560
  %v841 = vpack.c.b16 %v566, %v561
  %v842 = vpack.c.b16 %v572, %v567
  %v843 = vpack.c.b16 %v573, %v568
  %v844 = vpack.c.b16 %v574, %v569
  %v845 = vpack.c.b16 %v575, %v570
  %v846 = vpack.c.b16 %v576, %v571
  %v847 = vpack.c.b16 %v582, %v577
  %v848 = vpack.c.b16 %v583, %v578
  %v849 = vpack.c.b16 %v584, %v579
  %v850 = vpack.c.b16 %v585, %v580
  %v851 = vpack.c.b16 %v586, %v581
  %v852 = vpack.c.b16 %v592, %v587
  %v853 = vpack.c.b16 %v593, %v588
  %v854 = vpack.c.b16 %v594, %v589
  %v855 = vpack.c.b16 %v595, %v590
  %v856 = vpack.c.b16 %v596, %v591
  %v857 = vpack.c.b16 %v602, %v597
  %v858 = vpack.c.b16 %v603, %v598
  %v859 = vpack.c.b16 %v604, %v599
  %v860 = vpack.c.b16 %v605, %v600
  %v861 = vpack.c.b16 %v606, %v601
  %v862 = vpack.c.b16 %v612, %v607
  %v863 = vpack.c.b16 %v613, %v608
  %v864 = vpack.c.b16 %v614, %v609
  %v865 = vpack.c.b16 %v615, %v610
  %v866 = vpack.c.b16 %v616, %v611
  %v867 = vpack.c.b16 %v622, %v617
  %v868 = vpack.c.b16 %v623, %v618
  %v869 = vpack.c.b16 %v624, %v619
  %v870 = vpack.c.b16 %v625, %v620
  %v871 = vpack.c.b16 %v626, %v621
  %v872 = vpack.c.b16 %v632, %v627
  %v873 = vpack.c.b16 %v633, %v628
  %v874 = vpack.c.b16 %v634, %v629
  %v875 = vpack.c.b16 %v635, %v630
  %v876 = vpack.c.b16 %v636, %v631
  %v877 = vpack.c.b16 %v642, %v637
  %v878 = vpack.c.b16 %v643, %v638
  %v879 = vpack.c.b16 %v644, %v639
  %v880 = vpack.c.b16 %v645, %v640
  %v881 = vpack.c.b16 %v646, %v641
  %v882 = vpack.c.b16 %v652, %v647
  %v883 = vpack.c.b16 %v653, %v648
  %v884 = vpack.c.b16 %v654, %v649
  %v885 = vpack.c.b16 %v655, %v650
  %v886 = vpack.c.b16 %v656, %v651
  %v887 = vpack.c.b16 %v662, %v657
  %v888 = vpack.c.b16 %v663, %v658
  %v889 = vpack.c.b16 %v664, %v659
  %v890 = vpack.c.b16 %v665, %v660
  %v891 = vpack.c.b16 %v666, %v661
  %v892 = vpack.c.b16 %v672, %v667
  %v893 = vpack.c.b16 %v673, %v668
  %v894 = vpack.c.b16 %v674, %v669
  %v895 = vpack.c.b16 %v675, %v670
  %v896 = vpack.c.b16 %v676, %v671
  %v897 = vpack.c.b16 %v682, %v677
  %v898 = vpack.c.b16 %v683, %v678
  %v899 = vpack.c.b16 %v684, %v679
  %v900 = vpack.c.b16 %v685, %v680
  %v901 = vpack.c.b16 %v686, %v681
  %v902 = vpack.c.b16 %v692, %v687
  %v903 = vpack.c.b16 %v693, %v688
  %v904 = vpack.c.b16 %v694, %v689
  %v905 = vpack.c.b16 %v695, %v690
  %v906 = vpack.c.b16 %v696, %v691
  %v907 = vpack.c.b16 %v702, %v697
  %v908 = vpack.c.b16 %v703, %v698
  %v909 = vpack.c.b16 %v704, %v699
  %v910 = vpack.c.b16 %v705, %v700
  %v911 = vpack.c.b16 %v706, %v701
  %v912 = vpack.c.b16 %v712, %v707
  %v913 = vpack.c.b16 %v713, %v708
  %v914 = vpack.c.b16 %v714, %v709
  %v915 = vpack.c.b16 %v715, %v710
  %v916 = vpack.c.b16 %v716, %v711
  %v917 = vpack.c.b16 %v722, %v717
  %v918 = vpack.c.b16 %v723, %v718
  %v919 = vpack.c.b16 %v724, %v719
  %v920 = vpack.c.b16 %v725, %v720
  %v921 = vpack.c.b16 %v726, %v721
  %v922 = vpack.c.b16 %v732, %v727
  %v923 = vpack.c.b16 %v733, %v728
  %v924 = vpack.c.b16 %v734, %v729
  %v925 = vpack.c.b16 %v735, %v730
  %v926 = vpack.c.b16 %v736, %v731
  %v927 = vpack.c.b16 %v742, %v737
  %v928 = vpack.c.b16 %v743, %v738
  %v929 = vpack.c.b16 %v744, %v739
  %v930 = vpack.c.b16 %v745, %v740
  %v931 = vpack.c.b16 %v746, %v741
  %v932 = vpack.c.b16 %v752, %v747
  %v933 = vpack.c.b16 %v753, %v748
  %v934 = vpack.c.b16 %v754, %v749
  %v935 = vpack.c.b16 %v755, %v750
  %v936 = vpack.c.b16 %v756, %v751
  %v937 = vpack.c.b16 %v762, %v757
  %v938 = vpack.c.b16 %v763, %v758
  %v939 = vpack.c.b16 %v764, %v759
  %v940 = vpack.c.b16 %v765, %v760
  %v941 = vpack.c.b16 %v766, %v761
  %v942 = vpack.c.b16 %v772, %v767
  %v943 = vpack.c.b16 %v773, %v768
  %v944 = vpack.c.b16 %v774, %v769
  %v945 = vpack.c.b16 %v775, %v770
  %v946 = vpack.c.b16 %v776, %v771
  %v947 = vpack.c.b16 %v782, %v777
  %v948 = vpack.c.b16 %v783, %v778
  %v949 = vpack.c.b16 %v784, %v779
  %v950 = vpack.c.b16 %v785, %v780
  %v951 = vpack.c.b16 %v786, %v781
  %v952 = vpack.c.b16 %v792, %v787
  %v953 = vpack.c.b16 %v793, %v788
  %v954 = vpack.c.b16 %v794, %v789
  %v955 = vpack.c.b16 %v795, %v790
  %v956 = vpack.c.b16 %v796, %v791
  %v1157 = vunpack.c.l.b16 %v213
  %v1158 = vunpack.c.l.b16 %v214
  %v1159 = vunpack.c.l.b16 %v215
  %v1160 = vunpack.c.l.b16 %v216
  %v1161 = vunpack.c.l.b16 %v217
  %v1162 = vunpack.c.l.b16 %v218
  %v1163 = vunpack.c.l.b16 %v219
  %v1164 = vunpack.c.l.b16 %v220
  %v1165 = vunpack.c.l.b16 %v221
  %v1166 = vunpack.c.l.b16 %v222
  %v1167 = vunpack.c.l.b16 %v223
  %v1168 = vunpack.c.l.b16 %v224
  %v1169 = vunpack.c.l.b16 %v225
  %v1170 = vunpack.c.l.b16 %v226
  %v1171 = vunpack.c.l.b16 %v227
  %v1172 = vunpack.c.l.b16 %v228
  %v1173 = vunpack.c.l.b16 %v229
  %v1174 = vunpack.c.l.b16 %v230
  %v1175 = vunpack.c.l.b16 %v231
  %v1176 = vunpack.c.l.b16 %v232
  %v1177 = vunpack.c.l.b16 %v233
  %v1178 = vunpack.c.l.b16 %v234
  %v1179 = vunpack.c.l.b16 %v235
  %v1180 = vunpack.c.l.b16 %v236
  %v1181 = vunpack.c.l.b16 %v237
  %v1182 = vunpack.c.l.b16 %v238
  %v1183 = vunpack.c.l.b16 %v239
  %v1184 = vunpack.c.l.b16 %v240
  %v1185 = vunpack.c.l.b16 %v241
  %v1186 = vunpack.c.l.b16 %v242
  %v1187 = vunpack.c.l.b16 %v243
  %v1188 = vunpack.c.l.b16 %v244
  %v1189 = vunpack.c.l.b16 %v245
  %v1190 = vunpack.c.l.b16 %v246
  %v1191 = vunpack.c.l.b16 %v247
  %v1192 = vunpack.c.l.b16 %v248
  %v1193 = vunpack.c.l.b16 %v249
  %v1194 = vunpack.c.l.b16 %v250
  %v1195 = vunpack.c.l.b16 %v251
  %v1196 = vunpack.c.l.b16 %v252
  %v1197 = vunpack.c.l.b16 %v253
  %v1198 = vunpack.c.l.b16 %v254
  %v1199 = vunpack.c.l.b16 %v255
  %v1200 = vunpack.c.l.b16 %v256
  %v1201 = vunpack.c.l.b16 %v257
  %v1202 = vunpack.c.l.b16 %v258
  %v1203 = vunpack.c.l.b16 %v259
  %v1204 = vunpack.c.l.b16 %v260
  %v1205 = vunpack.c.l.b16 %v261
  %v1206 = vunpack.c.l.b16 %v262
  %v1207 = vunpack.c.l.b16 %v263
  %v1208 = vunpack.c.l.b16 %v264
  %v1209 = vunpack.c.l.b16 %v265
  %v1210 = vunpack.c.l.b16 %v266
  %v1211 = vunpack.c.l.b16 %v267
  %v1212 = vunpack.c.l.b16 %v268
  %v1213 = vunpack.c.l.b16 %v269
  %v1214 = vunpack.c.l.b16 %v270
  %v1215 = vunpack.c.l.b16 %v271
  %v1216 = vunpack.c.l.b16 %v272
  %v1217 = vunpack.c.l.b16 %v273
  %v1218 = vunpack.c.l.b16 %v274
  %v1219 = vunpack.c.l.b16 %v275
  %v1220 = vunpack.c.l.b16 %v276
  %v1221 = vunpack.c.l.b16 %v277
  %v1222 = vunpack.c.l.b16 %v278
  %v1223 = vunpack.c.l.b16 %v279
  %v1224 = vunpack.c.l.b16 %v280
  %v1225 = vunpack.c.l.b16 %v281
  %v1226 = vunpack.c.l.b16 %v282
  %v1227 = vunpack.c.l.b16 %v283
  %v1228 = vunpack.c.l.b16 %v284
  %v1229 = vpack.c.b16 %v1158, %v1157
  %v1230 = vpack.c.b16 %v1160, %v1159
  %v1231 = vpack.c.b16 %v1162, %v1161
  %v1232 = vpack.c.b16 %v1164, %v1163
  %v1233 = vpack.c.b16 %v1166, %v1165
  %v1234 = vpack.c.b16 %v1168, %v1167
  %v1235 = vpack.c.b16 %v1170, %v1169
  %v1236 = vpack.c.b16 %v1172, %v1171
  %v1237 = vpack.c.b16 %v1174, %v1173
  %v1238 = vpack.c.b16 %v1176, %v1175
  %v1239 = vpack.c.b16 %v1178, %v1177
  %v1240 = vpack.c.b16 %v1180, %v1179
  %v1241 = vpack.c.b16 %v1182, %v1181
  %v1242 = vpack.c.b16 %v1184, %v1183
  %v1243 = vpack.c.b16 %v1186, %v1185
  %v1244 = vpack.c.b16 %v1188, %v1187
  %v1245 = vpack.c.b16 %v1190, %v1189
  %v1246 = vpack.c.b16 %v1192, %v1191
  %v1247 = vpack.c.b16 %v1194, %v1193
  %v1248 = vpack.c.b16 %v1196, %v1195
  %v1249 = vpack.c.b16 %v1198, %v1197
  %v1250 = vpack.c.b16 %v1200, %v1199
  %v1251 = vpack.c.b16 %v1202, %v1201
  %v1252 = vpack.c.b16 %v1204, %v1203
  %v1253 = vpack.c.b16 %v1206, %v1205
  %v1254 = vpack.c.b16 %v1208, %v1207
  %v1255 = vpack.c.b16 %v1210, %v1209
  %v1256 = vpack.c.b16 %v1212, %v1211
  %v1257 = vpack.c.b16 %v1214, %v1213
  %v1258 = vpack.c.b16 %v1216, %v1215
  %v1259 = vpack.c.b16 %v1218, %v1217
  %v1260 = vpack.c.b16 %v1220, %v1219
  %v1261 = vpack.c.b16 %v1222, %v1221
  %v1262 = vpack.c.b16 %v1224, %v1223
  %v1263 = vpack.c.b16 %v1226, %v1225
  %v1264 = vpack.c.b16 %v1228, %v1227
  %vm1301 = vcmask 523264
  %v1303 = vsel %vm1301, %v801, 0
  %v1306 = vsel %vm1301, %v806, 0
  %v1309 = vsel %vm1301, %v811, 0
  %v1312 = vsel %vm1301, %v816, 0
  %v1315 = vsel %vm1301, %v821, 0
  %v1318 = vsel %vm1301, %v826, 0
  %v1321 = vsel %vm1301, %v831, 0
  %v1324 = vsel %vm1301, %v836, 0
  %v1327 = vsel %vm1301, %v841, 0
  %v1330 = vsel %vm1301, %v846, 0
  %v1333 = vsel %vm1301, %v851, 0
  %v1336 = vsel %vm1301, %v856, 0
  %v1339 = vsel %vm1301, %v861, 0
  %v1342 = vsel %vm1301, %v866, 0
  %v1345 = vsel %vm1301, %v871, 0
  %v1348 = vsel %vm1301, %v876, 0
  %v1351 = vsel %vm1301, %v881, 0
  %v1354 = vsel %vm1301, %v886, 0
  %v1357 = vsel %vm1301, %v891, 0
  %v1360 = vsel %vm1301, %v896, 0
  %v1363 = vsel %vm1301, %v901, 0
  %v1366 = vsel %vm1301, %v906, 0
  %v1369 = vsel %vm1301, %v911, 0
  %v1372 = vsel %vm1301, %v916, 0
  %v1375 = vsel %vm1301, %v921, 0
  %v1378 = vsel %vm1301, %v926, 0
  %v1381 = vsel %vm1301, %v931, 0
  %v1384 = vsel %vm1301, %v936, 0
  %v1387 = vsel %vm1301, %v941, 0
  %v1390 = vsel %vm1301, %v946, 0
  %v1393 = vsel %vm1301, %v951, 0
  %v1396 = vsel %vm1301, %v956, 0
  %1398 = vmatprep.subr.bf16.mxu0 0
  %1399 = vmatpush1.bf16.msra.mxu0 %v1229
  %1400 = vmatprep.subr.bf16.mxu0 0
  %1401 = vmatpush1.bf16.msra.mxu0 %v1230
  %1402 = vmatprep.subr.bf16.mxu0 0
  %1403 = vmatpush1.bf16.msra.mxu0 %v1231
  %1404 = vmatprep.subr.bf16.mxu0 0
  %1405 = vmatpush1.bf16.msra.mxu0 %v1232
  %1406 = vmatprep.subr.bf16.mxu0 0
  %1407 = vmatpush1.bf16.msra.mxu0 %v1233
  %1408 = vmatprep.subr.bf16.mxu0 0
  %1409 = vmatpush1.bf16.msra.mxu0 %v1234
  %1410 = vmatprep.subr.bf16.mxu0 0
  %1411 = vmatpush1.bf16.msra.mxu0 %v1235
  %1412 = vmatprep.subr.bf16.mxu0 0
  %1413 = vmatpush1.bf16.msra.mxu0 %v1236
  %1414 = vmatprep.subr.bf16.mxu0 0
  %1415 = vmatpush1.bf16.msra.mxu0 %v1237
  %1416 = vmatprep.subr.bf16.mxu0 0
  %1417 = vmatpush1.bf16.msra.mxu0 %v1238
  %1418 = vmatprep.subr.bf16.mxu0 0
  %1419 = vmatpush1.bf16.msra.mxu0 %v1239
  %1420 = vmatprep.subr.bf16.mxu0 0
  %1421 = vmatpush1.bf16.msra.mxu0 %v1240
  %1422 = vmatprep.subr.bf16.mxu0 0
  %1423 = vmatpush1.bf16.msra.mxu0 %v1241
  %1424 = vmatprep.subr.bf16.mxu0 0
  %1425 = vmatpush1.bf16.msra.mxu0 %v1242
  %1426 = vmatprep.subr.bf16.mxu0 0
  %1427 = vmatpush1.bf16.msra.mxu0 %v1243
  %1428 = vmatprep.subr.bf16.mxu0 0
  %1429 = vmatpush1.bf16.msra.mxu0 %v1244
  %1430 = vmatprep.mubr.bf16.mxu0 %v798
  %1431 = vmatmul.mubr.bf16.gmra.mrb[0].mxu0 %v797
  %v1432 = vpop.f32.mrb[0].mxu0
  %v1433 = vadd.f32 0.0, %v1432
  %v1434 = vpop.f32.mrb[0].mxu0
  %v1435 = vpop.f32.mrb[0].mxu0
  %v1436 = vadd.f32 0.0, %v1435
  %v1437 = vpop.f32.mrb[0].mxu0
  %1438 = vmatprep.mubr.bf16.mxu0 %v803
  %1439 = vmatmul.mubr.bf16.gmra.mrb[0].mxu0 %v802
  %v1440 = vpop.f32.mrb[0].mxu0
  %v1441 = vadd.f32 0.0, %v1440
  %v1442 = vpop.f32.mrb[0].mxu0
  %v1443 = vpop.f32.mrb[0].mxu0
  %v1444 = vadd.f32 0.0, %v1443
  %v1445 = vpop.f32.mrb[0].mxu0
  %1446 = vmatprep.mubr.bf16.mxu0 %v808
  %1447 = vmatmul.mubr.bf16.gmra.mrb[0].mxu0 %v807
  %v1448 = vpop.f32.mrb[0].mxu0
  %v1449 = vadd.f32 0.0, %v1448
  %v1450 = vpop.f32.mrb[0].mxu0
  %v1451 = vpop.f32.mrb[0].mxu0
  %v1452 = vadd.f32 0.0, %v1451
  %v1453 = vpop.f32.mrb[0].mxu0
  %1454 = vmatprep.mubr.bf16.mxu0 %v813
  %1455 = vmatmul.mubr.bf16.gmra.mrb[0].mxu0 %v812
  %v1456 = vpop.f32.mrb[0].mxu0
  %v1457 = vadd.f32 0.0, %v1456
  %v1458 = vpop.f32.mrb[0].mxu0
  %v1459 = vpop.f32.mrb[0].mxu0
  %v1460 = vadd.f32 0.0, %v1459
  %v1461 = vpop.f32.mrb[0].mxu0
  %1462 = vmatprep.mubr.bf16.mxu0 %v818
  %1463 = vmatmul.mubr.bf16.gmra.mrb[0].mxu0 %v817
  %v1464 = vpop.f32.mrb[0].mxu0
  %v1465 = vadd.f32 0.0, %v1464
  %v1466 = vpop.f32.mrb[0].mxu0
  %v1467 = vpop.f32.mrb[0].mxu0
  %v1468 = vadd.f32 0.0, %v1467
  %v1469 = vpop.f32.mrb[0].mxu0
  %1470 = vmatprep.mubr.bf16.mxu0 %v823
  %1471 = vmatmul.mubr.bf16.gmra.mrb[0].mxu0 %v822
  %v1472 = vpop.f32.mrb[0].mxu0
  %v1473 = vadd.f32 0.0, %v1472
  %v1474 = vpop.f32.mrb[0].mxu0
  %v1475 = vpop.f32.mrb[0].mxu0
  %v1476 = vadd.f32 0.0, %v1475
  %v1477 = vpop.f32.mrb[0].mxu0
  %1478 = vmatprep.mubr.bf16.mxu0 %v828
  %1479 = vmatmul.mubr.bf16.gmra.mrb[0].mxu0 %v827
  %v1480 = vpop.f32.mrb[0].mxu0
  %v1481 = vadd.f32 0.0, %v1480
  %v1482 = vpop.f32.mrb[0].mxu0
  %v1483 = vpop.f32.mrb[0].mxu0
  %v1484 = vadd.f32 0.0, %v1483
  %v1485 = vpop.f32.mrb[0].mxu0
  %1486 = vmatprep.mubr.bf16.mxu0 %v833
  %1487 = vmatmul.mubr.bf16.gmra.mrb[0].mxu0 %v832
  %v1488 = vpop.f32.mrb[0].mxu0
  %v1489 = vadd.f32 0.0, %v1488
  %v1490 = vpop.f32.mrb[0].mxu0
  %v1491 = vpop.f32.mrb[0].mxu0
  %v1492 = vadd.f32 0.0, %v1491
  %v1493 = vpop.f32.mrb[0].mxu0
  %1494 = vmatprep.mubr.bf16.mxu0 %v838
  %1495 = vmatmul.mubr.bf16.gmra.mrb[0].mxu0 %v837
  %v1496 = vpop.f32.mrb[0].mxu0
  %v1497 = vadd.f32 0.0, %v1496
  %v1498 = vpop.f32.mrb[0].mxu0
  %v1499 = vpop.f32.mrb[0].mxu0
  %v1500 = vadd.f32 0.0, %v1499
  %v1501 = vpop.f32.mrb[0].mxu0
  %1502 = vmatprep.mubr.bf16.mxu0 %v843
  %1503 = vmatmul.mubr.bf16.gmra.mrb[0].mxu0 %v842
  %v1504 = vpop.f32.mrb[0].mxu0
  %v1505 = vadd.f32 0.0, %v1504
  %v1506 = vpop.f32.mrb[0].mxu0
  %v1507 = vpop.f32.mrb[0].mxu0
  %v1508 = vadd.f32 0.0, %v1507
  %v1509 = vpop.f32.mrb[0].mxu0
  %1510 = vmatprep.mubr.bf16.mxu0 %v848
  %1511 = vmatmul.mubr.bf16.gmra.mrb[0].mxu0 %v847
  %v1512 = vpop.f32.mrb[0].mxu0
  %v1513 = vadd.f32 0.0, %v1512
  %v1514 = vpop.f32.mrb[0].mxu0
  %v1515 = vpop.f32.mrb[0].mxu0
  %v1516 = vadd.f32 0.0, %v1515
  %v1517 = vpop.f32.mrb[0].mxu0
  %1518 = vmatprep.mubr.bf16.mxu0 %v853
  %1519 = vmatmul.mubr.bf16.gmra.mrb[0].mxu0 %v852
  %v1520 = vpop.f32.mrb[0].mxu0
  %v1521 = vadd.f32 0.0, %v1520
  %v1522 = vpop.f32.mrb[0].mxu0
  %v1523 = vpop.f32.mrb[0].mxu0
  %v1524 = vadd.f32 0.0, %v1523
  %v1525 = vpop.f32.mrb[0].mxu0
  %1526 = vmatprep.mubr.bf16.mxu0 %v858
  %1527 = vmatmul.mubr.bf16.gmra.mrb[0].mxu0 %v857
  %v1528 = vpop.f32.mrb[0].mxu0
  %v1529 = vadd.f32 0.0, %v1528
  %v1530 = vpop.f32.mrb[0].mxu0
  %v1531 = vpop.f32.mrb[0].mxu0
  %v1532 = vadd.f32 0.0, %v1531
  %v1533 = vpop.f32.mrb[0].mxu0
  %1534 = vmatprep.mubr.bf16.mxu0 %v863
  %1535 = vmatmul.mubr.bf16.gmra.mrb[0].mxu0 %v862
  %v1536 = vpop.f32.mrb[0].mxu0
  %v1537 = vadd.f32 0.0, %v1536
  %v1538 = vpop.f32.mrb[0].mxu0
  %v1539 = vpop.f32.mrb[0].mxu0
  %v1540 = vadd.f32 0.0, %v1539
  %v1541 = vpop.f32.mrb[0].mxu0
  %1542 = vmatprep.mubr.bf16.mxu0 %v868
  %1543 = vmatmul.mubr.bf16.gmra.mrb[0].mxu0 %v867
  %v1544 = vpop.f32.mrb[0].mxu0
  %v1545 = vadd.f32 0.0, %v1544
  %v1546 = vpop.f32.mrb[0].mxu0
  %v1547 = vpop.f32.mrb[0].mxu0
  %v1548 = vadd.f32 0.0, %v1547
  %v1549 = vpop.f32.mrb[0].mxu0
  %1550 = vmatprep.mubr.bf16.mxu0 %v873
  %1551 = vmatmul.mubr.bf16.gmra.mrb[0].mxu0 %v872
  %v1552 = vpop.f32.mrb[0].mxu0
  %v1553 = vadd.f32 0.0, %v1552
  %v1554 = vpop.f32.mrb[0].mxu0
  %v1555 = vpop.f32.mrb[0].mxu0
  %v1556 = vadd.f32 0.0, %v1555
  %v1557 = vpop.f32.mrb[0].mxu0
  %1558 = vmatprep.mubr.bf16.mxu0 %v878
  %1559 = vmatmul.mubr.bf16.gmra.mrb[0].mxu0 %v877
  %v1560 = vpop.f32.mrb[0].mxu0
  %v1561 = vadd.f32 0.0, %v1560
  %v1562 = vpop.f32.mrb[0].mxu0
  %v1563 = vpop.f32.mrb[0].mxu0
  %v1564 = vadd.f32 0.0, %v1563
  %v1565 = vpop.f32.mrb[0].mxu0
  %1566 = vmatprep.mubr.bf16.mxu0 %v883
  %1567 = vmatmul.mubr.bf16.gmra.mrb[0].mxu0 %v882
  %v1568 = vpop.f32.mrb[0].mxu0
  %v1569 = vadd.f32 0.0, %v1568
  %v1570 = vpop.f32.mrb[0].mxu0
  %v1571 = vpop.f32.mrb[0].mxu0
  %v1572 = vadd.f32 0.0, %v1571
  %v1573 = vpop.f32.mrb[0].mxu0
  %1574 = vmatprep.mubr.bf16.mxu0 %v888
  %1575 = vmatmul.mubr.bf16.gmra.mrb[0].mxu0 %v887
  %v1576 = vpop.f32.mrb[0].mxu0
  %v1577 = vadd.f32 0.0, %v1576
  %v1578 = vpop.f32.mrb[0].mxu0
  %v1579 = vpop.f32.mrb[0].mxu0
  %v1580 = vadd.f32 0.0, %v1579
  %v1581 = vpop.f32.mrb[0].mxu0
  %1582 = vmatprep.mubr.bf16.mxu0 %v893
  %1583 = vmatmul.mubr.bf16.gmra.mrb[0].mxu0 %v892
  %v1584 = vpop.f32.mrb[0].mxu0
  %v1585 = vadd.f32 0.0, %v1584
  %v1586 = vpop.f32.mrb[0].mxu0
  %v1587 = vpop.f32.mrb[0].mxu0
  %v1588 = vadd.f32 0.0, %v1587
  %v1589 = vpop.f32.mrb[0].mxu0
  %1590 = vmatprep.mubr.bf16.mxu0 %v898
  %1591 = vmatmul.mubr.bf16.gmra.mrb[0].mxu0 %v897
  %v1592 = vpop.f32.mrb[0].mxu0
  %v1593 = vadd.f32 0.0, %v1592
  %v1594 = vpop.f32.mrb[0].mxu0
  %v1595 = vpop.f32.mrb[0].mxu0
  %v1596 = vadd.f32 0.0, %v1595
  %v1597 = vpop.f32.mrb[0].mxu0
  %1598 = vmatprep.mubr.bf16.mxu0 %v903
  %1599 = vmatmul.mubr.bf16.gmra.mrb[0].mxu0 %v902
  %v1600 = vpop.f32.mrb[0].mxu0
  %v1601 = vadd.f32 0.0, %v1600
  %v1602 = vpop.f32.mrb[0].mxu0
  %v1603 = vpop.f32.mrb[0].mxu0
  %v1604 = vadd.f32 0.0, %v1603
  %v1605 = vpop.f32.mrb[0].mxu0
  %1606 = vmatprep.mubr.bf16.mxu0 %v908
  %1607 = vmatmul.mubr.bf16.gmra.mrb[0].mxu0 %v907
  %v1608 = vpop.f32.mrb[0].mxu0
  %v1609 = vadd.f32 0.0, %v1608
  %v1610 = vpop.f32.mrb[0].mxu0
  %v1611 = vpop.f32.mrb[0].mxu0
  %v1612 = vadd.f32 0.0, %v1611
  %v1613 = vpop.f32.mrb[0].mxu0
  %1614 = vmatprep.mubr.bf16.mxu0 %v913
  %1615 = vmatmul.mubr.bf16.gmra.mrb[0].mxu0 %v912
  %v1616 = vpop.f32.mrb[0].mxu0
  %v1617 = vadd.f32 0.0, %v1616
  %v1618 = vpop.f32.mrb[0].mxu0
  %v1619 = vpop.f32.mrb[0].mxu0
  %v1620 = vadd.f32 0.0, %v1619
  %v1621 = vpop.f32.mrb[0].mxu0
  %1622 = vmatprep.mubr.bf16.mxu0 %v918
  %1623 = vmatmul.mubr.bf16.gmra.mrb[0].mxu0 %v917
  %v1624 = vpop.f32.mrb[0].mxu0
  %v1625 = vadd.f32 0.0, %v1624
  %v1626 = vpop.f32.mrb[0].mxu0
  %v1627 = vpop.f32.mrb[0].mxu0
  %v1628 = vadd.f32 0.0, %v1627
  %v1629 = vpop.f32.mrb[0].mxu0
  %1630 = vmatprep.mubr.bf16.mxu0 %v923
  %1631 = vmatmul.mubr.bf16.gmra.mrb[0].mxu0 %v922
  %v1632 = vpop.f32.mrb[0].mxu0
  %v1633 = vadd.f32 0.0, %v1632
  %v1634 = vpop.f32.mrb[0].mxu0
  %v1635 = vpop.f32.mrb[0].mxu0
  %v1636 = vadd.f32 0.0, %v1635
  %v1637 = vpop.f32.mrb[0].mxu0
  %1638 = vmatprep.mubr.bf16.mxu0 %v928
  %1639 = vmatmul.mubr.bf16.gmra.mrb[0].mxu0 %v927
  %v1640 = vpop.f32.mrb[0].mxu0
  %v1641 = vadd.f32 0.0, %v1640
  %v1642 = vpop.f32.mrb[0].mxu0
  %v1643 = vpop.f32.mrb[0].mxu0
  %v1644 = vadd.f32 0.0, %v1643
  %v1645 = vpop.f32.mrb[0].mxu0
  %1646 = vmatprep.mubr.bf16.mxu0 %v933
  %1647 = vmatmul.mubr.bf16.gmra.mrb[0].mxu0 %v932
  %v1648 = vpop.f32.mrb[0].mxu0
  %v1649 = vadd.f32 0.0, %v1648
  %v1650 = vpop.f32.mrb[0].mxu0
  %v1651 = vpop.f32.mrb[0].mxu0
  %v1652 = vadd.f32 0.0, %v1651
  %v1653 = vpop.f32.mrb[0].mxu0
  %1654 = vmatprep.mubr.bf16.mxu0 %v938
  %1655 = vmatmul.mubr.bf16.gmra.mrb[0].mxu0 %v937
  %v1656 = vpop.f32.mrb[0].mxu0
  %v1657 = vadd.f32 0.0, %v1656
  %v1658 = vpop.f32.mrb[0].mxu0
  %v1659 = vpop.f32.mrb[0].mxu0
  %v1660 = vadd.f32 0.0, %v1659
  %v1661 = vpop.f32.mrb[0].mxu0
  %1662 = vmatprep.mubr.bf16.mxu0 %v943
  %1663 = vmatmul.mubr.bf16.gmra.mrb[0].mxu0 %v942
  %v1664 = vpop.f32.mrb[0].mxu0
  %v1665 = vadd.f32 0.0, %v1664
  %v1666 = vpop.f32.mrb[0].mxu0
  %v1667 = vpop.f32.mrb[0].mxu0
  %v1668 = vadd.f32 0.0, %v1667
  %v1669 = vpop.f32.mrb[0].mxu0
  %1670 = vmatprep.mubr.bf16.mxu0 %v948
  %1671 = vmatmul.mubr.bf16.gmra.mrb[0].mxu0 %v947
  %v1672 = vpop.f32.mrb[0].mxu0
  %v1673 = vadd.f32 0.0, %v1672
  %v1674 = vpop.f32.mrb[0].mxu0
  %v1675 = vpop.f32.mrb[0].mxu0
  %v1676 = vadd.f32 0.0, %v1675
  %v1677 = vpop.f32.mrb[0].mxu0
  %1678 = vmatprep.mubr.bf16.mxu0 %v953
  %1679 = vmatmul.mubr.bf16.gmra.mrb[0].mxu0 %v952
  %v1680 = vpop.f32.mrb[0].mxu0
  %v1681 = vadd.f32 0.0, %v1680
  %v1682 = vpop.f32.mrb[0].mxu0
  %v1683 = vpop.f32.mrb[0].mxu0
  %v1684 = vadd.f32 0.0, %v1683
  %v1685 = vpop.f32.mrb[0].mxu0
  %1686 = vdwg.mxu0
  %1687 = vmatprep.subr.bf16.mxu0 0
  %1688 = vmatpush1.bf16.msra.mxu0 %v1245
  %1689 = vmatprep.subr.bf16.mxu0 0
  %1690 = vmatpush1.bf16.msra.mxu0 %v1246
  %1691 = vmatprep.subr.bf16.mxu0 0
  %1692 = vmatpush1.bf16.msra.mxu0 %v1247
  %1693 = vmatprep.subr.bf16.mxu0 0
  %1694 = vmatpush1.bf16.msra.mxu0 %v1248
  %1695 = vmatprep.subr.bf16.mxu0 0
  %1696 = vmatpush1.bf16.msra.mxu0 %v1249
  %1697 = vmatprep.subr.bf16.mxu0 0
  %1698 = vmatpush1.bf16.msra.mxu0 %v1250
  %1699 = vmatprep.subr.bf16.mxu0 0
  %1700 = vmatpush1.bf16.msra.mxu0 %v1251
  %1701 = vmatprep.subr.bf16.mxu0 0
  %1702 = vmatpush1.bf16.msra.mxu0 %v1252
  %1703 = vmatprep.subr.bf16.mxu0 0
  %1704 = vmatpush1.bf16.msra.mxu0 %v1253
  %1705 = vmatprep.subr.bf16.mxu0 0
  %1706 = vmatpush1.bf16.msra.mxu0 %v1254
  %1707 = vmatprep.subr.bf16.mxu0 0
  %1708 = vmatpush1.bf16.msra.mxu0 %v1255
  %1709 = vmatprep.subr.bf16.mxu0 0
  %1710 = vmatpush1.bf16.msra.mxu0 %v1256
  %1711 = vmatprep.subr.bf16.mxu0 0
  %1712 = vmatpush1.bf16.msra.mxu0 %v1257
  %1713 = vmatprep.subr.bf16.mxu0 0
  %1714 = vmatpush1.bf16.msra.mxu0 %v1258
  %1715 = vmatprep.subr.bf16.mxu0 0
  %1716 = vmatpush1.bf16.msra.mxu0 %v1259
  %1717 = vmatprep.subr.bf16.mxu0 0
  %1718 = vmatpush1.bf16.msra.mxu0 %v1260
  %1719 = vmatprep.mubr.bf16.mxu0 %v800
  %1720 = vmatmul.mubr.bf16.gmra.mrb[0].mxu0 %v799
  %v1721 = vpop.f32.mrb[0].mxu0
  %v1722 = vadd.f32 %v1433, %v1721
  %v1723 = vpop.f32.mrb[0].mxu0
  %v1724 = vpop.f32.mrb[0].mxu0
  %v1725 = vadd.f32 %v1436, %v1724
  %v1726 = vpop.f32.mrb[0].mxu0
  %1727 = vmatprep.mubr.bf16.mxu0 %v805
  %1728 = vmatmul.mubr.bf16.gmra.mrb[0].mxu0 %v804
  %v1729 = vpop.f32.mrb[0].mxu0
  %v1730 = vadd.f32 %v1441, %v1729
  %v1731 = vpop.f32.mrb[0].mxu0
  %v1732 = vpop.f32.mrb[0].mxu0
  %v1733 = vadd.f32 %v1444, %v1732
  %v1734 = vpop.f32.mrb[0].mxu0
  %1735 = vmatprep.mubr.bf16.mxu0 %v810
  %1736 = vmatmul.mubr.bf16.gmra.mrb[0].mxu0 %v809
  %v1737 = vpop.f32.mrb[0].mxu0
  %v1738 = vadd.f32 %v1449, %v1737
  %v1739 = vpop.f32.mrb[0].mxu0
  %v1740 = vpop.f32.mrb[0].mxu0
  %v1741 = vadd.f32 %v1452, %v1740
  %v1742 = vpop.f32.mrb[0].mxu0
  %1743 = vmatprep.mubr.bf16.mxu0 %v815
  %1744 = vmatmul.mubr.bf16.gmra.mrb[0].mxu0 %v814
  %v1745 = vpop.f32.mrb[0].mxu0
  %v1746 = vadd.f32 %v1457, %v1745
  %v1747 = vpop.f32.mrb[0].mxu0
  %v1748 = vpop.f32.mrb[0].mxu0
  %v1749 = vadd.f32 %v1460, %v1748
  %v1750 = vpop.f32.mrb[0].mxu0
  %1751 = vmatprep.mubr.bf16.mxu0 %v820
  %1752 = vmatmul.mubr.bf16.gmra.mrb[0].mxu0 %v819
  %v1753 = vpop.f32.mrb[0].mxu0
  %v1754 = vadd.f32 %v1465, %v1753
  %v1755 = vpop.f32.mrb[0].mxu0
  %v1756 = vpop.f32.mrb[0].mxu0
  %v1757 = vadd.f32 %v1468, %v1756
  %v1758 = vpop.f32.mrb[0].mxu0
  %1759 = vmatprep.mubr.bf16.mxu0 %v825
  %1760 = vmatmul.mubr.bf16.gmra.mrb[0].mxu0 %v824
  %v1761 = vpop.f32.mrb[0].mxu0
  %v1762 = vadd.f32 %v1473, %v1761
  %v1763 = vpop.f32.mrb[0].mxu0
  %v1764 = vpop.f32.mrb[0].mxu0
  %v1765 = vadd.f32 %v1476, %v1764
  %v1766 = vpop.f32.mrb[0].mxu0
  %1767 = vmatprep.mubr.bf16.mxu0 %v830
  %1768 = vmatmul.mubr.bf16.gmra.mrb[0].mxu0 %v829
  %v1769 = vpop.f32.mrb[0].mxu0
  %v1770 = vadd.f32 %v1481, %v1769
  %v1771 = vpop.f32.mrb[0].mxu0
  %v1772 = vpop.f32.mrb[0].mxu0
  %v1773 = vadd.f32 %v1484, %v1772
  %v1774 = vpop.f32.mrb[0].mxu0
  %1775 = vmatprep.mubr.bf16.mxu0 %v835
  %1776 = vmatmul.mubr.bf16.gmra.mrb[0].mxu0 %v834
  %v1777 = vpop.f32.mrb[0].mxu0
  %v1778 = vadd.f32 %v1489, %v1777
  %v1779 = vpop.f32.mrb[0].mxu0
  %v1780 = vpop.f32.mrb[0].mxu0
  %v1781 = vadd.f32 %v1492, %v1780
  %v1782 = vpop.f32.mrb[0].mxu0
  %1783 = vmatprep.mubr.bf16.mxu0 %v840
  %1784 = vmatmul.mubr.bf16.gmra.mrb[0].mxu0 %v839
  %v1785 = vpop.f32.mrb[0].mxu0
  %v1786 = vadd.f32 %v1497, %v1785
  %v1787 = vpop.f32.mrb[0].mxu0
  %v1788 = vpop.f32.mrb[0].mxu0
  %v1789 = vadd.f32 %v1500, %v1788
  %v1790 = vpop.f32.mrb[0].mxu0
  %1791 = vmatprep.mubr.bf16.mxu0 %v845
  %1792 = vmatmul.mubr.bf16.gmra.mrb[0].mxu0 %v844
  %v1793 = vpop.f32.mrb[0].mxu0
  %v1794 = vadd.f32 %v1505, %v1793
  %v1795 = vpop.f32.mrb[0].mxu0
  %v1796 = vpop.f32.mrb[0].mxu0
  %v1797 = vadd.f32 %v1508, %v1796
  %v1798 = vpop.f32.mrb[0].mxu0
  %1799 = vmatprep.mubr.bf16.mxu0 %v850
  %1800 = vmatmul.mubr.bf16.gmra.mrb[0].mxu0 %v849
  %v1801 = vpop.f32.mrb[0].mxu0
  %v1802 = vadd.f32 %v1513, %v1801
  %v1803 = vpop.f32.mrb[0].mxu0
  %v1804 = vpop.f32.mrb[0].mxu0
  %v1805 = vadd.f32 %v1516, %v1804
  %v1806 = vpop.f32.mrb[0].mxu0
  %1807 = vmatprep.mubr.bf16.mxu0 %v855
  %1808 = vmatmul.mubr.bf16.gmra.mrb[0].mxu0 %v854
  %v1809 = vpop.f32.mrb[0].mxu0
  %v1810 = vadd.f32 %v1521, %v1809
  %v1811 = vpop.f32.mrb[0].mxu0
  %v1812 = vpop.f32.mrb[0].mxu0
  %v1813 = vadd.f32 %v1524, %v1812
  %v1814 = vpop.f32.mrb[0].mxu0
  %1815 = vmatprep.mubr.bf16.mxu0 %v860
  %1816 = vmatmul.mubr.bf16.gmra.mrb[0].mxu0 %v859
  %v1817 = vpop.f32.mrb[0].mxu0
  %v1818 = vadd.f32 %v1529, %v1817
  %v1819 = vpop.f32.mrb[0].mxu0
  %v1820 = vpop.f32.mrb[0].mxu0
  %v1821 = vadd.f32 %v1532, %v1820
  %v1822 = vpop.f32.mrb[0].mxu0
  %1823 = vmatprep.mubr.bf16.mxu0 %v865
  %1824 = vmatmul.mubr.bf16.gmra.mrb[0].mxu0 %v864
  %v1825 = vpop.f32.mrb[0].mxu0
  %v1826 = vadd.f32 %v1537, %v1825
  %v1827 = vpop.f32.mrb[0].mxu0
  %v1828 = vpop.f32.mrb[0].mxu0
  %v1829 = vadd.f32 %v1540, %v1828
  %v1830 = vpop.f32.mrb[0].mxu0
  %1831 = vmatprep.mubr.bf16.mxu0 %v870
  %1832 = vmatmul.mubr.bf16.gmra.mrb[0].mxu0 %v869
  %v1833 = vpop.f32.mrb[0].mxu0
  %v1834 = vadd.f32 %v1545, %v1833
  %v1835 = vpop.f32.mrb[0].mxu0
  %v1836 = vpop.f32.mrb[0].mxu0
  %v1837 = vadd.f32 %v1548, %v1836
  %v1838 = vpop.f32.mrb[0].mxu0
  %1839 = vmatprep.mubr.bf16.mxu0 %v875
  %1840 = vmatmul.mubr.bf16.gmra.mrb[0].mxu0 %v874
  %v1841 = vpop.f32.mrb[0].mxu0
  %v1842 = vadd.f32 %v1553, %v1841
  %v1843 = vpop.f32.mrb[0].mxu0
  %v1844 = vpop.f32.mrb[0].mxu0
  %v1845 = vadd.f32 %v1556, %v1844
  %v1846 = vpop.f32.mrb[0].mxu0
  %1847 = vmatprep.mubr.bf16.mxu0 %v880
  %1848 = vmatmul.mubr.bf16.gmra.mrb[0].mxu0 %v879
  %v1849 = vpop.f32.mrb[0].mxu0
  %v1850 = vadd.f32 %v1561, %v1849
  %v1851 = vpop.f32.mrb[0].mxu0
  %v1852 = vpop.f32.mrb[0].mxu0
  %v1853 = vadd.f32 %v1564, %v1852
  %v1854 = vpop.f32.mrb[0].mxu0
  %1855 = vmatprep.mubr.bf16.mxu0 %v885
  %1856 = vmatmul.mubr.bf16.gmra.mrb[0].mxu0 %v884
  %v1857 = vpop.f32.mrb[0].mxu0
  %v1858 = vadd.f32 %v1569, %v1857
  %v1859 = vpop.f32.mrb[0].mxu0
  %v1860 = vpop.f32.mrb[0].mxu0
  %v1861 = vadd.f32 %v1572, %v1860
  %v1862 = vpop.f32.mrb[0].mxu0
  %1863 = vmatprep.mubr.bf16.mxu0 %v890
  %1864 = vmatmul.mubr.bf16.gmra.mrb[0].mxu0 %v889
  %v1865 = vpop.f32.mrb[0].mxu0
  %v1866 = vadd.f32 %v1577, %v1865
  %v1867 = vpop.f32.mrb[0].mxu0
  %v1868 = vpop.f32.mrb[0].mxu0
  %v1869 = vadd.f32 %v1580, %v1868
  %v1870 = vpop.f32.mrb[0].mxu0
  %1871 = vmatprep.mubr.bf16.mxu0 %v895
  %1872 = vmatmul.mubr.bf16.gmra.mrb[0].mxu0 %v894
  %v1873 = vpop.f32.mrb[0].mxu0
  %v1874 = vadd.f32 %v1585, %v1873
  %v1875 = vpop.f32.mrb[0].mxu0
  %v1876 = vpop.f32.mrb[0].mxu0
  %v1877 = vadd.f32 %v1588, %v1876
  %v1878 = vpop.f32.mrb[0].mxu0
  %1879 = vmatprep.mubr.bf16.mxu0 %v900
  %1880 = vmatmul.mubr.bf16.gmra.mrb[0].mxu0 %v899
  %v1881 = vpop.f32.mrb[0].mxu0
  %v1882 = vadd.f32 %v1593, %v1881
  %v1883 = vpop.f32.mrb[0].mxu0
  %v1884 = vpop.f32.mrb[0].mxu0
  %v1885 = vadd.f32 %v1596, %v1884
  %v1886 = vpop.f32.mrb[0].mxu0
  %1887 = vmatprep.mubr.bf16.mxu0 %v905
  %1888 = vmatmul.mubr.bf16.gmra.mrb[0].mxu0 %v904
  %v1889 = vpop.f32.mrb[0].mxu0
  %v1890 = vadd.f32 %v1601, %v1889
  %v1891 = vpop.f32.mrb[0].mxu0
  %v1892 = vpop.f32.mrb[0].mxu0
  %v1893 = vadd.f32 %v1604, %v1892
  %v1894 = vpop.f32.mrb[0].mxu0
  %1895 = vmatprep.mubr.bf16.mxu0 %v910
  %1896 = vmatmul.mubr.bf16.gmra.mrb[0].mxu0 %v909
  %v1897 = vpop.f32.mrb[0].mxu0
  %v1898 = vadd.f32 %v1609, %v1897
  %v1899 = vpop.f32.mrb[0].mxu0
  %v1900 = vpop.f32.mrb[0].mxu0
  %v1901 = vadd.f32 %v1612, %v1900
  %v1902 = vpop.f32.mrb[0].mxu0
  %1903 = vmatprep.mubr.bf16.mxu0 %v915
  %1904 = vmatmul.mubr.bf16.gmra.mrb[0].mxu0 %v914
  %v1905 = vpop.f32.mrb[0].mxu0
  %v1906 = vadd.f32 %v1617, %v1905
  %v1907 = vpop.f32.mrb[0].mxu0
  %v1908 = vpop.f32.mrb[0].mxu0
  %v1909 = vadd.f32 %v1620, %v1908
  %v1910 = vpop.f32.mrb[0].mxu0
  %1911 = vmatprep.mubr.bf16.mxu0 %v920
  %1912 = vmatmul.mubr.bf16.gmra.mrb[0].mxu0 %v919
  %v1913 = vpop.f32.mrb[0].mxu0
  %v1914 = vadd.f32 %v1625, %v1913
  %v1915 = vpop.f32.mrb[0].mxu0
  %v1916 = vpop.f32.mrb[0].mxu0
  %v1917 = vadd.f32 %v1628, %v1916
  %v1918 = vpop.f32.mrb[0].mxu0
  %1919 = vmatprep.mubr.bf16.mxu0 %v925
  %1920 = vmatmul.mubr.bf16.gmra.mrb[0].mxu0 %v924
  %v1921 = vpop.f32.mrb[0].mxu0
  %v1922 = vadd.f32 %v1633, %v1921
  %v1923 = vpop.f32.mrb[0].mxu0
  %v1924 = vpop.f32.mrb[0].mxu0
  %v1925 = vadd.f32 %v1636, %v1924
  %v1926 = vpop.f32.mrb[0].mxu0
  %1927 = vmatprep.mubr.bf16.mxu0 %v930
  %1928 = vmatmul.mubr.bf16.gmra.mrb[0].mxu0 %v929
  %v1929 = vpop.f32.mrb[0].mxu0
  %v1930 = vadd.f32 %v1641, %v1929
  %v1931 = vpop.f32.mrb[0].mxu0
  %v1932 = vpop.f32.mrb[0].mxu0
  %v1933 = vadd.f32 %v1644, %v1932
  %v1934 = vpop.f32.mrb[0].mxu0
  %1935 = vmatprep.mubr.bf16.mxu0 %v935
  %1936 = vmatmul.mubr.bf16.gmra.mrb[0].mxu0 %v934
  %v1937 = vpop.f32.mrb[0].mxu0
  %v1938 = vadd.f32 %v1649, %v1937
  %v1939 = vpop.f32.mrb[0].mxu0
  %v1940 = vpop.f32.mrb[0].mxu0
  %v1941 = vadd.f32 %v1652, %v1940
  %v1942 = vpop.f32.mrb[0].mxu0
  %1943 = vmatprep.mubr.bf16.mxu0 %v940
  %1944 = vmatmul.mubr.bf16.gmra.mrb[0].mxu0 %v939
  %v1945 = vpop.f32.mrb[0].mxu0
  %v1946 = vadd.f32 %v1657, %v1945
  %v1947 = vpop.f32.mrb[0].mxu0
  %v1948 = vpop.f32.mrb[0].mxu0
  %v1949 = vadd.f32 %v1660, %v1948
  %v1950 = vpop.f32.mrb[0].mxu0
  %1951 = vmatprep.mubr.bf16.mxu0 %v945
  %1952 = vmatmul.mubr.bf16.gmra.mrb[0].mxu0 %v944
  %v1953 = vpop.f32.mrb[0].mxu0
  %v1954 = vadd.f32 %v1665, %v1953
  %v1955 = vpop.f32.mrb[0].mxu0
  %v1956 = vpop.f32.mrb[0].mxu0
  %v1957 = vadd.f32 %v1668, %v1956
  %v1958 = vpop.f32.mrb[0].mxu0
  %1959 = vmatprep.mubr.bf16.mxu0 %v950
  %1960 = vmatmul.mubr.bf16.gmra.mrb[0].mxu0 %v949
  %v1961 = vpop.f32.mrb[0].mxu0
  %v1962 = vadd.f32 %v1673, %v1961
  %v1963 = vpop.f32.mrb[0].mxu0
  %v1964 = vpop.f32.mrb[0].mxu0
  %v1965 = vadd.f32 %v1676, %v1964
  %v1966 = vpop.f32.mrb[0].mxu0
  %1967 = vmatprep.mubr.bf16.mxu0 %v955
  %1968 = vmatmul.mubr.bf16.gmra.mrb[0].mxu0 %v954
  %v1969 = vpop.f32.mrb[0].mxu0
  %v1970 = vadd.f32 %v1681, %v1969
  %v1971 = vpop.f32.mrb[0].mxu0
  %v1972 = vpop.f32.mrb[0].mxu0
  %v1973 = vadd.f32 %v1684, %v1972
  %v1974 = vpop.f32.mrb[0].mxu0
  %1975 = vdwg.mxu0
  %1976 = vmatprep.subr.bf16.mxu0 0
  %1977 = vmatpush1.bf16.msra.mxu0 %v1261
  %1978 = vmatprep.subr.bf16.mxu0 0
  %1979 = vmatpush1.bf16.msra.mxu0 %v1262
  %1980 = vmatprep.subr.bf16.mxu0 0
  %1981 = vmatpush1.bf16.msra.mxu0 %v1263
  %1982 = vmatprep.subr.bf16.mxu0 0
  %1983 = vmatpush1.bf16.msra.mxu0 %v1264
  %1984 = vmatprep.subr.bf16.mxu0 0
  %1985 = vmatpush1.bf16.msra.mxu0 0
  %1986 = vmatprep.subr.bf16.mxu0 0
  %1987 = vmatpush1.bf16.msra.mxu0 0
  %1988 = vmatprep.subr.bf16.mxu0 0
  %1989 = vmatpush1.bf16.msra.mxu0 0
  %1990 = vmatprep.subr.bf16.mxu0 0
  %1991 = vmatpush1.bf16.msra.mxu0 0
  %1992 = vmatprep.subr.bf16.mxu0 0
  %1993 = vmatpush1.bf16.msra.mxu0 0
  %1994 = vmatprep.subr.bf16.mxu0 0
  %1995 = vmatpush1.bf16.msra.mxu0 0
  %1996 = vmatprep.subr.bf16.mxu0 0
  %1997 = vmatpush1.bf16.msra.mxu0 0
  %1998 = vmatprep.subr.bf16.mxu0 0
  %1999 = vmatpush1.bf16.msra.mxu0 0
  %2000 = vmatprep.subr.bf16.mxu0 0
  %2001 = vmatpush1.bf16.msra.mxu0 0
  %2002 = vmatprep.subr.bf16.mxu0 0
  %2003 = vmatpush1.bf16.msra.mxu0 0
  %2004 = vmatprep.subr.bf16.mxu0 0
  %2005 = vmatpush1.bf16.msra.mxu0 0
  %2006 = vmatprep.subr.bf16.mxu0 0
  %2007 = vmatpush1.bf16.msra.mxu0 0
  %2008 = vmatprep.mubr.bf16.mxu0 0
  %2009 = vmatmul.mubr.bf16.gmra.mrb[0].mxu0 %v1303
  %v2010 = vpop.f32.mrb[0].mxu0
  %v2011 = vadd.f32 %v1722, %v2010
  %v2012 = vpop.f32.mrb[0].mxu0
  %v2013 = vpop.f32.mrb[0].mxu0
  %v2014 = vadd.f32 %v1725, %v2013
  %v2015 = vpop.f32.mrb[0].mxu0
  %2016 = vmatprep.mubr.bf16.mxu0 0
  %2017 = vmatmul.mubr.bf16.gmra.mrb[0].mxu0 %v1306
  %v2018 = vpop.f32.mrb[0].mxu0
  %v2019 = vadd.f32 %v1730, %v2018
  %v2020 = vpop.f32.mrb[0].mxu0
  %v2021 = vpop.f32.mrb[0].mxu0
  %v2022 = vadd.f32 %v1733, %v2021
  %v2023 = vpop.f32.mrb[0].mxu0
  %2024 = vmatprep.mubr.bf16.mxu0 0
  %2025 = vmatmul.mubr.bf16.gmra.mrb[0].mxu0 %v1309
  %v2026 = vpop.f32.mrb[0].mxu0
  %v2027 = vadd.f32 %v1738, %v2026
  %v2028 = vpop.f32.mrb[0].mxu0
  %v2029 = vpop.f32.mrb[0].mxu0
  %v2030 = vadd.f32 %v1741, %v2029
  %v2031 = vpop.f32.mrb[0].mxu0
  %2032 = vmatprep.mubr.bf16.mxu0 0
  %2033 = vmatmul.mubr.bf16.gmra.mrb[0].mxu0 %v1312
  %v2034 = vpop.f32.mrb[0].mxu0
  %v2035 = vadd.f32 %v1746, %v2034
  %v2036 = vpop.f32.mrb[0].mxu0
  %v2037 = vpop.f32.mrb[0].mxu0
  %v2038 = vadd.f32 %v1749, %v2037
  %v2039 = vpop.f32.mrb[0].mxu0
  %2040 = vmatprep.mubr.bf16.mxu0 0
  %2041 = vmatmul.mubr.bf16.gmra.mrb[0].mxu0 %v1315
  %v2042 = vpop.f32.mrb[0].mxu0
  %v2043 = vadd.f32 %v1754, %v2042
  %v2044 = vpop.f32.mrb[0].mxu0
  %v2045 = vpop.f32.mrb[0].mxu0
  %v2046 = vadd.f32 %v1757, %v2045
  %v2047 = vpop.f32.mrb[0].mxu0
  %2048 = vmatprep.mubr.bf16.mxu0 0
  %2049 = vmatmul.mubr.bf16.gmra.mrb[0].mxu0 %v1318
  %v2050 = vpop.f32.mrb[0].mxu0
  %v2051 = vadd.f32 %v1762, %v2050
  %v2052 = vpop.f32.mrb[0].mxu0
  %v2053 = vpop.f32.mrb[0].mxu0
  %v2054 = vadd.f32 %v1765, %v2053
  %v2055 = vpop.f32.mrb[0].mxu0
  %2056 = vmatprep.mubr.bf16.mxu0 0
  %2057 = vmatmul.mubr.bf16.gmra.mrb[0].mxu0 %v1321
  %v2058 = vpop.f32.mrb[0].mxu0
  %v2059 = vadd.f32 %v1770, %v2058
  %v2060 = vpop.f32.mrb[0].mxu0
  %v2061 = vpop.f32.mrb[0].mxu0
  %v2062 = vadd.f32 %v1773, %v2061
  %v2063 = vpop.f32.mrb[0].mxu0
  %2064 = vmatprep.mubr.bf16.mxu0 0
  %2065 = vmatmul.mubr.bf16.gmra.mrb[0].mxu0 %v1324
  %v2066 = vpop.f32.mrb[0].mxu0
  %v2067 = vadd.f32 %v1778, %v2066
  %v2068 = vpop.f32.mrb[0].mxu0
  %v2069 = vpop.f32.mrb[0].mxu0
  %v2070 = vadd.f32 %v1781, %v2069
  %v2071 = vpop.f32.mrb[0].mxu0
  %2072 = vmatprep.mubr.bf16.mxu0 0
  %2073 = vmatmul.mubr.bf16.gmra.mrb[0].mxu0 %v1327
  %v2074 = vpop.f32.mrb[0].mxu0
  %v2075 = vadd.f32 %v1786, %v2074
  %v2076 = vpop.f32.mrb[0].mxu0
  %v2077 = vpop.f32.mrb[0].mxu0
  %v2078 = vadd.f32 %v1789, %v2077
  %v2079 = vpop.f32.mrb[0].mxu0
  %2080 = vmatprep.mubr.bf16.mxu0 0
  %2081 = vmatmul.mubr.bf16.gmra.mrb[0].mxu0 %v1330
  %v2082 = vpop.f32.mrb[0].mxu0
  %v2083 = vadd.f32 %v1794, %v2082
  %v2084 = vpop.f32.mrb[0].mxu0
  %v2085 = vpop.f32.mrb[0].mxu0
  %v2086 = vadd.f32 %v1797, %v2085
  %v2087 = vpop.f32.mrb[0].mxu0
  %2088 = vmatprep.mubr.bf16.mxu0 0
  %2089 = vmatmul.mubr.bf16.gmra.mrb[0].mxu0 %v1333
  %v2090 = vpop.f32.mrb[0].mxu0
  %v2091 = vadd.f32 %v1802, %v2090
  %v2092 = vpop.f32.mrb[0].mxu0
  %v2093 = vpop.f32.mrb[0].mxu0
  %v2094 = vadd.f32 %v1805, %v2093
  %v2095 = vpop.f32.mrb[0].mxu0
  %2096 = vmatprep.mubr.bf16.mxu0 0
  %2097 = vmatmul.mubr.bf16.gmra.mrb[0].mxu0 %v1336
  %v2098 = vpop.f32.mrb[0].mxu0
  %v2099 = vadd.f32 %v1810, %v2098
  %v2100 = vpop.f32.mrb[0].mxu0
  %v2101 = vpop.f32.mrb[0].mxu0
  %v2102 = vadd.f32 %v1813, %v2101
  %v2103 = vpop.f32.mrb[0].mxu0
  %2104 = vmatprep.mubr.bf16.mxu0 0
  %2105 = vmatmul.mubr.bf16.gmra.mrb[0].mxu0 %v1339
  %v2106 = vpop.f32.mrb[0].mxu0
  %v2107 = vadd.f32 %v1818, %v2106
  %v2108 = vpop.f32.mrb[0].mxu0
  %v2109 = vpop.f32.mrb[0].mxu0
  %v2110 = vadd.f32 %v1821, %v2109
  %v2111 = vpop.f32.mrb[0].mxu0
  %2112 = vmatprep.mubr.bf16.mxu0 0
  %2113 = vmatmul.mubr.bf16.gmra.mrb[0].mxu0 %v1342
  %v2114 = vpop.f32.mrb[0].mxu0
  %v2115 = vadd.f32 %v1826, %v2114
  %v2116 = vpop.f32.mrb[0].mxu0
  %v2117 = vpop.f32.mrb[0].mxu0
  %v2118 = vadd.f32 %v1829, %v2117
  %v2119 = vpop.f32.mrb[0].mxu0
  %2120 = vmatprep.mubr.bf16.mxu0 0
  %2121 = vmatmul.mubr.bf16.gmra.mrb[0].mxu0 %v1345
  %v2122 = vpop.f32.mrb[0].mxu0
  %v2123 = vadd.f32 %v1834, %v2122
  %v2124 = vpop.f32.mrb[0].mxu0
  %v2125 = vpop.f32.mrb[0].mxu0
  %v2126 = vadd.f32 %v1837, %v2125
  %v2127 = vpop.f32.mrb[0].mxu0
  %2128 = vmatprep.mubr.bf16.mxu0 0
  %2129 = vmatmul.mubr.bf16.gmra.mrb[0].mxu0 %v1348
  %v2130 = vpop.f32.mrb[0].mxu0
  %v2131 = vadd.f32 %v1842, %v2130
  %v2132 = vpop.f32.mrb[0].mxu0
  %v2133 = vpop.f32.mrb[0].mxu0
  %v2134 = vadd.f32 %v1845, %v2133
  %v2135 = vpop.f32.mrb[0].mxu0
  %2136 = vmatprep.mubr.bf16.mxu0 0
  %2137 = vmatmul.mubr.bf16.gmra.mrb[0].mxu0 %v1351
  %v2138 = vpop.f32.mrb[0].mxu0
  %v2139 = vadd.f32 %v1850, %v2138
  %v2140 = vpop.f32.mrb[0].mxu0
  %v2141 = vpop.f32.mrb[0].mxu0
  %v2142 = vadd.f32 %v1853, %v2141
  %v2143 = vpop.f32.mrb[0].mxu0
  %2144 = vmatprep.mubr.bf16.mxu0 0
  %2145 = vmatmul.mubr.bf16.gmra.mrb[0].mxu0 %v1354
  %v2146 = vpop.f32.mrb[0].mxu0
  %v2147 = vadd.f32 %v1858, %v2146
  %v2148 = vpop.f32.mrb[0].mxu0
  %v2149 = vpop.f32.mrb[0].mxu0
  %v2150 = vadd.f32 %v1861, %v2149
  %v2151 = vpop.f32.mrb[0].mxu0
  %2152 = vmatprep.mubr.bf16.mxu0 0
  %2153 = vmatmul.mubr.bf16.gmra.mrb[0].mxu0 %v1357
  %v2154 = vpop.f32.mrb[0].mxu0
  %v2155 = vadd.f32 %v1866, %v2154
  %v2156 = vpop.f32.mrb[0].mxu0
  %v2157 = vpop.f32.mrb[0].mxu0
  %v2158 = vadd.f32 %v1869, %v2157
  %v2159 = vpop.f32.mrb[0].mxu0
  %2160 = vmatprep.mubr.bf16.mxu0 0
  %2161 = vmatmul.mubr.bf16.gmra.mrb[0].mxu0 %v1360
  %v2162 = vpop.f32.mrb[0].mxu0
  %v2163 = vadd.f32 %v1874, %v2162
  %v2164 = vpop.f32.mrb[0].mxu0
  %v2165 = vpop.f32.mrb[0].mxu0
  %v2166 = vadd.f32 %v1877, %v2165
  %v2167 = vpop.f32.mrb[0].mxu0
  %2168 = vmatprep.mubr.bf16.mxu0 0
  %2169 = vmatmul.mubr.bf16.gmra.mrb[0].mxu0 %v1363
  %v2170 = vpop.f32.mrb[0].mxu0
  %v2171 = vadd.f32 %v1882, %v2170
  %v2172 = vpop.f32.mrb[0].mxu0
  %v2173 = vpop.f32.mrb[0].mxu0
  %v2174 = vadd.f32 %v1885, %v2173
  %v2175 = vpop.f32.mrb[0].mxu0
  %2176 = vmatprep.mubr.bf16.mxu0 0
  %2177 = vmatmul.mubr.bf16.gmra.mrb[0].mxu0 %v1366
  %v2178 = vpop.f32.mrb[0].mxu0
  %v2179 = vadd.f32 %v1890, %v2178
  %v2180 = vpop.f32.mrb[0].mxu0
  %v2181 = vpop.f32.mrb[0].mxu0
  %v2182 = vadd.f32 %v1893, %v2181
  %v2183 = vpop.f32.mrb[0].mxu0
  %2184 = vmatprep.mubr.bf16.mxu0 0
  %2185 = vmatmul.mubr.bf16.gmra.mrb[0].mxu0 %v1369
  %v2186 = vpop.f32.mrb[0].mxu0
  %v2187 = vadd.f32 %v1898, %v2186
  %v2188 = vpop.f32.mrb[0].mxu0
  %v2189 = vpop.f32.mrb[0].mxu0
  %v2190 = vadd.f32 %v1901, %v2189
  %v2191 = vpop.f32.mrb[0].mxu0
  %2192 = vmatprep.mubr.bf16.mxu0 0
  %2193 = vmatmul.mubr.bf16.gmra.mrb[0].mxu0 %v1372
  %v2194 = vpop.f32.mrb[0].mxu0
  %v2195 = vadd.f32 %v1906, %v2194
  %v2196 = vpop.f32.mrb[0].mxu0
  %v2197 = vpop.f32.mrb[0].mxu0
  %v2198 = vadd.f32 %v1909, %v2197
  %v2199 = vpop.f32.mrb[0].mxu0
  %2200 = vmatprep.mubr.bf16.mxu0 0
  %2201 = vmatmul.mubr.bf16.gmra.mrb[0].mxu0 %v1375
  %v2202 = vpop.f32.mrb[0].mxu0
  %v2203 = vadd.f32 %v1914, %v2202
  %v2204 = vpop.f32.mrb[0].mxu0
  %v2205 = vpop.f32.mrb[0].mxu0
  %v2206 = vadd.f32 %v1917, %v2205
  %v2207 = vpop.f32.mrb[0].mxu0
  %2208 = vmatprep.mubr.bf16.mxu0 0
  %2209 = vmatmul.mubr.bf16.gmra.mrb[0].mxu0 %v1378
  %v2210 = vpop.f32.mrb[0].mxu0
  %v2211 = vadd.f32 %v1922, %v2210
  %v2212 = vpop.f32.mrb[0].mxu0
  %v2213 = vpop.f32.mrb[0].mxu0
  %v2214 = vadd.f32 %v1925, %v2213
  %v2215 = vpop.f32.mrb[0].mxu0
  %2216 = vmatprep.mubr.bf16.mxu0 0
  %2217 = vmatmul.mubr.bf16.gmra.mrb[0].mxu0 %v1381
  %v2218 = vpop.f32.mrb[0].mxu0
  %v2219 = vadd.f32 %v1930, %v2218
  %v2220 = vpop.f32.mrb[0].mxu0
  %v2221 = vpop.f32.mrb[0].mxu0
  %v2222 = vadd.f32 %v1933, %v2221
  %v2223 = vpop.f32.mrb[0].mxu0
  %2224 = vmatprep.mubr.bf16.mxu0 0
  %2225 = vmatmul.mubr.bf16.gmra.mrb[0].mxu0 %v1384
  %v2226 = vpop.f32.mrb[0].mxu0
  %v2227 = vadd.f32 %v1938, %v2226
  %v2228 = vpop.f32.mrb[0].mxu0
  %v2229 = vpop.f32.mrb[0].mxu0
  %v2230 = vadd.f32 %v1941, %v2229
  %v2231 = vpop.f32.mrb[0].mxu0
  %2232 = vmatprep.mubr.bf16.mxu0 0
  %2233 = vmatmul.mubr.bf16.gmra.mrb[0].mxu0 %v1387
  %v2234 = vpop.f32.mrb[0].mxu0
  %v2235 = vadd.f32 %v1946, %v2234
  %v2236 = vpop.f32.mrb[0].mxu0
  %v2237 = vpop.f32.mrb[0].mxu0
  %v2238 = vadd.f32 %v1949, %v2237
  %v2239 = vpop.f32.mrb[0].mxu0
  %2240 = vmatprep.mubr.bf16.mxu0 0
  %2241 = vmatmul.mubr.bf16.gmra.mrb[0].mxu0 %v1390
  %v2242 = vpop.f32.mrb[0].mxu0
  %v2243 = vadd.f32 %v1954, %v2242
  %v2244 = vpop.f32.mrb[0].mxu0
  %v2245 = vpop.f32.mrb[0].mxu0
  %v2246 = vadd.f32 %v1957, %v2245
  %v2247 = vpop.f32.mrb[0].mxu0
  %2248 = vmatprep.mubr.bf16.mxu0 0
  %2249 = vmatmul.mubr.bf16.gmra.mrb[0].mxu0 %v1393
  %v2250 = vpop.f32.mrb[0].mxu0
  %v2251 = vadd.f32 %v1962, %v2250
  %v2252 = vpop.f32.mrb[0].mxu0
  %v2253 = vpop.f32.mrb[0].mxu0
  %v2254 = vadd.f32 %v1965, %v2253
  %v2255 = vpop.f32.mrb[0].mxu0
  %2256 = vmatprep.mubr.bf16.mxu0 0
  %2257 = vmatmul.mubr.bf16.gmra.mrb[0].mxu0 %v1396
  %v2258 = vpop.f32.mrb[0].mxu0
  %v2259 = vadd.f32 %v1970, %v2258
  %v2260 = vpop.f32.mrb[0].mxu0
  %v2261 = vpop.f32.mrb[0].mxu0
  %v2262 = vadd.f32 %v1973, %v2261
  %v2263 = vpop.f32.mrb[0].mxu0
  %2264 = vdwg.mxu0
  %v2265 = vld [vmem:[%s2] sm:$0xff]
  %v2266 = vld [vmem:[%s2 + $0x8] sm:$0xff]
  %v2267 = vld [vmem:[%s2 + $0x10] sm:$0xff]
  %v2268 = vld [vmem:[%s2 + $0x18] sm:$0xff]
  %v2269 = vld [vmem:[%s2 + $0x20] sm:$0xff]
  %v2270 = vld [vmem:[%s2 + $0x28] sm:$0xff]
  %v2271 = vld [vmem:[%s2 + $0x30] sm:$0xff]
  %v2272 = vld [vmem:[%s2 + $0x38] sm:$0xff]
  %v2273 = vld [vmem:[%s2 + $0x40] sm:$0xff]
  %v2274 = vld [vmem:[%s2 + $0x48] sm:$0xff]
  %v2275 = vld [vmem:[%s2 + $0x50] sm:$0xff]
  %v2276 = vld [vmem:[%s2 + $0x58] sm:$0xff]
  %v2277 = vld [vmem:[%s2 + $0x60] sm:$0xff]
  %v2278 = vld [vmem:[%s2 + $0x68] sm:$0xff]
  %v2279 = vld [vmem:[%s2 + $0x70] sm:$0xff]
  %v2280 = vld [vmem:[%s2 + $0x78] sm:$0xff]
  %2281 = vmatprep.subr.mxu0 0.0
  %2282 = vmatpush1.msra.mxu0 %v2265
  %2283 = vmatprep.subr.mxu0 0.0
  %2284 = vmatpush1.msra.mxu0 %v2266
  %2285 = vmatprep.subr.mxu0 0.0
  %2286 = vmatpush1.msra.mxu0 %v2267
  %2287 = vmatprep.subr.mxu0 0.0
  %2288 = vmatpush1.msra.mxu0 %v2268
  %2289 = vmatprep.subr.mxu0 0.0
  %2290 = vmatpush1.msra.mxu0 %v2269
  %2291 = vmatprep.subr.mxu0 0.0
  %2292 = vmatpush1.msra.mxu0 %v2270
  %2293 = vmatprep.subr.mxu0 0.0
  %2294 = vmatpush1.msra.mxu0 %v2271
  %2295 = vmatprep.subr.mxu0 0.0
  %2296 = vmatpush1.msra.mxu0 %v2272
  %2297 = vmatprep.subr.mxu0 0.0
  %2298 = vmatpush1.msra.mxu0 %v2273
  %2299 = vmatprep.subr.mxu0 0.0
  %2300 = vmatpush1.msra.mxu0 %v2274
  %2301 = vmatprep.subr.mxu0 0.0
  %2302 = vmatpush1.msra.mxu0 %v2275
  %2303 = vmatprep.subr.mxu0 0.0
  %2304 = vmatpush1.msra.mxu0 %v2276
  %2305 = vmatprep.subr.mxu0 0.0
  %2306 = vmatpush1.msra.mxu0 %v2277
  %2307 = vmatprep.subr.mxu0 0.0
  %2308 = vmatpush1.msra.mxu0 %v2278
  %2309 = vmatprep.subr.mxu0 0.0
  %2310 = vmatpush1.msra.mxu0 %v2279
  %2311 = vmatprep.subr.mxu0 0.0
  %2312 = vmatpush1.msra.mxu0 %v2280
  %2313 = vmatprep.subr.mxu0 0.0
  %2314 = vmatpush1.msra.mxu0 0.0
  %2315 = vmatprep.subr.mxu0 0.0
  %2316 = vmatpush1.msra.mxu0 0.0
  %2317 = vmatprep.subr.mxu0 0.0
  %2318 = vmatpush1.msra.mxu0 0.0
  %2319 = vmatprep.subr.mxu0 0.0
  %2320 = vmatpush1.msra.mxu0 0.0
  %2321 = vmatprep.subr.mxu0 0.0
  %2322 = vmatpush1.msra.mxu0 0.0
  %2323 = vmatprep.subr.mxu0 0.0
  %2324 = vmatpush1.msra.mxu0 0.0
  %2325 = vmatprep.subr.mxu0 0.0
  %2326 = vmatpush1.msra.mxu0 0.0
  %2327 = vmatprep.subr.mxu0 0.0
  %2328 = vmatpush1.msra.mxu0 0.0
  %2329 = vmatprep.subr.mxu0 0.0
  %2330 = vmatpush1.msra.mxu0 0.0
  %2331 = vmatprep.subr.mxu0 0.0
  %2332 = vmatpush1.msra.mxu0 0.0
  %2333 = vmatprep.subr.mxu0 0.0
  %2334 = vmatpush1.msra.mxu0 0.0
  %2335 = vmatprep.subr.mxu0 0.0
  %2336 = vmatpush1.msra.mxu0 0.0
  %2337 = vmatprep.subr.mxu0 0.0
  %2338 = vmatpush1.msra.mxu0 0.0
  %2339 = vmatprep.subr.mxu0 0.0
  %2340 = vmatpush1.msra.mxu0 0.0
  %2341 = vmatprep.subr.mxu0 0.0
  %2342 = vmatpush1.msra.mxu0 0.0
  %2343 = vmatprep.subr.mxu0 0.0
  %2344 = vmatpush1.msra.mxu0 0.0
  %2345 = vmatprep.mubr.f32.mxu0 0.0
  %2346 = vmatmul.mubr.f32.gmra.mrb[0].mxu0 %v2011
  %v2347 = vpop.f32.mrb[0].mxu0
  %v2348 = vadd.f32 0.0, %v2347
  %v2349 = vpop.f32.mrb[0].mxu0
  %2350 = vmatprep.mubr.f32.mxu0 0.0
  %2351 = vmatmul.mubr.f32.gmra.mrb[0].mxu0 %v2014
  %v2352 = vpop.f32.mrb[0].mxu0
  %v2353 = vadd.f32 0.0, %v2352
  %v2354 = vpop.f32.mrb[0].mxu0
  %2355 = vmatprep.mubr.f32.mxu0 0.0
  %2356 = vmatmul.mubr.f32.gmra.mrb[0].mxu0 %v2019
  %v2357 = vpop.f32.mrb[0].mxu0
  %v2358 = vadd.f32 0.0, %v2357
  %v2359 = vpop.f32.mrb[0].mxu0
  %2360 = vmatprep.mubr.f32.mxu0 0.0
  %2361 = vmatmul.mubr.f32.gmra.mrb[0].mxu0 %v2022
  %v2362 = vpop.f32.mrb[0].mxu0
  %v2363 = vadd.f32 0.0, %v2362
  %v2364 = vpop.f32.mrb[0].mxu0
  %2365 = vmatprep.mubr.f32.mxu0 0.0
  %2366 = vmatmul.mubr.f32.gmra.mrb[0].mxu0 %v2027
  %v2367 = vpop.f32.mrb[0].mxu0
  %v2368 = vadd.f32 0.0, %v2367
  %v2369 = vpop.f32.mrb[0].mxu0
  %2370 = vmatprep.mubr.f32.mxu0 0.0
  %2371 = vmatmul.mubr.f32.gmra.mrb[0].mxu0 %v2030
  %v2372 = vpop.f32.mrb[0].mxu0
  %v2373 = vadd.f32 0.0, %v2372
  %v2374 = vpop.f32.mrb[0].mxu0
  %2375 = vmatprep.mubr.f32.mxu0 0.0
  %2376 = vmatmul.mubr.f32.gmra.mrb[0].mxu0 %v2035
  %v2377 = vpop.f32.mrb[0].mxu0
  %v2378 = vadd.f32 0.0, %v2377
  %v2379 = vpop.f32.mrb[0].mxu0
  %2380 = vmatprep.mubr.f32.mxu0 0.0
  %2381 = vmatmul.mubr.f32.gmra.mrb[0].mxu0 %v2038
  %v2382 = vpop.f32.mrb[0].mxu0
  %v2383 = vadd.f32 0.0, %v2382
  %v2384 = vpop.f32.mrb[0].mxu0
  %2385 = vmatprep.mubr.f32.mxu0 0.0
  %2386 = vmatmul.mubr.f32.gmra.mrb[0].mxu0 %v2043
  %v2387 = vpop.f32.mrb[0].mxu0
  %v2388 = vadd.f32 0.0, %v2387
  %v2389 = vpop.f32.mrb[0].mxu0
  %2390 = vmatprep.mubr.f32.mxu0 0.0
  %2391 = vmatmul.mubr.f32.gmra.mrb[0].mxu0 %v2046
  %v2392 = vpop.f32.mrb[0].mxu0
  %v2393 = vadd.f32 0.0, %v2392
  %v2394 = vpop.f32.mrb[0].mxu0
  %2395 = vmatprep.mubr.f32.mxu0 0.0
  %2396 = vmatmul.mubr.f32.gmra.mrb[0].mxu0 %v2051
  %v2397 = vpop.f32.mrb[0].mxu0
  %v2398 = vadd.f32 0.0, %v2397
  %v2399 = vpop.f32.mrb[0].mxu0
  %2400 = vmatprep.mubr.f32.mxu0 0.0
  %2401 = vmatmul.mubr.f32.gmra.mrb[0].mxu0 %v2054
  %v2402 = vpop.f32.mrb[0].mxu0
  %v2403 = vadd.f32 0.0, %v2402
  %v2404 = vpop.f32.mrb[0].mxu0
  %2405 = vmatprep.mubr.f32.mxu0 0.0
  %2406 = vmatmul.mubr.f32.gmra.mrb[0].mxu0 %v2059
  %v2407 = vpop.f32.mrb[0].mxu0
  %v2408 = vadd.f32 0.0, %v2407
  %v2409 = vpop.f32.mrb[0].mxu0
  %2410 = vmatprep.mubr.f32.mxu0 0.0
  %2411 = vmatmul.mubr.f32.gmra.mrb[0].mxu0 %v2062
  %v2412 = vpop.f32.mrb[0].mxu0
  %v2413 = vadd.f32 0.0, %v2412
  %v2414 = vpop.f32.mrb[0].mxu0
  %2415 = vmatprep.mubr.f32.mxu0 0.0
  %2416 = vmatmul.mubr.f32.gmra.mrb[0].mxu0 %v2067
  %v2417 = vpop.f32.mrb[0].mxu0
  %v2418 = vadd.f32 0.0, %v2417
  %v2419 = vpop.f32.mrb[0].mxu0
  %2420 = vmatprep.mubr.f32.mxu0 0.0
  %2421 = vmatmul.mubr.f32.gmra.mrb[0].mxu0 %v2070
  %v2422 = vpop.f32.mrb[0].mxu0
  %v2423 = vadd.f32 0.0, %v2422
  %v2424 = vpop.f32.mrb[0].mxu0
  %2425 = vmatprep.mubr.f32.mxu0 0.0
  %2426 = vmatmul.mubr.f32.gmra.mrb[0].mxu0 %v2075
  %v2427 = vpop.f32.mrb[0].mxu0
  %v2428 = vadd.f32 0.0, %v2427
  %v2429 = vpop.f32.mrb[0].mxu0
  %2430 = vmatprep.mubr.f32.mxu0 0.0
  %2431 = vmatmul.mubr.f32.gmra.mrb[0].mxu0 %v2078
  %v2432 = vpop.f32.mrb[0].mxu0
  %v2433 = vadd.f32 0.0, %v2432
  %v2434 = vpop.f32.mrb[0].mxu0
  %2435 = vmatprep.mubr.f32.mxu0 0.0
  %2436 = vmatmul.mubr.f32.gmra.mrb[0].mxu0 %v2083
  %v2437 = vpop.f32.mrb[0].mxu0
  %v2438 = vadd.f32 0.0, %v2437
  %v2439 = vpop.f32.mrb[0].mxu0
  %2440 = vmatprep.mubr.f32.mxu0 0.0
  %2441 = vmatmul.mubr.f32.gmra.mrb[0].mxu0 %v2086
  %v2442 = vpop.f32.mrb[0].mxu0
  %v2443 = vadd.f32 0.0, %v2442
  %v2444 = vpop.f32.mrb[0].mxu0
  %2445 = vmatprep.mubr.f32.mxu0 0.0
  %2446 = vmatmul.mubr.f32.gmra.mrb[0].mxu0 %v2091
  %v2447 = vpop.f32.mrb[0].mxu0
  %v2448 = vadd.f32 0.0, %v2447
  %v2449 = vpop.f32.mrb[0].mxu0
  %2450 = vmatprep.mubr.f32.mxu0 0.0
  %2451 = vmatmul.mubr.f32.gmra.mrb[0].mxu0 %v2094
  %v2452 = vpop.f32.mrb[0].mxu0
  %v2453 = vadd.f32 0.0, %v2452
  %v2454 = vpop.f32.mrb[0].mxu0
  %2455 = vmatprep.mubr.f32.mxu0 0.0
  %2456 = vmatmul.mubr.f32.gmra.mrb[0].mxu0 %v2099
  %v2457 = vpop.f32.mrb[0].mxu0
  %v2458 = vadd.f32 0.0, %v2457
  %v2459 = vpop.f32.mrb[0].mxu0
  %2460 = vmatprep.mubr.f32.mxu0 0.0
  %2461 = vmatmul.mubr.f32.gmra.mrb[0].mxu0 %v2102
  %v2462 = vpop.f32.mrb[0].mxu0
  %v2463 = vadd.f32 0.0, %v2462
  %v2464 = vpop.f32.mrb[0].mxu0
  %2465 = vmatprep.mubr.f32.mxu0 0.0
  %2466 = vmatmul.mubr.f32.gmra.mrb[0].mxu0 %v2107
  %v2467 = vpop.f32.mrb[0].mxu0
  %v2468 = vadd.f32 0.0, %v2467
  %v2469 = vpop.f32.mrb[0].mxu0
  %2470 = vmatprep.mubr.f32.mxu0 0.0
  %2471 = vmatmul.mubr.f32.gmra.mrb[0].mxu0 %v2110
  %v2472 = vpop.f32.mrb[0].mxu0
  %v2473 = vadd.f32 0.0, %v2472
  %v2474 = vpop.f32.mrb[0].mxu0
  %2475 = vmatprep.mubr.f32.mxu0 0.0
  %2476 = vmatmul.mubr.f32.gmra.mrb[0].mxu0 %v2115
  %v2477 = vpop.f32.mrb[0].mxu0
  %v2478 = vadd.f32 0.0, %v2477
  %v2479 = vpop.f32.mrb[0].mxu0
  %2480 = vmatprep.mubr.f32.mxu0 0.0
  %2481 = vmatmul.mubr.f32.gmra.mrb[0].mxu0 %v2118
  %v2482 = vpop.f32.mrb[0].mxu0
  %v2483 = vadd.f32 0.0, %v2482
  %v2484 = vpop.f32.mrb[0].mxu0
  %2485 = vmatprep.mubr.f32.mxu0 0.0
  %2486 = vmatmul.mubr.f32.gmra.mrb[0].mxu0 %v2123
  %v2487 = vpop.f32.mrb[0].mxu0
  %v2488 = vadd.f32 0.0, %v2487
  %v2489 = vpop.f32.mrb[0].mxu0
  %2490 = vmatprep.mubr.f32.mxu0 0.0
  %2491 = vmatmul.mubr.f32.gmra.mrb[0].mxu0 %v2126
  %v2492 = vpop.f32.mrb[0].mxu0
  %v2493 = vadd.f32 0.0, %v2492
  %v2494 = vpop.f32.mrb[0].mxu0
  %2495 = vmatprep.mubr.f32.mxu0 0.0
  %2496 = vmatmul.mubr.f32.gmra.mrb[0].mxu0 %v2131
  %v2497 = vpop.f32.mrb[0].mxu0
  %v2498 = vadd.f32 0.0, %v2497
  %v2499 = vpop.f32.mrb[0].mxu0
  %2500 = vmatprep.mubr.f32.mxu0 0.0
  %2501 = vmatmul.mubr.f32.gmra.mrb[0].mxu0 %v2134
  %v2502 = vpop.f32.mrb[0].mxu0
  %v2503 = vadd.f32 0.0, %v2502
  %v2504 = vpop.f32.mrb[0].mxu0
  %2505 = vmatprep.mubr.f32.mxu0 0.0
  %2506 = vmatmul.mubr.f32.gmra.mrb[0].mxu0 %v2139
  %v2507 = vpop.f32.mrb[0].mxu0
  %v2508 = vadd.f32 0.0, %v2507
  %v2509 = vpop.f32.mrb[0].mxu0
  %2510 = vmatprep.mubr.f32.mxu0 0.0
  %2511 = vmatmul.mubr.f32.gmra.mrb[0].mxu0 %v2142
  %v2512 = vpop.f32.mrb[0].mxu0
  %v2513 = vadd.f32 0.0, %v2512
  %v2514 = vpop.f32.mrb[0].mxu0
  %2515 = vmatprep.mubr.f32.mxu0 0.0
  %2516 = vmatmul.mubr.f32.gmra.mrb[0].mxu0 %v2147
  %v2517 = vpop.f32.mrb[0].mxu0
  %v2518 = vadd.f32 0.0, %v2517
  %v2519 = vpop.f32.mrb[0].mxu0
  %2520 = vmatprep.mubr.f32.mxu0 0.0
  %2521 = vmatmul.mubr.f32.gmra.mrb[0].mxu0 %v2150
  %v2522 = vpop.f32.mrb[0].mxu0
  %v2523 = vadd.f32 0.0, %v2522
  %v2524 = vpop.f32.mrb[0].mxu0
  %2525 = vmatprep.mubr.f32.mxu0 0.0
  %2526 = vmatmul.mubr.f32.gmra.mrb[0].mxu0 %v2155
  %v2527 = vpop.f32.mrb[0].mxu0
  %v2528 = vadd.f32 0.0, %v2527
  %v2529 = vpop.f32.mrb[0].mxu0
  %2530 = vmatprep.mubr.f32.mxu0 0.0
  %2531 = vmatmul.mubr.f32.gmra.mrb[0].mxu0 %v2158
  %v2532 = vpop.f32.mrb[0].mxu0
  %v2533 = vadd.f32 0.0, %v2532
  %v2534 = vpop.f32.mrb[0].mxu0
  %2535 = vmatprep.mubr.f32.mxu0 0.0
  %2536 = vmatmul.mubr.f32.gmra.mrb[0].mxu0 %v2163
  %v2537 = vpop.f32.mrb[0].mxu0
  %v2538 = vadd.f32 0.0, %v2537
  %v2539 = vpop.f32.mrb[0].mxu0
  %2540 = vmatprep.mubr.f32.mxu0 0.0
  %2541 = vmatmul.mubr.f32.gmra.mrb[0].mxu0 %v2166
  %v2542 = vpop.f32.mrb[0].mxu0
  %v2543 = vadd.f32 0.0, %v2542
  %v2544 = vpop.f32.mrb[0].mxu0
  %2545 = vmatprep.mubr.f32.mxu0 0.0
  %2546 = vmatmul.mubr.f32.gmra.mrb[0].mxu0 %v2171
  %v2547 = vpop.f32.mrb[0].mxu0
  %v2548 = vadd.f32 0.0, %v2547
  %v2549 = vpop.f32.mrb[0].mxu0
  %2550 = vmatprep.mubr.f32.mxu0 0.0
  %2551 = vmatmul.mubr.f32.gmra.mrb[0].mxu0 %v2174
  %v2552 = vpop.f32.mrb[0].mxu0
  %v2553 = vadd.f32 0.0, %v2552
  %v2554 = vpop.f32.mrb[0].mxu0
  %2555 = vmatprep.mubr.f32.mxu0 0.0
  %2556 = vmatmul.mubr.f32.gmra.mrb[0].mxu0 %v2179
  %v2557 = vpop.f32.mrb[0].mxu0
  %v2558 = vadd.f32 0.0, %v2557
  %v2559 = vpop.f32.mrb[0].mxu0
  %2560 = vmatprep.mubr.f32.mxu0 0.0
  %2561 = vmatmul.mubr.f32.gmra.mrb[0].mxu0 %v2182
  %v2562 = vpop.f32.mrb[0].mxu0
  %v2563 = vadd.f32 0.0, %v2562
  %v2564 = vpop.f32.mrb[0].mxu0
  %2565 = vmatprep.mubr.f32.mxu0 0.0
  %2566 = vmatmul.mubr.f32.gmra.mrb[0].mxu0 %v2187
  %v2567 = vpop.f32.mrb[0].mxu0
  %v2568 = vadd.f32 0.0, %v2567
  %v2569 = vpop.f32.mrb[0].mxu0
  %2570 = vmatprep.mubr.f32.mxu0 0.0
  %2571 = vmatmul.mubr.f32.gmra.mrb[0].mxu0 %v2190
  %v2572 = vpop.f32.mrb[0].mxu0
  %v2573 = vadd.f32 0.0, %v2572
  %v2574 = vpop.f32.mrb[0].mxu0
  %2575 = vmatprep.mubr.f32.mxu0 0.0
  %2576 = vmatmul.mubr.f32.gmra.mrb[0].mxu0 %v2195
  %v2577 = vpop.f32.mrb[0].mxu0
  %v2578 = vadd.f32 0.0, %v2577
  %v2579 = vpop.f32.mrb[0].mxu0
  %2580 = vmatprep.mubr.f32.mxu0 0.0
  %2581 = vmatmul.mubr.f32.gmra.mrb[0].mxu0 %v2198
  %v2582 = vpop.f32.mrb[0].mxu0
  %v2583 = vadd.f32 0.0, %v2582
  %v2584 = vpop.f32.mrb[0].mxu0
  %2585 = vmatprep.mubr.f32.mxu0 0.0
  %2586 = vmatmul.mubr.f32.gmra.mrb[0].mxu0 %v2203
  %v2587 = vpop.f32.mrb[0].mxu0
  %v2588 = vadd.f32 0.0, %v2587
  %v2589 = vpop.f32.mrb[0].mxu0
  %2590 = vmatprep.mubr.f32.mxu0 0.0
  %2591 = vmatmul.mubr.f32.gmra.mrb[0].mxu0 %v2206
  %v2592 = vpop.f32.mrb[0].mxu0
  %v2593 = vadd.f32 0.0, %v2592
  %v2594 = vpop.f32.mrb[0].mxu0
  %2595 = vmatprep.mubr.f32.mxu0 0.0
  %2596 = vmatmul.mubr.f32.gmra.mrb[0].mxu0 %v2211
  %v2597 = vpop.f32.mrb[0].mxu0
  %v2598 = vadd.f32 0.0, %v2597
  %v2599 = vpop.f32.mrb[0].mxu0
  %2600 = vmatprep.mubr.f32.mxu0 0.0
  %2601 = vmatmul.mubr.f32.gmra.mrb[0].mxu0 %v2214
  %v2602 = vpop.f32.mrb[0].mxu0
  %v2603 = vadd.f32 0.0, %v2602
  %v2604 = vpop.f32.mrb[0].mxu0
  %2605 = vmatprep.mubr.f32.mxu0 0.0
  %2606 = vmatmul.mubr.f32.gmra.mrb[0].mxu0 %v2219
  %v2607 = vpop.f32.mrb[0].mxu0
  %v2608 = vadd.f32 0.0, %v2607
  %v2609 = vpop.f32.mrb[0].mxu0
  %2610 = vmatprep.mubr.f32.mxu0 0.0
  %2611 = vmatmul.mubr.f32.gmra.mrb[0].mxu0 %v2222
  %v2612 = vpop.f32.mrb[0].mxu0
  %v2613 = vadd.f32 0.0, %v2612
  %v2614 = vpop.f32.mrb[0].mxu0
  %2615 = vmatprep.mubr.f32.mxu0 0.0
  %2616 = vmatmul.mubr.f32.gmra.mrb[0].mxu0 %v2227
  %v2617 = vpop.f32.mrb[0].mxu0
  %v2618 = vadd.f32 0.0, %v2617
  %v2619 = vpop.f32.mrb[0].mxu0
  %2620 = vmatprep.mubr.f32.mxu0 0.0
  %2621 = vmatmul.mubr.f32.gmra.mrb[0].mxu0 %v2230
  %v2622 = vpop.f32.mrb[0].mxu0
  %v2623 = vadd.f32 0.0, %v2622
  %v2624 = vpop.f32.mrb[0].mxu0
  %2625 = vmatprep.mubr.f32.mxu0 0.0
  %2626 = vmatmul.mubr.f32.gmra.mrb[0].mxu0 %v2235
  %v2627 = vpop.f32.mrb[0].mxu0
  %v2628 = vadd.f32 0.0, %v2627
  %v2629 = vpop.f32.mrb[0].mxu0
  %2630 = vmatprep.mubr.f32.mxu0 0.0
  %2631 = vmatmul.mubr.f32.gmra.mrb[0].mxu0 %v2238
  %v2632 = vpop.f32.mrb[0].mxu0
  %v2633 = vadd.f32 0.0, %v2632
  %v2634 = vpop.f32.mrb[0].mxu0
  %2635 = vmatprep.mubr.f32.mxu0 0.0
  %2636 = vmatmul.mubr.f32.gmra.mrb[0].mxu0 %v2243
  %v2637 = vpop.f32.mrb[0].mxu0
  %v2638 = vadd.f32 0.0, %v2637
  %v2639 = vpop.f32.mrb[0].mxu0
  %2640 = vmatprep.mubr.f32.mxu0 0.0
  %2641 = vmatmul.mubr.f32.gmra.mrb[0].mxu0 %v2246
  %v2642 = vpop.f32.mrb[0].mxu0
  %v2643 = vadd.f32 0.0, %v2642
  %v2644 = vpop.f32.mrb[0].mxu0
  %2645 = vmatprep.mubr.f32.mxu0 0.0
  %2646 = vmatmul.mubr.f32.gmra.mrb[0].mxu0 %v2251
  %v2647 = vpop.f32.mrb[0].mxu0
  %v2648 = vadd.f32 0.0, %v2647
  %v2649 = vpop.f32.mrb[0].mxu0
  %2650 = vmatprep.mubr.f32.mxu0 0.0
  %2651 = vmatmul.mubr.f32.gmra.mrb[0].mxu0 %v2254
  %v2652 = vpop.f32.mrb[0].mxu0
  %v2653 = vadd.f32 0.0, %v2652
  %v2654 = vpop.f32.mrb[0].mxu0
  %2655 = vmatprep.mubr.f32.mxu0 0.0
  %2656 = vmatmul.mubr.f32.gmra.mrb[0].mxu0 %v2259
  %v2657 = vpop.f32.mrb[0].mxu0
  %v2658 = vadd.f32 0.0, %v2657
  %v2659 = vpop.f32.mrb[0].mxu0
  %2660 = vmatprep.mubr.f32.mxu0 0.0
  %2661 = vmatmul.mubr.f32.gmra.mrb[0].mxu0 %v2262
  %v2662 = vpop.f32.mrb[0].mxu0
  %v2663 = vadd.f32 0.0, %v2662
  %v2664 = vpop.f32.mrb[0].mxu0
  %2665 = vdwg.mxu0
  %v2666 = vadd.f32 %v2348, %v2353
  %v2667 = vadd.f32 %v2666, %v2358
  %v2668 = vadd.f32 %v2667, %v2363
  %v2669 = vadd.f32 %v2668, %v2368
  %v2670 = vadd.f32 %v2669, %v2373
  %v2671 = vadd.f32 %v2670, %v2378
  %v2672 = vadd.f32 %v2671, %v2383
  %v2673 = vadd.f32 %v2672, %v2388
  %v2674 = vadd.f32 %v2673, %v2393
  %v2675 = vadd.f32 %v2674, %v2398
  %v2676 = vadd.f32 %v2675, %v2403
  %v2677 = vadd.f32 %v2676, %v2408
  %v2678 = vadd.f32 %v2677, %v2413
  %v2679 = vadd.f32 %v2678, %v2418
  %v2680 = vadd.f32 %v2679, %v2423
  %v2681 = vadd.f32 %v2680, %v2428
  %v2682 = vadd.f32 %v2681, %v2433
  %v2683 = vadd.f32 %v2682, %v2438
  %v2684 = vadd.f32 %v2683, %v2443
  %v2685 = vadd.f32 %v2684, %v2448
  %v2686 = vadd.f32 %v2685, %v2453
  %v2687 = vadd.f32 %v2686, %v2458
  %v2688 = vadd.f32 %v2687, %v2463
  %v2689 = vadd.f32 %v2688, %v2468
  %v2690 = vadd.f32 %v2689, %v2473
  %v2691 = vadd.f32 %v2690, %v2478
  %v2692 = vadd.f32 %v2691, %v2483
  %v2693 = vadd.f32 %v2692, %v2488
  %v2694 = vadd.f32 %v2693, %v2493
  %v2695 = vadd.f32 %v2694, %v2498
  %v2696 = vadd.f32 %v2695, %v2503
  %v2697 = vadd.f32 %v2696, %v2508
  %v2698 = vadd.f32 %v2697, %v2513
  %v2699 = vadd.f32 %v2698, %v2518
  %v2700 = vadd.f32 %v2699, %v2523
  %v2701 = vadd.f32 %v2700, %v2528
  %v2702 = vadd.f32 %v2701, %v2533
  %v2703 = vadd.f32 %v2702, %v2538
  %v2704 = vadd.f32 %v2703, %v2543
  %v2705 = vadd.f32 %v2704, %v2548
  %v2706 = vadd.f32 %v2705, %v2553
  %v2707 = vadd.f32 %v2706, %v2558
  %v2708 = vadd.f32 %v2707, %v2563
  %v2709 = vadd.f32 %v2708, %v2568
  %v2710 = vadd.f32 %v2709, %v2573
  %v2711 = vadd.f32 %v2710, %v2578
  %v2712 = vadd.f32 %v2711, %v2583
  %v2713 = vadd.f32 %v2712, %v2588
  %v2714 = vadd.f32 %v2713, %v2593
  %v2715 = vadd.f32 %v2714, %v2598
  %v2716 = vadd.f32 %v2715, %v2603
  %v2717 = vadd.f32 %v2716, %v2608
  %v2718 = vadd.f32 %v2717, %v2613
  %v2719 = vadd.f32 %v2718, %v2618
  %v2720 = vadd.f32 %v2719, %v2623
  %v2721 = vadd.f32 %v2720, %v2628
  %v2722 = vadd.f32 %v2721, %v2633
  %v2723 = vadd.f32 %v2722, %v2638
  %v2724 = vadd.f32 %v2723, %v2643
  %v2725 = vadd.f32 %v2724, %v2648
  %v2726 = vadd.f32 %v2725, %v2653
  %v2727 = vadd.f32 %v2726, %v2658
  %v2728 = vadd.f32 %v2727, %v2663
  %v2729 = vrot.slane %v2728, 4
  %v2730 = vadd.f32 %v2728, %v2729
  %v2731 = vrot.slane %v2730, 2
  %v2732 = vadd.f32 %v2730, %v2731
  %v2733 = vrot.slane %v2732, 1
  %v2734 = vadd.f32 %v2732, %v2733
  %v2735 = vmul.f32 %v2734, 3.0517578e-05
  %v2736 = vmul.f32 %v2011, %v2011
  %v2737 = vmul.f32 %v2014, %v2014
  %v2738 = vmul.f32 %v2019, %v2019
  %v2739 = vmul.f32 %v2022, %v2022
  %v2740 = vmul.f32 %v2027, %v2027
  %v2741 = vmul.f32 %v2030, %v2030
  %v2742 = vmul.f32 %v2035, %v2035
  %v2743 = vmul.f32 %v2038, %v2038
  %v2744 = vmul.f32 %v2043, %v2043
  %v2745 = vmul.f32 %v2046, %v2046
  %v2746 = vmul.f32 %v2051, %v2051
  %v2747 = vmul.f32 %v2054, %v2054
  %v2748 = vmul.f32 %v2059, %v2059
  %v2749 = vmul.f32 %v2062, %v2062
  %v2750 = vmul.f32 %v2067, %v2067
  %v2751 = vmul.f32 %v2070, %v2070
  %v2752 = vmul.f32 %v2075, %v2075
  %v2753 = vmul.f32 %v2078, %v2078
  %v2754 = vmul.f32 %v2083, %v2083
  %v2755 = vmul.f32 %v2086, %v2086
  %v2756 = vmul.f32 %v2091, %v2091
  %v2757 = vmul.f32 %v2094, %v2094
  %v2758 = vmul.f32 %v2099, %v2099
  %v2759 = vmul.f32 %v2102, %v2102
  %v2760 = vmul.f32 %v2107, %v2107
  %v2761 = vmul.f32 %v2110, %v2110
  %v2762 = vmul.f32 %v2115, %v2115
  %v2763 = vmul.f32 %v2118, %v2118
  %v2764 = vmul.f32 %v2123, %v2123
  %v2765 = vmul.f32 %v2126, %v2126
  %v2766 = vmul.f32 %v2131, %v2131
  %v2767 = vmul.f32 %v2134, %v2134
  %v2768 = vmul.f32 %v2139, %v2139
  %v2769 = vmul.f32 %v2142, %v2142
  %v2770 = vmul.f32 %v2147, %v2147
  %v2771 = vmul.f32 %v2150, %v2150
  %v2772 = vmul.f32 %v2155, %v2155
  %v2773 = vmul.f32 %v2158, %v2158
  %v2774 = vmul.f32 %v2163, %v2163
  %v2775 = vmul.f32 %v2166, %v2166
  %v2776 = vmul.f32 %v2171, %v2171
  %v2777 = vmul.f32 %v2174, %v2174
  %v2778 = vmul.f32 %v2179, %v2179
  %v2779 = vmul.f32 %v2182, %v2182
  %v2780 = vmul.f32 %v2187, %v2187
  %v2781 = vmul.f32 %v2190, %v2190
  %v2782 = vmul.f32 %v2195, %v2195
  %v2783 = vmul.f32 %v2198, %v2198
  %v2784 = vmul.f32 %v2203, %v2203
  %v2785 = vmul.f32 %v2206, %v2206
  %v2786 = vmul.f32 %v2211, %v2211
  %v2787 = vmul.f32 %v2214, %v2214
  %v2788 = vmul.f32 %v2219, %v2219
  %v2789 = vmul.f32 %v2222, %v2222
  %v2790 = vmul.f32 %v2227, %v2227
  %v2791 = vmul.f32 %v2230, %v2230
  %v2792 = vmul.f32 %v2235, %v2235
  %v2793 = vmul.f32 %v2238, %v2238
  %v2794 = vmul.f32 %v2243, %v2243
  %v2795 = vmul.f32 %v2246, %v2246
  %v2796 = vmul.f32 %v2251, %v2251
  %v2797 = vmul.f32 %v2254, %v2254
  %v2798 = vmul.f32 %v2259, %v2259
  %v2799 = vmul.f32 %v2262, %v2262
  %2800 = vmatprep.subr.mxu0 0.0
  %2801 = vmatpush1.msra.mxu0 %v2265
  %2802 = vmatprep.subr.mxu0 0.0
  %2803 = vmatpush1.msra.mxu0 %v2266
  %2804 = vmatprep.subr.mxu0 0.0
  %2805 = vmatpush1.msra.mxu0 %v2267
  %2806 = vmatprep.subr.mxu0 0.0
  %2807 = vmatpush1.msra.mxu0 %v2268
  %2808 = vmatprep.subr.mxu0 0.0
  %2809 = vmatpush1.msra.mxu0 %v2269
  %2810 = vmatprep.subr.mxu0 0.0
  %2811 = vmatpush1.msra.mxu0 %v2270
  %2812 = vmatprep.subr.mxu0 0.0
  %2813 = vmatpush1.msra.mxu0 %v2271
  %2814 = vmatprep.subr.mxu0 0.0
  %2815 = vmatpush1.msra.mxu0 %v2272
  %2816 = vmatprep.subr.mxu0 0.0
  %2817 = vmatpush1.msra.mxu0 %v2273
  %2818 = vmatprep.subr.mxu0 0.0
  %2819 = vmatpush1.msra.mxu0 %v2274
  %2820 = vmatprep.subr.mxu0 0.0
  %2821 = vmatpush1.msra.mxu0 %v2275
  %2822 = vmatprep.subr.mxu0 0.0
  %2823 = vmatpush1.msra.mxu0 %v2276
  %2824 = vmatprep.subr.mxu0 0.0
  %2825 = vmatpush1.msra.mxu0 %v2277
  %2826 = vmatprep.subr.mxu0 0.0
  %2827 = vmatpush1.msra.mxu0 %v2278
  %2828 = vmatprep.subr.mxu0 0.0
  %2829 = vmatpush1.msra.mxu0 %v2279
  %2830 = vmatprep.subr.mxu0 0.0
  %2831 = vmatpush1.msra.mxu0 %v2280
  %2832 = vmatprep.subr.mxu0 0.0
  %2833 = vmatpush1.msra.mxu0 0.0
  %2834 = vmatprep.subr.mxu0 0.0
  %2835 = vmatpush1.msra.mxu0 0.0
  %2836 = vmatprep.subr.mxu0 0.0
  %2837 = vmatpush1.msra.mxu0 0.0
  %2838 = vmatprep.subr.mxu0 0.0
  %2839 = vmatpush1.msra.mxu0 0.0
  %2840 = vmatprep.subr.mxu0 0.0
  %2841 = vmatpush1.msra.mxu0 0.0
  %2842 = vmatprep.subr.mxu0 0.0
  %2843 = vmatpush1.msra.mxu0 0.0
  %2844 = vmatprep.subr.mxu0 0.0
  %2845 = vmatpush1.msra.mxu0 0.0
  %2846 = vmatprep.subr.mxu0 0.0
  %2847 = vmatpush1.msra.mxu0 0.0
  %2848 = vmatprep.subr.mxu0 0.0
  %2849 = vmatpush1.msra.mxu0 0.0
  %2850 = vmatprep.subr.mxu0 0.0
  %2851 = vmatpush1.msra.mxu0 0.0
  %2852 = vmatprep.subr.mxu0 0.0
  %2853 = vmatpush1.msra.mxu0 0.0
  %2854 = vmatprep.subr.mxu0 0.0
  %2855 = vmatpush1.msra.mxu0 0.0
  %2856 = vmatprep.subr.mxu0 0.0
  %2857 = vmatpush1.msra.mxu0 0.0
  %2858 = vmatprep.subr.mxu0 0.0
  %2859 = vmatpush1.msra.mxu0 0.0
  %2860 = vmatprep.subr.mxu0 0.0
  %2861 = vmatpush1.msra.mxu0 0.0
  %2862 = vmatprep.subr.mxu0 0.0
  %2863 = vmatpush1.msra.mxu0 0.0
  %2864 = vmatprep.mubr.f32.mxu0 0.0
  %2865 = vmatmul.mubr.f32.gmra.mrb[0].mxu0 %v2736
  %v2866 = vpop.f32.mrb[0].mxu0
  %v2867 = vadd.f32 0.0, %v2866
  %v2868 = vpop.f32.mrb[0].mxu0
  %2869 = vmatprep.mubr.f32.mxu0 0.0
  %2870 = vmatmul.mubr.f32.gmra.mrb[0].mxu0 %v2737
  %v2871 = vpop.f32.mrb[0].mxu0
  %v2872 = vadd.f32 0.0, %v2871
  %v2873 = vpop.f32.mrb[0].mxu0
  %2874 = vmatprep.mubr.f32.mxu0 0.0
  %2875 = vmatmul.mubr.f32.gmra.mrb[0].mxu0 %v2738
  %v2876 = vpop.f32.mrb[0].mxu0
  %v2877 = vadd.f32 0.0, %v2876
  %v2878 = vpop.f32.mrb[0].mxu0
  %2879 = vmatprep.mubr.f32.mxu0 0.0
  %2880 = vmatmul.mubr.f32.gmra.mrb[0].mxu0 %v2739
  %v2881 = vpop.f32.mrb[0].mxu0
  %v2882 = vadd.f32 0.0, %v2881
  %v2883 = vpop.f32.mrb[0].mxu0
  %2884 = vmatprep.mubr.f32.mxu0 0.0
  %2885 = vmatmul.mubr.f32.gmra.mrb[0].mxu0 %v2740
  %v2886 = vpop.f32.mrb[0].mxu0
  %v2887 = vadd.f32 0.0, %v2886
  %v2888 = vpop.f32.mrb[0].mxu0
  %2889 = vmatprep.mubr.f32.mxu0 0.0
  %2890 = vmatmul.mubr.f32.gmra.mrb[0].mxu0 %v2741
  %v2891 = vpop.f32.mrb[0].mxu0
  %v2892 = vadd.f32 0.0, %v2891
  %v2893 = vpop.f32.mrb[0].mxu0
  %2894 = vmatprep.mubr.f32.mxu0 0.0
  %2895 = vmatmul.mubr.f32.gmra.mrb[0].mxu0 %v2742
  %v2896 = vpop.f32.mrb[0].mxu0
  %v2897 = vadd.f32 0.0, %v2896
  %v2898 = vpop.f32.mrb[0].mxu0
  %2899 = vmatprep.mubr.f32.mxu0 0.0
  %2900 = vmatmul.mubr.f32.gmra.mrb[0].mxu0 %v2743
  %v2901 = vpop.f32.mrb[0].mxu0
  %v2902 = vadd.f32 0.0, %v2901
  %v2903 = vpop.f32.mrb[0].mxu0
  %2904 = vmatprep.mubr.f32.mxu0 0.0
  %2905 = vmatmul.mubr.f32.gmra.mrb[0].mxu0 %v2744
  %v2906 = vpop.f32.mrb[0].mxu0
  %v2907 = vadd.f32 0.0, %v2906
  %v2908 = vpop.f32.mrb[0].mxu0
  %2909 = vmatprep.mubr.f32.mxu0 0.0
  %2910 = vmatmul.mubr.f32.gmra.mrb[0].mxu0 %v2745
  %v2911 = vpop.f32.mrb[0].mxu0
  %v2912 = vadd.f32 0.0, %v2911
  %v2913 = vpop.f32.mrb[0].mxu0
  %2914 = vmatprep.mubr.f32.mxu0 0.0
  %2915 = vmatmul.mubr.f32.gmra.mrb[0].mxu0 %v2746
  %v2916 = vpop.f32.mrb[0].mxu0
  %v2917 = vadd.f32 0.0, %v2916
  %v2918 = vpop.f32.mrb[0].mxu0
  %2919 = vmatprep.mubr.f32.mxu0 0.0
  %2920 = vmatmul.mubr.f32.gmra.mrb[0].mxu0 %v2747
  %v2921 = vpop.f32.mrb[0].mxu0
  %v2922 = vadd.f32 0.0, %v2921
  %v2923 = vpop.f32.mrb[0].mxu0
  %2924 = vmatprep.mubr.f32.mxu0 0.0
  %2925 = vmatmul.mubr.f32.gmra.mrb[0].mxu0 %v2748
  %v2926 = vpop.f32.mrb[0].mxu0
  %v2927 = vadd.f32 0.0, %v2926
  %v2928 = vpop.f32.mrb[0].mxu0
  %2929 = vmatprep.mubr.f32.mxu0 0.0
  %2930 = vmatmul.mubr.f32.gmra.mrb[0].mxu0 %v2749
  %v2931 = vpop.f32.mrb[0].mxu0
  %v2932 = vadd.f32 0.0, %v2931
  %v2933 = vpop.f32.mrb[0].mxu0
  %2934 = vmatprep.mubr.f32.mxu0 0.0
  %2935 = vmatmul.mubr.f32.gmra.mrb[0].mxu0 %v2750
  %v2936 = vpop.f32.mrb[0].mxu0
  %v2937 = vadd.f32 0.0, %v2936
  %v2938 = vpop.f32.mrb[0].mxu0
  %2939 = vmatprep.mubr.f32.mxu0 0.0
  %2940 = vmatmul.mubr.f32.gmra.mrb[0].mxu0 %v2751
  %v2941 = vpop.f32.mrb[0].mxu0
  %v2942 = vadd.f32 0.0, %v2941
  %v2943 = vpop.f32.mrb[0].mxu0
  %2944 = vmatprep.mubr.f32.mxu0 0.0
  %2945 = vmatmul.mubr.f32.gmra.mrb[0].mxu0 %v2752
  %v2946 = vpop.f32.mrb[0].mxu0
  %v2947 = vadd.f32 0.0, %v2946
  %v2948 = vpop.f32.mrb[0].mxu0
  %2949 = vmatprep.mubr.f32.mxu0 0.0
  %2950 = vmatmul.mubr.f32.gmra.mrb[0].mxu0 %v2753
  %v2951 = vpop.f32.mrb[0].mxu0
  %v2952 = vadd.f32 0.0, %v2951
  %v2953 = vpop.f32.mrb[0].mxu0
  %2954 = vmatprep.mubr.f32.mxu0 0.0
  %2955 = vmatmul.mubr.f32.gmra.mrb[0].mxu0 %v2754
  %v2956 = vpop.f32.mrb[0].mxu0
  %v2957 = vadd.f32 0.0, %v2956
  %v2958 = vpop.f32.mrb[0].mxu0
  %2959 = vmatprep.mubr.f32.mxu0 0.0
  %2960 = vmatmul.mubr.f32.gmra.mrb[0].mxu0 %v2755
  %v2961 = vpop.f32.mrb[0].mxu0
  %v2962 = vadd.f32 0.0, %v2961
  %v2963 = vpop.f32.mrb[0].mxu0
  %2964 = vmatprep.mubr.f32.mxu0 0.0
  %2965 = vmatmul.mubr.f32.gmra.mrb[0].mxu0 %v2756
  %v2966 = vpop.f32.mrb[0].mxu0
  %v2967 = vadd.f32 0.0, %v2966
  %v2968 = vpop.f32.mrb[0].mxu0
  %2969 = vmatprep.mubr.f32.mxu0 0.0
  %2970 = vmatmul.mubr.f32.gmra.mrb[0].mxu0 %v2757
  %v2971 = vpop.f32.mrb[0].mxu0
  %v2972 = vadd.f32 0.0, %v2971
  %v2973 = vpop.f32.mrb[0].mxu0
  %2974 = vmatprep.mubr.f32.mxu0 0.0
  %2975 = vmatmul.mubr.f32.gmra.mrb[0].mxu0 %v2758
  %v2976 = vpop.f32.mrb[0].mxu0
  %v2977 = vadd.f32 0.0, %v2976
  %v2978 = vpop.f32.mrb[0].mxu0
  %2979 = vmatprep.mubr.f32.mxu0 0.0
  %2980 = vmatmul.mubr.f32.gmra.mrb[0].mxu0 %v2759
  %v2981 = vpop.f32.mrb[0].mxu0
  %v2982 = vadd.f32 0.0, %v2981
  %v2983 = vpop.f32.mrb[0].mxu0
  %2984 = vmatprep.mubr.f32.mxu0 0.0
  %2985 = vmatmul.mubr.f32.gmra.mrb[0].mxu0 %v2760
  %v2986 = vpop.f32.mrb[0].mxu0
  %v2987 = vadd.f32 0.0, %v2986
  %v2988 = vpop.f32.mrb[0].mxu0
  %2989 = vmatprep.mubr.f32.mxu0 0.0
  %2990 = vmatmul.mubr.f32.gmra.mrb[0].mxu0 %v2761
  %v2991 = vpop.f32.mrb[0].mxu0
  %v2992 = vadd.f32 0.0, %v2991
  %v2993 = vpop.f32.mrb[0].mxu0
  %2994 = vmatprep.mubr.f32.mxu0 0.0
  %2995 = vmatmul.mubr.f32.gmra.mrb[0].mxu0 %v2762
  %v2996 = vpop.f32.mrb[0].mxu0
  %v2997 = vadd.f32 0.0, %v2996
  %v2998 = vpop.f32.mrb[0].mxu0
  %2999 = vmatprep.mubr.f32.mxu0 0.0
  %3000 = vmatmul.mubr.f32.gmra.mrb[0].mxu0 %v2763
  %v3001 = vpop.f32.mrb[0].mxu0
  %v3002 = vadd.f32 0.0, %v3001
  %v3003 = vpop.f32.mrb[0].mxu0
  %3004 = vmatprep.mubr.f32.mxu0 0.0
  %3005 = vmatmul.mubr.f32.gmra.mrb[0].mxu0 %v2764
  %v3006 = vpop.f32.mrb[0].mxu0
  %v3007 = vadd.f32 0.0, %v3006
  %v3008 = vpop.f32.mrb[0].mxu0
  %3009 = vmatprep.mubr.f32.mxu0 0.0
  %3010 = vmatmul.mubr.f32.gmra.mrb[0].mxu0 %v2765
  %v3011 = vpop.f32.mrb[0].mxu0
  %v3012 = vadd.f32 0.0, %v3011
  %v3013 = vpop.f32.mrb[0].mxu0
  %3014 = vmatprep.mubr.f32.mxu0 0.0
  %3015 = vmatmul.mubr.f32.gmra.mrb[0].mxu0 %v2766
  %v3016 = vpop.f32.mrb[0].mxu0
  %v3017 = vadd.f32 0.0, %v3016
  %v3018 = vpop.f32.mrb[0].mxu0
  %3019 = vmatprep.mubr.f32.mxu0 0.0
  %3020 = vmatmul.mubr.f32.gmra.mrb[0].mxu0 %v2767
  %v3021 = vpop.f32.mrb[0].mxu0
  %v3022 = vadd.f32 0.0, %v3021
  %v3023 = vpop.f32.mrb[0].mxu0
  %3024 = vmatprep.mubr.f32.mxu0 0.0
  %3025 = vmatmul.mubr.f32.gmra.mrb[0].mxu0 %v2768
  %v3026 = vpop.f32.mrb[0].mxu0
  %v3027 = vadd.f32 0.0, %v3026
  %v3028 = vpop.f32.mrb[0].mxu0
  %3029 = vmatprep.mubr.f32.mxu0 0.0
  %3030 = vmatmul.mubr.f32.gmra.mrb[0].mxu0 %v2769
  %v3031 = vpop.f32.mrb[0].mxu0
  %v3032 = vadd.f32 0.0, %v3031
  %v3033 = vpop.f32.mrb[0].mxu0
  %3034 = vmatprep.mubr.f32.mxu0 0.0
  %3035 = vmatmul.mubr.f32.gmra.mrb[0].mxu0 %v2770
  %v3036 = vpop.f32.mrb[0].mxu0
  %v3037 = vadd.f32 0.0, %v3036
  %v3038 = vpop.f32.mrb[0].mxu0
  %3039 = vmatprep.mubr.f32.mxu0 0.0
  %3040 = vmatmul.mubr.f32.gmra.mrb[0].mxu0 %v2771
  %v3041 = vpop.f32.mrb[0].mxu0
  %v3042 = vadd.f32 0.0, %v3041
  %v3043 = vpop.f32.mrb[0].mxu0
  %3044 = vmatprep.mubr.f32.mxu0 0.0
  %3045 = vmatmul.mubr.f32.gmra.mrb[0].mxu0 %v2772
  %v3046 = vpop.f32.mrb[0].mxu0
  %v3047 = vadd.f32 0.0, %v3046
  %v3048 = vpop.f32.mrb[0].mxu0
  %3049 = vmatprep.mubr.f32.mxu0 0.0
  %3050 = vmatmul.mubr.f32.gmra.mrb[0].mxu0 %v2773
  %v3051 = vpop.f32.mrb[0].mxu0
  %v3052 = vadd.f32 0.0, %v3051
  %v3053 = vpop.f32.mrb[0].mxu0
  %3054 = vmatprep.mubr.f32.mxu0 0.0
  %3055 = vmatmul.mubr.f32.gmra.mrb[0].mxu0 %v2774
  %v3056 = vpop.f32.mrb[0].mxu0
  %v3057 = vadd.f32 0.0, %v3056
  %v3058 = vpop.f32.mrb[0].mxu0
  %3059 = vmatprep.mubr.f32.mxu0 0.0
  %3060 = vmatmul.mubr.f32.gmra.mrb[0].mxu0 %v2775
  %v3061 = vpop.f32.mrb[0].mxu0
  %v3062 = vadd.f32 0.0, %v3061
  %v3063 = vpop.f32.mrb[0].mxu0
  %3064 = vmatprep.mubr.f32.mxu0 0.0
  %3065 = vmatmul.mubr.f32.gmra.mrb[0].mxu0 %v2776
  %v3066 = vpop.f32.mrb[0].mxu0
  %v3067 = vadd.f32 0.0, %v3066
  %v3068 = vpop.f32.mrb[0].mxu0
  %3069 = vmatprep.mubr.f32.mxu0 0.0
  %3070 = vmatmul.mubr.f32.gmra.mrb[0].mxu0 %v2777
  %v3071 = vpop.f32.mrb[0].mxu0
  %v3072 = vadd.f32 0.0, %v3071
  %v3073 = vpop.f32.mrb[0].mxu0
  %3074 = vmatprep.mubr.f32.mxu0 0.0
  %3075 = vmatmul.mubr.f32.gmra.mrb[0].mxu0 %v2778
  %v3076 = vpop.f32.mrb[0].mxu0
  %v3077 = vadd.f32 0.0, %v3076
  %v3078 = vpop.f32.mrb[0].mxu0
  %3079 = vmatprep.mubr.f32.mxu0 0.0
  %3080 = vmatmul.mubr.f32.gmra.mrb[0].mxu0 %v2779
  %v3081 = vpop.f32.mrb[0].mxu0
  %v3082 = vadd.f32 0.0, %v3081
  %v3083 = vpop.f32.mrb[0].mxu0
  %3084 = vmatprep.mubr.f32.mxu0 0.0
  %3085 = vmatmul.mubr.f32.gmra.mrb[0].mxu0 %v2780
  %v3086 = vpop.f32.mrb[0].mxu0
  %v3087 = vadd.f32 0.0, %v3086
  %v3088 = vpop.f32.mrb[0].mxu0
  %3089 = vmatprep.mubr.f32.mxu0 0.0
  %3090 = vmatmul.mubr.f32.gmra.mrb[0].mxu0 %v2781
  %v3091 = vpop.f32.mrb[0].mxu0
  %v3092 = vadd.f32 0.0, %v3091
  %v3093 = vpop.f32.mrb[0].mxu0
  %3094 = vmatprep.mubr.f32.mxu0 0.0
  %3095 = vmatmul.mubr.f32.gmra.mrb[0].mxu0 %v2782
  %v3096 = vpop.f32.mrb[0].mxu0
  %v3097 = vadd.f32 0.0, %v3096
  %v3098 = vpop.f32.mrb[0].mxu0
  %3099 = vmatprep.mubr.f32.mxu0 0.0
  %3100 = vmatmul.mubr.f32.gmra.mrb[0].mxu0 %v2783
  %v3101 = vpop.f32.mrb[0].mxu0
  %v3102 = vadd.f32 0.0, %v3101
  %v3103 = vpop.f32.mrb[0].mxu0
  %3104 = vmatprep.mubr.f32.mxu0 0.0
  %3105 = vmatmul.mubr.f32.gmra.mrb[0].mxu0 %v2784
  %v3106 = vpop.f32.mrb[0].mxu0
  %v3107 = vadd.f32 0.0, %v3106
  %v3108 = vpop.f32.mrb[0].mxu0
  %3109 = vmatprep.mubr.f32.mxu0 0.0
  %3110 = vmatmul.mubr.f32.gmra.mrb[0].mxu0 %v2785
  %v3111 = vpop.f32.mrb[0].mxu0
  %v3112 = vadd.f32 0.0, %v3111
  %v3113 = vpop.f32.mrb[0].mxu0
  %3114 = vmatprep.mubr.f32.mxu0 0.0
  %3115 = vmatmul.mubr.f32.gmra.mrb[0].mxu0 %v2786
  %v3116 = vpop.f32.mrb[0].mxu0
  %v3117 = vadd.f32 0.0, %v3116
  %v3118 = vpop.f32.mrb[0].mxu0
  %3119 = vmatprep.mubr.f32.mxu0 0.0
  %3120 = vmatmul.mubr.f32.gmra.mrb[0].mxu0 %v2787
  %v3121 = vpop.f32.mrb[0].mxu0
  %v3122 = vadd.f32 0.0, %v3121
  %v3123 = vpop.f32.mrb[0].mxu0
  %3124 = vmatprep.mubr.f32.mxu0 0.0
  %3125 = vmatmul.mubr.f32.gmra.mrb[0].mxu0 %v2788
  %v3126 = vpop.f32.mrb[0].mxu0
  %v3127 = vadd.f32 0.0, %v3126
  %v3128 = vpop.f32.mrb[0].mxu0
  %3129 = vmatprep.mubr.f32.mxu0 0.0
  %3130 = vmatmul.mubr.f32.gmra.mrb[0].mxu0 %v2789
  %v3131 = vpop.f32.mrb[0].mxu0
  %v3132 = vadd.f32 0.0, %v3131
  %v3133 = vpop.f32.mrb[0].mxu0
  %3134 = vmatprep.mubr.f32.mxu0 0.0
  %3135 = vmatmul.mubr.f32.gmra.mrb[0].mxu0 %v2790
  %v3136 = vpop.f32.mrb[0].mxu0
  %v3137 = vadd.f32 0.0, %v3136
  %v3138 = vpop.f32.mrb[0].mxu0
  %3139 = vmatprep.mubr.f32.mxu0 0.0
  %3140 = vmatmul.mubr.f32.gmra.mrb[0].mxu0 %v2791
  %v3141 = vpop.f32.mrb[0].mxu0
  %v3142 = vadd.f32 0.0, %v3141
  %v3143 = vpop.f32.mrb[0].mxu0
  %3144 = vmatprep.mubr.f32.mxu0 0.0
  %3145 = vmatmul.mubr.f32.gmra.mrb[0].mxu0 %v2792
  %v3146 = vpop.f32.mrb[0].mxu0
  %v3147 = vadd.f32 0.0, %v3146
  %v3148 = vpop.f32.mrb[0].mxu0
  %3149 = vmatprep.mubr.f32.mxu0 0.0
  %3150 = vmatmul.mubr.f32.gmra.mrb[0].mxu0 %v2793
  %v3151 = vpop.f32.mrb[0].mxu0
  %v3152 = vadd.f32 0.0, %v3151
  %v3153 = vpop.f32.mrb[0].mxu0
  %3154 = vmatprep.mubr.f32.mxu0 0.0
  %3155 = vmatmul.mubr.f32.gmra.mrb[0].mxu0 %v2794
  %v3156 = vpop.f32.mrb[0].mxu0
  %v3157 = vadd.f32 0.0, %v3156
  %v3158 = vpop.f32.mrb[0].mxu0
  %3159 = vmatprep.mubr.f32.mxu0 0.0
  %3160 = vmatmul.mubr.f32.gmra.mrb[0].mxu0 %v2795
  %v3161 = vpop.f32.mrb[0].mxu0
  %v3162 = vadd.f32 0.0, %v3161
  %v3163 = vpop.f32.mrb[0].mxu0
  %3164 = vmatprep.mubr.f32.mxu0 0.0
  %3165 = vmatmul.mubr.f32.gmra.mrb[0].mxu0 %v2796
  %v3166 = vpop.f32.mrb[0].mxu0
  %v3167 = vadd.f32 0.0, %v3166
  %v3168 = vpop.f32.mrb[0].mxu0
  %3169 = vmatprep.mubr.f32.mxu0 0.0
  %3170 = vmatmul.mubr.f32.gmra.mrb[0].mxu0 %v2797
  %v3171 = vpop.f32.mrb[0].mxu0
  %v3172 = vadd.f32 0.0, %v3171
  %v3173 = vpop.f32.mrb[0].mxu0
  %3174 = vmatprep.mubr.f32.mxu0 0.0
  %3175 = vmatmul.mubr.f32.gmra.mrb[0].mxu0 %v2798
  %v3176 = vpop.f32.mrb[0].mxu0
  %v3177 = vadd.f32 0.0, %v3176
  %v3178 = vpop.f32.mrb[0].mxu0
  %3179 = vmatprep.mubr.f32.mxu0 0.0
  %3180 = vmatmul.mubr.f32.gmra.mrb[0].mxu0 %v2799
  %v3181 = vpop.f32.mrb[0].mxu0
  %v3182 = vadd.f32 0.0, %v3181
  %v3183 = vpop.f32.mrb[0].mxu0
  %3184 = vdwg.mxu0
  %v3185 = vadd.f32 %v2867, %v2872
  %v3186 = vadd.f32 %v3185, %v2877
  %v3187 = vadd.f32 %v3186, %v2882
  %v3188 = vadd.f32 %v3187, %v2887
  %v3189 = vadd.f32 %v3188, %v2892
  %v3190 = vadd.f32 %v3189, %v2897
  %v3191 = vadd.f32 %v3190, %v2902
  %v3192 = vadd.f32 %v3191, %v2907
  %v3193 = vadd.f32 %v3192, %v2912
  %v3194 = vadd.f32 %v3193, %v2917
  %v3195 = vadd.f32 %v3194, %v2922
  %v3196 = vadd.f32 %v3195, %v2927
  %v3197 = vadd.f32 %v3196, %v2932
  %v3198 = vadd.f32 %v3197, %v2937
  %v3199 = vadd.f32 %v3198, %v2942
  %v3200 = vadd.f32 %v3199, %v2947
  %v3201 = vadd.f32 %v3200, %v2952
  %v3202 = vadd.f32 %v3201, %v2957
  %v3203 = vadd.f32 %v3202, %v2962
  %v3204 = vadd.f32 %v3203, %v2967
  %v3205 = vadd.f32 %v3204, %v2972
  %v3206 = vadd.f32 %v3205, %v2977
  %v3207 = vadd.f32 %v3206, %v2982
  %v3208 = vadd.f32 %v3207, %v2987
  %v3209 = vadd.f32 %v3208, %v2992
  %v3210 = vadd.f32 %v3209, %v2997
  %v3211 = vadd.f32 %v3210, %v3002
  %v3212 = vadd.f32 %v3211, %v3007
  %v3213 = vadd.f32 %v3212, %v3012
  %v3214 = vadd.f32 %v3213, %v3017
  %v3215 = vadd.f32 %v3214, %v3022
  %v3216 = vadd.f32 %v3215, %v3027
  %v3217 = vadd.f32 %v3216, %v3032
  %v3218 = vadd.f32 %v3217, %v3037
  %v3219 = vadd.f32 %v3218, %v3042
  %v3220 = vadd.f32 %v3219, %v3047
  %v3221 = vadd.f32 %v3220, %v3052
  %v3222 = vadd.f32 %v3221, %v3057
  %v3223 = vadd.f32 %v3222, %v3062
  %v3224 = vadd.f32 %v3223, %v3067
  %v3225 = vadd.f32 %v3224, %v3072
  %v3226 = vadd.f32 %v3225, %v3077
  %v3227 = vadd.f32 %v3226, %v3082
  %v3228 = vadd.f32 %v3227, %v3087
  %v3229 = vadd.f32 %v3228, %v3092
  %v3230 = vadd.f32 %v3229, %v3097
  %v3231 = vadd.f32 %v3230, %v3102
  %v3232 = vadd.f32 %v3231, %v3107
  %v3233 = vadd.f32 %v3232, %v3112
  %v3234 = vadd.f32 %v3233, %v3117
  %v3235 = vadd.f32 %v3234, %v3122
  %v3236 = vadd.f32 %v3235, %v3127
  %v3237 = vadd.f32 %v3236, %v3132
  %v3238 = vadd.f32 %v3237, %v3137
  %v3239 = vadd.f32 %v3238, %v3142
  %v3240 = vadd.f32 %v3239, %v3147
  %v3241 = vadd.f32 %v3240, %v3152
  %v3242 = vadd.f32 %v3241, %v3157
  %v3243 = vadd.f32 %v3242, %v3162
  %v3244 = vadd.f32 %v3243, %v3167
  %v3245 = vadd.f32 %v3244, %v3172
  %v3246 = vadd.f32 %v3245, %v3177
  %v3247 = vadd.f32 %v3246, %v3182
  %v3248 = vrot.slane %v3247, 4
  %v3249 = vadd.f32 %v3247, %v3248
  %v3250 = vrot.slane %v3249, 2
  %v3251 = vadd.f32 %v3249, %v3250
  %v3252 = vrot.slane %v3251, 1
  %v3253 = vadd.f32 %v3251, %v3252
  %v3254 = vmul.f32 %v3253, 3.0517578e-05
  %v3255 = vmul.f32 %v2735, %v2735
  %v3256 = vsub.f32 %v3254, %v3255
  %v3257 = vadd.f32 %v3256, 1e-05
  %v3258 = vrsqrt.pop %v3257
  %v3259 = vld [vmem:[%s3] sm:$0x1]
  %v3260 = vmul.f32 %v3259, %v3258
  %v3261 = vld [vmem:[%s4] sm:$0x1]
  %v3262 = vmul.f32 %v2735, %v3260
  %v3263 = vsub.f32 %v3261, %v3262
  %v3265 = vlaneseq
  %v3266 = vshrl.u32 %v3265, 7
  %v3267 = vsub.s32 0, %v3266
  %v3268 = vrot.slane %v3260, %v3267
  %v3270 = vmul.f32 %v2011, %v3268
  %v3271 = vmul.f32 %v2014, %v3268
  %v3272 = vmul.f32 %v2019, %v3268
  %v3273 = vmul.f32 %v2022, %v3268
  %v3274 = vmul.f32 %v2027, %v3268
  %v3275 = vmul.f32 %v2030, %v3268
  %v3276 = vmul.f32 %v2035, %v3268
  %v3277 = vmul.f32 %v2038, %v3268
  %v3278 = vmul.f32 %v2043, %v3268
  %v3279 = vmul.f32 %v2046, %v3268
  %v3280 = vmul.f32 %v2051, %v3268
  %v3281 = vmul.f32 %v2054, %v3268
  %v3282 = vmul.f32 %v2059, %v3268
  %v3283 = vmul.f32 %v2062, %v3268
  %v3284 = vmul.f32 %v2067, %v3268
  %v3285 = vmul.f32 %v2070, %v3268
  %v3286 = vmul.f32 %v2075, %v3268
  %v3287 = vmul.f32 %v2078, %v3268
  %v3288 = vmul.f32 %v2083, %v3268
  %v3289 = vmul.f32 %v2086, %v3268
  %v3290 = vmul.f32 %v2091, %v3268
  %v3291 = vmul.f32 %v2094, %v3268
  %v3292 = vmul.f32 %v2099, %v3268
  %v3293 = vmul.f32 %v2102, %v3268
  %v3294 = vmul.f32 %v2107, %v3268
  %v3295 = vmul.f32 %v2110, %v3268
  %v3296 = vmul.f32 %v2115, %v3268
  %v3297 = vmul.f32 %v2118, %v3268
  %v3298 = vmul.f32 %v2123, %v3268
  %v3299 = vmul.f32 %v2126, %v3268
  %v3300 = vmul.f32 %v2131, %v3268
  %v3301 = vmul.f32 %v2134, %v3268
  %v3302 = vmul.f32 %v2139, %v3268
  %v3303 = vmul.f32 %v2142, %v3268
  %v3304 = vmul.f32 %v2147, %v3268
  %v3305 = vmul.f32 %v2150, %v3268
  %v3306 = vmul.f32 %v2155, %v3268
  %v3307 = vmul.f32 %v2158, %v3268
  %v3308 = vmul.f32 %v2163, %v3268
  %v3309 = vmul.f32 %v2166, %v3268
  %v3310 = vmul.f32 %v2171, %v3268
  %v3311 = vmul.f32 %v2174, %v3268
  %v3312 = vmul.f32 %v2179, %v3268
  %v3313 = vmul.f32 %v2182, %v3268
  %v3314 = vmul.f32 %v2187, %v3268
  %v3315 = vmul.f32 %v2190, %v3268
  %v3316 = vmul.f32 %v2195, %v3268
  %v3317 = vmul.f32 %v2198, %v3268
  %v3318 = vmul.f32 %v2203, %v3268
  %v3319 = vmul.f32 %v2206, %v3268
  %v3320 = vmul.f32 %v2211, %v3268
  %v3321 = vmul.f32 %v2214, %v3268
  %v3322 = vmul.f32 %v2219, %v3268
  %v3323 = vmul.f32 %v2222, %v3268
  %v3324 = vmul.f32 %v2227, %v3268
  %v3325 = vmul.f32 %v2230, %v3268
  %v3326 = vmul.f32 %v2235, %v3268
  %v3327 = vmul.f32 %v2238, %v3268
  %v3328 = vmul.f32 %v2243, %v3268
  %v3329 = vmul.f32 %v2246, %v3268
  %v3330 = vmul.f32 %v2251, %v3268
  %v3331 = vmul.f32 %v2254, %v3268
  %v3332 = vmul.f32 %v2259, %v3268
  %v3333 = vmul.f32 %v2262, %v3268
  %v3335 = vlaneseq
  %v3336 = vshrl.u32 %v3335, 7
  %v3337 = vsub.s32 0, %v3336
  %v3338 = vrot.slane %v3263, %v3337
  %v3340 = vadd.f32 %v3270, %v3338
  %v3341 = vadd.f32 %v3271, %v3338
  %v3342 = vadd.f32 %v3272, %v3338
  %v3343 = vadd.f32 %v3273, %v3338
  %v3344 = vadd.f32 %v3274, %v3338
  %v3345 = vadd.f32 %v3275, %v3338
  %v3346 = vadd.f32 %v3276, %v3338
  %v3347 = vadd.f32 %v3277, %v3338
  %v3348 = vadd.f32 %v3278, %v3338
  %v3349 = vadd.f32 %v3279, %v3338
  %v3350 = vadd.f32 %v3280, %v3338
  %v3351 = vadd.f32 %v3281, %v3338
  %v3352 = vadd.f32 %v3282, %v3338
  %v3353 = vadd.f32 %v3283, %v3338
  %v3354 = vadd.f32 %v3284, %v3338
  %v3355 = vadd.f32 %v3285, %v3338
  %v3356 = vadd.f32 %v3286, %v3338
  %v3357 = vadd.f32 %v3287, %v3338
  %v3358 = vadd.f32 %v3288, %v3338
  %v3359 = vadd.f32 %v3289, %v3338
  %v3360 = vadd.f32 %v3290, %v3338
  %v3361 = vadd.f32 %v3291, %v3338
  %v3362 = vadd.f32 %v3292, %v3338
  %v3363 = vadd.f32 %v3293, %v3338
  %v3364 = vadd.f32 %v3294, %v3338
  %v3365 = vadd.f32 %v3295, %v3338
  %v3366 = vadd.f32 %v3296, %v3338
  %v3367 = vadd.f32 %v3297, %v3338
  %v3368 = vadd.f32 %v3298, %v3338
  %v3369 = vadd.f32 %v3299, %v3338
  %v3370 = vadd.f32 %v3300, %v3338
  %v3371 = vadd.f32 %v3301, %v3338
  %v3372 = vadd.f32 %v3302, %v3338
  %v3373 = vadd.f32 %v3303, %v3338
  %v3374 = vadd.f32 %v3304, %v3338
  %v3375 = vadd.f32 %v3305, %v3338
  %v3376 = vadd.f32 %v3306, %v3338
  %v3377 = vadd.f32 %v3307, %v3338
  %v3378 = vadd.f32 %v3308, %v3338
  %v3379 = vadd.f32 %v3309, %v3338
  %v3380 = vadd.f32 %v3310, %v3338
  %v3381 = vadd.f32 %v3311, %v3338
  %v3382 = vadd.f32 %v3312, %v3338
  %v3383 = vadd.f32 %v3313, %v3338
  %v3384 = vadd.f32 %v3314, %v3338
  %v3385 = vadd.f32 %v3315, %v3338
  %v3386 = vadd.f32 %v3316, %v3338
  %v3387 = vadd.f32 %v3317, %v3338
  %v3388 = vadd.f32 %v3318, %v3338
  %v3389 = vadd.f32 %v3319, %v3338
  %v3390 = vadd.f32 %v3320, %v3338
  %v3391 = vadd.f32 %v3321, %v3338
  %v3392 = vadd.f32 %v3322, %v3338
  %v3393 = vadd.f32 %v3323, %v3338
  %v3394 = vadd.f32 %v3324, %v3338
  %v3395 = vadd.f32 %v3325, %v3338
  %v3396 = vadd.f32 %v3326, %v3338
  %v3397 = vadd.f32 %v3327, %v3338
  %v3398 = vadd.f32 %v3328, %v3338
  %v3399 = vadd.f32 %v3329, %v3338
  %v3400 = vadd.f32 %v3330, %v3338
  %v3401 = vadd.f32 %v3331, %v3338
  %v3402 = vadd.f32 %v3332, %v3338
  %v3403 = vadd.f32 %v3333, %v3338
  %v3404 = vmax.f32 %v3340, 0.0
  %v3405 = vmax.f32 %v3341, 0.0
  %v3406 = vmax.f32 %v3342, 0.0
  %v3407 = vmax.f32 %v3343, 0.0
  %v3408 = vmax.f32 %v3344, 0.0
  %v3409 = vmax.f32 %v3345, 0.0
  %v3410 = vmax.f32 %v3346, 0.0
  %v3411 = vmax.f32 %v3347, 0.0
  %v3412 = vmax.f32 %v3348, 0.0
  %v3413 = vmax.f32 %v3349, 0.0
  %v3414 = vmax.f32 %v3350, 0.0
  %v3415 = vmax.f32 %v3351, 0.0
  %v3416 = vmax.f32 %v3352, 0.0
  %v3417 = vmax.f32 %v3353, 0.0
  %v3418 = vmax.f32 %v3354, 0.0
  %v3419 = vmax.f32 %v3355, 0.0
  %v3420 = vmax.f32 %v3356, 0.0
  %v3421 = vmax.f32 %v3357, 0.0
  %v3422 = vmax.f32 %v3358, 0.0
  %v3423 = vmax.f32 %v3359, 0.0
  %v3424 = vmax.f32 %v3360, 0.0
  %v3425 = vmax.f32 %v3361, 0.0
  %v3426 = vmax.f32 %v3362, 0.0
  %v3427 = vmax.f32 %v3363, 0.0
  %v3428 = vmax.f32 %v3364, 0.0
  %v3429 = vmax.f32 %v3365, 0.0
  %v3430 = vmax.f32 %v3366, 0.0
  %v3431 = vmax.f32 %v3367, 0.0
  %v3432 = vmax.f32 %v3368, 0.0
  %v3433 = vmax.f32 %v3369, 0.0
  %v3434 = vmax.f32 %v3370, 0.0
  %v3435 = vmax.f32 %v3371, 0.0
  %v3436 = vmax.f32 %v3372, 0.0
  %v3437 = vmax.f32 %v3373, 0.0
  %v3438 = vmax.f32 %v3374, 0.0
  %v3439 = vmax.f32 %v3375, 0.0
  %v3440 = vmax.f32 %v3376, 0.0
  %v3441 = vmax.f32 %v3377, 0.0
  %v3442 = vmax.f32 %v3378, 0.0
  %v3443 = vmax.f32 %v3379, 0.0
  %v3444 = vmax.f32 %v3380, 0.0
  %v3445 = vmax.f32 %v3381, 0.0
  %v3446 = vmax.f32 %v3382, 0.0
  %v3447 = vmax.f32 %v3383, 0.0
  %v3448 = vmax.f32 %v3384, 0.0
  %v3449 = vmax.f32 %v3385, 0.0
  %v3450 = vmax.f32 %v3386, 0.0
  %v3451 = vmax.f32 %v3387, 0.0
  %v3452 = vmax.f32 %v3388, 0.0
  %v3453 = vmax.f32 %v3389, 0.0
  %v3454 = vmax.f32 %v3390, 0.0
  %v3455 = vmax.f32 %v3391, 0.0
  %v3456 = vmax.f32 %v3392, 0.0
  %v3457 = vmax.f32 %v3393, 0.0
  %v3458 = vmax.f32 %v3394, 0.0
  %v3459 = vmax.f32 %v3395, 0.0
  %v3460 = vmax.f32 %v3396, 0.0
  %v3461 = vmax.f32 %v3397, 0.0
  %v3462 = vmax.f32 %v3398, 0.0
  %v3463 = vmax.f32 %v3399, 0.0
  %v3464 = vmax.f32 %v3400, 0.0
  %v3465 = vmax.f32 %v3401, 0.0
  %v3466 = vmax.f32 %v3402, 0.0
  %v3467 = vmax.f32 %v3403, 0.0
  %v3468 = vpack.c.bf16 %v3405, %v3404
  %v3469 = vpack.c.bf16 %v3407, %v3406
  %v3470 = vpack.c.bf16 %v3409, %v3408
  %v3471 = vpack.c.bf16 %v3411, %v3410
  %v3472 = vpack.c.bf16 %v3413, %v3412
  %v3473 = vpack.c.bf16 %v3415, %v3414
  %v3474 = vpack.c.bf16 %v3417, %v3416
  %v3475 = vpack.c.bf16 %v3419, %v3418
  %v3476 = vpack.c.bf16 %v3421, %v3420
  %v3477 = vpack.c.bf16 %v3423, %v3422
  %v3478 = vpack.c.bf16 %v3425, %v3424
  %v3479 = vpack.c.bf16 %v3427, %v3426
  %v3480 = vpack.c.bf16 %v3429, %v3428
  %v3481 = vpack.c.bf16 %v3431, %v3430
  %v3482 = vpack.c.bf16 %v3433, %v3432
  %v3483 = vpack.c.bf16 %v3435, %v3434
  %v3484 = vpack.c.bf16 %v3437, %v3436
  %v3485 = vpack.c.bf16 %v3439, %v3438
  %v3486 = vpack.c.bf16 %v3441, %v3440
  %v3487 = vpack.c.bf16 %v3443, %v3442
  %v3488 = vpack.c.bf16 %v3445, %v3444
  %v3489 = vpack.c.bf16 %v3447, %v3446
  %v3490 = vpack.c.bf16 %v3449, %v3448
  %v3491 = vpack.c.bf16 %v3451, %v3450
  %v3492 = vpack.c.bf16 %v3453, %v3452
  %v3493 = vpack.c.bf16 %v3455, %v3454
  %v3494 = vpack.c.bf16 %v3457, %v3456
  %v3495 = vpack.c.bf16 %v3459, %v3458
  %v3496 = vpack.c.bf16 %v3461, %v3460
  %v3497 = vpack.c.bf16 %v3463, %v3462
  %v3498 = vpack.c.bf16 %v3465, %v3464
  %v3499 = vpack.c.bf16 %v3467, %v3466
  %v3532 = vunpack.c.l.b16 %v3468
  %v3533 = vunpack.c.h.b16 %v3468
  %v3534 = vunpack.c.l.b16 %v3469
  %v3535 = vunpack.c.h.b16 %v3469
  %v3536 = vunpack.c.l.b16 %v3470
  %v3537 = vunpack.c.h.b16 %v3470
  %v3538 = vunpack.c.l.b16 %v3471
  %v3539 = vunpack.c.h.b16 %v3471
  %v3540 = vunpack.c.l.b16 %v3472
  %v3541 = vunpack.c.h.b16 %v3472
  %v3542 = vunpack.c.l.b16 %v3473
  %v3543 = vunpack.c.h.b16 %v3473
  %v3544 = vunpack.c.l.b16 %v3474
  %v3545 = vunpack.c.h.b16 %v3474
  %v3546 = vunpack.c.l.b16 %v3475
  %v3547 = vunpack.c.h.b16 %v3475
  %v3548 = vunpack.c.l.b16 %v3476
  %v3549 = vunpack.c.h.b16 %v3476
  %v3550 = vunpack.c.l.b16 %v3477
  %v3551 = vunpack.c.h.b16 %v3477
  %v3552 = vunpack.c.l.b16 %v3478
  %v3553 = vunpack.c.h.b16 %v3478
  %v3554 = vunpack.c.l.b16 %v3479
  %v3555 = vunpack.c.h.b16 %v3479
  %v3556 = vunpack.c.l.b16 %v3480
  %v3557 = vunpack.c.h.b16 %v3480
  %v3558 = vunpack.c.l.b16 %v3481
  %v3559 = vunpack.c.h.b16 %v3481
  %v3560 = vunpack.c.l.b16 %v3482
  %v3561 = vunpack.c.h.b16 %v3482
  %v3562 = vunpack.c.l.b16 %v3483
  %v3563 = vunpack.c.h.b16 %v3483
  %v3564 = vunpack.c.l.b16 %v3484
  %v3565 = vunpack.c.h.b16 %v3484
  %v3566 = vunpack.c.l.b16 %v3485
  %v3567 = vunpack.c.h.b16 %v3485
  %v3568 = vunpack.c.l.b16 %v3486
  %v3569 = vunpack.c.h.b16 %v3486
  %v3570 = vunpack.c.l.b16 %v3487
  %v3571 = vunpack.c.h.b16 %v3487
  %v3572 = vunpack.c.l.b16 %v3488
  %v3573 = vunpack.c.h.b16 %v3488
  %v3574 = vunpack.c.l.b16 %v3489
  %v3575 = vunpack.c.h.b16 %v3489
  %v3576 = vunpack.c.l.b16 %v3490
  %v3577 = vunpack.c.h.b16 %v3490
  %v3578 = vunpack.c.l.b16 %v3491
  %v3579 = vunpack.c.h.b16 %v3491
  %v3580 = vunpack.c.l.b16 %v3492
  %v3581 = vunpack.c.h.b16 %v3492
  %v3582 = vunpack.c.l.b16 %v3493
  %v3583 = vunpack.c.h.b16 %v3493
  %v3584 = vunpack.c.l.b16 %v3494
  %v3585 = vunpack.c.h.b16 %v3494
  %v3586 = vunpack.c.l.b16 %v3495
  %v3587 = vunpack.c.h.b16 %v3495
  %v3588 = vunpack.c.l.b16 %v3496
  %v3589 = vunpack.c.h.b16 %v3496
  %v3590 = vunpack.c.l.b16 %v3497
  %v3591 = vunpack.c.h.b16 %v3497
  %v3592 = vunpack.c.l.b16 %v3498
  %v3593 = vunpack.c.h.b16 %v3498
  %v3594 = vunpack.c.l.b16 %v3499
  %v3595 = vunpack.c.h.b16 %v3499
  %v3596 = vpack.c.b16 %v3532, %v3532
  %v3597 = vpack.c.b16 %v3533, %v3533
  %v3598 = vpack.c.b16 %v3534, %v3534
  %v3599 = vpack.c.b16 %v3535, %v3535
  %v3600 = vpack.c.b16 %v3536, %v3536
  %v3601 = vpack.c.b16 %v3537, %v3537
  %v3602 = vpack.c.b16 %v3538, %v3538
  %v3603 = vpack.c.b16 %v3539, %v3539
  %v3604 = vpack.c.b16 %v3540, %v3540
  %v3605 = vpack.c.b16 %v3541, %v3541
  %v3606 = vpack.c.b16 %v3542, %v3542
  %v3607 = vpack.c.b16 %v3543, %v3543
  %v3608 = vpack.c.b16 %v3544, %v3544
  %v3609 = vpack.c.b16 %v3545, %v3545
  %v3610 = vpack.c.b16 %v3546, %v3546
  %v3611 = vpack.c.b16 %v3547, %v3547
  %v3612 = vpack.c.b16 %v3548, %v3548
  %v3613 = vpack.c.b16 %v3549, %v3549
  %v3614 = vpack.c.b16 %v3550, %v3550
  %v3615 = vpack.c.b16 %v3551, %v3551
  %v3616 = vpack.c.b16 %v3552, %v3552
  %v3617 = vpack.c.b16 %v3553, %v3553
  %v3618 = vpack.c.b16 %v3554, %v3554
  %v3619 = vpack.c.b16 %v3555, %v3555
  %v3620 = vpack.c.b16 %v3556, %v3556
  %v3621 = vpack.c.b16 %v3557, %v3557
  %v3622 = vpack.c.b16 %v3558, %v3558
  %v3623 = vpack.c.b16 %v3559, %v3559
  %v3624 = vpack.c.b16 %v3560, %v3560
  %v3625 = vpack.c.b16 %v3561, %v3561
  %v3626 = vpack.c.b16 %v3562, %v3562
  %v3627 = vpack.c.b16 %v3563, %v3563
  %v3628 = vpack.c.b16 %v3564, %v3564
  %v3629 = vpack.c.b16 %v3565, %v3565
  %v3630 = vpack.c.b16 %v3566, %v3566
  %v3631 = vpack.c.b16 %v3567, %v3567
  %v3632 = vpack.c.b16 %v3568, %v3568
  %v3633 = vpack.c.b16 %v3569, %v3569
  %v3634 = vpack.c.b16 %v3570, %v3570
  %v3635 = vpack.c.b16 %v3571, %v3571
  %v3636 = vpack.c.b16 %v3572, %v3572
  %v3637 = vpack.c.b16 %v3573, %v3573
  %v3638 = vpack.c.b16 %v3574, %v3574
  %v3639 = vpack.c.b16 %v3575, %v3575
  %v3640 = vpack.c.b16 %v3576, %v3576
  %v3641 = vpack.c.b16 %v3577, %v3577
  %v3642 = vpack.c.b16 %v3578, %v3578
  %v3643 = vpack.c.b16 %v3579, %v3579
  %v3644 = vpack.c.b16 %v3580, %v3580
  %v3645 = vpack.c.b16 %v3581, %v3581
  %v3646 = vpack.c.b16 %v3582, %v3582
  %v3647 = vpack.c.b16 %v3583, %v3583
  %v3648 = vpack.c.b16 %v3584, %v3584
  %v3649 = vpack.c.b16 %v3585, %v3585
  %v3650 = vpack.c.b16 %v3586, %v3586
  %v3651 = vpack.c.b16 %v3587, %v3587
  %v3652 = vpack.c.b16 %v3588, %v3588
  %v3653 = vpack.c.b16 %v3589, %v3589
  %v3654 = vpack.c.b16 %v3590, %v3590
  %v3655 = vpack.c.b16 %v3591, %v3591
  %v3656 = vpack.c.b16 %v3592, %v3592
  %v3657 = vpack.c.b16 %v3593, %v3593
  %v3658 = vpack.c.b16 %v3594, %v3594
  %v3659 = vpack.c.b16 %v3595, %v3595
  %3724 = vst [vmem:[%s5] sm:$0xf] %v3596
  %3725 = vst [vmem:[%s5 + $0x4] sm:$0xf] %v3597
  %3726 = vst [vmem:[%s5 + $0x8] sm:$0xf] %v3598
  %3727 = vst [vmem:[%s5 + $0xc] sm:$0xf] %v3599
  %3728 = vst [vmem:[%s5 + $0x10] sm:$0xf] %v3600
  %3729 = vst [vmem:[%s5 + $0x14] sm:$0xf] %v3601
  %3730 = vst [vmem:[%s5 + $0x18] sm:$0xf] %v3602
  %3731 = vst [vmem:[%s5 + $0x1c] sm:$0xf] %v3603
  %3732 = vst [vmem:[%s5 + $0x20] sm:$0xf] %v3604
  %3733 = vst [vmem:[%s5 + $0x24] sm:$0xf] %v3605
  %3734 = vst [vmem:[%s5 + $0x28] sm:$0xf] %v3606
  %3735 = vst [vmem:[%s5 + $0x2c] sm:$0xf] %v3607
  %3736 = vst [vmem:[%s5 + $0x30] sm:$0xf] %v3608
  %3737 = vst [vmem:[%s5 + $0x34] sm:$0xf] %v3609
  %3738 = vst [vmem:[%s5 + $0x38] sm:$0xf] %v3610
  %3739 = vst [vmem:[%s5 + $0x3c] sm:$0xf] %v3611
  %3740 = vst [vmem:[%s5 + $0x40] sm:$0xf] %v3612
  %3741 = vst [vmem:[%s5 + $0x44] sm:$0xf] %v3613
  %3742 = vst [vmem:[%s5 + $0x48] sm:$0xf] %v3614
  %3743 = vst [vmem:[%s5 + $0x4c] sm:$0xf] %v3615
  %3744 = vst [vmem:[%s5 + $0x50] sm:$0xf] %v3616
  %3745 = vst [vmem:[%s5 + $0x54] sm:$0xf] %v3617
  %3746 = vst [vmem:[%s5 + $0x58] sm:$0xf] %v3618
  %3747 = vst [vmem:[%s5 + $0x5c] sm:$0xf] %v3619
  %3748 = vst [vmem:[%s5 + $0x60] sm:$0xf] %v3620
  %3749 = vst [vmem:[%s5 + $0x64] sm:$0xf] %v3621
  %3750 = vst [vmem:[%s5 + $0x68] sm:$0xf] %v3622
  %3751 = vst [vmem:[%s5 + $0x6c] sm:$0xf] %v3623
  %3752 = vst [vmem:[%s5 + $0x70] sm:$0xf] %v3624
  %3753 = vst [vmem:[%s5 + $0x74] sm:$0xf] %v3625
  %3754 = vst [vmem:[%s5 + $0x78] sm:$0xf] %v3626
  %3755 = vst [vmem:[%s5 + $0x7c] sm:$0xf] %v3627
  %3756 = vst [vmem:[%s5 + $0x80] sm:$0xf] %v3628
  %3757 = vst [vmem:[%s5 + $0x84] sm:$0xf] %v3629
  %3758 = vst [vmem:[%s5 + $0x88] sm:$0xf] %v3630
  %3759 = vst [vmem:[%s5 + $0x8c] sm:$0xf] %v3631
  %3760 = vst [vmem:[%s5 + $0x90] sm:$0xf] %v3632
  %3761 = vst [vmem:[%s5 + $0x94] sm:$0xf] %v3633
  %3762 = vst [vmem:[%s5 + $0x98] sm:$0xf] %v3634
  %3763 = vst [vmem:[%s5 + $0x9c] sm:$0xf] %v3635
  %3764 = vst [vmem:[%s5 + $0xa0] sm:$0xf] %v3636
  %3765 = vst [vmem:[%s5 + $0xa4] sm:$0xf] %v3637
  %3766 = vst [vmem:[%s5 + $0xa8] sm:$0xf] %v3638
  %3767 = vst [vmem:[%s5 + $0xac] sm:$0xf] %v3639
  %3768 = vst [vmem:[%s5 + $0xb0] sm:$0xf] %v3640
  %3769 = vst [vmem:[%s5 + $0xb4] sm:$0xf] %v3641
  %3770 = vst [vmem:[%s5 + $0xb8] sm:$0xf] %v3642
  %3771 = vst [vmem:[%s5 + $0xbc] sm:$0xf] %v3643
  %3772 = vst [vmem:[%s5 + $0xc0] sm:$0xf] %v3644
  %3773 = vst [vmem:[%s5 + $0xc4] sm:$0xf] %v3645
  %3774 = vst [vmem:[%s5 + $0xc8] sm:$0xf] %v3646
  %3775 = vst [vmem:[%s5 + $0xcc] sm:$0xf] %v3647
  %3776 = vst [vmem:[%s5 + $0xd0] sm:$0xf] %v3648
  %3777 = vst [vmem:[%s5 + $0xd4] sm:$0xf] %v3649
  %3778 = vst [vmem:[%s5 + $0xd8] sm:$0xf] %v3650
  %3779 = vst [vmem:[%s5 + $0xdc] sm:$0xf] %v3651
  %3780 = vst [vmem:[%s5 + $0xe0] sm:$0xf] %v3652
  %3781 = vst [vmem:[%s5 + $0xe4] sm:$0xf] %v3653
  %3782 = vst [vmem:[%s5 + $0xe8] sm:$0xf] %v3654
  %3783 = vst [vmem:[%s5 + $0xec] sm:$0xf] %v3655
  %3784 = vst [vmem:[%s5 + $0xf0] sm:$0xf] %v3656
  %3785 = vst [vmem:[%s5 + $0xf4] sm:$0xf] %v3657
  %3786 = vst [vmem:[%s5 + $0xf8] sm:$0xf] %v3658
  %3787 = vst [vmem:[%s5 + $0xfc] sm:$0xf] %v3659
  // Predicated region
  $region22: #{pallas_decoder_forward.14} parent=0 // pred_check
    _
  $region23: #{pallas_decoder_forward.14} parent=0 // pred_check_branch
    %3789 = sbr.rel (0) target = $region25
  $region24: #{pallas_decoder_forward.14} parent=0 // pred_region
    _
  $region25: #{pallas_decoder_forward.14} parent=0 // pred_fallthru
    _
  // Predicated region
  $region26: #{pallas_decoder_forward.14} parent=0 // pred_check
    _
  $region27: #{pallas_decoder_forward.14} parent=0 // pred_check_branch
    %3791 = sbr.rel (0) target = $region29
  $region28: #{pallas_decoder_forward.14} parent=0 // pred_region
    _
  $region29: #{pallas_decoder_forward.14} parent=0 // pred_fallthru
    _

// kernel: pallas_decoder_forward.15
$region0: #{pallas_decoder_forward.15}
  #allocation0 [shape = 'u32[]', space=smem, size = 0x4, offset = 0x4, fixed_abs, tag = 'smem constant byte address 0x4 - core index']
  #allocation1 [shape = 'u32[144,128]{1,0:T(1,128)}', space=vmem, size = 0x12000, scoped, tag = 'internal scratch']
  %s0 = inlined_call_operand.vmem [shape: bf16[2048,288], index: 0, kind: input, shape index: {}]
  %s1 = inlined_call_operand.vmem [shape: bf16[288,192], index: 1, kind: input, shape index: {}]
  %s2 = inlined_call_operand.vmem [shape: f32[2048,192], index: 2, kind: output, shape index: {}]
  %s3 = sld [smem:[#allocation0]]
  $region41: #{pallas_decoder_forward.15} parent=0
    _
  %s5 = ssub.s32 1, %s3
  %s6 = scalar_select 0, %s5, %s3
  loop: start=0, step=1, limit=10
  $region2: #{pallas_decoder_forward.15} parent=0 // loop_pre_header
    _
  $region3: #{pallas_decoder_forward.15} parent=0 // loop_header
    %s8 = sphi 0, %s12
    %p9 = scmp.ge.s32.totalorder %s8, 10
    %s18 = sphi 0, %s20
    %s21 = sphi 0, %s18
    %s22 = sphi 0, %s21
    %s38 = sphi 0, %s22
    %s42 = sphi 0, %s42
    %s44 = sphi 0, %s42
    %s45 = sphi 0, %s44
    %s59 = sphi 0, %s45
    %s65 = sphi 0, %s67
    %s68 = sphi 0, %s65
    %s69 = sphi 0, %s68
    %s85 = sphi 0, %s69
  $region4: #{pallas_decoder_forward.15} parent=0 // loop_header_branch
    %11 = sbr.rel (%p9) target = $region8
  $region5: #{pallas_decoder_forward.15} parent=0 // loop_body
    %s13 = ssub.s32 %s8, 1
    %s14 = ssub.s32 %s8, 2
    %s15 = sadd.s32 %s8, 1
    %s16 = ssub.s32 %s8, %s15
    %p17 = scmp.eq.s32.totalorder %s16, 0
    %s19 = sadd.s32 %s18, 1
    %s20 = scalar_select %p17, %s18, %s19
    %p23 = pneg %p17
    %p24 = scmp.eq.s32.totalorder %s8, 7
    %p25 = por %p23, %p24
    %p26 = scmp.ne.s32.totalorder %s18, %s21
    %p27 = scmp.eq.s32.totalorder %s8, 0
    %p28 = por %p26, %p27
    %p29 = scmp.ne.s32.totalorder %s18, %s21
    %p30 = scmp.eq.s32.totalorder %s13, 7
    %p31 = por %p29, %p30
    %p32 = scmp.ne.s32.totalorder %s21, %s22
    %p33 = scmp.eq.s32.totalorder %s13, 0
    %p34 = por %p32, %p33
    %p35 = scmp.ne.s32.totalorder %s21, %s22
    %p36 = scmp.eq.s32.totalorder %s14, 7
    %p37 = por %p35, %p36
    %p39 = scmp.ne.s32.totalorder %s22, %s38
    %p40 = scmp.eq.s32.totalorder %s14, 0
    %p41 = por %p39, %p40
    %s43 = sadd.s32 %s42, 1
    %p46 = scmp.eq.s32.totalorder %s8, 7
    %p47 = scmp.ne.s32.totalorder %s42, %s44
    %p48 = scmp.eq.s32.totalorder %s8, 0
    %p49 = por %p47, %p48
    %p50 = scmp.ne.s32.totalorder %s42, %s44
    %p51 = scmp.eq.s32.totalorder %s13, 7
    %p52 = por %p50, %p51
    %p53 = scmp.ne.s32.totalorder %s44, %s45
    %p54 = scmp.eq.s32.totalorder %s13, 0
    %p55 = por %p53, %p54
    %p56 = scmp.ne.s32.totalorder %s44, %s45
    %p57 = scmp.eq.s32.totalorder %s14, 7
    %p58 = por %p56, %p57
    %p60 = scmp.ne.s32.totalorder %s45, %s59
    %p61 = scmp.eq.s32.totalorder %s14, 0
    %p62 = por %p60, %p61
    %s63 = ssub.s32 %s8, %s15
    %p64 = scmp.eq.s32.totalorder %s63, 0
    %s66 = sadd.s32 %s65, 1
    %s67 = scalar_select %p64, %s65, %s66
    %p70 = pneg %p64
    %p71 = scmp.eq.s32.totalorder %s8, 7
    %p72 = por %p70, %p71
    %p73 = scmp.ne.s32.totalorder %s65, %s68
    %p74 = scmp.eq.s32.totalorder %s8, 0
    %p75 = por %p73, %p74
    %p76 = scmp.ne.s32.totalorder %s65, %s68
    %p77 = scmp.eq.s32.totalorder %s13, 7
    %p78 = por %p76, %p77
    %p79 = scmp.ne.s32.totalorder %s68, %s69
    %p80 = scmp.eq.s32.totalorder %s13, 0
    %p81 = por %p79, %p80
    %p82 = scmp.ne.s32.totalorder %s68, %s69
    %p83 = scmp.eq.s32.totalorder %s14, 7
    %p84 = por %p82, %p83
    %p86 = scmp.ne.s32.totalorder %s69, %s85
    %p87 = scmp.eq.s32.totalorder %s14, 0
    %p88 = por %p86, %p87
    %p89 = scmp.le.s32.totalorder 1, %s8
    %p90 = scmp.lt.s32.totalorder %s8, 9
    %p91 = pnand %p89, %p90
    %p92 = pneg %p91
    // Predicated region
    $region9: #{pallas_decoder_forward.15} parent=5 // pred_check
      _
    $region10: #{pallas_decoder_forward.15} parent=5 // pred_check_branch
      %94 = sbr.rel (%p91) target = $region12
    $region11: #{pallas_decoder_forward.15} parent=5 // pred_region
      %s95 = ssub.s32 %s8, 1
      // Predicated region
      $region13: #{pallas_decoder_forward.15} parent=11 // pred_check
        %p96 = pneg %p55
      $region14: #{pallas_decoder_forward.15} parent=11 // pred_check_branch
        %98 = sbr.rel (%p96) target = $region16
      $region15: #{pallas_decoder_forward.15} parent=11 // pred_region
        _
      $region16: #{pallas_decoder_forward.15} parent=11 // pred_fallthru
        _
    $region12: #{pallas_decoder_forward.15} parent=5 // pred_fallthru
      _
    %p99 = scmp.lt.s32.totalorder %s8, 8
    // Predicated region
    $region17: #{pallas_decoder_forward.15} parent=5 // pred_check
      %p100 = pneg %p99
    $region18: #{pallas_decoder_forward.15} parent=5 // pred_check_branch
      %102 = sbr.rel (%p100) target = $region20
    $region19: #{pallas_decoder_forward.15} parent=5 // pred_region
      // Predicated region
      $region21: #{pallas_decoder_forward.15} parent=19 // pred_check
        %p103 = pneg %p28
      $region22: #{pallas_decoder_forward.15} parent=19 // pred_check_branch
        %105 = sbr.rel (%p103) target = $region24
      $region23: #{pallas_decoder_forward.15} parent=19 // pred_region
        %s106 = smul.u32 32, %s8
        %p107 = scmp.lt.s32.totalorder %s106, 255
        %s108 = scalar_select %p107, %s106, 255
        %s109 = smul.addr %s108, 3
        %s110 = smul.addr %s109, 4
        %s111 = scalar_lea.vmem %s0, %s110
        %s112 = smul.u32 32, %s8
      $region24: #{pallas_decoder_forward.15} parent=19 // pred_fallthru
        _
    $region20: #{pallas_decoder_forward.15} parent=5 // pred_fallthru
      _
    %p113 = scmp.le.s32.totalorder 1, %s8
    %p114 = scmp.lt.s32.totalorder %s8, 9
    %p115 = pnand %p113, %p114
    %p116 = pneg %p115
    // Predicated region
    $region25: #{pallas_decoder_forward.15} parent=5 // pred_check
      _
    $region26: #{pallas_decoder_forward.15} parent=5 // pred_check_branch
      %118 = sbr.rel (%p115) target = $region28
    $region27: #{pallas_decoder_forward.15} parent=5 // pred_region
      %s119 = ssub.s32 %s8, 1
      %s120 = smul.u32 32, %s13
      %p121 = scmp.lt.s32.totalorder %s120, 255
      %s122 = scalar_select %p121, %s120, 255
      %s123 = smul.addr %s122, 3
      %s124 = smul.addr %s123, 4
      %s125 = scalar_lea.vmem %s0, %s124
      %p126 = pneg %p34
      %p127 = pneg %p31
      %p128 = pneg %p55
      %p129 = pneg %p52
      %p130 = pneg %p81
      %p131 = pneg %p78
      %s132 = smul.u32 32, %s13
      %p133 = scmp.lt.s32.totalorder %s132, 255
      %s134 = scalar_select %p133, %s132, 255
      %s135 = smul.addr %s134, 2
      %s136 = smul.addr %s135, 8
      %s137 = scalar_lea.vmem %s2, %s136
      %s138 = smul.u32 32, %s13
      %p139 = scmp.lt.s32.totalorder %s138, 255
      %s140 = scalar_select %p139, %s138, 255
      %s141 = smul.addr %s140, 3
      %s142 = smul.addr %s141, 4
      %s143 = scalar_lea.vmem %s0, %s142
      %s144 = smul.u32 32, %s13
      %s145 = smul.u32 32, %s13
      %p146 = scmp.lt.s32.totalorder %s145, 255
      %s147 = scalar_select %p146, %s145, 255
      %s148 = smul.addr %s147, 2
      %s149 = smul.addr %s148, 8
      %s150 = scalar_lea.vmem %s2, %s149
      %s151 = smul.u32 32, %s13
      %v153 = vld [vmem:[%s143] sm:$0xff]
      %v154 = vld [vmem:[%s143 + $0x8] sm:$0xf]
      %v155 = vld [vmem:[%s143 + $0xc] sm:$0xff]
      %v156 = vld [vmem:[%s143 + $0x14] sm:$0xf]
      %v157 = vld [vmem:[%s143 + $0x18] sm:$0xff]
      %v158 = vld [vmem:[%s143 + $0x20] sm:$0xf]
      %v159 = vld [vmem:[%s143 + $0x24] sm:$0xff]
      %v160 = vld [vmem:[%s143 + $0x2c] sm:$0xf]
      %v161 = vld [vmem:[%s143 + $0x30] sm:$0xff]
      %v162 = vld [vmem:[%s143 + $0x38] sm:$0xf]
      %v163 = vld [vmem:[%s143 + $0x3c] sm:$0xff]
      %v164 = vld [vmem:[%s143 + $0x44] sm:$0xf]
      %v165 = vld [vmem:[%s143 + $0x48] sm:$0xff]
      %v166 = vld [vmem:[%s143 + $0x50] sm:$0xf]
      %v167 = vld [vmem:[%s143 + $0x54] sm:$0xff]
      %v168 = vld [vmem:[%s143 + $0x5c] sm:$0xf]
      %v169 = vld [vmem:[%s143 + $0x60] sm:$0xff]
      %v170 = vld [vmem:[%s143 + $0x68] sm:$0xf]
      %v171 = vld [vmem:[%s143 + $0x6c] sm:$0xff]
      %v172 = vld [vmem:[%s143 + $0x74] sm:$0xf]
      %v173 = vld [vmem:[%s143 + $0x78] sm:$0xff]
      %v174 = vld [vmem:[%s143 + $0x80] sm:$0xf]
      %v175 = vld [vmem:[%s143 + $0x84] sm:$0xff]
      %v176 = vld [vmem:[%s143 + $0x8c] sm:$0xf]
      %v177 = vld [vmem:[%s143 + $0x90] sm:$0xff]
      %v178 = vld [vmem:[%s143 + $0x98] sm:$0xf]
      %v179 = vld [vmem:[%s143 + $0x9c] sm:$0xff]
      %v180 = vld [vmem:[%s143 + $0xa4] sm:$0xf]
      %v181 = vld [vmem:[%s143 + $0xa8] sm:$0xff]
      %v182 = vld [vmem:[%s143 + $0xb0] sm:$0xf]
      %v183 = vld [vmem:[%s143 + $0xb4] sm:$0xff]
      %v184 = vld [vmem:[%s143 + $0xbc] sm:$0xf]
      %v185 = vld [vmem:[%s143 + $0xc0] sm:$0xff]
      %v186 = vld [vmem:[%s143 + $0xc8] sm:$0xf]
      %v187 = vld [vmem:[%s143 + $0xcc] sm:$0xff]
      %v188 = vld [vmem:[%s143 + $0xd4] sm:$0xf]
      %v189 = vld [vmem:[%s143 + $0xd8] sm:$0xff]
      %v190 = vld [vmem:[%s143 + $0xe0] sm:$0xf]
      %v191 = vld [vmem:[%s143 + $0xe4] sm:$0xff]
      %v192 = vld [vmem:[%s143 + $0xec] sm:$0xf]
      %v193 = vld [vmem:[%s143 + $0xf0] sm:$0xff]
      %v194 = vld [vmem:[%s143 + $0xf8] sm:$0xf]
      %v195 = vld [vmem:[%s143 + $0xfc] sm:$0xff]
      %v196 = vld [vmem:[%s143 + $0x104] sm:$0xf]
      %v197 = vld [vmem:[%s143 + $0x108] sm:$0xff]
      %v198 = vld [vmem:[%s143 + $0x110] sm:$0xf]
      %v199 = vld [vmem:[%s143 + $0x114] sm:$0xff]
      %v200 = vld [vmem:[%s143 + $0x11c] sm:$0xf]
      %v201 = vld [vmem:[%s143 + $0x120] sm:$0xff]
      %v202 = vld [vmem:[%s143 + $0x128] sm:$0xf]
      %v203 = vld [vmem:[%s143 + $0x12c] sm:$0xff]
      %v204 = vld [vmem:[%s143 + $0x134] sm:$0xf]
      %v205 = vld [vmem:[%s143 + $0x138] sm:$0xff]
      %v206 = vld [vmem:[%s143 + $0x140] sm:$0xf]
      %v207 = vld [vmem:[%s143 + $0x144] sm:$0xff]
      %v208 = vld [vmem:[%s143 + $0x14c] sm:$0xf]
      %v209 = vld [vmem:[%s143 + $0x150] sm:$0xff]
      %v210 = vld [vmem:[%s143 + $0x158] sm:$0xf]
      %v211 = vld [vmem:[%s143 + $0x15c] sm:$0xff]
      %v212 = vld [vmem:[%s143 + $0x164] sm:$0xf]
      %v213 = vld [vmem:[%s143 + $0x168] sm:$0xff]
      %v214 = vld [vmem:[%s143 + $0x170] sm:$0xf]
      %v215 = vld [vmem:[%s143 + $0x174] sm:$0xff]
      %v216 = vld [vmem:[%s143 + $0x17c] sm:$0xf]
      %v217 = vld [vmem:[%s1] sm:$0xff]
      %v218 = vld [vmem:[%s1 + $0x8] sm:$0xff]
      %v219 = vld [vmem:[%s1 + $0x10] sm:$0xff]
      %v220 = vld [vmem:[%s1 + $0x18] sm:$0xff]
      %v221 = vld [vmem:[%s1 + $0x20] sm:$0xff]
      %v222 = vld [vmem:[%s1 + $0x28] sm:$0xff]
      %v223 = vld [vmem:[%s1 + $0x30] sm:$0xff]
      %v224 = vld [vmem:[%s1 + $0x38] sm:$0xff]
      %v225 = vld [vmem:[%s1 + $0x40] sm:$0xff]
      %v226 = vld [vmem:[%s1 + $0x48] sm:$0xff]
      %v227 = vld [vmem:[%s1 + $0x50] sm:$0xff]
      %v228 = vld [vmem:[%s1 + $0x58] sm:$0xff]
      %v229 = vld [vmem:[%s1 + $0x60] sm:$0xff]
      %v230 = vld [vmem:[%s1 + $0x68] sm:$0xff]
      %v231 = vld [vmem:[%s1 + $0x70] sm:$0xff]
      %v232 = vld [vmem:[%s1 + $0x78] sm:$0xff]
      %v233 = vld [vmem:[%s1 + $0x80] sm:$0xff]
      %v234 = vld [vmem:[%s1 + $0x88] sm:$0xff]
      %v235 = vld [vmem:[%s1 + $0x90] sm:$0xff]
      %v236 = vld [vmem:[%s1 + $0x98] sm:$0xff]
      %v237 = vld [vmem:[%s1 + $0xa0] sm:$0xff]
      %v238 = vld [vmem:[%s1 + $0xa8] sm:$0xff]
      %v239 = vld [vmem:[%s1 + $0xb0] sm:$0xff]
      %v240 = vld [vmem:[%s1 + $0xb8] sm:$0xff]
      %v241 = vld [vmem:[%s1 + $0xc0] sm:$0xff]
      %v242 = vld [vmem:[%s1 + $0xc8] sm:$0xff]
      %v243 = vld [vmem:[%s1 + $0xd0] sm:$0xff]
      %v244 = vld [vmem:[%s1 + $0xd8] sm:$0xff]
      %v245 = vld [vmem:[%s1 + $0xe0] sm:$0xff]
      %v246 = vld [vmem:[%s1 + $0xe8] sm:$0xff]
      %v247 = vld [vmem:[%s1 + $0xf0] sm:$0xff]
      %v248 = vld [vmem:[%s1 + $0xf8] sm:$0xff]
      %v249 = vld [vmem:[%s1 + $0x100] sm:$0xff]
      %v250 = vld [vmem:[%s1 + $0x108] sm:$0xff]
      %v251 = vld [vmem:[%s1 + $0x110] sm:$0xff]
      %v252 = vld [vmem:[%s1 + $0x118] sm:$0xff]
      %v317 = vunpack.c.l.b16 %v153
      %v318 = vunpack.c.h.b16 %v153
      %v319 = vunpack.c.l.b16 %v154
      %v320 = vunpack.c.l.b16 %v155
      %v321 = vunpack.c.h.b16 %v155
      %v322 = vunpack.c.l.b16 %v156
      %v323 = vunpack.c.l.b16 %v157
      %v324 = vunpack.c.h.b16 %v157
      %v325 = vunpack.c.l.b16 %v158
      %v326 = vunpack.c.l.b16 %v159
      %v327 = vunpack.c.h.b16 %v159
      %v328 = vunpack.c.l.b16 %v160
      %v329 = vunpack.c.l.b16 %v161
      %v330 = vunpack.c.h.b16 %v161
      %v331 = vunpack.c.l.b16 %v162
      %v332 = vunpack.c.l.b16 %v163
      %v333 = vunpack.c.h.b16 %v163
      %v334 = vunpack.c.l.b16 %v164
      %v335 = vunpack.c.l.b16 %v165
      %v336 = vunpack.c.h.b16 %v165
      %v337 = vunpack.c.l.b16 %v166
      %v338 = vunpack.c.l.b16 %v167
      %v339 = vunpack.c.h.b16 %v167
      %v340 = vunpack.c.l.b16 %v168
      %v341 = vunpack.c.l.b16 %v169
      %v342 = vunpack.c.h.b16 %v169
      %v343 = vunpack.c.l.b16 %v170
      %v344 = vunpack.c.l.b16 %v171
      %v345 = vunpack.c.h.b16 %v171
      %v346 = vunpack.c.l.b16 %v172
      %v347 = vunpack.c.l.b16 %v173
      %v348 = vunpack.c.h.b16 %v173
      %v349 = vunpack.c.l.b16 %v174
      %v350 = vunpack.c.l.b16 %v175
      %v351 = vunpack.c.h.b16 %v175
      %v352 = vunpack.c.l.b16 %v176
      %v353 = vunpack.c.l.b16 %v177
      %v354 = vunpack.c.h.b16 %v177
      %v355 = vunpack.c.l.b16 %v178
      %v356 = vunpack.c.l.b16 %v179
      %v357 = vunpack.c.h.b16 %v179
      %v358 = vunpack.c.l.b16 %v180
      %v359 = vunpack.c.l.b16 %v181
      %v360 = vunpack.c.h.b16 %v181
      %v361 = vunpack.c.l.b16 %v182
      %v362 = vunpack.c.l.b16 %v183
      %v363 = vunpack.c.h.b16 %v183
      %v364 = vunpack.c.l.b16 %v184
      %v365 = vunpack.c.l.b16 %v185
      %v366 = vunpack.c.h.b16 %v185
      %v367 = vunpack.c.l.b16 %v186
      %v368 = vunpack.c.l.b16 %v187
      %v369 = vunpack.c.h.b16 %v187
      %v370 = vunpack.c.l.b16 %v188
      %v371 = vunpack.c.l.b16 %v189
      %v372 = vunpack.c.h.b16 %v189
      %v373 = vunpack.c.l.b16 %v190
      %v374 = vunpack.c.l.b16 %v191
      %v375 = vunpack.c.h.b16 %v191
      %v376 = vunpack.c.l.b16 %v192
      %v377 = vunpack.c.l.b16 %v193
      %v378 = vunpack.c.h.b16 %v193
      %v379 = vunpack.c.l.b16 %v194
      %v380 = vunpack.c.l.b16 %v195
      %v381 = vunpack.c.h.b16 %v195
      %v382 = vunpack.c.l.b16 %v196
      %v383 = vunpack.c.l.b16 %v197
      %v384 = vunpack.c.h.b16 %v197
      %v385 = vunpack.c.l.b16 %v198
      %v386 = vunpack.c.l.b16 %v199
      %v387 = vunpack.c.h.b16 %v199
      %v388 = vunpack.c.l.b16 %v200
      %v389 = vunpack.c.l.b16 %v201
      %v390 = vunpack.c.h.b16 %v201
      %v391 = vunpack.c.l.b16 %v202
      %v392 = vunpack.c.l.b16 %v203
      %v393 = vunpack.c.h.b16 %v203
      %v394 = vunpack.c.l.b16 %v204
      %v395 = vunpack.c.l.b16 %v205
      %v396 = vunpack.c.h.b16 %v205
      %v397 = vunpack.c.l.b16 %v206
      %v398 = vunpack.c.l.b16 %v207
      %v399 = vunpack.c.h.b16 %v207
      %v400 = vunpack.c.l.b16 %v208
      %v401 = vunpack.c.l.b16 %v209
      %v402 = vunpack.c.h.b16 %v209
      %v403 = vunpack.c.l.b16 %v210
      %v404 = vunpack.c.l.b16 %v211
      %v405 = vunpack.c.h.b16 %v211
      %v406 = vunpack.c.l.b16 %v212
      %v407 = vunpack.c.l.b16 %v213
      %v408 = vunpack.c.h.b16 %v213
      %v409 = vunpack.c.l.b16 %v214
      %v410 = vunpack.c.l.b16 %v215
      %v411 = vunpack.c.h.b16 %v215
      %v412 = vunpack.c.l.b16 %v216
      %v413 = vpack.c.b16 %v320, %v317
      %v414 = vpack.c.b16 %v321, %v318
      %v415 = vpack.c.b16 %v322, %v319
      %v416 = vpack.c.b16 %v326, %v323
      %v417 = vpack.c.b16 %v327, %v324
      %v418 = vpack.c.b16 %v328, %v325
      %v419 = vpack.c.b16 %v332, %v329
      %v420 = vpack.c.b16 %v333, %v330
      %v421 = vpack.c.b16 %v334, %v331
      %v422 = vpack.c.b16 %v338, %v335
      %v423 = vpack.c.b16 %v339, %v336
      %v424 = vpack.c.b16 %v340, %v337
      %v425 = vpack.c.b16 %v344, %v341
      %v426 = vpack.c.b16 %v345, %v342
      %v427 = vpack.c.b16 %v346, %v343
      %v428 = vpack.c.b16 %v350, %v347
      %v429 = vpack.c.b16 %v351, %v348
      %v430 = vpack.c.b16 %v352, %v349
      %v431 = vpack.c.b16 %v356, %v353
      %v432 = vpack.c.b16 %v357, %v354
      %v433 = vpack.c.b16 %v358, %v355
      %v434 = vpack.c.b16 %v362, %v359
      %v435 = vpack.c.b16 %v363, %v360
      %v436 = vpack.c.b16 %v364, %v361
      %v437 = vpack.c.b16 %v368, %v365
      %v438 = vpack.c.b16 %v369, %v366
      %v439 = vpack.c.b16 %v370, %v367
      %v440 = vpack.c.b16 %v374, %v371
      %v441 = vpack.c.b16 %v375, %v372
      %v442 = vpack.c.b16 %v376, %v373
      %v443 = vpack.c.b16 %v380, %v377
      %v444 = vpack.c.b16 %v381, %v378
      %v445 = vpack.c.b16 %v382, %v379
      %v446 = vpack.c.b16 %v386, %v383
      %v447 = vpack.c.b16 %v387, %v384
      %v448 = vpack.c.b16 %v388, %v385
      %v449 = vpack.c.b16 %v392, %v389
      %v450 = vpack.c.b16 %v393, %v390
      %v451 = vpack.c.b16 %v394, %v391
      %v452 = vpack.c.b16 %v398, %v395
      %v453 = vpack.c.b16 %v399, %v396
      %v454 = vpack.c.b16 %v400, %v397
      %v455 = vpack.c.b16 %v404, %v401
      %v456 = vpack.c.b16 %v405, %v402
      %v457 = vpack.c.b16 %v406, %v403
      %v458 = vpack.c.b16 %v410, %v407
      %v459 = vpack.c.b16 %v411, %v408
      %v460 = vpack.c.b16 %v412, %v409
      %v529 = vunpack.c.l.b16 %v217
      %v530 = vunpack.c.h.b16 %v217
      %v531 = vunpack.c.l.b16 %v218
      %v532 = vunpack.c.h.b16 %v218
      %v533 = vunpack.c.l.b16 %v219
      %v534 = vunpack.c.h.b16 %v219
      %v535 = vunpack.c.l.b16 %v220
      %v536 = vunpack.c.h.b16 %v220
      %v537 = vunpack.c.l.b16 %v221
      %v538 = vunpack.c.h.b16 %v221
      %v539 = vunpack.c.l.b16 %v222
      %v540 = vunpack.c.h.b16 %v222
      %v541 = vunpack.c.l.b16 %v223
      %v542 = vunpack.c.h.b16 %v223
      %v543 = vunpack.c.l.b16 %v224
      %v544 = vunpack.c.h.b16 %v224
      %v545 = vunpack.c.l.b16 %v225
      %v546 = vunpack.c.h.b16 %v225
      %v547 = vunpack.c.l.b16 %v226
      %v548 = vunpack.c.h.b16 %v226
      %v549 = vunpack.c.l.b16 %v227
      %v550 = vunpack.c.h.b16 %v227
      %v551 = vunpack.c.l.b16 %v228
      %v552 = vunpack.c.h.b16 %v228
      %v553 = vunpack.c.l.b16 %v229
      %v554 = vunpack.c.h.b16 %v229
      %v555 = vunpack.c.l.b16 %v230
      %v556 = vunpack.c.h.b16 %v230
      %v557 = vunpack.c.l.b16 %v231
      %v558 = vunpack.c.h.b16 %v231
      %v559 = vunpack.c.l.b16 %v232
      %v560 = vunpack.c.h.b16 %v232
      %v561 = vunpack.c.l.b16 %v233
      %v562 = vunpack.c.h.b16 %v233
      %v563 = vunpack.c.l.b16 %v234
      %v564 = vunpack.c.h.b16 %v234
      %v565 = vunpack.c.l.b16 %v235
      %v566 = vunpack.c.h.b16 %v235
      %v567 = vunpack.c.l.b16 %v236
      %v568 = vunpack.c.h.b16 %v236
      %v569 = vunpack.c.l.b16 %v237
      %v570 = vunpack.c.h.b16 %v237
      %v571 = vunpack.c.l.b16 %v238
      %v572 = vunpack.c.h.b16 %v238
      %v573 = vunpack.c.l.b16 %v239
      %v574 = vunpack.c.h.b16 %v239
      %v575 = vunpack.c.l.b16 %v240
      %v576 = vunpack.c.h.b16 %v240
      %v577 = vunpack.c.l.b16 %v241
      %v578 = vunpack.c.h.b16 %v241
      %v579 = vunpack.c.l.b16 %v242
      %v580 = vunpack.c.h.b16 %v242
      %v581 = vunpack.c.l.b16 %v243
      %v582 = vunpack.c.h.b16 %v243
      %v583 = vunpack.c.l.b16 %v244
      %v584 = vunpack.c.h.b16 %v244
      %v585 = vunpack.c.l.b16 %v245
      %v586 = vunpack.c.h.b16 %v245
      %v587 = vunpack.c.l.b16 %v246
      %v588 = vunpack.c.h.b16 %v246
      %v589 = vunpack.c.l.b16 %v247
      %v590 = vunpack.c.h.b16 %v247
      %v591 = vunpack.c.l.b16 %v248
      %v592 = vunpack.c.h.b16 %v248
      %v593 = vunpack.c.l.b16 %v249
      %v594 = vunpack.c.h.b16 %v249
      %v595 = vunpack.c.l.b16 %v250
      %v596 = vunpack.c.h.b16 %v250
      %v597 = vunpack.c.l.b16 %v251
      %v598 = vunpack.c.h.b16 %v251
      %v599 = vunpack.c.l.b16 %v252
      %v600 = vunpack.c.h.b16 %v252
      %v601 = vpack.c.b16 %v531, %v529
      %v602 = vpack.c.b16 %v532, %v530
      %v603 = vpack.c.b16 %v535, %v533
      %v604 = vpack.c.b16 %v536, %v534
      %v605 = vpack.c.b16 %v539, %v537
      %v606 = vpack.c.b16 %v540, %v538
      %v607 = vpack.c.b16 %v543, %v541
      %v608 = vpack.c.b16 %v544, %v542
      %v609 = vpack.c.b16 %v547, %v545
      %v610 = vpack.c.b16 %v548, %v546
      %v611 = vpack.c.b16 %v551, %v549
      %v612 = vpack.c.b16 %v552, %v550
      %v613 = vpack.c.b16 %v555, %v553
      %v614 = vpack.c.b16 %v556, %v554
      %v615 = vpack.c.b16 %v559, %v557
      %v616 = vpack.c.b16 %v560, %v558
      %v617 = vpack.c.b16 %v563, %v561
      %v618 = vpack.c.b16 %v564, %v562
      %v619 = vpack.c.b16 %v567, %v565
      %v620 = vpack.c.b16 %v568, %v566
      %v621 = vpack.c.b16 %v571, %v569
      %v622 = vpack.c.b16 %v572, %v570
      %v623 = vpack.c.b16 %v575, %v573
      %v624 = vpack.c.b16 %v576, %v574
      %v625 = vpack.c.b16 %v579, %v577
      %v626 = vpack.c.b16 %v580, %v578
      %v627 = vpack.c.b16 %v583, %v581
      %v628 = vpack.c.b16 %v584, %v582
      %v629 = vpack.c.b16 %v587, %v585
      %v630 = vpack.c.b16 %v588, %v586
      %v631 = vpack.c.b16 %v591, %v589
      %v632 = vpack.c.b16 %v592, %v590
      %v633 = vpack.c.b16 %v595, %v593
      %v634 = vpack.c.b16 %v596, %v594
      %v635 = vpack.c.b16 %v599, %v597
      %v636 = vpack.c.b16 %v600, %v598
      %vm673 = vcmask 261120
      %v675 = vsel %vm673, %v415, 0
      %v678 = vsel %vm673, %v418, 0
      %v681 = vsel %vm673, %v421, 0
      %v684 = vsel %vm673, %v424, 0
      %v687 = vsel %vm673, %v427, 0
      %v690 = vsel %vm673, %v430, 0
      %v693 = vsel %vm673, %v433, 0
      %v696 = vsel %vm673, %v436, 0
      %v699 = vsel %vm673, %v439, 0
      %v702 = vsel %vm673, %v442, 0
      %v705 = vsel %vm673, %v445, 0
      %v708 = vsel %vm673, %v448, 0
      %v711 = vsel %vm673, %v451, 0
      %v714 = vsel %vm673, %v454, 0
      %v717 = vsel %vm673, %v457, 0
      %v720 = vsel %vm673, %v460, 0
      %722 = vmatprep.subr.bf16.mxu0 %v602
      %723 = vmatpush1.bf16.msra.mxu0 %v601
      %724 = vmatprep.subr.bf16.mxu0 %v604
      %725 = vmatpush1.bf16.msra.mxu0 %v603
      %726 = vmatprep.subr.bf16.mxu0 %v606
      %727 = vmatpush1.bf16.msra.mxu0 %v605
      %728 = vmatprep.subr.bf16.mxu0 %v608
      %729 = vmatpush1.bf16.msra.mxu0 %v607
      %730 = vmatprep.subr.bf16.mxu0 %v610
      %731 = vmatpush1.bf16.msra.mxu0 %v609
      %732 = vmatprep.subr.bf16.mxu0 %v612
      %733 = vmatpush1.bf16.msra.mxu0 %v611
      %734 = vmatprep.subr.bf16.mxu0 %v614
      %735 = vmatpush1.bf16.msra.mxu0 %v613
      %736 = vmatprep.subr.bf16.mxu0 %v616
      %737 = vmatpush1.bf16.msra.mxu0 %v615
      %738 = vmatprep.subr.bf16.mxu0 %v618
      %739 = vmatpush1.bf16.msra.mxu0 %v617
      %740 = vmatprep.subr.bf16.mxu0 %v620
      %741 = vmatpush1.bf16.msra.mxu0 %v619
      %742 = vmatprep.subr.bf16.mxu0 %v622
      %743 = vmatpush1.bf16.msra.mxu0 %v621
      %744 = vmatprep.subr.bf16.mxu0 %v624
      %745 = vmatpush1.bf16.msra.mxu0 %v623
      %746 = vmatprep.subr.bf16.mxu0 %v626
      %747 = vmatpush1.bf16.msra.mxu0 %v625
      %748 = vmatprep.subr.bf16.mxu0 %v628
      %749 = vmatpush1.bf16.msra.mxu0 %v627
      %750 = vmatprep.subr.bf16.mxu0 %v630
      %751 = vmatpush1.bf16.msra.mxu0 %v629
      %752 = vmatprep.subr.bf16.mxu0 %v632
      %753 = vmatpush1.bf16.msra.mxu0 %v631
      %754 = vmatprep.mubr.bf16.mxu0 %v414
      %755 = vmatmul.mubr.bf16.gmra.mrb[0].mxu0 %v413
      %v756 = vpop.f32.mrb[0].mxu0
      %v757 = vadd.f32 0.0, %v756
      %v758 = vpop.f32.mrb[0].mxu0
      %v759 = vadd.f32 0.0, %v758
      %v760 = vpop.f32.mrb[0].mxu0
      %v761 = vadd.f32 0.0, %v760
      %v762 = vpop.f32.mrb[0].mxu0
      %v763 = vadd.f32 0.0, %v762
      %764 = vmatprep.mubr.bf16.mxu0 %v417
      %765 = vmatmul.mubr.bf16.gmra.mrb[0].mxu0 %v416
      %v766 = vpop.f32.mrb[0].mxu0
      %v767 = vadd.f32 0.0, %v766
      %v768 = vpop.f32.mrb[0].mxu0
      %v769 = vadd.f32 0.0, %v768
      %v770 = vpop.f32.mrb[0].mxu0
      %v771 = vadd.f32 0.0, %v770
      %v772 = vpop.f32.mrb[0].mxu0
      %v773 = vadd.f32 0.0, %v772
      %774 = vmatprep.mubr.bf16.mxu0 %v420
      %775 = vmatmul.mubr.bf16.gmra.mrb[0].mxu0 %v419
      %v776 = vpop.f32.mrb[0].mxu0
      %v777 = vadd.f32 0.0, %v776
      %v778 = vpop.f32.mrb[0].mxu0
      %v779 = vadd.f32 0.0, %v778
      %v780 = vpop.f32.mrb[0].mxu0
      %v781 = vadd.f32 0.0, %v780
      %v782 = vpop.f32.mrb[0].mxu0
      %v783 = vadd.f32 0.0, %v782
      %784 = vmatprep.mubr.bf16.mxu0 %v423
      %785 = vmatmul.mubr.bf16.gmra.mrb[0].mxu0 %v422
      %v786 = vpop.f32.mrb[0].mxu0
      %v787 = vadd.f32 0.0, %v786
      %v788 = vpop.f32.mrb[0].mxu0
      %v789 = vadd.f32 0.0, %v788
      %v790 = vpop.f32.mrb[0].mxu0
      %v791 = vadd.f32 0.0, %v790
      %v792 = vpop.f32.mrb[0].mxu0
      %v793 = vadd.f32 0.0, %v792
      %794 = vmatprep.mubr.bf16.mxu0 %v426
      %795 = vmatmul.mubr.bf16.gmra.mrb[0].mxu0 %v425
      %v796 = vpop.f32.mrb[0].mxu0
      %v797 = vadd.f32 0.0, %v796
      %v798 = vpop.f32.mrb[0].mxu0
      %v799 = vadd.f32 0.0, %v798
      %v800 = vpop.f32.mrb[0].mxu0
      %v801 = vadd.f32 0.0, %v800
      %v802 = vpop.f32.mrb[0].mxu0
      %v803 = vadd.f32 0.0, %v802
      %804 = vmatprep.mubr.bf16.mxu0 %v429
      %805 = vmatmul.mubr.bf16.gmra.mrb[0].mxu0 %v428
      %v806 = vpop.f32.mrb[0].mxu0
      %v807 = vadd.f32 0.0, %v806
      %v808 = vpop.f32.mrb[0].mxu0
      %v809 = vadd.f32 0.0, %v808
      %v810 = vpop.f32.mrb[0].mxu0
      %v811 = vadd.f32 0.0, %v810
      %v812 = vpop.f32.mrb[0].mxu0
      %v813 = vadd.f32 0.0, %v812
      %814 = vmatprep.mubr.bf16.mxu0 %v432
      %815 = vmatmul.mubr.bf16.gmra.mrb[0].mxu0 %v431
      %v816 = vpop.f32.mrb[0].mxu0
      %v817 = vadd.f32 0.0, %v816
      %v818 = vpop.f32.mrb[0].mxu0
      %v819 = vadd.f32 0.0, %v818
      %v820 = vpop.f32.mrb[0].mxu0
      %v821 = vadd.f32 0.0, %v820
      %v822 = vpop.f32.mrb[0].mxu0
      %v823 = vadd.f32 0.0, %v822
      %824 = vmatprep.mubr.bf16.mxu0 %v435
      %825 = vmatmul.mubr.bf16.gmra.mrb[0].mxu0 %v434
      %v826 = vpop.f32.mrb[0].mxu0
      %v827 = vadd.f32 0.0, %v826
      %v828 = vpop.f32.mrb[0].mxu0
      %v829 = vadd.f32 0.0, %v828
      %v830 = vpop.f32.mrb[0].mxu0
      %v831 = vadd.f32 0.0, %v830
      %v832 = vpop.f32.mrb[0].mxu0
      %v833 = vadd.f32 0.0, %v832
      %834 = vmatprep.mubr.bf16.mxu0 %v438
      %835 = vmatmul.mubr.bf16.gmra.mrb[0].mxu0 %v437
      %v836 = vpop.f32.mrb[0].mxu0
      %v837 = vadd.f32 0.0, %v836
      %v838 = vpop.f32.mrb[0].mxu0
      %v839 = vadd.f32 0.0, %v838
      %v840 = vpop.f32.mrb[0].mxu0
      %v841 = vadd.f32 0.0, %v840
      %v842 = vpop.f32.mrb[0].mxu0
      %v843 = vadd.f32 0.0, %v842
      %844 = vmatprep.mubr.bf16.mxu0 %v441
      %845 = vmatmul.mubr.bf16.gmra.mrb[0].mxu0 %v440
      %v846 = vpop.f32.mrb[0].mxu0
      %v847 = vadd.f32 0.0, %v846
      %v848 = vpop.f32.mrb[0].mxu0
      %v849 = vadd.f32 0.0, %v848
      %v850 = vpop.f32.mrb[0].mxu0
      %v851 = vadd.f32 0.0, %v850
      %v852 = vpop.f32.mrb[0].mxu0
      %v853 = vadd.f32 0.0, %v852
      %854 = vmatprep.mubr.bf16.mxu0 %v444
      %855 = vmatmul.mubr.bf16.gmra.mrb[0].mxu0 %v443
      %v856 = vpop.f32.mrb[0].mxu0
      %v857 = vadd.f32 0.0, %v856
      %v858 = vpop.f32.mrb[0].mxu0
      %v859 = vadd.f32 0.0, %v858
      %v860 = vpop.f32.mrb[0].mxu0
      %v861 = vadd.f32 0.0, %v860
      %v862 = vpop.f32.mrb[0].mxu0
      %v863 = vadd.f32 0.0, %v862
      %864 = vmatprep.mubr.bf16.mxu0 %v447
      %865 = vmatmul.mubr.bf16.gmra.mrb[0].mxu0 %v446
      %v866 = vpop.f32.mrb[0].mxu0
      %v867 = vadd.f32 0.0, %v866
      %v868 = vpop.f32.mrb[0].mxu0
      %v869 = vadd.f32 0.0, %v868
      %v870 = vpop.f32.mrb[0].mxu0
      %v871 = vadd.f32 0.0, %v870
      %v872 = vpop.f32.mrb[0].mxu0
      %v873 = vadd.f32 0.0, %v872
      %874 = vmatprep.mubr.bf16.mxu0 %v450
      %875 = vmatmul.mubr.bf16.gmra.mrb[0].mxu0 %v449
      %v876 = vpop.f32.mrb[0].mxu0
      %v877 = vadd.f32 0.0, %v876
      %v878 = vpop.f32.mrb[0].mxu0
      %v879 = vadd.f32 0.0, %v878
      %v880 = vpop.f32.mrb[0].mxu0
      %v881 = vadd.f32 0.0, %v880
      %v882 = vpop.f32.mrb[0].mxu0
      %v883 = vadd.f32 0.0, %v882
      %884 = vmatprep.mubr.bf16.mxu0 %v453
      %885 = vmatmul.mubr.bf16.gmra.mrb[0].mxu0 %v452
      %v886 = vpop.f32.mrb[0].mxu0
      %v887 = vadd.f32 0.0, %v886
      %v888 = vpop.f32.mrb[0].mxu0
      %v889 = vadd.f32 0.0, %v888
      %v890 = vpop.f32.mrb[0].mxu0
      %v891 = vadd.f32 0.0, %v890
      %v892 = vpop.f32.mrb[0].mxu0
      %v893 = vadd.f32 0.0, %v892
      %894 = vmatprep.mubr.bf16.mxu0 %v456
      %895 = vmatmul.mubr.bf16.gmra.mrb[0].mxu0 %v455
      %v896 = vpop.f32.mrb[0].mxu0
      %v897 = vadd.f32 0.0, %v896
      %v898 = vpop.f32.mrb[0].mxu0
      %v899 = vadd.f32 0.0, %v898
      %v900 = vpop.f32.mrb[0].mxu0
      %v901 = vadd.f32 0.0, %v900
      %v902 = vpop.f32.mrb[0].mxu0
      %v903 = vadd.f32 0.0, %v902
      %904 = vmatprep.mubr.bf16.mxu0 %v459
      %905 = vmatmul.mubr.bf16.gmra.mrb[0].mxu0 %v458
      %v906 = vpop.f32.mrb[0].mxu0
      %v907 = vadd.f32 0.0, %v906
      %v908 = vpop.f32.mrb[0].mxu0
      %v909 = vadd.f32 0.0, %v908
      %v910 = vpop.f32.mrb[0].mxu0
      %v911 = vadd.f32 0.0, %v910
      %v912 = vpop.f32.mrb[0].mxu0
      %v913 = vadd.f32 0.0, %v912
      %914 = vdwg.mxu0
      %915 = vmatprep.subr.bf16.mxu0 %v634
      %916 = vmatpush1.bf16.msra.mxu0 %v633
      %917 = vmatprep.subr.bf16.mxu0 %v636
      %918 = vmatpush1.bf16.msra.mxu0 %v635
      %919 = vmatprep.subr.bf16.mxu0 0
      %920 = vmatpush1.bf16.msra.mxu0 0
      %921 = vmatprep.subr.bf16.mxu0 0
      %922 = vmatpush1.bf16.msra.mxu0 0
      %923 = vmatprep.subr.bf16.mxu0 0
      %924 = vmatpush1.bf16.msra.mxu0 0
      %925 = vmatprep.subr.bf16.mxu0 0
      %926 = vmatpush1.bf16.msra.mxu0 0
      %927 = vmatprep.subr.bf16.mxu0 0
      %928 = vmatpush1.bf16.msra.mxu0 0
      %929 = vmatprep.subr.bf16.mxu0 0
      %930 = vmatpush1.bf16.msra.mxu0 0
      %931 = vmatprep.subr.bf16.mxu0 0
      %932 = vmatpush1.bf16.msra.mxu0 0
      %933 = vmatprep.subr.bf16.mxu0 0
      %934 = vmatpush1.bf16.msra.mxu0 0
      %935 = vmatprep.subr.bf16.mxu0 0
      %936 = vmatpush1.bf16.msra.mxu0 0
      %937 = vmatprep.subr.bf16.mxu0 0
      %938 = vmatpush1.bf16.msra.mxu0 0
      %939 = vmatprep.subr.bf16.mxu0 0
      %940 = vmatpush1.bf16.msra.mxu0 0
      %941 = vmatprep.subr.bf16.mxu0 0
      %942 = vmatpush1.bf16.msra.mxu0 0
      %943 = vmatprep.subr.bf16.mxu0 0
      %944 = vmatpush1.bf16.msra.mxu0 0
      %945 = vmatprep.subr.bf16.mxu0 0
      %946 = vmatpush1.bf16.msra.mxu0 0
      %947 = vmatprep.mubr.bf16.mxu0 0
      %948 = vmatmul.mubr.bf16.gmra.mrb[0].mxu0 %v675
      %v949 = vpop.f32.mrb[0].mxu0
      %v950 = vadd.f32 %v757, %v949
      %v951 = vpop.f32.mrb[0].mxu0
      %v952 = vadd.f32 %v759, %v951
      %v953 = vpop.f32.mrb[0].mxu0
      %v954 = vadd.f32 %v761, %v953
      %v955 = vpop.f32.mrb[0].mxu0
      %v956 = vadd.f32 %v763, %v955
      %957 = vmatprep.mubr.bf16.mxu0 0
      %958 = vmatmul.mubr.bf16.gmra.mrb[0].mxu0 %v678
      %v959 = vpop.f32.mrb[0].mxu0
      %v960 = vadd.f32 %v767, %v959
      %v961 = vpop.f32.mrb[0].mxu0
      %v962 = vadd.f32 %v769, %v961
      %v963 = vpop.f32.mrb[0].mxu0
      %v964 = vadd.f32 %v771, %v963
      %v965 = vpop.f32.mrb[0].mxu0
      %v966 = vadd.f32 %v773, %v965
      %967 = vmatprep.mubr.bf16.mxu0 0
      %968 = vmatmul.mubr.bf16.gmra.mrb[0].mxu0 %v681
      %v969 = vpop.f32.mrb[0].mxu0
      %v970 = vadd.f32 %v777, %v969
      %v971 = vpop.f32.mrb[0].mxu0
      %v972 = vadd.f32 %v779, %v971
      %v973 = vpop.f32.mrb[0].mxu0
      %v974 = vadd.f32 %v781, %v973
      %v975 = vpop.f32.mrb[0].mxu0
      %v976 = vadd.f32 %v783, %v975
      %977 = vmatprep.mubr.bf16.mxu0 0
      %978 = vmatmul.mubr.bf16.gmra.mrb[0].mxu0 %v684
      %v979 = vpop.f32.mrb[0].mxu0
      %v980 = vadd.f32 %v787, %v979
      %v981 = vpop.f32.mrb[0].mxu0
      %v982 = vadd.f32 %v789, %v981
      %v983 = vpop.f32.mrb[0].mxu0
      %v984 = vadd.f32 %v791, %v983
      %v985 = vpop.f32.mrb[0].mxu0
      %v986 = vadd.f32 %v793, %v985
      %987 = vmatprep.mubr.bf16.mxu0 0
      %988 = vmatmul.mubr.bf16.gmra.mrb[0].mxu0 %v687
      %v989 = vpop.f32.mrb[0].mxu0
      %v990 = vadd.f32 %v797, %v989
      %v991 = vpop.f32.mrb[0].mxu0
      %v992 = vadd.f32 %v799, %v991
      %v993 = vpop.f32.mrb[0].mxu0
      %v994 = vadd.f32 %v801, %v993
      %v995 = vpop.f32.mrb[0].mxu0
      %v996 = vadd.f32 %v803, %v995
      %997 = vmatprep.mubr.bf16.mxu0 0
      %998 = vmatmul.mubr.bf16.gmra.mrb[0].mxu0 %v690
      %v999 = vpop.f32.mrb[0].mxu0
      %v1000 = vadd.f32 %v807, %v999
      %v1001 = vpop.f32.mrb[0].mxu0
      %v1002 = vadd.f32 %v809, %v1001
      %v1003 = vpop.f32.mrb[0].mxu0
      %v1004 = vadd.f32 %v811, %v1003
      %v1005 = vpop.f32.mrb[0].mxu0
      %v1006 = vadd.f32 %v813, %v1005
      %1007 = vmatprep.mubr.bf16.mxu0 0
      %1008 = vmatmul.mubr.bf16.gmra.mrb[0].mxu0 %v693
      %v1009 = vpop.f32.mrb[0].mxu0
      %v1010 = vadd.f32 %v817, %v1009
      %v1011 = vpop.f32.mrb[0].mxu0
      %v1012 = vadd.f32 %v819, %v1011
      %v1013 = vpop.f32.mrb[0].mxu0
      %v1014 = vadd.f32 %v821, %v1013
      %v1015 = vpop.f32.mrb[0].mxu0
      %v1016 = vadd.f32 %v823, %v1015
      %1017 = vmatprep.mubr.bf16.mxu0 0
      %1018 = vmatmul.mubr.bf16.gmra.mrb[0].mxu0 %v696
      %v1019 = vpop.f32.mrb[0].mxu0
      %v1020 = vadd.f32 %v827, %v1019
      %v1021 = vpop.f32.mrb[0].mxu0
      %v1022 = vadd.f32 %v829, %v1021
      %v1023 = vpop.f32.mrb[0].mxu0
      %v1024 = vadd.f32 %v831, %v1023
      %v1025 = vpop.f32.mrb[0].mxu0
      %v1026 = vadd.f32 %v833, %v1025
      %1027 = vmatprep.mubr.bf16.mxu0 0
      %1028 = vmatmul.mubr.bf16.gmra.mrb[0].mxu0 %v699
      %v1029 = vpop.f32.mrb[0].mxu0
      %v1030 = vadd.f32 %v837, %v1029
      %v1031 = vpop.f32.mrb[0].mxu0
      %v1032 = vadd.f32 %v839, %v1031
      %v1033 = vpop.f32.mrb[0].mxu0
      %v1034 = vadd.f32 %v841, %v1033
      %v1035 = vpop.f32.mrb[0].mxu0
      %v1036 = vadd.f32 %v843, %v1035
      %1037 = vmatprep.mubr.bf16.mxu0 0
      %1038 = vmatmul.mubr.bf16.gmra.mrb[0].mxu0 %v702
      %v1039 = vpop.f32.mrb[0].mxu0
      %v1040 = vadd.f32 %v847, %v1039
      %v1041 = vpop.f32.mrb[0].mxu0
      %v1042 = vadd.f32 %v849, %v1041
      %v1043 = vpop.f32.mrb[0].mxu0
      %v1044 = vadd.f32 %v851, %v1043
      %v1045 = vpop.f32.mrb[0].mxu0
      %v1046 = vadd.f32 %v853, %v1045
      %1047 = vmatprep.mubr.bf16.mxu0 0
      %1048 = vmatmul.mubr.bf16.gmra.mrb[0].mxu0 %v705
      %v1049 = vpop.f32.mrb[0].mxu0
      %v1050 = vadd.f32 %v857, %v1049
      %v1051 = vpop.f32.mrb[0].mxu0
      %v1052 = vadd.f32 %v859, %v1051
      %v1053 = vpop.f32.mrb[0].mxu0
      %v1054 = vadd.f32 %v861, %v1053
      %v1055 = vpop.f32.mrb[0].mxu0
      %v1056 = vadd.f32 %v863, %v1055
      %1057 = vmatprep.mubr.bf16.mxu0 0
      %1058 = vmatmul.mubr.bf16.gmra.mrb[0].mxu0 %v708
      %v1059 = vpop.f32.mrb[0].mxu0
      %v1060 = vadd.f32 %v867, %v1059
      %v1061 = vpop.f32.mrb[0].mxu0
      %v1062 = vadd.f32 %v869, %v1061
      %v1063 = vpop.f32.mrb[0].mxu0
      %v1064 = vadd.f32 %v871, %v1063
      %v1065 = vpop.f32.mrb[0].mxu0
      %v1066 = vadd.f32 %v873, %v1065
      %1067 = vmatprep.mubr.bf16.mxu0 0
      %1068 = vmatmul.mubr.bf16.gmra.mrb[0].mxu0 %v711
      %v1069 = vpop.f32.mrb[0].mxu0
      %v1070 = vadd.f32 %v877, %v1069
      %v1071 = vpop.f32.mrb[0].mxu0
      %v1072 = vadd.f32 %v879, %v1071
      %v1073 = vpop.f32.mrb[0].mxu0
      %v1074 = vadd.f32 %v881, %v1073
      %v1075 = vpop.f32.mrb[0].mxu0
      %v1076 = vadd.f32 %v883, %v1075
      %1077 = vmatprep.mubr.bf16.mxu0 0
      %1078 = vmatmul.mubr.bf16.gmra.mrb[0].mxu0 %v714
      %v1079 = vpop.f32.mrb[0].mxu0
      %v1080 = vadd.f32 %v887, %v1079
      %v1081 = vpop.f32.mrb[0].mxu0
      %v1082 = vadd.f32 %v889, %v1081
      %v1083 = vpop.f32.mrb[0].mxu0
      %v1084 = vadd.f32 %v891, %v1083
      %v1085 = vpop.f32.mrb[0].mxu0
      %v1086 = vadd.f32 %v893, %v1085
      %1087 = vmatprep.mubr.bf16.mxu0 0
      %1088 = vmatmul.mubr.bf16.gmra.mrb[0].mxu0 %v717
      %v1089 = vpop.f32.mrb[0].mxu0
      %v1090 = vadd.f32 %v897, %v1089
      %v1091 = vpop.f32.mrb[0].mxu0
      %v1092 = vadd.f32 %v899, %v1091
      %v1093 = vpop.f32.mrb[0].mxu0
      %v1094 = vadd.f32 %v901, %v1093
      %v1095 = vpop.f32.mrb[0].mxu0
      %v1096 = vadd.f32 %v903, %v1095
      %1097 = vmatprep.mubr.bf16.mxu0 0
      %1098 = vmatmul.mubr.bf16.gmra.mrb[0].mxu0 %v720
      %v1099 = vpop.f32.mrb[0].mxu0
      %v1100 = vadd.f32 %v907, %v1099
      %v1101 = vpop.f32.mrb[0].mxu0
      %v1102 = vadd.f32 %v909, %v1101
      %v1103 = vpop.f32.mrb[0].mxu0
      %v1104 = vadd.f32 %v911, %v1103
      %v1105 = vpop.f32.mrb[0].mxu0
      %v1106 = vadd.f32 %v913, %v1105
      %1107 = vdwg.mxu0
      %v1108 = vtanh.pop %v950
      %v1109 = vtanh.pop %v952
      %v1110 = vtanh.pop %v954
      %v1111 = vtanh.pop %v956
      %v1112 = vtanh.pop %v960
      %v1113 = vtanh.pop %v962
      %v1114 = vtanh.pop %v964
      %v1115 = vtanh.pop %v966
      %v1116 = vtanh.pop %v970
      %v1117 = vtanh.pop %v972
      %v1118 = vtanh.pop %v974
      %v1119 = vtanh.pop %v976
      %v1120 = vtanh.pop %v980
      %v1121 = vtanh.pop %v982
      %v1122 = vtanh.pop %v984
      %v1123 = vtanh.pop %v986
      %v1124 = vtanh.pop %v990
      %v1125 = vtanh.pop %v992
      %v1126 = vtanh.pop %v994
      %v1127 = vtanh.pop %v996
      %v1128 = vtanh.pop %v1000
      %v1129 = vtanh.pop %v1002
      %v1130 = vtanh.pop %v1004
      %v1131 = vtanh.pop %v1006
      %v1132 = vtanh.pop %v1010
      %v1133 = vtanh.pop %v1012
      %v1134 = vtanh.pop %v1014
      %v1135 = vtanh.pop %v1016
      %v1136 = vtanh.pop %v1020
      %v1137 = vtanh.pop %v1022
      %v1138 = vtanh.pop %v1024
      %v1139 = vtanh.pop %v1026
      %v1140 = vtanh.pop %v1030
      %v1141 = vtanh.pop %v1032
      %v1142 = vtanh.pop %v1034
      %v1143 = vtanh.pop %v1036
      %v1144 = vtanh.pop %v1040
      %v1145 = vtanh.pop %v1042
      %v1146 = vtanh.pop %v1044
      %v1147 = vtanh.pop %v1046
      %v1148 = vtanh.pop %v1050
      %v1149 = vtanh.pop %v1052
      %v1150 = vtanh.pop %v1054
      %v1151 = vtanh.pop %v1056
      %v1152 = vtanh.pop %v1060
      %v1153 = vtanh.pop %v1062
      %v1154 = vtanh.pop %v1064
      %v1155 = vtanh.pop %v1066
      %v1156 = vtanh.pop %v1070
      %v1157 = vtanh.pop %v1072
      %v1158 = vtanh.pop %v1074
      %v1159 = vtanh.pop %v1076
      %v1160 = vtanh.pop %v1080
      %v1161 = vtanh.pop %v1082
      %v1162 = vtanh.pop %v1084
      %v1163 = vtanh.pop %v1086
      %v1164 = vtanh.pop %v1090
      %v1165 = vtanh.pop %v1092
      %v1166 = vtanh.pop %v1094
      %v1167 = vtanh.pop %v1096
      %v1168 = vtanh.pop %v1100
      %v1169 = vtanh.pop %v1102
      %v1170 = vtanh.pop %v1104
      %v1171 = vtanh.pop %v1106
      %1172 = vst [vmem:[%s150] sm:$0xff] %v1108
      %vm1173 = vcmask 523264
      %1174 = vst.msk [vmem:[%s150 + $0x8] sm:$0xff] %vm1173, %v1109
      %1175 = vst [vmem:[%s150 + $0x10] sm:$0xff] %v1110
      %1176 = vst.msk [vmem:[%s150 + $0x18] sm:$0xff] %vm1173, %v1111
      %1177 = vst [vmem:[%s150 + $0x20] sm:$0xff] %v1112
      %1178 = vst.msk [vmem:[%s150 + $0x28] sm:$0xff] %vm1173, %v1113
      %1179 = vst [vmem:[%s150 + $0x30] sm:$0xff] %v1114
      %1180 = vst.msk [vmem:[%s150 + $0x38] sm:$0xff] %vm1173, %v1115
      %1181 = vst [vmem:[%s150 + $0x40] sm:$0xff] %v1116
      %1182 = vst.msk [vmem:[%s150 + $0x48] sm:$0xff] %vm1173, %v1117
      %1183 = vst [vmem:[%s150 + $0x50] sm:$0xff] %v1118
      %1184 = vst.msk [vmem:[%s150 + $0x58] sm:$0xff] %vm1173, %v1119
      %1185 = vst [vmem:[%s150 + $0x60] sm:$0xff] %v1120
      %1186 = vst.msk [vmem:[%s150 + $0x68] sm:$0xff] %vm1173, %v1121
      %1187 = vst [vmem:[%s150 + $0x70] sm:$0xff] %v1122
      %1188 = vst.msk [vmem:[%s150 + $0x78] sm:$0xff] %vm1173, %v1123
      %1189 = vst [vmem:[%s150 + $0x80] sm:$0xff] %v1124
      %1190 = vst.msk [vmem:[%s150 + $0x88] sm:$0xff] %vm1173, %v1125
      %1191 = vst [vmem:[%s150 + $0x90] sm:$0xff] %v1126
      %1192 = vst.msk [vmem:[%s150 + $0x98] sm:$0xff] %vm1173, %v1127
      %1193 = vst [vmem:[%s150 + $0xa0] sm:$0xff] %v1128
      %1194 = vst.msk [vmem:[%s150 + $0xa8] sm:$0xff] %vm1173, %v1129
      %1195 = vst [vmem:[%s150 + $0xb0] sm:$0xff] %v1130
      %1196 = vst.msk [vmem:[%s150 + $0xb8] sm:$0xff] %vm1173, %v1131
      %1197 = vst [vmem:[%s150 + $0xc0] sm:$0xff] %v1132
      %1198 = vst.msk [vmem:[%s150 + $0xc8] sm:$0xff] %vm1173, %v1133
      %1199 = vst [vmem:[%s150 + $0xd0] sm:$0xff] %v1134
      %1200 = vst.msk [vmem:[%s150 + $0xd8] sm:$0xff] %vm1173, %v1135
      %1201 = vst [vmem:[%s150 + $0xe0] sm:$0xff] %v1136
      %1202 = vst.msk [vmem:[%s150 + $0xe8] sm:$0xff] %vm1173, %v1137
      %1203 = vst [vmem:[%s150 + $0xf0] sm:$0xff] %v1138
      %1204 = vst.msk [vmem:[%s150 + $0xf8] sm:$0xff] %vm1173, %v1139
      %1205 = vst [vmem:[%s150 + $0x100] sm:$0xff] %v1140
      %1206 = vst.msk [vmem:[%s150 + $0x108] sm:$0xff] %vm1173, %v1141
      %1207 = vst [vmem:[%s150 + $0x110] sm:$0xff] %v1142
      %1208 = vst.msk [vmem:[%s150 + $0x118] sm:$0xff] %vm1173, %v1143
      %1209 = vst [vmem:[%s150 + $0x120] sm:$0xff] %v1144
      %1210 = vst.msk [vmem:[%s150 + $0x128] sm:$0xff] %vm1173, %v1145
      %1211 = vst [vmem:[%s150 + $0x130] sm:$0xff] %v1146
      %1212 = vst.msk [vmem:[%s150 + $0x138] sm:$0xff] %vm1173, %v1147
      %1213 = vst [vmem:[%s150 + $0x140] sm:$0xff] %v1148
      %1214 = vst.msk [vmem:[%s150 + $0x148] sm:$0xff] %vm1173, %v1149
      %1215 = vst [vmem:[%s150 + $0x150] sm:$0xff] %v1150
      %1216 = vst.msk [vmem:[%s150 + $0x158] sm:$0xff] %vm1173, %v1151
      %1217 = vst [vmem:[%s150 + $0x160] sm:$0xff] %v1152
      %1218 = vst.msk [vmem:[%s150 + $0x168] sm:$0xff] %vm1173, %v1153
      %1219 = vst [vmem:[%s150 + $0x170] sm:$0xff] %v1154
      %1220 = vst.msk [vmem:[%s150 + $0x178] sm:$0xff] %vm1173, %v1155
      %1221 = vst [vmem:[%s150 + $0x180] sm:$0xff] %v1156
      %1222 = vst.msk [vmem:[%s150 + $0x188] sm:$0xff] %vm1173, %v1157
      %1223 = vst [vmem:[%s150 + $0x190] sm:$0xff] %v1158
      %1224 = vst.msk [vmem:[%s150 + $0x198] sm:$0xff] %vm1173, %v1159
      %1225 = vst [vmem:[%s150 + $0x1a0] sm:$0xff] %v1160
      %1226 = vst.msk [vmem:[%s150 + $0x1a8] sm:$0xff] %vm1173, %v1161
      %1227 = vst [vmem:[%s150 + $0x1b0] sm:$0xff] %v1162
      %1228 = vst.msk [vmem:[%s150 + $0x1b8] sm:$0xff] %vm1173, %v1163
      %1229 = vst [vmem:[%s150 + $0x1c0] sm:$0xff] %v1164
      %1230 = vst.msk [vmem:[%s150 + $0x1c8] sm:$0xff] %vm1173, %v1165
      %1231 = vst [vmem:[%s150 + $0x1d0] sm:$0xff] %v1166
      %1232 = vst.msk [vmem:[%s150 + $0x1d8] sm:$0xff] %vm1173, %v1167
      %1233 = vst [vmem:[%s150 + $0x1e0] sm:$0xff] %v1168
      %1234 = vst.msk [vmem:[%s150 + $0x1e8] sm:$0xff] %vm1173, %v1169
      %1235 = vst [vmem:[%s150 + $0x1f0] sm:$0xff] %v1170
      %1236 = vst.msk [vmem:[%s150 + $0x1f8] sm:$0xff] %vm1173, %v1171
      %s1237 = smul.u32 32, %s13
      %p1238 = scmp.lt.s32.totalorder %s1237, 255
      %s1239 = scalar_select %p1238, %s1237, 255
      %s1240 = smul.addr %s1239, 2
      %s1241 = smul.addr %s1240, 8
      %s1242 = scalar_lea.vmem %s2, %s1241
      // Predicated region
      $region29: #{pallas_decoder_forward.15} parent=27 // pred_check
        %p1243 = pneg %p78
      $region30: #{pallas_decoder_forward.15} parent=27 // pred_check_branch
        %1245 = sbr.rel (%p1243) target = $region32
      $region31: #{pallas_decoder_forward.15} parent=27 // pred_region
        %s1246 = smul.u32 32, %s13
      $region32: #{pallas_decoder_forward.15} parent=27 // pred_fallthru
        _
    $region28: #{pallas_decoder_forward.15} parent=5 // pred_fallthru
      _
    %p1247 = scmp.le.s32.totalorder 2, %s8
    // Predicated region
    $region33: #{pallas_decoder_forward.15} parent=5 // pred_check
      %p1248 = pneg %p1247
    $region34: #{pallas_decoder_forward.15} parent=5 // pred_check_branch
      %1250 = sbr.rel (%p1248) target = $region36
    $region35: #{pallas_decoder_forward.15} parent=5 // pred_region
      %s1251 = ssub.s32 %s8, 2
      // Predicated region
      $region37: #{pallas_decoder_forward.15} parent=35 // pred_check
        %p1252 = pneg %p84
      $region38: #{pallas_decoder_forward.15} parent=35 // pred_check_branch
        %1254 = sbr.rel (%p1252) target = $region40
      $region39: #{pallas_decoder_forward.15} parent=35 // pred_region
        %s1255 = smul.u32 32, %s14
        %p1256 = scmp.lt.s32.totalorder %s1255, 255
        %s1257 = scalar_select %p1256, %s1255, 255
        %s1258 = smul.addr %s1257, 2
        %s1259 = smul.addr %s1258, 8
        %s1260 = scalar_lea.vmem %s2, %s1259
      $region40: #{pallas_decoder_forward.15} parent=35 // pred_fallthru
        _
    $region36: #{pallas_decoder_forward.15} parent=5 // pred_fallthru
      _
  $region6: #{pallas_decoder_forward.15} parent=0 // loop_footer
    %s12 = sadd.s32 1, %s8
  $region7: #{pallas_decoder_forward.15} parent=0 // loop_footer_branch
    %7 = sbr.rel target = $region3
  $region8: #{pallas_decoder_forward.15} parent=0 // loop_exit
    _

</llo_original>
